<compile_context>
chip_gen: v7x
topology: tpu7x:2x2x1
jax: 0.10.0
libtpu: 0.0.40
codegen_flags: <defaults>
</compile_context>

<pallas_src>
from functools import partial

import jax
import jax.numpy as jnp
from jax.experimental import pallas as pl
from jax.experimental.pallas import tpu as pltpu

TOKEN_SELF_ATTN_VALUE = -5e4      # reformer_pytorch constant for masking attention to self
VMEM_LIMIT = 32 * 1024 * 1024     # >= v5e's 16 MiB default, == v6e/v7x default scoped limit


# --------------------------------------------------------------------------------------
# tiling helpers (targeted at realistic Reformer dims; toy __main__ shapes just pad up)
# --------------------------------------------------------------------------------------
def _pick_row_tile(n, cap=256):
    """Largest multiple-of-16 divisor of n (<= cap) with >= 2 grid steps: sublane-aligned
    for bf16 outputs and small enough that f32 x + bf16 weights/outputs double-buffered
    stay well under the v5e scoped-VMEM limit.  Falls back to the full axis."""
    best = n
    d = 16
    while d <= min(n, cap):
        if n % d == 0 and n // d >= 2:
            best = d
        d += 16
    return best


def _pick_bh_tile(n, cap=4):
    """Largest divisor of n (<= cap) giving >= 2 grid steps; falls back to n."""
    best = n
    for d in range(1, min(n, cap) + 1):
        if n % d == 0 and n // d >= 2:
            best = d
    return best


def _pick_chunk_tile(n, cap=32):
    """Largest multiple-of-8 divisor of n (<= cap, >= 2 grid steps): keeps the f32 lse
    output block sublane-aligned and bounds per-step VMEM (score intermediates scale
    with tb*tc) so the kernel fits v7x's 64 MiB VMEM.  Falls back to the full axis."""
    best = n
    d = 8
    while d <= min(n, cap):
        if n % d == 0 and n // d >= 2:
            best = d
        d += 8
    return best


# --------------------------------------------------------------------------------------
# Pallas kernel 1: fused shared-QK / V projections (x loaded once, bf16 MXU, f32 acc)
# --------------------------------------------------------------------------------------
def _qkv_proj_kernel(x_ref, wqk_ref, wv_ref, qk_ref, v_ref):
    x = x_ref[...].astype(jnp.bfloat16)                    # weights arrive already in bf16
    qk_ref[...] = jnp.dot(x, wqk_ref[...],
                          preferred_element_type=jnp.float32).astype(qk_ref.dtype)
    v_ref[...] = jnp.dot(x, wv_ref[...],
                         preferred_element_type=jnp.float32).astype(v_ref.dtype)


def qkv_projection(x2d, w_qk_bf, w_v_bf):
    MB, C = x2d.shape
    tm = _pick_row_tile(MB)
    grid = (MB // tm,)
    flops = 2 * 2 * MB * C * C
    bytes_accessed = 4 * MB * C + 2 * (2 * C * C) + 2 * (2 * MB * C)
    # NOTE: the constant-index weight specs could additionally be single-buffered
    # (pipeline_mode=pl.Buffered(1)); bf16 weights + the explicit vmem limit already
    # keep residency comfortable at realistic d_model, so we keep the default here.
    return pl.pallas_call(
        _qkv_proj_kernel,
        out_shape=(jax.ShapeDtypeStruct((MB, C), jnp.bfloat16),
                   jax.ShapeDtypeStruct((MB, C), jnp.bfloat16)),
        grid=grid,
        in_specs=[pl.BlockSpec((tm, C), lambda i: (i, 0)),
                  pl.BlockSpec((C, C), lambda i: (0, 0)),
                  pl.BlockSpec((C, C), lambda i: (0, 0))],
        out_specs=(pl.BlockSpec((tm, C), lambda i: (i, 0)),
                   pl.BlockSpec((tm, C), lambda i: (i, 0))),
        compiler_params=pltpu.CompilerParams(dimension_semantics=("parallel",),
                                             vmem_limit_bytes=VMEM_LIMIT),
        cost_estimate=pl.CostEstimate(flops=flops, transcendentals=0,
                                      bytes_accessed=bytes_accessed),
    )(x2d, w_qk_bf, w_v_bf)


# --------------------------------------------------------------------------------------
# Pallas kernel 2: chunked LSH attention on the bucket-sorted sequence
#   grid = (batch*head tiles, chunk tiles); look-one-back comes from a single-chunk halo
#   block (previous tile's last chunk, wrap-around handled by the index_map).
# --------------------------------------------------------------------------------------
def _lsh_attn_kernel(sqk_ref, sv_ref, st_ref, pqk_ref, pv_ref, pt_ref,
                     so_ref, lse_ref, *, scale):
    tb, tc, BIN, DH = sqk_ref.shape

    q = sqk_ref[...].astype(jnp.float32)           # (tb, tc, BIN, DH) queries (unnormalized)
    v_cur = sv_ref[...]                            # bf16
    t_cur = st_ref[...][..., 0]                    # (tb, tc, BIN) original positions (int32)

    pq = pqk_ref[...].astype(jnp.float32)          # (tb, 1, BIN, DH) halo chunk
    pv = pv_ref[...]
    pt = pt_ref[...][..., 0]                       # (tb, 1, BIN)

    # shared-QK attention: keys are the L2-normalized queries (F.normalize, eps=1e-12);
    # rsqrt runs on the EUP slot (free under the MXU) instead of sqrt + divide on the VALU.
    def normalize(x):
        ss = jnp.sum(x * x, axis=-1, keepdims=True)
        return x * jax.lax.rsqrt(jnp.maximum(ss, 1e-24))

    k_cur = normalize(q)
    k_halo = normalize(pq)

    # look one back: chunk c also attends to chunk c-1; chunk "-1" of this tile is the
    # halo block (last chunk of the previous tile / wrap-around chunk of the sequence).
    k_prev = jnp.concatenate([k_halo, k_cur[:, :-1]], axis=1)        # (tb, tc, BIN, DH)
    v_prev = jnp.concatenate([pv, v_cur[:, :-1]], axis=1)
    t_prev = jnp.concatenate([pt, t_cur[:, :-1]], axis=1)

    k_full = jnp.concatenate([k_cur, k_prev], axis=2)                # (tb, tc, 2*BIN, DH)
    v_full = jnp.concatenate([v_cur, v_prev], axis=2)
    t_full = jnp.concatenate([t_cur, t_prev], axis=2)                # (tb, tc, 2*BIN)

    # merge (bh-tile, chunk-tile) -> single batch axis so all chunks hit the MXU in one
    # batched einsum instead of a per-head / per-chunk Python loop.
    BC = tb * tc
    q2 = (q * scale).reshape(BC, BIN, DH).astype(jnp.bfloat16)       # scale folded into q
    k2 = k_full.reshape(BC, 2 * BIN, DH).astype(jnp.bfloat16)
    v2 = v_full.reshape(BC, 2 * BIN, DH)                             # already bf16
    qt = t_cur.reshape(BC, BIN)
    kt = t_full.reshape(BC, 2 * BIN)

    dots = jnp.einsum('cie,cje->cij', q2, k2, preferred_element_type=jnp.float32)
    # mask out attention to self (and same-token duplicates across rounds), like reformer
    dots = jnp.where(qt[:, :, None] == kt[:, None, :], TOKEN_SELF_ATTN_VALUE, dots)

    # f32 softmax; keep the per-row logsumexp for the multi-round combine.  The softmax
    # normalization is applied to the (BIN, DH) output with an exact divide so the
    # weights are exactly consistent with lse.
    m = jnp.max(dots, axis=-1, keepdims=True)
    e = jnp.exp(dots - m)
    s = jnp.sum(e, axis=-1, keepdims=True)
    lse = m + jnp.log(s)

    bo = jnp.einsum('cij,cje->cie', e.astype(jnp.bfloat16), v2,
                    preferred_element_type=jnp.float32)
    bo = bo * (1.0 / s)

    so_ref[...] = bo.reshape(tb, tc, BIN, DH).astype(so_ref.dtype)
    lse_ref[...] = lse.reshape(tb, tc, BIN).astype(lse_ref.dtype)    # lane-dense lse store


def lsh_chunk_attention(sqk4, sv4, st4, *, scale):
    BH, NC, BIN, DH = sqk4.shape
    tb = _pick_bh_tile(BH)                         # several (batch*head) rows per step
    tc = _pick_chunk_tile(NC)                      # chunk axis is a real grid dimension
    grid = (BH // tb, NC // tc)

    st4 = st4[..., None]                           # trailing 1 keeps halo blocks' last two
                                                   # dims equal to the full array dims

    cur4 = pl.BlockSpec((tb, tc, BIN, DH), lambda i, c: (i, c, 0, 0))
    halo4 = pl.BlockSpec((tb, 1, BIN, DH),
                         lambda i, c: (i, (c * tc + NC - 1) % NC, 0, 0))
    cur_t = pl.BlockSpec((tb, tc, BIN, 1), lambda i, c: (i, c, 0, 0))
    halo_t = pl.BlockSpec((tb, 1, BIN, 1),
                          lambda i, c: (i, (c * tc + NC - 1) % NC, 0, 0))

    flops = 2 * 2 * BH * NC * BIN * (2 * BIN) * DH
    transcendentals = BH * NC * BIN * (2 * BIN)
    bytes_accessed = (2 * (BH * NC * BIN * DH * 2) + BH * NC * BIN * 4     # inputs
                      + BH * NC * BIN * DH * 2 + BH * NC * BIN * 4)        # outputs

    return pl.pallas_call(
        partial(_lsh_attn_kernel, scale=scale),
        out_shape=(jax.ShapeDtypeStruct((BH, NC, BIN, DH), jnp.bfloat16),
                   jax.ShapeDtypeStruct((BH, NC, BIN), jnp.float32)),
        grid=grid,
        in_specs=[cur4, cur4, cur_t,               # current chunk tiles
                  halo4, halo4, halo_t],           # single-chunk look-back halos
        out_specs=(pl.BlockSpec((tb, tc, BIN, DH), lambda i, c: (i, c, 0, 0)),
                   pl.BlockSpec((tb, tc, BIN), lambda i, c: (i, c, 0))),
        compiler_params=pltpu.CompilerParams(
            dimension_semantics=("parallel", "parallel"),
            vmem_limit_bytes=VMEM_LIMIT),
        cost_estimate=pl.CostEstimate(flops=flops, transcendentals=transcendentals,
                                      bytes_accessed=bytes_accessed),
    )(sqk4, sv4, st4, sqk4, sv4, st4)


# --------------------------------------------------------------------------------------
# Pallas kernel 3: output projection (Linear with bias)
# --------------------------------------------------------------------------------------
def _out_proj_kernel(x_ref, w_ref, b_ref, o_ref):
    x = x_ref[...].astype(jnp.bfloat16)
    y = jnp.dot(x, w_ref[...], preferred_element_type=jnp.float32) + b_ref[...]
    o_ref[...] = y.astype(o_ref.dtype)


def out_projection(x2d, w_out_bf, b_out):
    MB, C = x2d.shape
    Cout = w_out_bf.shape[1]
    tm = _pick_row_tile(MB)
    grid = (MB // tm,)
    return pl.pallas_call(
        _out_proj_kernel,
        out_shape=jax.ShapeDtypeStruct((MB, Cout), jnp.float32),
        grid=grid,
        in_specs=[pl.BlockSpec((tm, C), lambda i: (i, 0)),
                  pl.BlockSpec((C, Cout), lambda i: (0, 0)),
                  pl.BlockSpec((1, Cout), lambda i: (0, 0))],
        out_specs=pl.BlockSpec((tm, Cout), lambda i: (i, 0)),
        compiler_params=pltpu.CompilerParams(dimension_semantics=("parallel",),
                                             vmem_limit_bytes=VMEM_LIMIT),
        cost_estimate=pl.CostEstimate(
            flops=2 * MB * C * Cout, transcendentals=0,
            bytes_accessed=4 * MB * C + 2 * C * Cout + 4 * Cout + 4 * MB * Cout),
    )(x2d, w_out_bf, b_out)


# --------------------------------------------------------------------------------------
# LSH bucketing + sorting (XLA: data-dependent argsort / gather)
# --------------------------------------------------------------------------------------
def _lsh_sort_indices(qk_bh, n_buckets, n_hashes, rng_key):
    BH, T, DH = qk_bh.shape
    # random rotations are shared across batch*head (random_rotations_per_head=False);
    # PyTorch draws them fresh per forward — here they come from a deterministic key.
    rot = jax.random.normal(rng_key, (DH, n_hashes, n_buckets // 2), jnp.float32)
    rotated = jnp.einsum('btf,fhi->bhti', qk_bh.astype(jnp.float32), rot)
    rotated = jnp.concatenate([rotated, -rotated], axis=-1)       # (BH, n_hashes, T, n_buckets)
    buckets = jnp.argmax(rotated, axis=-1).astype(jnp.int32)      # (BH, n_hashes, T)
    offsets = (jnp.arange(n_hashes, dtype=jnp.int32) * n_buckets)[None, :, None]
    buckets = (buckets + offsets).reshape(BH, n_hashes * T)
    ticker = jnp.arange(n_hashes * T, dtype=jnp.int32)[None, :]
    # NOTE: int32 sort key (buckets*T + pos) can overflow only for T*n_hashes*n_buckets
    # beyond ~2^31 — far outside this module's operating range.
    buckets_and_t = buckets * T + (ticker % T)
    sticker = jnp.argsort(buckets_and_t, axis=-1).astype(jnp.int32)   # sorted ticker
    undo_sort = jnp.argsort(sticker, axis=-1).astype(jnp.int32)
    st = sticker % T                                                  # sorted original positions
    return st, undo_sort


# --------------------------------------------------------------------------------------
# ReformerLayer forward
# --------------------------------------------------------------------------------------
def reformer_layer_forward(queries, keys, values, attn_mask, tau, delta, *,
                           params, hash_key, n_heads, bucket_size=4, n_hashes=4):
    del keys, values, attn_mask, tau, delta       # unused, same as the PyTorch module
    B, N, C = queries.shape
    H = n_heads
    assert C % H == 0, "d_model must be divisible by n_heads"
    DH = C // H

    # --- fit_length: zero-pad to a multiple of 2*bucket_size -------------------------
    mlen = 2 * bucket_size
    T = N if N % mlen == 0 else N + (mlen - N % mlen)
    x = queries if T == N else jnp.concatenate(
        [queries, jnp.zeros((B, T - N, C), queries.dtype)], axis=1)

    # pre-cast weights to bf16 once (MXU operands are bf16 anyway; halves weight DMA)
    w_qk_bf = params['w_qk'].astype(jnp.bfloat16)
    w_v_bf = params['w_v'].astype(jnp.bfloat16)
    w_out_bf = params['w_out'].astype(jnp.bfloat16)

    # --- shared QK and V projections (Pallas GEMMs, bf16 outputs) ---------------------
    x2d = x.reshape(B * T, C)
    qk2d, v2d = qkv_projection(x2d, w_qk_bf, w_v_bf)

    def merge_heads(y):                            # (B*T, C) -> (B*H, T, DH)
        return y.reshape(B, T, H, DH).transpose(0, 2, 1, 3).reshape(B * H, T, DH)

    qk_bh = merge_heads(qk2d)                      # bf16 — halves the XLA gather traffic
    v_bh = merge_heads(v2d)
    BH = B * H

    # --- LSH bucketing, sort and gather (XLA) -----------------------------------------
    n_buckets = T // bucket_size
    st, undo_sort = _lsh_sort_indices(qk_bh, n_buckets, n_hashes, hash_key)
    idx = jnp.broadcast_to(st[..., None], (BH, n_hashes * T, DH))
    sqk = jnp.take_along_axis(qk_bh, idx, axis=1)
    sv = jnp.take_along_axis(v_bh, idx, axis=1)

    # --- chunked attention on the sorted sequence (Pallas) ----------------------------
    n_chunks = n_hashes * n_buckets                # bin size per chunk == bucket_size
    so4, lse4 = lsh_chunk_attention(
        sqk.reshape(BH, n_chunks, bucket_size, DH),
        sv.reshape(BH, n_chunks, bucket_size, DH),
        st.reshape(BH, n_chunks, bucket_size),
        scale=float(DH) ** -0.5)
    so = so4.reshape(BH, n_hashes * T, DH)         # bf16
    slse = lse4.reshape(BH, n_hashes * T)          # f32

    # --- undo the sort and combine hash rounds (XLA) ----------------------------------
    o = jnp.take_along_axis(
        so, jnp.broadcast_to(undo_sort[..., None], (BH, n_hashes * T, DH)), axis=1)
    logits = jnp.take_along_axis(slse, undo_sort, axis=1)
    o = o.reshape(BH, n_hashes, T, DH).astype(jnp.float32)
    logits = logits.reshape(BH, n_hashes, T, 1)
    probs = jax.nn.softmax(logits, axis=1)         # exp(lse - logsumexp over hash rounds)
    out_bh = jnp.sum(o * probs, axis=1)            # (BH, T, DH) f32

    # --- split heads + output projection (Pallas GEMM) --------------------------------
    out2d = out_bh.reshape(B, H, T, DH).transpose(0, 2, 1, 3).reshape(B * T, C)
    out = out_projection(out2d, w_out_bf, params['b_out']).reshape(B, T, C)

    return out[:, :N, :], None


def make_params(key, d_model):
    k1, k2, k3 = jax.random.split(key, 3)
    s = 0.02
    return {
        'w_qk': s * jax.random.normal(k1, (d_model, d_model), jnp.float32),
        'w_v': s * jax.random.normal(k2, (d_model, d_model), jnp.float32),
        'w_out': s * jax.random.normal(k3, (d_model, d_model), jnp.float32),
        'b_out': jnp.zeros((1, d_model), jnp.float32),
    }


if __name__ == "__main__":
    # queries: [batch=2, seq=14, d_model=32]; n_heads=4, bucket_size=4, n_hashes=4
    # (seq=14 exercises fit_length padding up to 16 = 2*bucket_size multiple).
    # NOTE: these are smoke-test shapes; the tile pickers are written for realistic
    # Reformer dims (d_model>=512, bucket_size=64, T in the thousands) and simply pad
    # up to (8,128)/(16,128) tiles here.
    B, N, d_model, n_heads = 2, 14, 32, 4
    bucket_size, n_hashes = 4, 4

    root = jax.random.PRNGKey(0)
    kx, kp, kh = jax.random.split(root, 3)
    queries = jax.random.normal(kx, (B, N, d_model), jnp.float32)
    params = make_params(kp, d_model)

    fwd = jax.jit(partial(reformer_layer_forward,
                          n_heads=n_heads, bucket_size=bucket_size, n_hashes=n_hashes))
    out, attn = fwd(queries, None, None, None, None, None,
                    params=params, hash_key=kh)
    out = jax.block_until_ready(out)

    assert out.shape == (B, N, d_model)
    assert attn is None
    assert bool(jnp.all(jnp.isfinite(out)))
    print("KERNEL_OK")
</pallas_src>

<mosaic_0001>
module attributes {stable_mosaic.version = 11 : i64} {
  func.func private @main(%arg0: i32) attributes {dimension_semantics = [#tpu.dimension_semantics<core_parallel>], iteration_bounds = array<i64: 2>, tpu.core_type = #tpu.core_type<sc_scalar_subcore>, window_params = []} {
    return
  }
}

module attributes {stable_mosaic.version = 11 : i64} {
  func.func private @main(%arg0: i32) attributes {dimension_semantics = [#tpu.dimension_semantics<core_parallel>], iteration_bounds = array<i64: 2>, tpu.core_type = #tpu.core_type<sc_scalar_subcore>, window_params = []} {
    return
  }
}

module attributes {stable_mosaic.version = 11 : i64} {
  func.func @_qkv_proj_kernel(%arg0: i32, %arg1: memref<16x32xf32, #tpu.memory_space<vmem>>, %arg2: memref<32x32xbf16, #tpu.memory_space<vmem>>, %arg3: memref<32x32xbf16, #tpu.memory_space<vmem>>, %arg4: memref<16x32xbf16, #tpu.memory_space<vmem>>, %arg5: memref<16x32xbf16, #tpu.memory_space<vmem>>) attributes {dimension_semantics = [#tpu.dimension_semantics<parallel>], iteration_bounds = array<i64: 2>, scalar_prefetch = 0 : i64, scratch_operands = 0 : i64, tpu.core_type = #tpu.core_type<tc>, window_params = [{transform_indices = @transform_0, window_bounds = array<i64: 16, 32>}, {pipeline_mode = #tpu.pipeline_mode<synchronous>, transform_indices = @transform_1, window_bounds = array<i64: 32, 32>}, {pipeline_mode = #tpu.pipeline_mode<synchronous>, transform_indices = @transform_2, window_bounds = array<i64: 32, 32>}, {transform_indices = @transform_3, window_bounds = array<i64: 16, 32>}, {transform_indices = @transform_4, window_bounds = array<i64: 16, 32>}]} {
    %c0 = arith.constant 0 : index
    %c0_0 = arith.constant 0 : index
    %0 = vector.load %arg1[%c0, %c0_0] : memref<16x32xf32, #tpu.memory_space<vmem>>, vector<16x32xf32>
    %1 = arith.truncf %0 : vector<16x32xf32> to vector<16x32xbf16>
    %c0_1 = arith.constant 0 : index
    %c0_2 = arith.constant 0 : index
    %2 = vector.load %arg2[%c0_1, %c0_2] : memref<32x32xbf16, #tpu.memory_space<vmem>>, vector<32x32xbf16>
    %cst = arith.constant dense<0.000000e+00> : vector<16x32xf32>
    %3 = tpu.matmul %1, %2, %cst {dimension_numbers = #tpu.dot_dimension_numbers<[1], [0], [0], [1], [0, 0, 1, 1], [], []>} : vector<16x32xbf16>, vector<32x32xbf16>, vector<16x32xf32> -> vector<16x32xf32>
    %4 = arith.truncf %3 : vector<16x32xf32> to vector<16x32xbf16>
    %c0_3 = arith.constant 0 : index
    %c0_4 = arith.constant 0 : index
    %5 = vector.load %arg4[%c0_3, %c0_4] : memref<16x32xbf16, #tpu.memory_space<vmem>>, vector<16x32xbf16>
    tpu.vector_store %arg4[%c0_3, %c0_4], %4 {strides = array<i32>} : memref<16x32xbf16, #tpu.memory_space<vmem>>, vector<16x32xbf16>,
    %c0_5 = arith.constant 0 : index
    %c0_6 = arith.constant 0 : index
    %6 = vector.load %arg3[%c0_5, %c0_6] : memref<32x32xbf16, #tpu.memory_space<vmem>>, vector<32x32xbf16>
    %cst_7 = arith.constant dense<0.000000e+00> : vector<16x32xf32>
    %7 = tpu.matmul %1, %6, %cst_7 {dimension_numbers = #tpu.dot_dimension_numbers<[1], [0], [0], [1], [0, 0, 1, 1], [], []>} : vector<16x32xbf16>, vector<32x32xbf16>, vector<16x32xf32> -> vector<16x32xf32>
    %8 = arith.truncf %7 : vector<16x32xf32> to vector<16x32xbf16>
    %c0_8 = arith.constant 0 : index
    %c0_9 = arith.constant 0 : index
    %9 = vector.load %arg5[%c0_8, %c0_9] : memref<16x32xbf16, #tpu.memory_space<vmem>>, vector<16x32xbf16>
    tpu.vector_store %arg5[%c0_8, %c0_9], %8 {strides = array<i32>} : memref<16x32xbf16, #tpu.memory_space<vmem>>, vector<16x32xbf16>,
    return
  }
  func.func @transform_0(%arg0: i32) -> (i32, i32) {
    %c0_i32 = arith.constant 0 : i32
    %c0_i32_0 = arith.constant 0 : i32
    return %arg0, %c0_i32 : i32, i32
  }
  func.func @transform_1(%arg0: i32) -> (i32, i32) {
    %c0_i32 = arith.constant 0 : i32
    %c0_i32_0 = arith.constant 0 : i32
    %c0_i32_1 = arith.constant 0 : i32
    return %c0_i32, %c0_i32_0 : i32, i32
  }
  func.func @transform_2(%arg0: i32) -> (i32, i32) {
    %c0_i32 = arith.constant 0 : i32
    %c0_i32_0 = arith.constant 0 : i32
    %c0_i32_1 = arith.constant 0 : i32
    return %c0_i32, %c0_i32_0 : i32, i32
  }
  func.func @transform_3(%arg0: i32) -> (i32, i32) {
    %c0_i32 = arith.constant 0 : i32
    %c0_i32_0 = arith.constant 0 : i32
    return %arg0, %c0_i32 : i32, i32
  }
  func.func @transform_4(%arg0: i32) -> (i32, i32) {
    %c0_i32 = arith.constant 0 : i32
    %c0_i32_0 = arith.constant 0 : i32
    return %arg0, %c0_i32 : i32, i32
  }
}

module attributes {stable_mosaic.version = 11 : i64} {
  func.func @_lsh_attn_kernel(%arg0: i32, %arg1: i32, %arg2: memref<4x8x4x8xbf16, #tpu.memory_space<vmem>>, %arg3: memref<4x8x4x8xbf16, #tpu.memory_space<vmem>>, %arg4: memref<4x8x4x1xi32, #tpu.memory_space<vmem>>, %arg5: memref<4x1x4x8xbf16, #tpu.memory_space<vmem>>, %arg6: memref<4x1x4x8xbf16, #tpu.memory_space<vmem>>, %arg7: memref<4x1x4x1xi32, #tpu.memory_space<vmem>>, %arg8: memref<4x8x4x8xbf16, #tpu.memory_space<vmem>>, %arg9: memref<4x8x4xf32, #tpu.memory_space<vmem>>) attributes {dimension_semantics = [#tpu.dimension_semantics<parallel>, #tpu.dimension_semantics<parallel>], iteration_bounds = array<i64: 2, 2>, scalar_prefetch = 0 : i64, scratch_operands = 0 : i64, tpu.core_type = #tpu.core_type<tc>, window_params = [{transform_indices = @transform_0, window_bounds = array<i64: 4, 8, 4, 8>}, {transform_indices = @transform_1, window_bounds = array<i64: 4, 8, 4, 8>}, {transform_indices = @transform_2, window_bounds = array<i64: 4, 8, 4, 1>}, {transform_indices = @transform_3, window_bounds = array<i64: 4, 1, 4, 8>}, {transform_indices = @transform_4, window_bounds = array<i64: 4, 1, 4, 8>}, {transform_indices = @transform_5, window_bounds = array<i64: 4, 1, 4, 1>}, {transform_indices = @transform_6, window_bounds = array<i64: 4, 8, 4, 8>}, {transform_indices = @transform_7, window_bounds = array<i64: 4, 8, 4>}]} {
    %c0 = arith.constant 0 : index
    %c0_0 = arith.constant 0 : index
    %c0_1 = arith.constant 0 : index
    %c0_2 = arith.constant 0 : index
    %0 = vector.load %arg2[%c0, %c0_0, %c0_1, %c0_2] : memref<4x8x4x8xbf16, #tpu.memory_space<vmem>>, vector<4x8x4x8xbf16>
    %1 = arith.extf %0 : vector<4x8x4x8xbf16> to vector<4x8x4x8xf32>
    %c0_3 = arith.constant 0 : index
    %c0_4 = arith.constant 0 : index
    %c0_5 = arith.constant 0 : index
    %c0_6 = arith.constant 0 : index
    %2 = vector.load %arg3[%c0_3, %c0_4, %c0_5, %c0_6] : memref<4x8x4x8xbf16, #tpu.memory_space<vmem>>, vector<4x8x4x8xbf16>
    %c0_7 = arith.constant 0 : index
    %c0_8 = arith.constant 0 : index
    %c0_9 = arith.constant 0 : index
    %c0_10 = arith.constant 0 : index
    %3 = vector.load %arg4[%c0_7, %c0_8, %c0_9, %c0_10] : memref<4x8x4x1xi32, #tpu.memory_space<vmem>>, vector<4x8x4x1xi32>
    %4 = vector.shape_cast %3 : vector<4x8x4x1xi32> to vector<4x8x4xi32>
    %c0_11 = arith.constant 0 : index
    %c0_12 = arith.constant 0 : index
    %c0_13 = arith.constant 0 : index
    %c0_14 = arith.constant 0 : index
    %5 = vector.load %arg5[%c0_11, %c0_12, %c0_13, %c0_14] : memref<4x1x4x8xbf16, #tpu.memory_space<vmem>>, vector<4x1x4x8xbf16>
    %6 = arith.extf %5 : vector<4x1x4x8xbf16> to vector<4x1x4x8xf32>
    %c0_15 = arith.constant 0 : index
    %c0_16 = arith.constant 0 : index
    %c0_17 = arith.constant 0 : index
    %c0_18 = arith.constant 0 : index
    %7 = vector.load %arg6[%c0_15, %c0_16, %c0_17, %c0_18] : memref<4x1x4x8xbf16, #tpu.memory_space<vmem>>, vector<4x1x4x8xbf16>
    %c0_19 = arith.constant 0 : index
    %c0_20 = arith.constant 0 : index
    %c0_21 = arith.constant 0 : index
    %c0_22 = arith.constant 0 : index
    %8 = vector.load %arg7[%c0_19, %c0_20, %c0_21, %c0_22] : memref<4x1x4x1xi32, #tpu.memory_space<vmem>>, vector<4x1x4x1xi32>
    %9 = vector.shape_cast %8 : vector<4x1x4x1xi32> to vector<4x1x4xi32>
    %10 = arith.mulf %1, %1 : vector<4x8x4x8xf32>
    %cst = arith.constant dense<0.000000e+00> : vector<4x8x4xf32>
    %11 = vector.multi_reduction <add>, %10, %cst [3] : vector<4x8x4x8xf32> to vector<4x8x4xf32>
    %12 = vector.shape_cast %11 : vector<4x8x4xf32> to vector<4x8x4x1xf32>
    %cst_23 = arith.constant 1.000000e-24 : f32
    %13 = vector.broadcast %cst_23 : f32 to vector<4x8x4x1xf32>
    %14 = arith.maximumf %12, %13 : vector<4x8x4x1xf32>
    %15 = math.rsqrt %14 : vector<4x8x4x1xf32>
    %16 = vector.broadcast %15 : vector<4x8x4x1xf32> to vector<4x8x4x8xf32>
    %17 = arith.mulf %1, %16 : vector<4x8x4x8xf32>
    %18 = arith.mulf %6, %6 : vector<4x1x4x8xf32>
    %cst_24 = arith.constant dense<0.000000e+00> : vector<4x1x4xf32>
    %19 = vector.multi_reduction <add>, %18, %cst_24 [3] : vector<4x1x4x8xf32> to vector<4x1x4xf32>
    %20 = vector.shape_cast %19 : vector<4x1x4xf32> to vector<4x1x4x1xf32>
    %cst_25 = arith.constant 1.000000e-24 : f32
    %21 = vector.broadcast %cst_25 : f32 to vector<4x1x4x1xf32>
    %22 = arith.maximumf %20, %21 : vector<4x1x4x1xf32>
    %23 = math.rsqrt %22 : vector<4x1x4x1xf32>
    %24 = vector.broadcast %23 : vector<4x1x4x1xf32> to vector<4x1x4x8xf32>
    %25 = arith.mulf %6, %24 : vector<4x1x4x8xf32>
    %26 = vector.extract_strided_slice %17 {offsets = [0, 0, 0, 0], sizes = [4, 7, 4, 8], strides = [1, 1, 1, 1]} : vector<4x8x4x8xf32> to vector<4x7x4x8xf32>
    %27 = tpu.concatenate %25, %26 in 1 : vector<4x1x4x8xf32>, vector<4x7x4x8xf32> -> vector<4x8x4x8xf32>
    %28 = vector.extract_strided_slice %2 {offsets = [0, 0, 0, 0], sizes = [4, 7, 4, 8], strides = [1, 1, 1, 1]} : vector<4x8x4x8xbf16> to vector<4x7x4x8xbf16>
    %29 = tpu.concatenate %7, %28 in 1 : vector<4x1x4x8xbf16>, vector<4x7x4x8xbf16> -> vector<4x8x4x8xbf16>
    %30 = vector.extract_strided_slice %4 {offsets = [0, 0, 0], sizes = [4, 7, 4], strides = [1, 1, 1]} : vector<4x8x4xi32> to vector<4x7x4xi32>
    %31 = tpu.concatenate %9, %30 in 1 : vector<4x1x4xi32>, vector<4x7x4xi32> -> vector<4x8x4xi32>
    %32 = tpu.concatenate %17, %27 in 2 : vector<4x8x4x8xf32>, vector<4x8x4x8xf32> -> vector<4x8x8x8xf32>
    %33 = tpu.concatenate %2, %29 in 2 : vector<4x8x4x8xbf16>, vector<4x8x4x8xbf16> -> vector<4x8x8x8xbf16>
    %34 = tpu.concatenate %4, %31 in 2 : vector<4x8x4xi32>, vector<4x8x4xi32> -> vector<4x8x8xi32>
    %cst_26 = arith.constant 0.353553385 : f32
    %35 = vector.broadcast %cst_26 : f32 to vector<4x8x4x8xf32>
    %36 = arith.mulf %1, %35 : vector<4x8x4x8xf32>
    %37 = vector.shape_cast %36 : vector<4x8x4x8xf32> to vector<32x4x8xf32>
    %38 = arith.truncf %37 : vector<32x4x8xf32> to vector<32x4x8xbf16>
    %39 = vector.shape_cast %32 : vector<4x8x8x8xf32> to vector<32x8x8xf32>
    %40 = arith.truncf %39 : vector<32x8x8xf32> to vector<32x8x8xbf16>
    %41 = vector.shape_cast %33 : vector<4x8x8x8xbf16> to vector<32x8x8xbf16>
    %42 = vector.shape_cast %4 : vector<4x8x4xi32> to vector<32x4xi32>
    %43 = vector.shape_cast %34 : vector<4x8x8xi32> to vector<32x8xi32>
    "tpu.trace_start"() <{level = 10 : i32, message = "cie,cje->cij"}> : () -> ()
    %cst_27 = arith.constant dense<0.000000e+00> : vector<32x4x8xf32>
    %44 = tpu.matmul %38, %40, %cst_27 {dimension_numbers = #tpu.dot_dimension_numbers<[2], [2], [1], [1], [0, 0, 0, 1, 1, 1], [0], [0]>} : vector<32x4x8xbf16>, vector<32x8x8xbf16>, vector<32x4x8xf32> -> vector<32x4x8xf32>
    "tpu.trace_stop"() : () -> ()
    %45 = vector.shape_cast %42 : vector<32x4xi32> to vector<32x4x1xi32>
    %46 = vector.shape_cast %43 : vector<32x8xi32> to vector<32x1x8xi32>
    %47 = vector.broadcast %45 : vector<32x4x1xi32> to vector<32x4x8xi32>
    %48 = vector.broadcast %46 : vector<32x1x8xi32> to vector<32x4x8xi32>
    %49 = arith.cmpi eq, %47, %48 : vector<32x4x8xi32>
    %cst_28 = arith.constant -5.000000e+04 : f32
    %50 = vector.broadcast %cst_28 : f32 to vector<32x4x8xf32>
    %51 = arith.select %49, %50, %44 : vector<32x4x8xi1>, vector<32x4x8xf32>
    %cst_29 = arith.constant dense<0xFF800000> : vector<32x4xf32>
    %52 = vector.multi_reduction <maximumf>, %51, %cst_29 [2] : vector<32x4x8xf32> to vector<32x4xf32>
    %53 = vector.shape_cast %52 : vector<32x4xf32> to vector<32x4x1xf32>
    %54 = vector.broadcast %53 : vector<32x4x1xf32> to vector<32x4x8xf32>
    %55 = arith.subf %51, %54 : vector<32x4x8xf32>
    %56 = math.exp %55 : vector<32x4x8xf32>
    %cst_30 = arith.constant dense<0.000000e+00> : vector<32x4xf32>
    %57 = vector.multi_reduction <add>, %56, %cst_30 [2] : vector<32x4x8xf32> to vector<32x4xf32>
    %58 = vector.shape_cast %57 : vector<32x4xf32> to vector<32x4x1xf32>
    %59 = math.log %58 : vector<32x4x1xf32>
    %60 = arith.addf %53, %59 : vector<32x4x1xf32>
    %61 = arith.truncf %56 : vector<32x4x8xf32> to vector<32x4x8xbf16>
    "tpu.trace_start"() <{level = 10 : i32, message = "cij,cje->cie"}> : () -> ()
    %cst_31 = arith.constant dense<0.000000e+00> : vector<32x4x8xf32>
    %62 = tpu.matmul %61, %41, %cst_31 {dimension_numbers = #tpu.dot_dimension_numbers<[2], [1], [1], [2], [0, 0, 0, 1, 1, 2], [0], [0]>} : vector<32x4x8xbf16>, vector<32x8x8xbf16>, vector<32x4x8xf32> -> vector<32x4x8xf32>
    "tpu.trace_stop"() : () -> ()
    %cst_32 = arith.constant 1.000000e+00 : f32
    %63 = vector.broadcast %cst_32 : f32 to vector<32x4x1xf32>
    %64 = arith.divf %63, %58 : vector<32x4x1xf32>
    %65 = vector.broadcast %64 : vector<32x4x1xf32> to vector<32x4x8xf32>
    %66 = arith.mulf %62, %65 : vector<32x4x8xf32>
    %67 = vector.shape_cast %66 : vector<32x4x8xf32> to vector<4x8x4x8xf32>
    %68 = arith.truncf %67 : vector<4x8x4x8xf32> to vector<4x8x4x8xbf16>
    %c0_33 = arith.constant 0 : index
    %c0_34 = arith.constant 0 : index
    %c0_35 = arith.constant 0 : index
    %c0_36 = arith.constant 0 : index
    %69 = vector.load %arg8[%c0_33, %c0_34, %c0_35, %c0_36] : memref<4x8x4x8xbf16, #tpu.memory_space<vmem>>, vector<4x8x4x8xbf16>
    tpu.vector_store %arg8[%c0_33, %c0_34, %c0_35, %c0_36], %68 {strides = array<i32>} : memref<4x8x4x8xbf16, #tpu.memory_space<vmem>>, vector<4x8x4x8xbf16>,
    %70 = vector.shape_cast %60 : vector<32x4x1xf32> to vector<4x8x4xf32>
    %c0_37 = arith.constant 0 : index
    %c0_38 = arith.constant 0 : index
    %c0_39 = arith.constant 0 : index
    %71 = vector.load %arg9[%c0_37, %c0_38, %c0_39] : memref<4x8x4xf32, #tpu.memory_space<vmem>>, vector<4x8x4xf32>
    tpu.vector_store %arg9[%c0_37, %c0_38, %c0_39], %70 {strides = array<i32>} : memref<4x8x4xf32, #tpu.memory_space<vmem>>, vector<4x8x4xf32>,
    return
  }
  func.func @transform_0(%arg0: i32, %arg1: i32) -> (i32, i32, i32, i32) {
    %c0_i32 = arith.constant 0 : i32
    %c0_i32_0 = arith.constant 0 : i32
    %c0_i32_1 = arith.constant 0 : i32
    return %arg0, %arg1, %c0_i32, %c0_i32_0 : i32, i32, i32, i32
  }
  func.func @transform_1(%arg0: i32, %arg1: i32) -> (i32, i32, i32, i32) {
    %c0_i32 = arith.constant 0 : i32
    %c0_i32_0 = arith.constant 0 : i32
    %c0_i32_1 = arith.constant 0 : i32
    return %arg0, %arg1, %c0_i32, %c0_i32_0 : i32, i32, i32, i32
  }
  func.func @transform_2(%arg0: i32, %arg1: i32) -> (i32, i32, i32, i32) {
    %c0_i32 = arith.constant 0 : i32
    %c0_i32_0 = arith.constant 0 : i32
    %c0_i32_1 = arith.constant 0 : i32
    return %arg0, %arg1, %c0_i32, %c0_i32_0 : i32, i32, i32, i32
  }
  func.func @transform_3(%arg0: i32, %arg1: i32) -> (i32, i32, i32, i32) {
    %c8_i32 = arith.constant 8 : i32
    %0 = arith.muli %arg1, %c8_i32 : i32
    %c16_i32 = arith.constant 16 : i32
    %1 = arith.addi %0, %c16_i32 : i32
    %c1_i32 = arith.constant 1 : i32
    %2 = arith.subi %1, %c1_i32 : i32
    %c16_i32_0 = arith.constant 16 : i32
    %c0_i32 = arith.constant 0 : i32
    %3 = arith.cmpi eq, %c16_i32_0, %c0_i32 : i32
    %c1_i32_1 = arith.constant 1 : i32
    %4 = arith.select %3, %c1_i32_1, %c16_i32_0 : i32
    %5 = arith.remsi %2, %4 : i32
    %c0_i32_2 = arith.constant 0 : i32
    %6 = arith.cmpi ne, %5, %c0_i32_2 : i32
    %c0_i32_3 = arith.constant 0 : i32
    %7 = arith.cmpi slt, %5, %c0_i32_3 : i32
    %c0_i32_4 = arith.constant 0 : i32
    %8 = arith.cmpi slt, %4, %c0_i32_4 : i32
    %9 = arith.xori %7, %8 : i1
    %10 = arith.andi %9, %6 : i1
    %11 = arith.addi %5, %4 : i32
    %12 = arith.select %10, %11, %5 : i32
    %c0_i32_5 = arith.constant 0 : i32
    %c0_i32_6 = arith.constant 0 : i32
    %c0_i32_7 = arith.constant 0 : i32
    return %arg0, %12, %c0_i32_5, %c0_i32_6 : i32, i32, i32, i32
  }
  func.func @transform_4(%arg0: i32, %arg1: i32) -> (i32, i32, i32, i32) {
    %c8_i32 = arith.constant 8 : i32
    %0 = arith.muli %arg1, %c8_i32 : i32
    %c16_i32 = arith.constant 16 : i32
    %1 = arith.addi %0, %c16_i32 : i32
    %c1_i32 = arith.constant 1 : i32
    %2 = arith.subi %1, %c1_i32 : i32
    %c16_i32_0 = arith.constant 16 : i32
    %c0_i32 = arith.constant 0 : i32
    %3 = arith.cmpi eq, %c16_i32_0, %c0_i32 : i32
    %c1_i32_1 = arith.constant 1 : i32
    %4 = arith.select %3, %c1_i32_1, %c16_i32_0 : i32
    %5 = arith.remsi %2, %4 : i32
    %c0_i32_2 = arith.constant 0 : i32
    %6 = arith.cmpi ne, %5, %c0_i32_2 : i32
    %c0_i32_3 = arith.constant 0 : i32
    %7 = arith.cmpi slt, %5, %c0_i32_3 : i32
    %c0_i32_4 = arith.constant 0 : i32
    %8 = arith.cmpi slt, %4, %c0_i32_4 : i32
    %9 = arith.xori %7, %8 : i1
    %10 = arith.andi %9, %6 : i1
    %11 = arith.addi %5, %4 : i32
    %12 = arith.select %10, %11, %5 : i32
    %c0_i32_5 = arith.constant 0 : i32
    %c0_i32_6 = arith.constant 0 : i32
    %c0_i32_7 = arith.constant 0 : i32
    return %arg0, %12, %c0_i32_5, %c0_i32_6 : i32, i32, i32, i32
  }
  func.func @transform_5(%arg0: i32, %arg1: i32) -> (i32, i32, i32, i32) {
    %c8_i32 = arith.constant 8 : i32
    %0 = arith.muli %arg1, %c8_i32 : i32
    %c16_i32 = arith.constant 16 : i32
    %1 = arith.addi %0, %c16_i32 : i32
    %c1_i32 = arith.constant 1 : i32
    %2 = arith.subi %1, %c1_i32 : i32
    %c16_i32_0 = arith.constant 16 : i32
    %c0_i32 = arith.constant 0 : i32
    %3 = arith.cmpi eq, %c16_i32_0, %c0_i32 : i32
    %c1_i32_1 = arith.constant 1 : i32
    %4 = arith.select %3, %c1_i32_1, %c16_i32_0 : i32
    %5 = arith.remsi %2, %4 : i32
    %c0_i32_2 = arith.constant 0 : i32
    %6 = arith.cmpi ne, %5, %c0_i32_2 : i32
    %c0_i32_3 = arith.constant 0 : i32
    %7 = arith.cmpi slt, %5, %c0_i32_3 : i32
    %c0_i32_4 = arith.constant 0 : i32
    %8 = arith.cmpi slt, %4, %c0_i32_4 : i32
    %9 = arith.xori %7, %8 : i1
    %10 = arith.andi %9, %6 : i1
    %11 = arith.addi %5, %4 : i32
    %12 = arith.select %10, %11, %5 : i32
    %c0_i32_5 = arith.constant 0 : i32
    %c0_i32_6 = arith.constant 0 : i32
    %c0_i32_7 = arith.constant 0 : i32
    return %arg0, %12, %c0_i32_5, %c0_i32_6 : i32, i32, i32, i32
  }
  func.func @transform_6(%arg0: i32, %arg1: i32) -> (i32, i32, i32, i32) {
    %c0_i32 = arith.constant 0 : i32
    %c0_i32_0 = arith.constant 0 : i32
    %c0_i32_1 = arith.constant 0 : i32
    return %arg0, %arg1, %c0_i32, %c0_i32_0 : i32, i32, i32, i32
  }
  func.func @transform_7(%arg0: i32, %arg1: i32) -> (i32, i32, i32) {
    %c0_i32 = arith.constant 0 : i32
    %c0_i32_0 = arith.constant 0 : i32
    return %arg0, %arg1, %c0_i32 : i32, i32, i32
  }
}

module attributes {stable_mosaic.version = 11 : i64} {
  func.func @_out_proj_kernel(%arg0: i32, %arg1: memref<16x32xf32, #tpu.memory_space<vmem>>, %arg2: memref<32x32xbf16, #tpu.memory_space<vmem>>, %arg3: memref<1x32xf32, #tpu.memory_space<vmem>>, %arg4: memref<16x32xf32, #tpu.memory_space<vmem>>) attributes {dimension_semantics = [#tpu.dimension_semantics<parallel>], iteration_bounds = array<i64: 2>, scalar_prefetch = 0 : i64, scratch_operands = 0 : i64, tpu.core_type = #tpu.core_type<tc>, window_params = [{transform_indices = @transform_0, window_bounds = array<i64: 16, 32>}, {pipeline_mode = #tpu.pipeline_mode<synchronous>, transform_indices = @transform_1, window_bounds = array<i64: 32, 32>}, {pipeline_mode = #tpu.pipeline_mode<synchronous>, transform_indices = @transform_2, window_bounds = array<i64: 1, 32>}, {transform_indices = @transform_3, window_bounds = array<i64: 16, 32>}]} {
    %c0 = arith.constant 0 : index
    %c0_0 = arith.constant 0 : index
    %0 = vector.load %arg1[%c0, %c0_0] : memref<16x32xf32, #tpu.memory_space<vmem>>, vector<16x32xf32>
    %1 = arith.truncf %0 : vector<16x32xf32> to vector<16x32xbf16>
    %c0_1 = arith.constant 0 : index
    %c0_2 = arith.constant 0 : index
    %2 = vector.load %arg2[%c0_1, %c0_2] : memref<32x32xbf16, #tpu.memory_space<vmem>>, vector<32x32xbf16>
    %cst = arith.constant dense<0.000000e+00> : vector<16x32xf32>
    %3 = tpu.matmul %1, %2, %cst {dimension_numbers = #tpu.dot_dimension_numbers<[1], [0], [0], [1], [0, 0, 1, 1], [], []>} : vector<16x32xbf16>, vector<32x32xbf16>, vector<16x32xf32> -> vector<16x32xf32>
    %c0_3 = arith.constant 0 : index
    %c0_4 = arith.constant 0 : index
    %4 = vector.load %arg3[%c0_3, %c0_4] : memref<1x32xf32, #tpu.memory_space<vmem>>, vector<1x32xf32>
    %5 = vector.broadcast %4 : vector<1x32xf32> to vector<16x32xf32>
    %6 = arith.addf %3, %5 : vector<16x32xf32>
    %c0_5 = arith.constant 0 : index
    %c0_6 = arith.constant 0 : index
    %7 = vector.load %arg4[%c0_5, %c0_6] : memref<16x32xf32, #tpu.memory_space<vmem>>, vector<16x32xf32>
    tpu.vector_store %arg4[%c0_5, %c0_6], %6 {strides = array<i32>} : memref<16x32xf32, #tpu.memory_space<vmem>>, vector<16x32xf32>,
    return
  }
  func.func @transform_0(%arg0: i32) -> (i32, i32) {
    %c0_i32 = arith.constant 0 : i32
    %c0_i32_0 = arith.constant 0 : i32
    return %arg0, %c0_i32 : i32, i32
  }
  func.func @transform_1(%arg0: i32) -> (i32, i32) {
    %c0_i32 = arith.constant 0 : i32
    %c0_i32_0 = arith.constant 0 : i32
    %c0_i32_1 = arith.constant 0 : i32
    return %c0_i32, %c0_i32_0 : i32, i32
  }
  func.func @transform_2(%arg0: i32) -> (i32, i32) {
    %c0_i32 = arith.constant 0 : i32
    %c0_i32_0 = arith.constant 0 : i32
    %c0_i32_1 = arith.constant 0 : i32
    return %c0_i32, %c0_i32_0 : i32, i32
  }
  func.func @transform_3(%arg0: i32) -> (i32, i32) {
    %c0_i32 = arith.constant 0 : i32
    %c0_i32_0 = arith.constant 0 : i32
    return %arg0, %c0_i32 : i32, i32
  }
}

</mosaic_0001>

<llo_original>
// kernel: reformer_layer_forward.3
$region0: #{reformer_layer_forward.3}
  #allocation0 [shape = 'u32[]', space=smem, size = 0x4, offset = 0x4, fixed_abs, tag = 'smem constant byte address 0x4 - core index']
  #allocation1 [shape = 'u32[144,128]{1,0:T(1,128)}', space=vmem, size = 0x12000, scoped, tag = 'internal scratch']
  %s0 = inlined_call_operand.vmem [shape: f32[32,32], index: 0, kind: input, shape index: {}]
  %s1 = inlined_call_operand.vmem [shape: bf16[32,32], index: 1, kind: input, shape index: {}]
  %s2 = inlined_call_operand.vmem [shape: bf16[32,32], index: 2, kind: input, shape index: {}]
  %s3 = inlined_call_operand.vmem [shape: bf16[32,32], index: 3, kind: output, shape index: {0}]
  %s4 = inlined_call_operand.vmem [shape: bf16[32,32], index: 4, kind: output, shape index: {1}]
  %5 = xla_tuple %s3, %s4
  %s6 = sld [smem:[#allocation0]]
  $region53: #{reformer_layer_forward.3} parent=0
    _
  %s8 = ssub.s32 1, %s6
  %s9 = scalar_select 0, %s8, %s6
  loop: start=0, step=1, limit=4
  $region2: #{reformer_layer_forward.3} parent=0 // loop_pre_header
    _
  $region3: #{reformer_layer_forward.3} parent=0 // loop_header
    %s11 = sphi 0, %s15
    %p12 = scmp.ge.s32.totalorder %s11, 4
    %s21 = sphi 0, %s23
    %s24 = sphi 0, %s21
    %s25 = sphi 0, %s24
    %s41 = sphi 0, %s25
    %s45 = sphi 0, %s45
    %s47 = sphi 0, %s45
    %s48 = sphi 0, %s47
    %s62 = sphi 0, %s48
    %s66 = sphi 0, %s66
    %s68 = sphi 0, %s66
    %s69 = sphi 0, %s68
    %s83 = sphi 0, %s69
    %s89 = sphi 0, %s91
    %s92 = sphi 0, %s89
    %s93 = sphi 0, %s92
    %s109 = sphi 0, %s93
    %s115 = sphi 0, %s117
    %s118 = sphi 0, %s115
    %s119 = sphi 0, %s118
    %s135 = sphi 0, %s119
  $region4: #{reformer_layer_forward.3} parent=0 // loop_header_branch
    %14 = sbr.rel (%p12) target = $region8
  $region5: #{reformer_layer_forward.3} parent=0 // loop_body
    %s16 = ssub.s32 %s11, 1
    %s17 = ssub.s32 %s11, 2
    %s18 = sadd.s32 %s11, 1
    %s19 = ssub.s32 %s11, %s18
    %p20 = scmp.eq.s32.totalorder %s19, 0
    %s22 = sadd.s32 %s21, 1
    %s23 = scalar_select %p20, %s21, %s22
    %p26 = pneg %p20
    %p27 = scmp.eq.s32.totalorder %s11, 1
    %p28 = por %p26, %p27
    %p29 = scmp.ne.s32.totalorder %s21, %s24
    %p30 = scmp.eq.s32.totalorder %s11, 0
    %p31 = por %p29, %p30
    %p32 = scmp.ne.s32.totalorder %s21, %s24
    %p33 = scmp.eq.s32.totalorder %s16, 1
    %p34 = por %p32, %p33
    %p35 = scmp.ne.s32.totalorder %s24, %s25
    %p36 = scmp.eq.s32.totalorder %s16, 0
    %p37 = por %p35, %p36
    %p38 = scmp.ne.s32.totalorder %s24, %s25
    %p39 = scmp.eq.s32.totalorder %s17, 1
    %p40 = por %p38, %p39
    %p42 = scmp.ne.s32.totalorder %s25, %s41
    %p43 = scmp.eq.s32.totalorder %s17, 0
    %p44 = por %p42, %p43
    %s46 = sadd.s32 %s45, 1
    %p49 = scmp.eq.s32.totalorder %s11, 1
    %p50 = scmp.ne.s32.totalorder %s45, %s47
    %p51 = scmp.eq.s32.totalorder %s11, 0
    %p52 = por %p50, %p51
    %p53 = scmp.ne.s32.totalorder %s45, %s47
    %p54 = scmp.eq.s32.totalorder %s16, 1
    %p55 = por %p53, %p54
    %p56 = scmp.ne.s32.totalorder %s47, %s48
    %p57 = scmp.eq.s32.totalorder %s16, 0
    %p58 = por %p56, %p57
    %p59 = scmp.ne.s32.totalorder %s47, %s48
    %p60 = scmp.eq.s32.totalorder %s17, 1
    %p61 = por %p59, %p60
    %p63 = scmp.ne.s32.totalorder %s48, %s62
    %p64 = scmp.eq.s32.totalorder %s17, 0
    %p65 = por %p63, %p64
    %s67 = sadd.s32 %s66, 1
    %p70 = scmp.eq.s32.totalorder %s11, 1
    %p71 = scmp.ne.s32.totalorder %s66, %s68
    %p72 = scmp.eq.s32.totalorder %s11, 0
    %p73 = por %p71, %p72
    %p74 = scmp.ne.s32.totalorder %s66, %s68
    %p75 = scmp.eq.s32.totalorder %s16, 1
    %p76 = por %p74, %p75
    %p77 = scmp.ne.s32.totalorder %s68, %s69
    %p78 = scmp.eq.s32.totalorder %s16, 0
    %p79 = por %p77, %p78
    %p80 = scmp.ne.s32.totalorder %s68, %s69
    %p81 = scmp.eq.s32.totalorder %s17, 1
    %p82 = por %p80, %p81
    %p84 = scmp.ne.s32.totalorder %s69, %s83
    %p85 = scmp.eq.s32.totalorder %s17, 0
    %p86 = por %p84, %p85
    %s87 = ssub.s32 %s11, %s18
    %p88 = scmp.eq.s32.totalorder %s87, 0
    %s90 = sadd.s32 %s89, 1
    %s91 = scalar_select %p88, %s89, %s90
    %p94 = pneg %p88
    %p95 = scmp.eq.s32.totalorder %s11, 1
    %p96 = por %p94, %p95
    %p97 = scmp.ne.s32.totalorder %s89, %s92
    %p98 = scmp.eq.s32.totalorder %s11, 0
    %p99 = por %p97, %p98
    %p100 = scmp.ne.s32.totalorder %s89, %s92
    %p101 = scmp.eq.s32.totalorder %s16, 1
    %p102 = por %p100, %p101
    %p103 = scmp.ne.s32.totalorder %s92, %s93
    %p104 = scmp.eq.s32.totalorder %s16, 0
    %p105 = por %p103, %p104
    %p106 = scmp.ne.s32.totalorder %s92, %s93
    %p107 = scmp.eq.s32.totalorder %s17, 1
    %p108 = por %p106, %p107
    %p110 = scmp.ne.s32.totalorder %s93, %s109
    %p111 = scmp.eq.s32.totalorder %s17, 0
    %p112 = por %p110, %p111
    %s113 = ssub.s32 %s11, %s18
    %p114 = scmp.eq.s32.totalorder %s113, 0
    %s116 = sadd.s32 %s115, 1
    %s117 = scalar_select %p114, %s115, %s116
    %p120 = pneg %p114
    %p121 = scmp.eq.s32.totalorder %s11, 1
    %p122 = por %p120, %p121
    %p123 = scmp.ne.s32.totalorder %s115, %s118
    %p124 = scmp.eq.s32.totalorder %s11, 0
    %p125 = por %p123, %p124
    %p126 = scmp.ne.s32.totalorder %s115, %s118
    %p127 = scmp.eq.s32.totalorder %s16, 1
    %p128 = por %p126, %p127
    %p129 = scmp.ne.s32.totalorder %s118, %s119
    %p130 = scmp.eq.s32.totalorder %s16, 0
    %p131 = por %p129, %p130
    %p132 = scmp.ne.s32.totalorder %s118, %s119
    %p133 = scmp.eq.s32.totalorder %s17, 1
    %p134 = por %p132, %p133
    %p136 = scmp.ne.s32.totalorder %s119, %s135
    %p137 = scmp.eq.s32.totalorder %s17, 0
    %p138 = por %p136, %p137
    %p139 = scmp.le.s32.totalorder 1, %s11
    %p140 = scmp.lt.s32.totalorder %s11, 3
    %p141 = pnand %p139, %p140
    %p142 = pneg %p141
    // Predicated region
    $region9: #{reformer_layer_forward.3} parent=5 // pred_check
      _
    $region10: #{reformer_layer_forward.3} parent=5 // pred_check_branch
      %144 = sbr.rel (%p141) target = $region12
    $region11: #{reformer_layer_forward.3} parent=5 // pred_region
      %s145 = ssub.s32 %s11, 1
      // Predicated region
      $region13: #{reformer_layer_forward.3} parent=11 // pred_check
        %p146 = pneg %p58
      $region14: #{reformer_layer_forward.3} parent=11 // pred_check_branch
        %148 = sbr.rel (%p146) target = $region16
      $region15: #{reformer_layer_forward.3} parent=11 // pred_region
        _
      $region16: #{reformer_layer_forward.3} parent=11 // pred_fallthru
        _
      // Predicated region
      $region17: #{reformer_layer_forward.3} parent=11 // pred_check
        %p149 = pneg %p79
      $region18: #{reformer_layer_forward.3} parent=11 // pred_check_branch
        %151 = sbr.rel (%p149) target = $region20
      $region19: #{reformer_layer_forward.3} parent=11 // pred_region
        _
      $region20: #{reformer_layer_forward.3} parent=11 // pred_fallthru
        _
    $region12: #{reformer_layer_forward.3} parent=5 // pred_fallthru
      _
    %p152 = scmp.lt.s32.totalorder %s11, 2
    // Predicated region
    $region21: #{reformer_layer_forward.3} parent=5 // pred_check
      %p153 = pneg %p152
    $region22: #{reformer_layer_forward.3} parent=5 // pred_check_branch
      %155 = sbr.rel (%p153) target = $region24
    $region23: #{reformer_layer_forward.3} parent=5 // pred_region
      // Predicated region
      $region25: #{reformer_layer_forward.3} parent=23 // pred_check
        %p156 = pneg %p31
      $region26: #{reformer_layer_forward.3} parent=23 // pred_check_branch
        %158 = sbr.rel (%p156) target = $region28
      $region27: #{reformer_layer_forward.3} parent=23 // pred_region
        %s159 = smul.u32 2, %s11
        %p160 = scmp.lt.s32.totalorder %s159, 3
        %s161 = scalar_select %p160, %s159, 3
        %s162 = smul.addr %s161, 8
        %s163 = scalar_lea.vmem %s0, %s162
        %s164 = smul.u32 2, %s11
      $region28: #{reformer_layer_forward.3} parent=23 // pred_fallthru
        _
    $region24: #{reformer_layer_forward.3} parent=5 // pred_fallthru
      _
    %p165 = scmp.le.s32.totalorder 1, %s11
    %p166 = scmp.lt.s32.totalorder %s11, 3
    %p167 = pnand %p165, %p166
    %p168 = pneg %p167
    // Predicated region
    $region29: #{reformer_layer_forward.3} parent=5 // pred_check
      _
    $region30: #{reformer_layer_forward.3} parent=5 // pred_check_branch
      %170 = sbr.rel (%p167) target = $region32
    $region31: #{reformer_layer_forward.3} parent=5 // pred_region
      %s171 = ssub.s32 %s11, 1
      %s172 = smul.u32 2, %s16
      %p173 = scmp.lt.s32.totalorder %s172, 3
      %s174 = scalar_select %p173, %s172, 3
      %s175 = smul.addr %s174, 8
      %s176 = scalar_lea.vmem %s0, %s175
      %p177 = pneg %p37
      %p178 = pneg %p34
      %p179 = pneg %p58
      %p180 = pneg %p55
      %p181 = pneg %p79
      %p182 = pneg %p76
      %p183 = pneg %p105
      %p184 = pneg %p102
      %s185 = smul.u32 2, %s16
      %p186 = scmp.lt.s32.totalorder %s185, 3
      %s187 = scalar_select %p186, %s185, 3
      %s188 = smul.addr %s187, 4
      %s189 = scalar_lea.vmem %s3, %s188
      %p190 = pneg %p131
      %p191 = pneg %p128
      %s192 = smul.u32 2, %s16
      %p193 = scmp.lt.s32.totalorder %s192, 3
      %s194 = scalar_select %p193, %s192, 3
      %s195 = smul.addr %s194, 4
      %s196 = scalar_lea.vmem %s4, %s195
      %s197 = smul.u32 2, %s16
      %p198 = scmp.lt.s32.totalorder %s197, 3
      %s199 = scalar_select %p198, %s197, 3
      %s200 = smul.addr %s199, 8
      %s201 = scalar_lea.vmem %s0, %s200
      %s202 = smul.u32 2, %s16
      %s203 = smul.u32 2, %s16
      %p204 = scmp.lt.s32.totalorder %s203, 3
      %s205 = scalar_select %p204, %s203, 3
      %s206 = smul.addr %s205, 4
      %s207 = scalar_lea.vmem %s3, %s206
      %s208 = smul.u32 2, %s16
      %s209 = smul.u32 2, %s16
      %p210 = scmp.lt.s32.totalorder %s209, 3
      %s211 = scalar_select %p210, %s209, 3
      %s212 = smul.addr %s211, 4
      %s213 = scalar_lea.vmem %s4, %s212
      %s214 = smul.u32 2, %s16
      %v216 = vld [vmem:[%s201] sm:$0xff]
      %v217 = vld [vmem:[%s201 + $0x8] sm:$0xff]
      %v218 = vpack.c.bf16 %v217, %v216
      %v219 = vld [vmem:[%s1] sm:$0xf]
      %v220 = vld [vmem:[%s1 + $0x4] sm:$0xf]
      %v221 = vld [vmem:[%s1 + $0x8] sm:$0xf]
      %v222 = vld [vmem:[%s1 + $0xc] sm:$0xf]
      %v227 = vunpack.c.l.b16 %v219
      %v228 = vunpack.c.l.b16 %v220
      %v229 = vunpack.c.l.b16 %v221
      %v230 = vunpack.c.l.b16 %v222
      %v231 = vpack.c.b16 %v228, %v227
      %v232 = vpack.c.b16 %v230, %v229
      %vm235 = vcmask 261120
      %v237 = vsel %vm235, %v218, 0
      %239 = vmatprep.subr.bf16.mxu0 0
      %240 = vmatpush1.bf16.msra.mxu0 %v231
      %241 = vmatprep.subr.bf16.mxu0 0
      %242 = vmatpush1.bf16.msra.mxu0 %v232
      %243 = vmatprep.subr.bf16.mxu0 0
      %244 = vmatpush1.bf16.msra.mxu0 0
      %245 = vmatprep.subr.bf16.mxu0 0
      %246 = vmatpush1.bf16.msra.mxu0 0
      %247 = vmatprep.subr.bf16.mxu0 0
      %248 = vmatpush1.bf16.msra.mxu0 0
      %249 = vmatprep.subr.bf16.mxu0 0
      %250 = vmatpush1.bf16.msra.mxu0 0
      %251 = vmatprep.subr.bf16.mxu0 0
      %252 = vmatpush1.bf16.msra.mxu0 0
      %253 = vmatprep.subr.bf16.mxu0 0
      %254 = vmatpush1.bf16.msra.mxu0 0
      %255 = vmatprep.subr.bf16.mxu0 0
      %256 = vmatpush1.bf16.msra.mxu0 0
      %257 = vmatprep.subr.bf16.mxu0 0
      %258 = vmatpush1.bf16.msra.mxu0 0
      %259 = vmatprep.subr.bf16.mxu0 0
      %260 = vmatpush1.bf16.msra.mxu0 0
      %261 = vmatprep.subr.bf16.mxu0 0
      %262 = vmatpush1.bf16.msra.mxu0 0
      %263 = vmatprep.subr.bf16.mxu0 0
      %264 = vmatpush1.bf16.msra.mxu0 0
      %265 = vmatprep.subr.bf16.mxu0 0
      %266 = vmatpush1.bf16.msra.mxu0 0
      %267 = vmatprep.subr.bf16.mxu0 0
      %268 = vmatpush1.bf16.msra.mxu0 0
      %269 = vmatprep.subr.bf16.mxu0 0
      %270 = vmatpush1.bf16.msra.mxu0 0
      %271 = vmatprep.mubr.bf16.mxu0 0
      %272 = vmatmul.mubr.bf16.gmra.mrb[0].mxu0 %v237
      %v273 = vpop.f32.mrb[0].mxu0
      %v274 = vadd.f32 0.0, %v273
      %v275 = vpop.f32.mrb[0].mxu0
      %v276 = vpop.f32.mrb[0].mxu0
      %v277 = vadd.f32 0.0, %v276
      %v278 = vpop.f32.mrb[0].mxu0
      %279 = vdwg.mxu0
      %v280 = vpack.c.bf16 %v277, %v274
      %v282 = vunpack.c.l.b16 %v280
      %v283 = vunpack.c.h.b16 %v280
      %v284 = vpack.c.b16 %v282, %v282
      %v285 = vpack.c.b16 %v283, %v283
      %vm288 = vcmask 257024
      %289 = vst.msk [vmem:[%s207] sm:$0xf] %vm288, %v284
      %290 = vst.msk [vmem:[%s207 + $0x4] sm:$0xf] %vm288, %v285
      %v291 = vld [vmem:[%s2] sm:$0xf]
      %v292 = vld [vmem:[%s2 + $0x4] sm:$0xf]
      %v293 = vld [vmem:[%s2 + $0x8] sm:$0xf]
      %v294 = vld [vmem:[%s2 + $0xc] sm:$0xf]
      %v299 = vunpack.c.l.b16 %v291
      %v300 = vunpack.c.l.b16 %v292
      %v301 = vunpack.c.l.b16 %v293
      %v302 = vunpack.c.l.b16 %v294
      %v303 = vpack.c.b16 %v300, %v299
      %v304 = vpack.c.b16 %v302, %v301
      %307 = vmatprep.subr.bf16.mxu0 0
      %308 = vmatpush1.bf16.msra.mxu0 %v303
      %309 = vmatprep.subr.bf16.mxu0 0
      %310 = vmatpush1.bf16.msra.mxu0 %v304
      %311 = vmatprep.subr.bf16.mxu0 0
      %312 = vmatpush1.bf16.msra.mxu0 0
      %313 = vmatprep.subr.bf16.mxu0 0
      %314 = vmatpush1.bf16.msra.mxu0 0
      %315 = vmatprep.subr.bf16.mxu0 0
      %316 = vmatpush1.bf16.msra.mxu0 0
      %317 = vmatprep.subr.bf16.mxu0 0
      %318 = vmatpush1.bf16.msra.mxu0 0
      %319 = vmatprep.subr.bf16.mxu0 0
      %320 = vmatpush1.bf16.msra.mxu0 0
      %321 = vmatprep.subr.bf16.mxu0 0
      %322 = vmatpush1.bf16.msra.mxu0 0
      %323 = vmatprep.subr.bf16.mxu0 0
      %324 = vmatpush1.bf16.msra.mxu0 0
      %325 = vmatprep.subr.bf16.mxu0 0
      %326 = vmatpush1.bf16.msra.mxu0 0
      %327 = vmatprep.subr.bf16.mxu0 0
      %328 = vmatpush1.bf16.msra.mxu0 0
      %329 = vmatprep.subr.bf16.mxu0 0
      %330 = vmatpush1.bf16.msra.mxu0 0
      %331 = vmatprep.subr.bf16.mxu0 0
      %332 = vmatpush1.bf16.msra.mxu0 0
      %333 = vmatprep.subr.bf16.mxu0 0
      %334 = vmatpush1.bf16.msra.mxu0 0
      %335 = vmatprep.subr.bf16.mxu0 0
      %336 = vmatpush1.bf16.msra.mxu0 0
      %337 = vmatprep.subr.bf16.mxu0 0
      %338 = vmatpush1.bf16.msra.mxu0 0
      %339 = vmatprep.mubr.bf16.mxu0 0
      %340 = vmatmul.mubr.bf16.gmra.mrb[0].mxu0 %v237
      %v341 = vpop.f32.mrb[0].mxu0
      %v342 = vadd.f32 0.0, %v341
      %v343 = vpop.f32.mrb[0].mxu0
      %v344 = vpop.f32.mrb[0].mxu0
      %v345 = vadd.f32 0.0, %v344
      %v346 = vpop.f32.mrb[0].mxu0
      %347 = vdwg.mxu0
      %v348 = vpack.c.bf16 %v345, %v342
      %v350 = vunpack.c.l.b16 %v348
      %v351 = vunpack.c.h.b16 %v348
      %v352 = vpack.c.b16 %v350, %v350
      %v353 = vpack.c.b16 %v351, %v351
      %356 = vst.msk [vmem:[%s213] sm:$0xf] %vm288, %v352
      %357 = vst.msk [vmem:[%s213 + $0x4] sm:$0xf] %vm288, %v353
      %s358 = smul.u32 2, %s16
      %p359 = scmp.lt.s32.totalorder %s358, 3
      %s360 = scalar_select %p359, %s358, 3
      %s361 = smul.addr %s360, 4
      %s362 = scalar_lea.vmem %s3, %s361
      %s363 = smul.u32 2, %s16
      %p364 = scmp.lt.s32.totalorder %s363, 3
      %s365 = scalar_select %p364, %s363, 3
      %s366 = smul.addr %s365, 4
      %s367 = scalar_lea.vmem %s4, %s366
      // Predicated region
      $region33: #{reformer_layer_forward.3} parent=31 // pred_check
        %p368 = pneg %p102
      $region34: #{reformer_layer_forward.3} parent=31 // pred_check_branch
        %370 = sbr.rel (%p368) target = $region36
      $region35: #{reformer_layer_forward.3} parent=31 // pred_region
        %s371 = smul.u32 2, %s16
      $region36: #{reformer_layer_forward.3} parent=31 // pred_fallthru
        _
      // Predicated region
      $region37: #{reformer_layer_forward.3} parent=31 // pred_check
        %p372 = pneg %p128
      $region38: #{reformer_layer_forward.3} parent=31 // pred_check_branch
        %374 = sbr.rel (%p372) target = $region40
      $region39: #{reformer_layer_forward.3} parent=31 // pred_region
        %s375 = smul.u32 2, %s16
      $region40: #{reformer_layer_forward.3} parent=31 // pred_fallthru
        _
    $region32: #{reformer_layer_forward.3} parent=5 // pred_fallthru
      _
    %p376 = scmp.le.s32.totalorder 2, %s11
    // Predicated region
    $region41: #{reformer_layer_forward.3} parent=5 // pred_check
      %p377 = pneg %p376
    $region42: #{reformer_layer_forward.3} parent=5 // pred_check_branch
      %379 = sbr.rel (%p377) target = $region44
    $region43: #{reformer_layer_forward.3} parent=5 // pred_region
      %s380 = ssub.s32 %s11, 2
      // Predicated region
      $region45: #{reformer_layer_forward.3} parent=43 // pred_check
        %p381 = pneg %p108
      $region46: #{reformer_layer_forward.3} parent=43 // pred_check_branch
        %383 = sbr.rel (%p381) target = $region48
      $region47: #{reformer_layer_forward.3} parent=43 // pred_region
        %s384 = smul.u32 2, %s17
        %p385 = scmp.lt.s32.totalorder %s384, 3
        %s386 = scalar_select %p385, %s384, 3
        %s387 = smul.addr %s386, 4
        %s388 = scalar_lea.vmem %s3, %s387
      $region48: #{reformer_layer_forward.3} parent=43 // pred_fallthru
        _
      // Predicated region
      $region49: #{reformer_layer_forward.3} parent=43 // pred_check
        %p389 = pneg %p134
      $region50: #{reformer_layer_forward.3} parent=43 // pred_check_branch
        %391 = sbr.rel (%p389) target = $region52
      $region51: #{reformer_layer_forward.3} parent=43 // pred_region
        %s392 = smul.u32 2, %s17
        %p393 = scmp.lt.s32.totalorder %s392, 3
        %s394 = scalar_select %p393, %s392, 3
        %s395 = smul.addr %s394, 4
        %s396 = scalar_lea.vmem %s4, %s395
      $region52: #{reformer_layer_forward.3} parent=43 // pred_fallthru
        _
    $region44: #{reformer_layer_forward.3} parent=5 // pred_fallthru
      _
  $region6: #{reformer_layer_forward.3} parent=0 // loop_footer
    %s15 = sadd.s32 1, %s11
  $region7: #{reformer_layer_forward.3} parent=0 // loop_footer_branch
    %10 = sbr.rel target = $region3
  $region8: #{reformer_layer_forward.3} parent=0 // loop_exit
    _

// kernel: reformer_layer_forward.5
$region0: #{reformer_layer_forward.5}
  #allocation0 [shape = 'u32[]', space=smem, size = 0x4, offset = 0x4, fixed_abs, tag = 'smem constant byte address 0x4 - core index']
  #allocation1 [shape = 'u32[144,128]{1,0:T(1,128)}', space=vmem, size = 0x12000, scoped, tag = 'internal scratch']
  %s0 = inlined_call_operand.vmem [shape: f32[32,32], index: 0, kind: input, shape index: {}]
  %s1 = inlined_call_operand.vmem [shape: bf16[32,32], index: 1, kind: input, shape index: {}]
  %s2 = inlined_call_operand.vmem [shape: f32[1,32], index: 2, kind: input, shape index: {}]
  %s3 = inlined_call_operand.vmem [shape: f32[32,32], index: 3, kind: output, shape index: {}]
  %s4 = sld [smem:[#allocation0]]
  $region45: #{reformer_layer_forward.5} parent=0
    _
  %s6 = ssub.s32 1, %s4
  %s7 = scalar_select 0, %s6, %s4
  loop: start=0, step=1, limit=4
  $region2: #{reformer_layer_forward.5} parent=0 // loop_pre_header
    _
  $region3: #{reformer_layer_forward.5} parent=0 // loop_header
    %s9 = sphi 0, %s13
    %p10 = scmp.ge.s32.totalorder %s9, 4
    %s19 = sphi 0, %s21
    %s22 = sphi 0, %s19
    %s23 = sphi 0, %s22
    %s39 = sphi 0, %s23
    %s43 = sphi 0, %s43
    %s45 = sphi 0, %s43
    %s46 = sphi 0, %s45
    %s60 = sphi 0, %s46
    %s64 = sphi 0, %s64
    %s66 = sphi 0, %s64
    %s67 = sphi 0, %s66
    %s81 = sphi 0, %s67
    %s87 = sphi 0, %s89
    %s90 = sphi 0, %s87
    %s91 = sphi 0, %s90
    %s107 = sphi 0, %s91
  $region4: #{reformer_layer_forward.5} parent=0 // loop_header_branch
    %12 = sbr.rel (%p10) target = $region8
  $region5: #{reformer_layer_forward.5} parent=0 // loop_body
    %s14 = ssub.s32 %s9, 1
    %s15 = ssub.s32 %s9, 2
    %s16 = sadd.s32 %s9, 1
    %s17 = ssub.s32 %s9, %s16
    %p18 = scmp.eq.s32.totalorder %s17, 0
    %s20 = sadd.s32 %s19, 1
    %s21 = scalar_select %p18, %s19, %s20
    %p24 = pneg %p18
    %p25 = scmp.eq.s32.totalorder %s9, 1
    %p26 = por %p24, %p25
    %p27 = scmp.ne.s32.totalorder %s19, %s22
    %p28 = scmp.eq.s32.totalorder %s9, 0
    %p29 = por %p27, %p28
    %p30 = scmp.ne.s32.totalorder %s19, %s22
    %p31 = scmp.eq.s32.totalorder %s14, 1
    %p32 = por %p30, %p31
    %p33 = scmp.ne.s32.totalorder %s22, %s23
    %p34 = scmp.eq.s32.totalorder %s14, 0
    %p35 = por %p33, %p34
    %p36 = scmp.ne.s32.totalorder %s22, %s23
    %p37 = scmp.eq.s32.totalorder %s15, 1
    %p38 = por %p36, %p37
    %p40 = scmp.ne.s32.totalorder %s23, %s39
    %p41 = scmp.eq.s32.totalorder %s15, 0
    %p42 = por %p40, %p41
    %s44 = sadd.s32 %s43, 1
    %p47 = scmp.eq.s32.totalorder %s9, 1
    %p48 = scmp.ne.s32.totalorder %s43, %s45
    %p49 = scmp.eq.s32.totalorder %s9, 0
    %p50 = por %p48, %p49
    %p51 = scmp.ne.s32.totalorder %s43, %s45
    %p52 = scmp.eq.s32.totalorder %s14, 1
    %p53 = por %p51, %p52
    %p54 = scmp.ne.s32.totalorder %s45, %s46
    %p55 = scmp.eq.s32.totalorder %s14, 0
    %p56 = por %p54, %p55
    %p57 = scmp.ne.s32.totalorder %s45, %s46
    %p58 = scmp.eq.s32.totalorder %s15, 1
    %p59 = por %p57, %p58
    %p61 = scmp.ne.s32.totalorder %s46, %s60
    %p62 = scmp.eq.s32.totalorder %s15, 0
    %p63 = por %p61, %p62
    %s65 = sadd.s32 %s64, 1
    %p68 = scmp.eq.s32.totalorder %s9, 1
    %p69 = scmp.ne.s32.totalorder %s64, %s66
    %p70 = scmp.eq.s32.totalorder %s9, 0
    %p71 = por %p69, %p70
    %p72 = scmp.ne.s32.totalorder %s64, %s66
    %p73 = scmp.eq.s32.totalorder %s14, 1
    %p74 = por %p72, %p73
    %p75 = scmp.ne.s32.totalorder %s66, %s67
    %p76 = scmp.eq.s32.totalorder %s14, 0
    %p77 = por %p75, %p76
    %p78 = scmp.ne.s32.totalorder %s66, %s67
    %p79 = scmp.eq.s32.totalorder %s15, 1
    %p80 = por %p78, %p79
    %p82 = scmp.ne.s32.totalorder %s67, %s81
    %p83 = scmp.eq.s32.totalorder %s15, 0
    %p84 = por %p82, %p83
    %s85 = ssub.s32 %s9, %s16
    %p86 = scmp.eq.s32.totalorder %s85, 0
    %s88 = sadd.s32 %s87, 1
    %s89 = scalar_select %p86, %s87, %s88
    %p92 = pneg %p86
    %p93 = scmp.eq.s32.totalorder %s9, 1
    %p94 = por %p92, %p93
    %p95 = scmp.ne.s32.totalorder %s87, %s90
    %p96 = scmp.eq.s32.totalorder %s9, 0
    %p97 = por %p95, %p96
    %p98 = scmp.ne.s32.totalorder %s87, %s90
    %p99 = scmp.eq.s32.totalorder %s14, 1
    %p100 = por %p98, %p99
    %p101 = scmp.ne.s32.totalorder %s90, %s91
    %p102 = scmp.eq.s32.totalorder %s14, 0
    %p103 = por %p101, %p102
    %p104 = scmp.ne.s32.totalorder %s90, %s91
    %p105 = scmp.eq.s32.totalorder %s15, 1
    %p106 = por %p104, %p105
    %p108 = scmp.ne.s32.totalorder %s91, %s107
    %p109 = scmp.eq.s32.totalorder %s15, 0
    %p110 = por %p108, %p109
    %p111 = scmp.le.s32.totalorder 1, %s9
    %p112 = scmp.lt.s32.totalorder %s9, 3
    %p113 = pnand %p111, %p112
    %p114 = pneg %p113
    // Predicated region
    $region9: #{reformer_layer_forward.5} parent=5 // pred_check
      _
    $region10: #{reformer_layer_forward.5} parent=5 // pred_check_branch
      %116 = sbr.rel (%p113) target = $region12
    $region11: #{reformer_layer_forward.5} parent=5 // pred_region
      %s117 = ssub.s32 %s9, 1
      // Predicated region
      $region13: #{reformer_layer_forward.5} parent=11 // pred_check
        %p118 = pneg %p56
      $region14: #{reformer_layer_forward.5} parent=11 // pred_check_branch
        %120 = sbr.rel (%p118) target = $region16
      $region15: #{reformer_layer_forward.5} parent=11 // pred_region
        _
      $region16: #{reformer_layer_forward.5} parent=11 // pred_fallthru
        _
      // Predicated region
      $region17: #{reformer_layer_forward.5} parent=11 // pred_check
        %p121 = pneg %p77
      $region18: #{reformer_layer_forward.5} parent=11 // pred_check_branch
        %123 = sbr.rel (%p121) target = $region20
      $region19: #{reformer_layer_forward.5} parent=11 // pred_region
        _
      $region20: #{reformer_layer_forward.5} parent=11 // pred_fallthru
        _
    $region12: #{reformer_layer_forward.5} parent=5 // pred_fallthru
      _
    %p124 = scmp.lt.s32.totalorder %s9, 2
    // Predicated region
    $region21: #{reformer_layer_forward.5} parent=5 // pred_check
      %p125 = pneg %p124
    $region22: #{reformer_layer_forward.5} parent=5 // pred_check_branch
      %127 = sbr.rel (%p125) target = $region24
    $region23: #{reformer_layer_forward.5} parent=5 // pred_region
      // Predicated region
      $region25: #{reformer_layer_forward.5} parent=23 // pred_check
        %p128 = pneg %p29
      $region26: #{reformer_layer_forward.5} parent=23 // pred_check_branch
        %130 = sbr.rel (%p128) target = $region28
      $region27: #{reformer_layer_forward.5} parent=23 // pred_region
        %s131 = smul.u32 2, %s9
        %p132 = scmp.lt.s32.totalorder %s131, 3
        %s133 = scalar_select %p132, %s131, 3
        %s134 = smul.addr %s133, 8
        %s135 = scalar_lea.vmem %s0, %s134
        %s136 = smul.u32 2, %s9
      $region28: #{reformer_layer_forward.5} parent=23 // pred_fallthru
        _
    $region24: #{reformer_layer_forward.5} parent=5 // pred_fallthru
      _
    %p137 = scmp.le.s32.totalorder 1, %s9
    %p138 = scmp.lt.s32.totalorder %s9, 3
    %p139 = pnand %p137, %p138
    %p140 = pneg %p139
    // Predicated region
    $region29: #{reformer_layer_forward.5} parent=5 // pred_check
      _
    $region30: #{reformer_layer_forward.5} parent=5 // pred_check_branch
      %142 = sbr.rel (%p139) target = $region32
    $region31: #{reformer_layer_forward.5} parent=5 // pred_region
      %s143 = ssub.s32 %s9, 1
      %s144 = smul.u32 2, %s14
      %p145 = scmp.lt.s32.totalorder %s144, 3
      %s146 = scalar_select %p145, %s144, 3
      %s147 = smul.addr %s146, 8
      %s148 = scalar_lea.vmem %s0, %s147
      %p149 = pneg %p35
      %p150 = pneg %p32
      %p151 = pneg %p56
      %p152 = pneg %p53
      %p153 = pneg %p77
      %p154 = pneg %p74
      %p155 = pneg %p103
      %p156 = pneg %p100
      %s157 = smul.u32 2, %s14
      %p158 = scmp.lt.s32.totalorder %s157, 3
      %s159 = scalar_select %p158, %s157, 3
      %s160 = smul.addr %s159, 8
      %s161 = scalar_lea.vmem %s3, %s160
      %s162 = smul.u32 2, %s14
      %p163 = scmp.lt.s32.totalorder %s162, 3
      %s164 = scalar_select %p163, %s162, 3
      %s165 = smul.addr %s164, 8
      %s166 = scalar_lea.vmem %s0, %s165
      %s167 = smul.u32 2, %s14
      %s168 = smul.u32 2, %s14
      %p169 = scmp.lt.s32.totalorder %s168, 3
      %s170 = scalar_select %p169, %s168, 3
      %s171 = smul.addr %s170, 8
      %s172 = scalar_lea.vmem %s3, %s171
      %s173 = smul.u32 2, %s14
      %v175 = vld [vmem:[%s166] sm:$0xff]
      %v176 = vld [vmem:[%s166 + $0x8] sm:$0xff]
      %v177 = vpack.c.bf16 %v176, %v175
      %v178 = vld [vmem:[%s1] sm:$0xf]
      %v179 = vld [vmem:[%s1 + $0x4] sm:$0xf]
      %v180 = vld [vmem:[%s1 + $0x8] sm:$0xf]
      %v181 = vld [vmem:[%s1 + $0xc] sm:$0xf]
      %v182 = vld [vmem:[%s2] sm:$0x1]
      %v184 = vlaneseq
      %v185 = vshrl.u32 %v184, 7
      %v186 = vsub.s32 0, %v185
      %v187 = vrot.slane %v182, %v186
      %v193 = vunpack.c.l.b16 %v178
      %v194 = vunpack.c.l.b16 %v179
      %v195 = vunpack.c.l.b16 %v180
      %v196 = vunpack.c.l.b16 %v181
      %v197 = vpack.c.b16 %v194, %v193
      %v198 = vpack.c.b16 %v196, %v195
      %vm201 = vcmask 261120
      %v203 = vsel %vm201, %v177, 0
      %205 = vmatprep.subr.bf16.mxu0 0
      %206 = vmatpush1.bf16.msra.mxu0 %v197
      %207 = vmatprep.subr.bf16.mxu0 0
      %208 = vmatpush1.bf16.msra.mxu0 %v198
      %209 = vmatprep.subr.bf16.mxu0 0
      %210 = vmatpush1.bf16.msra.mxu0 0
      %211 = vmatprep.subr.bf16.mxu0 0
      %212 = vmatpush1.bf16.msra.mxu0 0
      %213 = vmatprep.subr.bf16.mxu0 0
      %214 = vmatpush1.bf16.msra.mxu0 0
      %215 = vmatprep.subr.bf16.mxu0 0
      %216 = vmatpush1.bf16.msra.mxu0 0
      %217 = vmatprep.subr.bf16.mxu0 0
      %218 = vmatpush1.bf16.msra.mxu0 0
      %219 = vmatprep.subr.bf16.mxu0 0
      %220 = vmatpush1.bf16.msra.mxu0 0
      %221 = vmatprep.subr.bf16.mxu0 0
      %222 = vmatpush1.bf16.msra.mxu0 0
      %223 = vmatprep.subr.bf16.mxu0 0
      %224 = vmatpush1.bf16.msra.mxu0 0
      %225 = vmatprep.subr.bf16.mxu0 0
      %226 = vmatpush1.bf16.msra.mxu0 0
      %227 = vmatprep.subr.bf16.mxu0 0
      %228 = vmatpush1.bf16.msra.mxu0 0
      %229 = vmatprep.subr.bf16.mxu0 0
      %230 = vmatpush1.bf16.msra.mxu0 0
      %231 = vmatprep.subr.bf16.mxu0 0
      %232 = vmatpush1.bf16.msra.mxu0 0
      %233 = vmatprep.subr.bf16.mxu0 0
      %234 = vmatpush1.bf16.msra.mxu0 0
      %235 = vmatprep.subr.bf16.mxu0 0
      %236 = vmatpush1.bf16.msra.mxu0 0
      %237 = vmatprep.mubr.bf16.mxu0 0
      %238 = vmatmul.mubr.bf16.gmra.mrb[0].mxu0 %v203
      %v239 = vpop.f32.mrb[0].mxu0
      %v240 = vadd.f32 %v187, %v239
      %v241 = vpop.f32.mrb[0].mxu0
      %v242 = vpop.f32.mrb[0].mxu0
      %v243 = vadd.f32 %v187, %v242
      %v244 = vpop.f32.mrb[0].mxu0
      %245 = vdwg.mxu0
      %246 = vst.msk [vmem:[%s172] sm:$0xff] %vm201, %v240
      %247 = vst.msk [vmem:[%s172 + $0x8] sm:$0xff] %vm201, %v243
      %s248 = smul.u32 2, %s14
      %p249 = scmp.lt.s32.totalorder %s248, 3
      %s250 = scalar_select %p249, %s248, 3
      %s251 = smul.addr %s250, 8
      %s252 = scalar_lea.vmem %s3, %s251
      // Predicated region
      $region33: #{reformer_layer_forward.5} parent=31 // pred_check
        %p253 = pneg %p100
      $region34: #{reformer_layer_forward.5} parent=31 // pred_check_branch
        %255 = sbr.rel (%p253) target = $region36
      $region35: #{reformer_layer_forward.5} parent=31 // pred_region
        %s256 = smul.u32 2, %s14
      $region36: #{reformer_layer_forward.5} parent=31 // pred_fallthru
        _
    $region32: #{reformer_layer_forward.5} parent=5 // pred_fallthru
      _
    %p257 = scmp.le.s32.totalorder 2, %s9
    // Predicated region
    $region37: #{reformer_layer_forward.5} parent=5 // pred_check
      %p258 = pneg %p257
    $region38: #{reformer_layer_forward.5} parent=5 // pred_check_branch
      %260 = sbr.rel (%p258) target = $region40
    $region39: #{reformer_layer_forward.5} parent=5 // pred_region
      %s261 = ssub.s32 %s9, 2
      // Predicated region
      $region41: #{reformer_layer_forward.5} parent=39 // pred_check
        %p262 = pneg %p106
      $region42: #{reformer_layer_forward.5} parent=39 // pred_check_branch
        %264 = sbr.rel (%p262) target = $region44
      $region43: #{reformer_layer_forward.5} parent=39 // pred_region
        %s265 = smul.u32 2, %s15
        %p266 = scmp.lt.s32.totalorder %s265, 3
        %s267 = scalar_select %p266, %s265, 3
        %s268 = smul.addr %s267, 8
        %s269 = scalar_lea.vmem %s3, %s268
      $region44: #{reformer_layer_forward.5} parent=39 // pred_fallthru
        _
    $region40: #{reformer_layer_forward.5} parent=5 // pred_fallthru
      _
  $region6: #{reformer_layer_forward.5} parent=0 // loop_footer
    %s13 = sadd.s32 1, %s9
  $region7: #{reformer_layer_forward.5} parent=0 // loop_footer_branch
    %8 = sbr.rel target = $region3
  $region8: #{reformer_layer_forward.5} parent=0 // loop_exit
    _

// kernel: reformer_layer_forward.4
$region0: #{reformer_layer_forward.4}
  #allocation0 [shape = 'u32[]', space=smem, size = 0x4, offset = 0x4, fixed_abs, tag = 'smem constant byte address 0x4 - core index']
  #allocation1 [shape = 'u32[144,128]{1,0:T(1,128)}', space=vmem, size = 0x12000, scoped, tag = 'internal scratch']
  #allocation11 [shape = 's32[]', space=sflag, size = 0x4, offset = 0, fixed_abs, tag = 'sflag constant byte address 0x0 - dummy sync flag']
  %s0 = inlined_call_operand.vmem [shape: bf16[8,16,4,8], index: 0, kind: input, shape index: {}, may-alias: {0,3}]
  %s1 = inlined_call_operand.vmem [shape: bf16[8,16,4,8], index: 1, kind: input, shape index: {}, may-alias: {1,4}]
  %s2 = inlined_call_operand.vmem [shape: s32[8,16,4,1], index: 2, kind: input, shape index: {}, may-alias: {2,5}]
  %s3 = inlined_call_operand.vmem [shape: bf16[8,16,4,8], index: 3, kind: input, shape index: {}, may-alias: {0,3}]
  %s4 = inlined_call_operand.vmem [shape: bf16[8,16,4,8], index: 4, kind: input, shape index: {}, may-alias: {1,4}]
  %s5 = inlined_call_operand.vmem [shape: s32[8,16,4,1], index: 5, kind: input, shape index: {}, may-alias: {2,5}]
  %s6 = inlined_call_operand.hbm [shape: bf16[8,16,4,8], index: 6, kind: output, shape index: {0}]
  %s7 = inlined_call_operand.vmem [shape: f32[8,16,4], index: 7, kind: output, shape index: {1}]
  %8 = xla_tuple %s6, %s7
  %s9 = sld [smem:[#allocation0]]
  $region345: #{reformer_layer_forward.4} parent=0
    _
  %s11 = ssub.s32 1, %s9
  %s12 = scalar_select 0, %s11, %s9
  $region1: #{reformer_layer_forward.4} parent=0
    #allocation2 [shape = 'u8[65536]{0}', space=vmem, size = 0x10000, scoped, tag = 'input window, operand 0']
    #allocation3 [shape = 'u8[65536]{0}', space=vmem, size = 0x10000, scoped, tag = 'input window, operand 1']
    #allocation4 [shape = 'u8[131072]{0}', space=vmem, size = 0x20000, scoped, tag = 'input window, operand 2']
    #allocation5 [shape = 'u8[8192]{0}', space=vmem, size = 0x2000, scoped, tag = 'input window, operand 3']
    #allocation6 [shape = 'u8[8192]{0}', space=vmem, size = 0x2000, scoped, tag = 'input window, operand 4']
    #allocation7 [shape = 'u8[16384]{0}', space=vmem, size = 0x4000, scoped, tag = 'input window, operand 5']
    #allocation8 [shape = 'u8[65536]{0}', space=vmem, size = 0x10000, scoped, tag = 'output window, operand 0']
    #allocation9 [shape = 's32[2]{0}', space=sflag, size = 0x8, scoped, tag = 'scoped memory for reformer_layer_forward.4']
    #allocation10 [shape = 'u8[32768]{0}', space=vmem, size = 0x8000, scoped, tag = 'output window, operand 1']
    %13 = vsyncpa [#allocation9], 0
    %s14 = scalar_lea.sflag [#allocation9], 1
    %15 = vsyncpa %s14, 0
    loop: start=0, step=1, limit=6
    $region2: #{reformer_layer_forward.4} parent=1 // loop_pre_header
      _
    $region3: #{reformer_layer_forward.4} parent=1 // loop_header
      %s17 = sphi 0, %s21
      %p18 = scmp.ge.s32.totalorder %s17, 6
      %s24 = sphi 0, %s36
      %s25 = sphi 0, %s32
      %s26 = sphi 0, %s24
      %s27 = sphi 0, %s25
      %s28 = sphi 0, %s26
      %s29 = sphi 0, %s27
      %s41 = sphi 0, %s43
      %s44 = sphi 0, %s41
      %s45 = sphi 0, %s44
      %s61 = sphi 0, %s45
      %s69 = sphi 0, %s71
      %s72 = sphi 0, %s69
      %s73 = sphi 0, %s72
      %s89 = sphi 0, %s73
      %s97 = sphi 0, %s99
      %s100 = sphi 0, %s97
      %s101 = sphi 0, %s100
      %s117 = sphi 0, %s101
      %s153 = sphi 0, %s155
      %s156 = sphi 0, %s153
      %s157 = sphi 0, %s156
      %s173 = sphi 0, %s157
      %s209 = sphi 0, %s211
      %s212 = sphi 0, %s209
      %s213 = sphi 0, %s212
      %s229 = sphi 0, %s213
      %s265 = sphi 0, %s267
      %s268 = sphi 0, %s265
      %s269 = sphi 0, %s268
      %s285 = sphi 0, %s269
      %s293 = sphi 0, %s295
      %s296 = sphi 0, %s293
      %s297 = sphi 0, %s296
      %s313 = sphi 0, %s297
      %s321 = sphi 0, %s323
      %s324 = sphi 0, %s321
      %s325 = sphi 0, %s324
      %s341 = sphi 0, %s325
    $region4: #{reformer_layer_forward.4} parent=1 // loop_header_branch
      %20 = sbr.rel (%p18) target = $region8
    $region5: #{reformer_layer_forward.4} parent=1 // loop_body
      %s22 = ssub.s32 %s17, 1
      %s23 = ssub.s32 %s17, 2
      %s30 = sadd.s32 1, %s25
      %p31 = scmp.ge.s32.totalorder %s30, 2
      %s32 = scalar_select %p31, 0, %s30
      %s33 = sadd.s32 1, %s24
      %s34 = scalar_select %p31, %s33, %s24
      %p35 = scmp.ge.s32.totalorder %s34, 2
      %s36 = scalar_select %p35, 0, %s34
      %s37 = ssub.s32 %s24, %s36
      %s38 = ssub.s32 %s25, %s32
      %s39 = sor.u32 %s37, %s38
      %p40 = scmp.eq.s32.totalorder %s39, 0
      %s42 = sadd.s32 %s41, 1
      %s43 = scalar_select %p40, %s41, %s42
      %p46 = pneg %p40
      %p47 = scmp.eq.s32.totalorder %s17, 3
      %p48 = por %p46, %p47
      %p49 = scmp.ne.s32.totalorder %s41, %s44
      %p50 = scmp.eq.s32.totalorder %s17, 0
      %p51 = por %p49, %p50
      %p52 = scmp.ne.s32.totalorder %s41, %s44
      %p53 = scmp.eq.s32.totalorder %s22, 3
      %p54 = por %p52, %p53
      %p55 = scmp.ne.s32.totalorder %s44, %s45
      %p56 = scmp.eq.s32.totalorder %s22, 0
      %p57 = por %p55, %p56
      %p58 = scmp.ne.s32.totalorder %s44, %s45
      %p59 = scmp.eq.s32.totalorder %s23, 3
      %p60 = por %p58, %p59
      %p62 = scmp.ne.s32.totalorder %s45, %s61
      %p63 = scmp.eq.s32.totalorder %s23, 0
      %p64 = por %p62, %p63
      %s65 = ssub.s32 %s24, %s36
      %s66 = ssub.s32 %s25, %s32
      %s67 = sor.u32 %s65, %s66
      %p68 = scmp.eq.s32.totalorder %s67, 0
      %s70 = sadd.s32 %s69, 1
      %s71 = scalar_select %p68, %s69, %s70
      %p74 = pneg %p68
      %p75 = scmp.eq.s32.totalorder %s17, 3
      %p76 = por %p74, %p75
      %p77 = scmp.ne.s32.totalorder %s69, %s72
      %p78 = scmp.eq.s32.totalorder %s17, 0
      %p79 = por %p77, %p78
      %p80 = scmp.ne.s32.totalorder %s69, %s72
      %p81 = scmp.eq.s32.totalorder %s22, 3
      %p82 = por %p80, %p81
      %p83 = scmp.ne.s32.totalorder %s72, %s73
      %p84 = scmp.eq.s32.totalorder %s22, 0
      %p85 = por %p83, %p84
      %p86 = scmp.ne.s32.totalorder %s72, %s73
      %p87 = scmp.eq.s32.totalorder %s23, 3
      %p88 = por %p86, %p87
      %p90 = scmp.ne.s32.totalorder %s73, %s89
      %p91 = scmp.eq.s32.totalorder %s23, 0
      %p92 = por %p90, %p91
      %s93 = ssub.s32 %s24, %s36
      %s94 = ssub.s32 %s25, %s32
      %s95 = sor.u32 %s93, %s94
      %p96 = scmp.eq.s32.totalorder %s95, 0
      %s98 = sadd.s32 %s97, 1
      %s99 = scalar_select %p96, %s97, %s98
      %p102 = pneg %p96
      %p103 = scmp.eq.s32.totalorder %s17, 3
      %p104 = por %p102, %p103
      %p105 = scmp.ne.s32.totalorder %s97, %s100
      %p106 = scmp.eq.s32.totalorder %s17, 0
      %p107 = por %p105, %p106
      %p108 = scmp.ne.s32.totalorder %s97, %s100
      %p109 = scmp.eq.s32.totalorder %s22, 3
      %p110 = por %p108, %p109
      %p111 = scmp.ne.s32.totalorder %s100, %s101
      %p112 = scmp.eq.s32.totalorder %s22, 0
      %p113 = por %p111, %p112
      %p114 = scmp.ne.s32.totalorder %s100, %s101
      %p115 = scmp.eq.s32.totalorder %s23, 3
      %p116 = por %p114, %p115
      %p118 = scmp.ne.s32.totalorder %s101, %s117
      %p119 = scmp.eq.s32.totalorder %s23, 0
      %p120 = por %p118, %p119
      %s121 = smul.u32 %s25, 8
      %s122 = sadd.s32 %s121, 15
      %p123 = scmp.lt.s32.totalorder %s122, 0
      %s124 = ssub.s32 0, %s122
      %s125 = scalar_select %p123, %s124, %s122
      %s126 = sand.u32 %s125, 15
      %s127 = ssub.s32 0, %s126
      %s128 = scalar_select %p123, %s127, %s126
      %p129 = scmp.ne.s32.totalorder %s128, 0
      %p130 = scmp.lt.s32.totalorder %s128, 0
      %p131 = pnand %p130, %p129
      %p132 = pneg %p131
      %s133 = sadd.s32 %s128, 16
      %s134 = scalar_select %p132, %s133, %s128
      %s135 = smul.u32 %s32, 8
      %s136 = sadd.s32 %s135, 15
      %p137 = scmp.lt.s32.totalorder %s136, 0
      %s138 = ssub.s32 0, %s136
      %s139 = scalar_select %p137, %s138, %s136
      %s140 = sand.u32 %s139, 15
      %s141 = ssub.s32 0, %s140
      %s142 = scalar_select %p137, %s141, %s140
      %p143 = scmp.ne.s32.totalorder %s142, 0
      %p144 = scmp.lt.s32.totalorder %s142, 0
      %p145 = pnand %p144, %p143
      %p146 = pneg %p145
      %s147 = sadd.s32 %s142, 16
      %s148 = scalar_select %p146, %s147, %s142
      %s149 = ssub.s32 %s24, %s36
      %s150 = ssub.s32 %s134, %s148
      %s151 = sor.u32 %s149, %s150
      %p152 = scmp.eq.s32.totalorder %s151, 0
      %s154 = sadd.s32 %s153, 1
      %s155 = scalar_select %p152, %s153, %s154
      %p158 = pneg %p152
      %p159 = scmp.eq.s32.totalorder %s17, 3
      %p160 = por %p158, %p159
      %p161 = scmp.ne.s32.totalorder %s153, %s156
      %p162 = scmp.eq.s32.totalorder %s17, 0
      %p163 = por %p161, %p162
      %p164 = scmp.ne.s32.totalorder %s153, %s156
      %p165 = scmp.eq.s32.totalorder %s22, 3
      %p166 = por %p164, %p165
      %p167 = scmp.ne.s32.totalorder %s156, %s157
      %p168 = scmp.eq.s32.totalorder %s22, 0
      %p169 = por %p167, %p168
      %p170 = scmp.ne.s32.totalorder %s156, %s157
      %p171 = scmp.eq.s32.totalorder %s23, 3
      %p172 = por %p170, %p171
      %p174 = scmp.ne.s32.totalorder %s157, %s173
      %p175 = scmp.eq.s32.totalorder %s23, 0
      %p176 = por %p174, %p175
      %s177 = smul.u32 %s25, 8
      %s178 = sadd.s32 %s177, 15
      %p179 = scmp.lt.s32.totalorder %s178, 0
      %s180 = ssub.s32 0, %s178
      %s181 = scalar_select %p179, %s180, %s178
      %s182 = sand.u32 %s181, 15
      %s183 = ssub.s32 0, %s182
      %s184 = scalar_select %p179, %s183, %s182
      %p185 = scmp.ne.s32.totalorder %s184, 0
      %p186 = scmp.lt.s32.totalorder %s184, 0
      %p187 = pnand %p186, %p185
      %p188 = pneg %p187
      %s189 = sadd.s32 %s184, 16
      %s190 = scalar_select %p188, %s189, %s184
      %s191 = smul.u32 %s32, 8
      %s192 = sadd.s32 %s191, 15
      %p193 = scmp.lt.s32.totalorder %s192, 0
      %s194 = ssub.s32 0, %s192
      %s195 = scalar_select %p193, %s194, %s192
      %s196 = sand.u32 %s195, 15
      %s197 = ssub.s32 0, %s196
      %s198 = scalar_select %p193, %s197, %s196
      %p199 = scmp.ne.s32.totalorder %s198, 0
      %p200 = scmp.lt.s32.totalorder %s198, 0
      %p201 = pnand %p200, %p199
      %p202 = pneg %p201
      %s203 = sadd.s32 %s198, 16
      %s204 = scalar_select %p202, %s203, %s198
      %s205 = ssub.s32 %s24, %s36
      %s206 = ssub.s32 %s190, %s204
      %s207 = sor.u32 %s205, %s206
      %p208 = scmp.eq.s32.totalorder %s207, 0
      %s210 = sadd.s32 %s209, 1
      %s211 = scalar_select %p208, %s209, %s210
      %p214 = pneg %p208
      %p215 = scmp.eq.s32.totalorder %s17, 3
      %p216 = por %p214, %p215
      %p217 = scmp.ne.s32.totalorder %s209, %s212
      %p218 = scmp.eq.s32.totalorder %s17, 0
      %p219 = por %p217, %p218
      %p220 = scmp.ne.s32.totalorder %s209, %s212
      %p221 = scmp.eq.s32.totalorder %s22, 3
      %p222 = por %p220, %p221
      %p223 = scmp.ne.s32.totalorder %s212, %s213
      %p224 = scmp.eq.s32.totalorder %s22, 0
      %p225 = por %p223, %p224
      %p226 = scmp.ne.s32.totalorder %s212, %s213
      %p227 = scmp.eq.s32.totalorder %s23, 3
      %p228 = por %p226, %p227
      %p230 = scmp.ne.s32.totalorder %s213, %s229
      %p231 = scmp.eq.s32.totalorder %s23, 0
      %p232 = por %p230, %p231
      %s233 = smul.u32 %s25, 8
      %s234 = sadd.s32 %s233, 15
      %p235 = scmp.lt.s32.totalorder %s234, 0
      %s236 = ssub.s32 0, %s234
      %s237 = scalar_select %p235, %s236, %s234
      %s238 = sand.u32 %s237, 15
      %s239 = ssub.s32 0, %s238
      %s240 = scalar_select %p235, %s239, %s238
      %p241 = scmp.ne.s32.totalorder %s240, 0
      %p242 = scmp.lt.s32.totalorder %s240, 0
      %p243 = pnand %p242, %p241
      %p244 = pneg %p243
      %s245 = sadd.s32 %s240, 16
      %s246 = scalar_select %p244, %s245, %s240
      %s247 = smul.u32 %s32, 8
      %s248 = sadd.s32 %s247, 15
      %p249 = scmp.lt.s32.totalorder %s248, 0
      %s250 = ssub.s32 0, %s248
      %s251 = scalar_select %p249, %s250, %s248
      %s252 = sand.u32 %s251, 15
      %s253 = ssub.s32 0, %s252
      %s254 = scalar_select %p249, %s253, %s252
      %p255 = scmp.ne.s32.totalorder %s254, 0
      %p256 = scmp.lt.s32.totalorder %s254, 0
      %p257 = pnand %p256, %p255
      %p258 = pneg %p257
      %s259 = sadd.s32 %s254, 16
      %s260 = scalar_select %p258, %s259, %s254
      %s261 = ssub.s32 %s24, %s36
      %s262 = ssub.s32 %s246, %s260
      %s263 = sor.u32 %s261, %s262
      %p264 = scmp.eq.s32.totalorder %s263, 0
      %s266 = sadd.s32 %s265, 1
      %s267 = scalar_select %p264, %s265, %s266
      %p270 = pneg %p264
      %p271 = scmp.eq.s32.totalorder %s17, 3
      %p272 = por %p270, %p271
      %p273 = scmp.ne.s32.totalorder %s265, %s268
      %p274 = scmp.eq.s32.totalorder %s17, 0
      %p275 = por %p273, %p274
      %p276 = scmp.ne.s32.totalorder %s265, %s268
      %p277 = scmp.eq.s32.totalorder %s22, 3
      %p278 = por %p276, %p277
      %p279 = scmp.ne.s32.totalorder %s268, %s269
      %p280 = scmp.eq.s32.totalorder %s22, 0
      %p281 = por %p279, %p280
      %p282 = scmp.ne.s32.totalorder %s268, %s269
      %p283 = scmp.eq.s32.totalorder %s23, 3
      %p284 = por %p282, %p283
      %p286 = scmp.ne.s32.totalorder %s269, %s285
      %p287 = scmp.eq.s32.totalorder %s23, 0
      %p288 = por %p286, %p287
      %s289 = ssub.s32 %s24, %s36
      %s290 = ssub.s32 %s25, %s32
      %s291 = sor.u32 %s289, %s290
      %p292 = scmp.eq.s32.totalorder %s291, 0
      %s294 = sadd.s32 %s293, 1
      %s295 = scalar_select %p292, %s293, %s294
      %p298 = pneg %p292
      %p299 = scmp.eq.s32.totalorder %s17, 3
      %p300 = por %p298, %p299
      %p301 = scmp.ne.s32.totalorder %s293, %s296
      %p302 = scmp.eq.s32.totalorder %s17, 0
      %p303 = por %p301, %p302
      %p304 = scmp.ne.s32.totalorder %s293, %s296
      %p305 = scmp.eq.s32.totalorder %s22, 3
      %p306 = por %p304, %p305
      %p307 = scmp.ne.s32.totalorder %s296, %s297
      %p308 = scmp.eq.s32.totalorder %s22, 0
      %p309 = por %p307, %p308
      %p310 = scmp.ne.s32.totalorder %s296, %s297
      %p311 = scmp.eq.s32.totalorder %s23, 3
      %p312 = por %p310, %p311
      %p314 = scmp.ne.s32.totalorder %s297, %s313
      %p315 = scmp.eq.s32.totalorder %s23, 0
      %p316 = por %p314, %p315
      %s317 = ssub.s32 %s24, %s36
      %s318 = ssub.s32 %s25, %s32
      %s319 = sor.u32 %s317, %s318
      %p320 = scmp.eq.s32.totalorder %s319, 0
      %s322 = sadd.s32 %s321, 1
      %s323 = scalar_select %p320, %s321, %s322
      %p326 = pneg %p320
      %p327 = scmp.eq.s32.totalorder %s17, 3
      %p328 = por %p326, %p327
      %p329 = scmp.ne.s32.totalorder %s321, %s324
      %p330 = scmp.eq.s32.totalorder %s17, 0
      %p331 = por %p329, %p330
      %p332 = scmp.ne.s32.totalorder %s321, %s324
      %p333 = scmp.eq.s32.totalorder %s22, 3
      %p334 = por %p332, %p333
      %p335 = scmp.ne.s32.totalorder %s324, %s325
      %p336 = scmp.eq.s32.totalorder %s22, 0
      %p337 = por %p335, %p336
      %p338 = scmp.ne.s32.totalorder %s324, %s325
      %p339 = scmp.eq.s32.totalorder %s23, 3
      %p340 = por %p338, %p339
      %p342 = scmp.ne.s32.totalorder %s325, %s341
      %p343 = scmp.eq.s32.totalorder %s23, 0
      %p344 = por %p342, %p343
      %p345 = scmp.le.s32.totalorder 1, %s17
      %p346 = scmp.lt.s32.totalorder %s17, 5
      %p347 = pnand %p345, %p346
      %p348 = pneg %p347
      // Predicated region
      $region9: #{reformer_layer_forward.4} parent=5 // pred_check
        _
      $region10: #{reformer_layer_forward.4} parent=5 // pred_check_branch
        %350 = sbr.rel (%p347) target = $region12
      $region11: #{reformer_layer_forward.4} parent=5 // pred_region
        %s351 = ssub.s32 %s17, 1
      $region12: #{reformer_layer_forward.4} parent=5 // pred_fallthru
        _
      %p352 = scmp.lt.s32.totalorder %s17, 4
      // Predicated region
      $region13: #{reformer_layer_forward.4} parent=5 // pred_check
        %p353 = pneg %p352
      $region14: #{reformer_layer_forward.4} parent=5 // pred_check_branch
        %355 = sbr.rel (%p353) target = $region16
      $region15: #{reformer_layer_forward.4} parent=5 // pred_region
        // Predicated region
        $region17: #{reformer_layer_forward.4} parent=15 // pred_check
          %p356 = pneg %p51
        $region18: #{reformer_layer_forward.4} parent=15 // pred_check_branch
          %358 = sbr.rel (%p356) target = $region20
        $region19: #{reformer_layer_forward.4} parent=15 // pred_region
          %s359 = sand.u32 %s41, 1
          %s360 = sand.u32 %s41, 1
          %s361 = smul.addr %s360, 64
          %s362 = scalar_lea.vmem [#allocation2], %s361
          %s363 = smul.u32 4, %s24
          %s364 = smul.u32 8, %s25
          %s365 = smul.addr %s363, 16
          %s366 = sadd.s32 %s364, %s365
          %s367 = smul.addr %s366, 2
          %s368 = scalar_lea.vmem %s0, %s367
          // Predicated region
          $region21: #{reformer_layer_forward.4} parent=19 // pred_check
            _
          $region22: #{reformer_layer_forward.4} parent=19 // pred_check_branch
            %370 = sbr.rel (0) target = $region24
          $region23: #{reformer_layer_forward.4} parent=19 // pred_region
            // Predicated region
            $region25: #{reformer_layer_forward.4} parent=23 // pred_check
              _
            $region26: #{reformer_layer_forward.4} parent=23 // pred_check_branch
              %372 = sbr.rel target = $region28
            $region27: #{reformer_layer_forward.4} parent=23 // pred_region
              // Predicated region
              $region40: #{reformer_layer_forward.4} parent=27 // pred_check
                _
              $region41: #{reformer_layer_forward.4} parent=27 // pred_check_branch
                %449 = sbr.rel (0) target = $region43
              $region42: #{reformer_layer_forward.4} parent=27 // pred_region
                loop: start=0, step=1, limit=1
                $region44: #{reformer_layer_forward.4} parent=42 // loop_pre_header
                  _
                $region45: #{reformer_layer_forward.4} parent=42 // loop_header
                  %s451 = sphi 0, %s455
                  %p452 = scmp.ge.s32.totalorder %s451, 1
                  %s456 = sphi %s368, %s368
                  %s457 = sphi %s362, %s362
                $region46: #{reformer_layer_forward.4} parent=42 // loop_header_branch
                  %454 = sbr.rel (%p452) target = $region50
                $region47: #{reformer_layer_forward.4} parent=42 // loop_body
                  _
                $region48: #{reformer_layer_forward.4} parent=42 // loop_footer
                  %s455 = sadd.s32 1, %s451
                $region49: #{reformer_layer_forward.4} parent=42 // loop_footer_branch
                  %450 = sbr.rel target = $region45
                $region50: #{reformer_layer_forward.4} parent=42 // loop_exit
                  _
                loop: start=0, step=1, limit=1
                $region51: #{reformer_layer_forward.4} parent=42 // loop_pre_header
                  _
                $region52: #{reformer_layer_forward.4} parent=42 // loop_header
                  %s460 = sphi 0, %s464
                  %p461 = scmp.ge.s32.totalorder %s460, 1
                  %s465 = sphi %s368, %s368
                  %s466 = sphi %s362, %s362
                $region53: #{reformer_layer_forward.4} parent=42 // loop_header_branch
                  %463 = sbr.rel (%p461) target = $region57
                $region54: #{reformer_layer_forward.4} parent=42 // loop_body
                  %v467 = vld [vmem:[%s465] sm:$0x3]
                  %468 = vst [vmem:[%s466] sm:$0x3] %v467
                  %v469 = vld [vmem:[%s465 + $0x2] sm:$0x3]
                  %470 = vst [vmem:[%s466 + $0x2] sm:$0x3] %v469
                  %v471 = vld [vmem:[%s465 + $0x4] sm:$0x3]
                  %472 = vst [vmem:[%s466 + $0x4] sm:$0x3] %v471
                  %v473 = vld [vmem:[%s465 + $0x6] sm:$0x3]
                  %474 = vst [vmem:[%s466 + $0x6] sm:$0x3] %v473
                  %v475 = vld [vmem:[%s465 + $0x8] sm:$0x3]
                  %476 = vst [vmem:[%s466 + $0x8] sm:$0x3] %v475
                  %v477 = vld [vmem:[%s465 + $0xa] sm:$0x3]
                  %478 = vst [vmem:[%s466 + $0xa] sm:$0x3] %v477
                  %v479 = vld [vmem:[%s465 + $0xc] sm:$0x3]
                  %480 = vst [vmem:[%s466 + $0xc] sm:$0x3] %v479
                  %v481 = vld [vmem:[%s465 + $0xe] sm:$0x3]
                  %482 = vst [vmem:[%s466 + $0xe] sm:$0x3] %v481
                  %v483 = vld [vmem:[%s465 + $0x20] sm:$0x3]
                  %484 = vst [vmem:[%s466 + $0x10] sm:$0x3] %v483
                  %v485 = vld [vmem:[%s465 + $0x22] sm:$0x3]
                  %486 = vst [vmem:[%s466 + $0x12] sm:$0x3] %v485
                  %v487 = vld [vmem:[%s465 + $0x24] sm:$0x3]
                  %488 = vst [vmem:[%s466 + $0x14] sm:$0x3] %v487
                  %v489 = vld [vmem:[%s465 + $0x26] sm:$0x3]
                  %490 = vst [vmem:[%s466 + $0x16] sm:$0x3] %v489
                  %v491 = vld [vmem:[%s465 + $0x28] sm:$0x3]
                  %492 = vst [vmem:[%s466 + $0x18] sm:$0x3] %v491
                  %v493 = vld [vmem:[%s465 + $0x2a] sm:$0x3]
                  %494 = vst [vmem:[%s466 + $0x1a] sm:$0x3] %v493
                  %v495 = vld [vmem:[%s465 + $0x2c] sm:$0x3]
                  %496 = vst [vmem:[%s466 + $0x1c] sm:$0x3] %v495
                  %v497 = vld [vmem:[%s465 + $0x2e] sm:$0x3]
                  %498 = vst [vmem:[%s466 + $0x1e] sm:$0x3] %v497
                  %v499 = vld [vmem:[%s465 + $0x40] sm:$0x3]
                  %500 = vst [vmem:[%s466 + $0x20] sm:$0x3] %v499
                  %v501 = vld [vmem:[%s465 + $0x42] sm:$0x3]
                  %502 = vst [vmem:[%s466 + $0x22] sm:$0x3] %v501
                  %v503 = vld [vmem:[%s465 + $0x44] sm:$0x3]
                  %504 = vst [vmem:[%s466 + $0x24] sm:$0x3] %v503
                  %v505 = vld [vmem:[%s465 + $0x46] sm:$0x3]
                  %506 = vst [vmem:[%s466 + $0x26] sm:$0x3] %v505
                  %v507 = vld [vmem:[%s465 + $0x48] sm:$0x3]
                  %508 = vst [vmem:[%s466 + $0x28] sm:$0x3] %v507
                  %v509 = vld [vmem:[%s465 + $0x4a] sm:$0x3]
                  %510 = vst [vmem:[%s466 + $0x2a] sm:$0x3] %v509
                  %v511 = vld [vmem:[%s465 + $0x4c] sm:$0x3]
                  %512 = vst [vmem:[%s466 + $0x2c] sm:$0x3] %v511
                  %v513 = vld [vmem:[%s465 + $0x4e] sm:$0x3]
                  %514 = vst [vmem:[%s466 + $0x2e] sm:$0x3] %v513
                  %v515 = vld [vmem:[%s465 + $0x60] sm:$0x3]
                  %516 = vst [vmem:[%s466 + $0x30] sm:$0x3] %v515
                  %v517 = vld [vmem:[%s465 + $0x62] sm:$0x3]
                  %518 = vst [vmem:[%s466 + $0x32] sm:$0x3] %v517
                  %v519 = vld [vmem:[%s465 + $0x64] sm:$0x3]
                  %520 = vst [vmem:[%s466 + $0x34] sm:$0x3] %v519
                  %v521 = vld [vmem:[%s465 + $0x66] sm:$0x3]
                  %522 = vst [vmem:[%s466 + $0x36] sm:$0x3] %v521
                  %v523 = vld [vmem:[%s465 + $0x68] sm:$0x3]
                  %524 = vst [vmem:[%s466 + $0x38] sm:$0x3] %v523
                  %v525 = vld [vmem:[%s465 + $0x6a] sm:$0x3]
                  %526 = vst [vmem:[%s466 + $0x3a] sm:$0x3] %v525
                  %v527 = vld [vmem:[%s465 + $0x6c] sm:$0x3]
                  %528 = vst [vmem:[%s466 + $0x3c] sm:$0x3] %v527
                  %v529 = vld [vmem:[%s465 + $0x6e] sm:$0x3]
                  %530 = vst [vmem:[%s466 + $0x3e] sm:$0x3] %v529
                $region55: #{reformer_layer_forward.4} parent=42 // loop_footer
                  %s464 = sadd.s32 1, %s460
                $region56: #{reformer_layer_forward.4} parent=42 // loop_footer_branch
                  %459 = sbr.rel target = $region52
                $region57: #{reformer_layer_forward.4} parent=42 // loop_exit
                  _
              $region43: #{reformer_layer_forward.4} parent=27 // pred_fallthru
                _
            $region28: #{reformer_layer_forward.4} parent=23 // pred_fallthru
              _
            // Predicated region
            $region29: #{reformer_layer_forward.4} parent=23 // pred_check
              _
            $region30: #{reformer_layer_forward.4} parent=23 // pred_check_branch
              %374 = sbr.rel (0) target = $region32
            $region31: #{reformer_layer_forward.4} parent=23 // pred_region
              loop: start=0, step=1, limit=1
              $region33: #{reformer_layer_forward.4} parent=31 // loop_pre_header
                _
              $region34: #{reformer_layer_forward.4} parent=31 // loop_header
                %s377 = sphi 0, %s381
                %p378 = scmp.ge.s32.totalorder %s377, 1
                %s382 = sphi %s368, %s368
                %s383 = sphi %s362, %s362
              $region35: #{reformer_layer_forward.4} parent=31 // loop_header_branch
                %380 = sbr.rel (%p378) target = $region39
              $region36: #{reformer_layer_forward.4} parent=31 // loop_body
                %v384 = vld [vmem:[%s382] sm:$0x3]
                %385 = vst [vmem:[%s383] sm:$0x3] %v384
                %v386 = vld [vmem:[%s382 + $0x2] sm:$0x3]
                %387 = vst [vmem:[%s383 + $0x2] sm:$0x3] %v386
                %v388 = vld [vmem:[%s382 + $0x4] sm:$0x3]
                %389 = vst [vmem:[%s383 + $0x4] sm:$0x3] %v388
                %v390 = vld [vmem:[%s382 + $0x6] sm:$0x3]
                %391 = vst [vmem:[%s383 + $0x6] sm:$0x3] %v390
                %v392 = vld [vmem:[%s382 + $0x8] sm:$0x3]
                %393 = vst [vmem:[%s383 + $0x8] sm:$0x3] %v392
                %v394 = vld [vmem:[%s382 + $0xa] sm:$0x3]
                %395 = vst [vmem:[%s383 + $0xa] sm:$0x3] %v394
                %v396 = vld [vmem:[%s382 + $0xc] sm:$0x3]
                %397 = vst [vmem:[%s383 + $0xc] sm:$0x3] %v396
                %v398 = vld [vmem:[%s382 + $0xe] sm:$0x3]
                %399 = vst [vmem:[%s383 + $0xe] sm:$0x3] %v398
                %v400 = vld [vmem:[%s382 + $0x20] sm:$0x3]
                %401 = vst [vmem:[%s383 + $0x10] sm:$0x3] %v400
                %v402 = vld [vmem:[%s382 + $0x22] sm:$0x3]
                %403 = vst [vmem:[%s383 + $0x12] sm:$0x3] %v402
                %v404 = vld [vmem:[%s382 + $0x24] sm:$0x3]
                %405 = vst [vmem:[%s383 + $0x14] sm:$0x3] %v404
                %v406 = vld [vmem:[%s382 + $0x26] sm:$0x3]
                %407 = vst [vmem:[%s383 + $0x16] sm:$0x3] %v406
                %v408 = vld [vmem:[%s382 + $0x28] sm:$0x3]
                %409 = vst [vmem:[%s383 + $0x18] sm:$0x3] %v408
                %v410 = vld [vmem:[%s382 + $0x2a] sm:$0x3]
                %411 = vst [vmem:[%s383 + $0x1a] sm:$0x3] %v410
                %v412 = vld [vmem:[%s382 + $0x2c] sm:$0x3]
                %413 = vst [vmem:[%s383 + $0x1c] sm:$0x3] %v412
                %v414 = vld [vmem:[%s382 + $0x2e] sm:$0x3]
                %415 = vst [vmem:[%s383 + $0x1e] sm:$0x3] %v414
                %v416 = vld [vmem:[%s382 + $0x40] sm:$0x3]
                %417 = vst [vmem:[%s383 + $0x20] sm:$0x3] %v416
                %v418 = vld [vmem:[%s382 + $0x42] sm:$0x3]
                %419 = vst [vmem:[%s383 + $0x22] sm:$0x3] %v418
                %v420 = vld [vmem:[%s382 + $0x44] sm:$0x3]
                %421 = vst [vmem:[%s383 + $0x24] sm:$0x3] %v420
                %v422 = vld [vmem:[%s382 + $0x46] sm:$0x3]
                %423 = vst [vmem:[%s383 + $0x26] sm:$0x3] %v422
                %v424 = vld [vmem:[%s382 + $0x48] sm:$0x3]
                %425 = vst [vmem:[%s383 + $0x28] sm:$0x3] %v424
                %v426 = vld [vmem:[%s382 + $0x4a] sm:$0x3]
                %427 = vst [vmem:[%s383 + $0x2a] sm:$0x3] %v426
                %v428 = vld [vmem:[%s382 + $0x4c] sm:$0x3]
                %429 = vst [vmem:[%s383 + $0x2c] sm:$0x3] %v428
                %v430 = vld [vmem:[%s382 + $0x4e] sm:$0x3]
                %431 = vst [vmem:[%s383 + $0x2e] sm:$0x3] %v430
                %v432 = vld [vmem:[%s382 + $0x60] sm:$0x3]
                %433 = vst [vmem:[%s383 + $0x30] sm:$0x3] %v432
                %v434 = vld [vmem:[%s382 + $0x62] sm:$0x3]
                %435 = vst [vmem:[%s383 + $0x32] sm:$0x3] %v434
                %v436 = vld [vmem:[%s382 + $0x64] sm:$0x3]
                %437 = vst [vmem:[%s383 + $0x34] sm:$0x3] %v436
                %v438 = vld [vmem:[%s382 + $0x66] sm:$0x3]
                %439 = vst [vmem:[%s383 + $0x36] sm:$0x3] %v438
                %v440 = vld [vmem:[%s382 + $0x68] sm:$0x3]
                %441 = vst [vmem:[%s383 + $0x38] sm:$0x3] %v440
                %v442 = vld [vmem:[%s382 + $0x6a] sm:$0x3]
                %443 = vst [vmem:[%s383 + $0x3a] sm:$0x3] %v442
                %v444 = vld [vmem:[%s382 + $0x6c] sm:$0x3]
                %445 = vst [vmem:[%s383 + $0x3c] sm:$0x3] %v444
                %v446 = vld [vmem:[%s382 + $0x6e] sm:$0x3]
                %447 = vst [vmem:[%s383 + $0x3e] sm:$0x3] %v446
              $region37: #{reformer_layer_forward.4} parent=31 // loop_footer
                %s381 = sadd.s32 1, %s377
              $region38: #{reformer_layer_forward.4} parent=31 // loop_footer_branch
                %376 = sbr.rel target = $region34
              $region39: #{reformer_layer_forward.4} parent=31 // loop_exit
                _
            $region32: #{reformer_layer_forward.4} parent=23 // pred_fallthru
              _
          $region24: #{reformer_layer_forward.4} parent=19 // pred_fallthru
            _
          %531 = vnop
        $region20: #{reformer_layer_forward.4} parent=15 // pred_fallthru
          _
        // Predicated region
        $region58: #{reformer_layer_forward.4} parent=15 // pred_check
          %p532 = pneg %p79
        $region59: #{reformer_layer_forward.4} parent=15 // pred_check_branch
          %534 = sbr.rel (%p532) target = $region61
        $region60: #{reformer_layer_forward.4} parent=15 // pred_region
          %s535 = sand.u32 %s69, 1
          %s536 = sand.u32 %s69, 1
          %s537 = smul.addr %s536, 64
          %s538 = scalar_lea.vmem [#allocation3], %s537
          %s539 = smul.u32 4, %s24
          %s540 = smul.u32 8, %s25
          %s541 = smul.addr %s539, 16
          %s542 = sadd.s32 %s540, %s541
          %s543 = smul.addr %s542, 2
          %s544 = scalar_lea.vmem %s1, %s543
          // Predicated region
          $region62: #{reformer_layer_forward.4} parent=60 // pred_check
            _
          $region63: #{reformer_layer_forward.4} parent=60 // pred_check_branch
            %546 = sbr.rel (0) target = $region65
          $region64: #{reformer_layer_forward.4} parent=60 // pred_region
            // Predicated region
            $region66: #{reformer_layer_forward.4} parent=64 // pred_check
              _
            $region67: #{reformer_layer_forward.4} parent=64 // pred_check_branch
              %548 = sbr.rel target = $region69
            $region68: #{reformer_layer_forward.4} parent=64 // pred_region
              // Predicated region
              $region81: #{reformer_layer_forward.4} parent=68 // pred_check
                _
              $region82: #{reformer_layer_forward.4} parent=68 // pred_check_branch
                %625 = sbr.rel (0) target = $region84
              $region83: #{reformer_layer_forward.4} parent=68 // pred_region
                loop: start=0, step=1, limit=1
                $region85: #{reformer_layer_forward.4} parent=83 // loop_pre_header
                  _
                $region86: #{reformer_layer_forward.4} parent=83 // loop_header
                  %s627 = sphi 0, %s631
                  %p628 = scmp.ge.s32.totalorder %s627, 1
                  %s632 = sphi %s544, %s544
                  %s633 = sphi %s538, %s538
                $region87: #{reformer_layer_forward.4} parent=83 // loop_header_branch
                  %630 = sbr.rel (%p628) target = $region91
                $region88: #{reformer_layer_forward.4} parent=83 // loop_body
                  _
                $region89: #{reformer_layer_forward.4} parent=83 // loop_footer
                  %s631 = sadd.s32 1, %s627
                $region90: #{reformer_layer_forward.4} parent=83 // loop_footer_branch
                  %626 = sbr.rel target = $region86
                $region91: #{reformer_layer_forward.4} parent=83 // loop_exit
                  _
                loop: start=0, step=1, limit=1
                $region92: #{reformer_layer_forward.4} parent=83 // loop_pre_header
                  _
                $region93: #{reformer_layer_forward.4} parent=83 // loop_header
                  %s636 = sphi 0, %s640
                  %p637 = scmp.ge.s32.totalorder %s636, 1
                  %s641 = sphi %s544, %s544
                  %s642 = sphi %s538, %s538
                $region94: #{reformer_layer_forward.4} parent=83 // loop_header_branch
                  %639 = sbr.rel (%p637) target = $region98
                $region95: #{reformer_layer_forward.4} parent=83 // loop_body
                  %v643 = vld [vmem:[%s641] sm:$0x3]
                  %644 = vst [vmem:[%s642] sm:$0x3] %v643
                  %v645 = vld [vmem:[%s641 + $0x2] sm:$0x3]
                  %646 = vst [vmem:[%s642 + $0x2] sm:$0x3] %v645
                  %v647 = vld [vmem:[%s641 + $0x4] sm:$0x3]
                  %648 = vst [vmem:[%s642 + $0x4] sm:$0x3] %v647
                  %v649 = vld [vmem:[%s641 + $0x6] sm:$0x3]
                  %650 = vst [vmem:[%s642 + $0x6] sm:$0x3] %v649
                  %v651 = vld [vmem:[%s641 + $0x8] sm:$0x3]
                  %652 = vst [vmem:[%s642 + $0x8] sm:$0x3] %v651
                  %v653 = vld [vmem:[%s641 + $0xa] sm:$0x3]
                  %654 = vst [vmem:[%s642 + $0xa] sm:$0x3] %v653
                  %v655 = vld [vmem:[%s641 + $0xc] sm:$0x3]
                  %656 = vst [vmem:[%s642 + $0xc] sm:$0x3] %v655
                  %v657 = vld [vmem:[%s641 + $0xe] sm:$0x3]
                  %658 = vst [vmem:[%s642 + $0xe] sm:$0x3] %v657
                  %v659 = vld [vmem:[%s641 + $0x20] sm:$0x3]
                  %660 = vst [vmem:[%s642 + $0x10] sm:$0x3] %v659
                  %v661 = vld [vmem:[%s641 + $0x22] sm:$0x3]
                  %662 = vst [vmem:[%s642 + $0x12] sm:$0x3] %v661
                  %v663 = vld [vmem:[%s641 + $0x24] sm:$0x3]
                  %664 = vst [vmem:[%s642 + $0x14] sm:$0x3] %v663
                  %v665 = vld [vmem:[%s641 + $0x26] sm:$0x3]
                  %666 = vst [vmem:[%s642 + $0x16] sm:$0x3] %v665
                  %v667 = vld [vmem:[%s641 + $0x28] sm:$0x3]
                  %668 = vst [vmem:[%s642 + $0x18] sm:$0x3] %v667
                  %v669 = vld [vmem:[%s641 + $0x2a] sm:$0x3]
                  %670 = vst [vmem:[%s642 + $0x1a] sm:$0x3] %v669
                  %v671 = vld [vmem:[%s641 + $0x2c] sm:$0x3]
                  %672 = vst [vmem:[%s642 + $0x1c] sm:$0x3] %v671
                  %v673 = vld [vmem:[%s641 + $0x2e] sm:$0x3]
                  %674 = vst [vmem:[%s642 + $0x1e] sm:$0x3] %v673
                  %v675 = vld [vmem:[%s641 + $0x40] sm:$0x3]
                  %676 = vst [vmem:[%s642 + $0x20] sm:$0x3] %v675
                  %v677 = vld [vmem:[%s641 + $0x42] sm:$0x3]
                  %678 = vst [vmem:[%s642 + $0x22] sm:$0x3] %v677
                  %v679 = vld [vmem:[%s641 + $0x44] sm:$0x3]
                  %680 = vst [vmem:[%s642 + $0x24] sm:$0x3] %v679
                  %v681 = vld [vmem:[%s641 + $0x46] sm:$0x3]
                  %682 = vst [vmem:[%s642 + $0x26] sm:$0x3] %v681
                  %v683 = vld [vmem:[%s641 + $0x48] sm:$0x3]
                  %684 = vst [vmem:[%s642 + $0x28] sm:$0x3] %v683
                  %v685 = vld [vmem:[%s641 + $0x4a] sm:$0x3]
                  %686 = vst [vmem:[%s642 + $0x2a] sm:$0x3] %v685
                  %v687 = vld [vmem:[%s641 + $0x4c] sm:$0x3]
                  %688 = vst [vmem:[%s642 + $0x2c] sm:$0x3] %v687
                  %v689 = vld [vmem:[%s641 + $0x4e] sm:$0x3]
                  %690 = vst [vmem:[%s642 + $0x2e] sm:$0x3] %v689
                  %v691 = vld [vmem:[%s641 + $0x60] sm:$0x3]
                  %692 = vst [vmem:[%s642 + $0x30] sm:$0x3] %v691
                  %v693 = vld [vmem:[%s641 + $0x62] sm:$0x3]
                  %694 = vst [vmem:[%s642 + $0x32] sm:$0x3] %v693
                  %v695 = vld [vmem:[%s641 + $0x64] sm:$0x3]
                  %696 = vst [vmem:[%s642 + $0x34] sm:$0x3] %v695
                  %v697 = vld [vmem:[%s641 + $0x66] sm:$0x3]
                  %698 = vst [vmem:[%s642 + $0x36] sm:$0x3] %v697
                  %v699 = vld [vmem:[%s641 + $0x68] sm:$0x3]
                  %700 = vst [vmem:[%s642 + $0x38] sm:$0x3] %v699
                  %v701 = vld [vmem:[%s641 + $0x6a] sm:$0x3]
                  %702 = vst [vmem:[%s642 + $0x3a] sm:$0x3] %v701
                  %v703 = vld [vmem:[%s641 + $0x6c] sm:$0x3]
                  %704 = vst [vmem:[%s642 + $0x3c] sm:$0x3] %v703
                  %v705 = vld [vmem:[%s641 + $0x6e] sm:$0x3]
                  %706 = vst [vmem:[%s642 + $0x3e] sm:$0x3] %v705
                $region96: #{reformer_layer_forward.4} parent=83 // loop_footer
                  %s640 = sadd.s32 1, %s636
                $region97: #{reformer_layer_forward.4} parent=83 // loop_footer_branch
                  %635 = sbr.rel target = $region93
                $region98: #{reformer_layer_forward.4} parent=83 // loop_exit
                  _
              $region84: #{reformer_layer_forward.4} parent=68 // pred_fallthru
                _
            $region69: #{reformer_layer_forward.4} parent=64 // pred_fallthru
              _
            // Predicated region
            $region70: #{reformer_layer_forward.4} parent=64 // pred_check
              _
            $region71: #{reformer_layer_forward.4} parent=64 // pred_check_branch
              %550 = sbr.rel (0) target = $region73
            $region72: #{reformer_layer_forward.4} parent=64 // pred_region
              loop: start=0, step=1, limit=1
              $region74: #{reformer_layer_forward.4} parent=72 // loop_pre_header
                _
              $region75: #{reformer_layer_forward.4} parent=72 // loop_header
                %s553 = sphi 0, %s557
                %p554 = scmp.ge.s32.totalorder %s553, 1
                %s558 = sphi %s544, %s544
                %s559 = sphi %s538, %s538
              $region76: #{reformer_layer_forward.4} parent=72 // loop_header_branch
                %556 = sbr.rel (%p554) target = $region80
              $region77: #{reformer_layer_forward.4} parent=72 // loop_body
                %v560 = vld [vmem:[%s558] sm:$0x3]
                %561 = vst [vmem:[%s559] sm:$0x3] %v560
                %v562 = vld [vmem:[%s558 + $0x2] sm:$0x3]
                %563 = vst [vmem:[%s559 + $0x2] sm:$0x3] %v562
                %v564 = vld [vmem:[%s558 + $0x4] sm:$0x3]
                %565 = vst [vmem:[%s559 + $0x4] sm:$0x3] %v564
                %v566 = vld [vmem:[%s558 + $0x6] sm:$0x3]
                %567 = vst [vmem:[%s559 + $0x6] sm:$0x3] %v566
                %v568 = vld [vmem:[%s558 + $0x8] sm:$0x3]
                %569 = vst [vmem:[%s559 + $0x8] sm:$0x3] %v568
                %v570 = vld [vmem:[%s558 + $0xa] sm:$0x3]
                %571 = vst [vmem:[%s559 + $0xa] sm:$0x3] %v570
                %v572 = vld [vmem:[%s558 + $0xc] sm:$0x3]
                %573 = vst [vmem:[%s559 + $0xc] sm:$0x3] %v572
                %v574 = vld [vmem:[%s558 + $0xe] sm:$0x3]
                %575 = vst [vmem:[%s559 + $0xe] sm:$0x3] %v574
                %v576 = vld [vmem:[%s558 + $0x20] sm:$0x3]
                %577 = vst [vmem:[%s559 + $0x10] sm:$0x3] %v576
                %v578 = vld [vmem:[%s558 + $0x22] sm:$0x3]
                %579 = vst [vmem:[%s559 + $0x12] sm:$0x3] %v578
                %v580 = vld [vmem:[%s558 + $0x24] sm:$0x3]
                %581 = vst [vmem:[%s559 + $0x14] sm:$0x3] %v580
                %v582 = vld [vmem:[%s558 + $0x26] sm:$0x3]
                %583 = vst [vmem:[%s559 + $0x16] sm:$0x3] %v582
                %v584 = vld [vmem:[%s558 + $0x28] sm:$0x3]
                %585 = vst [vmem:[%s559 + $0x18] sm:$0x3] %v584
                %v586 = vld [vmem:[%s558 + $0x2a] sm:$0x3]
                %587 = vst [vmem:[%s559 + $0x1a] sm:$0x3] %v586
                %v588 = vld [vmem:[%s558 + $0x2c] sm:$0x3]
                %589 = vst [vmem:[%s559 + $0x1c] sm:$0x3] %v588
                %v590 = vld [vmem:[%s558 + $0x2e] sm:$0x3]
                %591 = vst [vmem:[%s559 + $0x1e] sm:$0x3] %v590
                %v592 = vld [vmem:[%s558 + $0x40] sm:$0x3]
                %593 = vst [vmem:[%s559 + $0x20] sm:$0x3] %v592
                %v594 = vld [vmem:[%s558 + $0x42] sm:$0x3]
                %595 = vst [vmem:[%s559 + $0x22] sm:$0x3] %v594
                %v596 = vld [vmem:[%s558 + $0x44] sm:$0x3]
                %597 = vst [vmem:[%s559 + $0x24] sm:$0x3] %v596
                %v598 = vld [vmem:[%s558 + $0x46] sm:$0x3]
                %599 = vst [vmem:[%s559 + $0x26] sm:$0x3] %v598
                %v600 = vld [vmem:[%s558 + $0x48] sm:$0x3]
                %601 = vst [vmem:[%s559 + $0x28] sm:$0x3] %v600
                %v602 = vld [vmem:[%s558 + $0x4a] sm:$0x3]
                %603 = vst [vmem:[%s559 + $0x2a] sm:$0x3] %v602
                %v604 = vld [vmem:[%s558 + $0x4c] sm:$0x3]
                %605 = vst [vmem:[%s559 + $0x2c] sm:$0x3] %v604
                %v606 = vld [vmem:[%s558 + $0x4e] sm:$0x3]
                %607 = vst [vmem:[%s559 + $0x2e] sm:$0x3] %v606
                %v608 = vld [vmem:[%s558 + $0x60] sm:$0x3]
                %609 = vst [vmem:[%s559 + $0x30] sm:$0x3] %v608
                %v610 = vld [vmem:[%s558 + $0x62] sm:$0x3]
                %611 = vst [vmem:[%s559 + $0x32] sm:$0x3] %v610
                %v612 = vld [vmem:[%s558 + $0x64] sm:$0x3]
                %613 = vst [vmem:[%s559 + $0x34] sm:$0x3] %v612
                %v614 = vld [vmem:[%s558 + $0x66] sm:$0x3]
                %615 = vst [vmem:[%s559 + $0x36] sm:$0x3] %v614
                %v616 = vld [vmem:[%s558 + $0x68] sm:$0x3]
                %617 = vst [vmem:[%s559 + $0x38] sm:$0x3] %v616
                %v618 = vld [vmem:[%s558 + $0x6a] sm:$0x3]
                %619 = vst [vmem:[%s559 + $0x3a] sm:$0x3] %v618
                %v620 = vld [vmem:[%s558 + $0x6c] sm:$0x3]
                %621 = vst [vmem:[%s559 + $0x3c] sm:$0x3] %v620
                %v622 = vld [vmem:[%s558 + $0x6e] sm:$0x3]
                %623 = vst [vmem:[%s559 + $0x3e] sm:$0x3] %v622
              $region78: #{reformer_layer_forward.4} parent=72 // loop_footer
                %s557 = sadd.s32 1, %s553
              $region79: #{reformer_layer_forward.4} parent=72 // loop_footer_branch
                %552 = sbr.rel target = $region75
              $region80: #{reformer_layer_forward.4} parent=72 // loop_exit
                _
            $region73: #{reformer_layer_forward.4} parent=64 // pred_fallthru
              _
          $region65: #{reformer_layer_forward.4} parent=60 // pred_fallthru
            _
          %707 = vnop
        $region61: #{reformer_layer_forward.4} parent=15 // pred_fallthru
          _
        // Predicated region
        $region99: #{reformer_layer_forward.4} parent=15 // pred_check
          %p708 = pneg %p107
        $region100: #{reformer_layer_forward.4} parent=15 // pred_check_branch
          %710 = sbr.rel (%p708) target = $region102
        $region101: #{reformer_layer_forward.4} parent=15 // pred_region
          %s711 = sand.u32 %s97, 1
          %s712 = sand.u32 %s97, 1
          %s713 = smul.addr %s712, 128
          %s714 = scalar_lea.vmem [#allocation4], %s713
          %s715 = smul.u32 4, %s24
          %s716 = smul.u32 8, %s25
          %s717 = smul.addr %s715, 16
          %s718 = sadd.s32 %s716, %s717
          %s719 = smul.addr %s718, 4
          %s720 = scalar_lea.vmem %s2, %s719
          // Predicated region
          $region103: #{reformer_layer_forward.4} parent=101 // pred_check
            _
          $region104: #{reformer_layer_forward.4} parent=101 // pred_check_branch
            %722 = sbr.rel (0) target = $region106
          $region105: #{reformer_layer_forward.4} parent=101 // pred_region
            // Predicated region
            $region107: #{reformer_layer_forward.4} parent=105 // pred_check
              _
            $region108: #{reformer_layer_forward.4} parent=105 // pred_check_branch
              %724 = sbr.rel target = $region110
            $region109: #{reformer_layer_forward.4} parent=105 // pred_region
              // Predicated region
              $region122: #{reformer_layer_forward.4} parent=109 // pred_check
                _
              $region123: #{reformer_layer_forward.4} parent=109 // pred_check_branch
                %801 = sbr.rel (0) target = $region125
              $region124: #{reformer_layer_forward.4} parent=109 // pred_region
                loop: start=0, step=1, limit=1
                $region126: #{reformer_layer_forward.4} parent=124 // loop_pre_header
                  _
                $region127: #{reformer_layer_forward.4} parent=124 // loop_header
                  %s803 = sphi 0, %s807
                  %p804 = scmp.ge.s32.totalorder %s803, 1
                  %s808 = sphi %s720, %s720
                  %s809 = sphi %s714, %s714
                $region128: #{reformer_layer_forward.4} parent=124 // loop_header_branch
                  %806 = sbr.rel (%p804) target = $region132
                $region129: #{reformer_layer_forward.4} parent=124 // loop_body
                  _
                $region130: #{reformer_layer_forward.4} parent=124 // loop_footer
                  %s807 = sadd.s32 1, %s803
                $region131: #{reformer_layer_forward.4} parent=124 // loop_footer_branch
                  %802 = sbr.rel target = $region127
                $region132: #{reformer_layer_forward.4} parent=124 // loop_exit
                  _
                loop: start=0, step=1, limit=1
                $region133: #{reformer_layer_forward.4} parent=124 // loop_pre_header
                  _
                $region134: #{reformer_layer_forward.4} parent=124 // loop_header
                  %s812 = sphi 0, %s816
                  %p813 = scmp.ge.s32.totalorder %s812, 1
                  %s817 = sphi %s720, %s720
                  %s818 = sphi %s714, %s714
                $region135: #{reformer_layer_forward.4} parent=124 // loop_header_branch
                  %815 = sbr.rel (%p813) target = $region139
                $region136: #{reformer_layer_forward.4} parent=124 // loop_body
                  %v819 = vld [vmem:[%s817] sm:$0xf]
                  %820 = vst [vmem:[%s818] sm:$0xf] %v819
                  %v821 = vld [vmem:[%s817 + $0x4] sm:$0xf]
                  %822 = vst [vmem:[%s818 + $0x4] sm:$0xf] %v821
                  %v823 = vld [vmem:[%s817 + $0x8] sm:$0xf]
                  %824 = vst [vmem:[%s818 + $0x8] sm:$0xf] %v823
                  %v825 = vld [vmem:[%s817 + $0xc] sm:$0xf]
                  %826 = vst [vmem:[%s818 + $0xc] sm:$0xf] %v825
                  %v827 = vld [vmem:[%s817 + $0x10] sm:$0xf]
                  %828 = vst [vmem:[%s818 + $0x10] sm:$0xf] %v827
                  %v829 = vld [vmem:[%s817 + $0x14] sm:$0xf]
                  %830 = vst [vmem:[%s818 + $0x14] sm:$0xf] %v829
                  %v831 = vld [vmem:[%s817 + $0x18] sm:$0xf]
                  %832 = vst [vmem:[%s818 + $0x18] sm:$0xf] %v831
                  %v833 = vld [vmem:[%s817 + $0x1c] sm:$0xf]
                  %834 = vst [vmem:[%s818 + $0x1c] sm:$0xf] %v833
                  %v835 = vld [vmem:[%s817 + $0x40] sm:$0xf]
                  %836 = vst [vmem:[%s818 + $0x20] sm:$0xf] %v835
                  %v837 = vld [vmem:[%s817 + $0x44] sm:$0xf]
                  %838 = vst [vmem:[%s818 + $0x24] sm:$0xf] %v837
                  %v839 = vld [vmem:[%s817 + $0x48] sm:$0xf]
                  %840 = vst [vmem:[%s818 + $0x28] sm:$0xf] %v839
                  %v841 = vld [vmem:[%s817 + $0x4c] sm:$0xf]
                  %842 = vst [vmem:[%s818 + $0x2c] sm:$0xf] %v841
                  %v843 = vld [vmem:[%s817 + $0x50] sm:$0xf]
                  %844 = vst [vmem:[%s818 + $0x30] sm:$0xf] %v843
                  %v845 = vld [vmem:[%s817 + $0x54] sm:$0xf]
                  %846 = vst [vmem:[%s818 + $0x34] sm:$0xf] %v845
                  %v847 = vld [vmem:[%s817 + $0x58] sm:$0xf]
                  %848 = vst [vmem:[%s818 + $0x38] sm:$0xf] %v847
                  %v849 = vld [vmem:[%s817 + $0x5c] sm:$0xf]
                  %850 = vst [vmem:[%s818 + $0x3c] sm:$0xf] %v849
                  %v851 = vld [vmem:[%s817 + $0x80] sm:$0xf]
                  %852 = vst [vmem:[%s818 + $0x40] sm:$0xf] %v851
                  %v853 = vld [vmem:[%s817 + $0x84] sm:$0xf]
                  %854 = vst [vmem:[%s818 + $0x44] sm:$0xf] %v853
                  %v855 = vld [vmem:[%s817 + $0x88] sm:$0xf]
                  %856 = vst [vmem:[%s818 + $0x48] sm:$0xf] %v855
                  %v857 = vld [vmem:[%s817 + $0x8c] sm:$0xf]
                  %858 = vst [vmem:[%s818 + $0x4c] sm:$0xf] %v857
                  %v859 = vld [vmem:[%s817 + $0x90] sm:$0xf]
                  %860 = vst [vmem:[%s818 + $0x50] sm:$0xf] %v859
                  %v861 = vld [vmem:[%s817 + $0x94] sm:$0xf]
                  %862 = vst [vmem:[%s818 + $0x54] sm:$0xf] %v861
                  %v863 = vld [vmem:[%s817 + $0x98] sm:$0xf]
                  %864 = vst [vmem:[%s818 + $0x58] sm:$0xf] %v863
                  %v865 = vld [vmem:[%s817 + $0x9c] sm:$0xf]
                  %866 = vst [vmem:[%s818 + $0x5c] sm:$0xf] %v865
                  %v867 = vld [vmem:[%s817 + $0xc0] sm:$0xf]
                  %868 = vst [vmem:[%s818 + $0x60] sm:$0xf] %v867
                  %v869 = vld [vmem:[%s817 + $0xc4] sm:$0xf]
                  %870 = vst [vmem:[%s818 + $0x64] sm:$0xf] %v869
                  %v871 = vld [vmem:[%s817 + $0xc8] sm:$0xf]
                  %872 = vst [vmem:[%s818 + $0x68] sm:$0xf] %v871
                  %v873 = vld [vmem:[%s817 + $0xcc] sm:$0xf]
                  %874 = vst [vmem:[%s818 + $0x6c] sm:$0xf] %v873
                  %v875 = vld [vmem:[%s817 + $0xd0] sm:$0xf]
                  %876 = vst [vmem:[%s818 + $0x70] sm:$0xf] %v875
                  %v877 = vld [vmem:[%s817 + $0xd4] sm:$0xf]
                  %878 = vst [vmem:[%s818 + $0x74] sm:$0xf] %v877
                  %v879 = vld [vmem:[%s817 + $0xd8] sm:$0xf]
                  %880 = vst [vmem:[%s818 + $0x78] sm:$0xf] %v879
                  %v881 = vld [vmem:[%s817 + $0xdc] sm:$0xf]
                  %882 = vst [vmem:[%s818 + $0x7c] sm:$0xf] %v881
                $region137: #{reformer_layer_forward.4} parent=124 // loop_footer
                  %s816 = sadd.s32 1, %s812
                $region138: #{reformer_layer_forward.4} parent=124 // loop_footer_branch
                  %811 = sbr.rel target = $region134
                $region139: #{reformer_layer_forward.4} parent=124 // loop_exit
                  _
              $region125: #{reformer_layer_forward.4} parent=109 // pred_fallthru
                _
            $region110: #{reformer_layer_forward.4} parent=105 // pred_fallthru
              _
            // Predicated region
            $region111: #{reformer_layer_forward.4} parent=105 // pred_check
              _
            $region112: #{reformer_layer_forward.4} parent=105 // pred_check_branch
              %726 = sbr.rel (0) target = $region114
            $region113: #{reformer_layer_forward.4} parent=105 // pred_region
              loop: start=0, step=1, limit=1
              $region115: #{reformer_layer_forward.4} parent=113 // loop_pre_header
                _
              $region116: #{reformer_layer_forward.4} parent=113 // loop_header
                %s729 = sphi 0, %s733
                %p730 = scmp.ge.s32.totalorder %s729, 1
                %s734 = sphi %s720, %s720
                %s735 = sphi %s714, %s714
              $region117: #{reformer_layer_forward.4} parent=113 // loop_header_branch
                %732 = sbr.rel (%p730) target = $region121
              $region118: #{reformer_layer_forward.4} parent=113 // loop_body
                %v736 = vld [vmem:[%s734] sm:$0xf]
                %737 = vst [vmem:[%s735] sm:$0xf] %v736
                %v738 = vld [vmem:[%s734 + $0x4] sm:$0xf]
                %739 = vst [vmem:[%s735 + $0x4] sm:$0xf] %v738
                %v740 = vld [vmem:[%s734 + $0x8] sm:$0xf]
                %741 = vst [vmem:[%s735 + $0x8] sm:$0xf] %v740
                %v742 = vld [vmem:[%s734 + $0xc] sm:$0xf]
                %743 = vst [vmem:[%s735 + $0xc] sm:$0xf] %v742
                %v744 = vld [vmem:[%s734 + $0x10] sm:$0xf]
                %745 = vst [vmem:[%s735 + $0x10] sm:$0xf] %v744
                %v746 = vld [vmem:[%s734 + $0x14] sm:$0xf]
                %747 = vst [vmem:[%s735 + $0x14] sm:$0xf] %v746
                %v748 = vld [vmem:[%s734 + $0x18] sm:$0xf]
                %749 = vst [vmem:[%s735 + $0x18] sm:$0xf] %v748
                %v750 = vld [vmem:[%s734 + $0x1c] sm:$0xf]
                %751 = vst [vmem:[%s735 + $0x1c] sm:$0xf] %v750
                %v752 = vld [vmem:[%s734 + $0x40] sm:$0xf]
                %753 = vst [vmem:[%s735 + $0x20] sm:$0xf] %v752
                %v754 = vld [vmem:[%s734 + $0x44] sm:$0xf]
                %755 = vst [vmem:[%s735 + $0x24] sm:$0xf] %v754
                %v756 = vld [vmem:[%s734 + $0x48] sm:$0xf]
                %757 = vst [vmem:[%s735 + $0x28] sm:$0xf] %v756
                %v758 = vld [vmem:[%s734 + $0x4c] sm:$0xf]
                %759 = vst [vmem:[%s735 + $0x2c] sm:$0xf] %v758
                %v760 = vld [vmem:[%s734 + $0x50] sm:$0xf]
                %761 = vst [vmem:[%s735 + $0x30] sm:$0xf] %v760
                %v762 = vld [vmem:[%s734 + $0x54] sm:$0xf]
                %763 = vst [vmem:[%s735 + $0x34] sm:$0xf] %v762
                %v764 = vld [vmem:[%s734 + $0x58] sm:$0xf]
                %765 = vst [vmem:[%s735 + $0x38] sm:$0xf] %v764
                %v766 = vld [vmem:[%s734 + $0x5c] sm:$0xf]
                %767 = vst [vmem:[%s735 + $0x3c] sm:$0xf] %v766
                %v768 = vld [vmem:[%s734 + $0x80] sm:$0xf]
                %769 = vst [vmem:[%s735 + $0x40] sm:$0xf] %v768
                %v770 = vld [vmem:[%s734 + $0x84] sm:$0xf]
                %771 = vst [vmem:[%s735 + $0x44] sm:$0xf] %v770
                %v772 = vld [vmem:[%s734 + $0x88] sm:$0xf]
                %773 = vst [vmem:[%s735 + $0x48] sm:$0xf] %v772
                %v774 = vld [vmem:[%s734 + $0x8c] sm:$0xf]
                %775 = vst [vmem:[%s735 + $0x4c] sm:$0xf] %v774
                %v776 = vld [vmem:[%s734 + $0x90] sm:$0xf]
                %777 = vst [vmem:[%s735 + $0x50] sm:$0xf] %v776
                %v778 = vld [vmem:[%s734 + $0x94] sm:$0xf]
                %779 = vst [vmem:[%s735 + $0x54] sm:$0xf] %v778
                %v780 = vld [vmem:[%s734 + $0x98] sm:$0xf]
                %781 = vst [vmem:[%s735 + $0x58] sm:$0xf] %v780
                %v782 = vld [vmem:[%s734 + $0x9c] sm:$0xf]
                %783 = vst [vmem:[%s735 + $0x5c] sm:$0xf] %v782
                %v784 = vld [vmem:[%s734 + $0xc0] sm:$0xf]
                %785 = vst [vmem:[%s735 + $0x60] sm:$0xf] %v784
                %v786 = vld [vmem:[%s734 + $0xc4] sm:$0xf]
                %787 = vst [vmem:[%s735 + $0x64] sm:$0xf] %v786
                %v788 = vld [vmem:[%s734 + $0xc8] sm:$0xf]
                %789 = vst [vmem:[%s735 + $0x68] sm:$0xf] %v788
                %v790 = vld [vmem:[%s734 + $0xcc] sm:$0xf]
                %791 = vst [vmem:[%s735 + $0x6c] sm:$0xf] %v790
                %v792 = vld [vmem:[%s734 + $0xd0] sm:$0xf]
                %793 = vst [vmem:[%s735 + $0x70] sm:$0xf] %v792
                %v794 = vld [vmem:[%s734 + $0xd4] sm:$0xf]
                %795 = vst [vmem:[%s735 + $0x74] sm:$0xf] %v794
                %v796 = vld [vmem:[%s734 + $0xd8] sm:$0xf]
                %797 = vst [vmem:[%s735 + $0x78] sm:$0xf] %v796
                %v798 = vld [vmem:[%s734 + $0xdc] sm:$0xf]
                %799 = vst [vmem:[%s735 + $0x7c] sm:$0xf] %v798
              $region119: #{reformer_layer_forward.4} parent=113 // loop_footer
                %s733 = sadd.s32 1, %s729
              $region120: #{reformer_layer_forward.4} parent=113 // loop_footer_branch
                %728 = sbr.rel target = $region116
              $region121: #{reformer_layer_forward.4} parent=113 // loop_exit
                _
            $region114: #{reformer_layer_forward.4} parent=105 // pred_fallthru
              _
          $region106: #{reformer_layer_forward.4} parent=101 // pred_fallthru
            _
          %883 = vnop
        $region102: #{reformer_layer_forward.4} parent=15 // pred_fallthru
          _
        // Predicated region
        $region140: #{reformer_layer_forward.4} parent=15 // pred_check
          %p884 = pneg %p163
        $region141: #{reformer_layer_forward.4} parent=15 // pred_check_branch
          %886 = sbr.rel (%p884) target = $region143
        $region142: #{reformer_layer_forward.4} parent=15 // pred_region
          %s887 = sand.u32 %s153, 1
          %s888 = sand.u32 %s153, 1
          %s889 = smul.addr %s888, 8
          %s890 = scalar_lea.vmem [#allocation5], %s889
          %s891 = smul.u32 %s25, 8
          %s892 = sadd.s32 %s891, 15
          %p893 = scmp.lt.s32.totalorder %s892, 0
          %s894 = ssub.s32 0, %s892
          %s895 = scalar_select %p893, %s894, %s892
          %s896 = sand.u32 %s895, 15
          %s897 = ssub.s32 0, %s896
          %s898 = scalar_select %p893, %s897, %s896
          %p899 = scmp.ne.s32.totalorder %s898, 0
          %p900 = scmp.lt.s32.totalorder %s898, 0
          %p901 = pnand %p900, %p899
          %p902 = pneg %p901
          %s903 = sadd.s32 %s898, 16
          %s904 = scalar_select %p902, %s903, %s898
          %s905 = smul.u32 4, %s24
          %s906 = smul.addr %s905, 16
          %s907 = sadd.s32 %s904, %s906
          %s908 = smul.addr %s907, 2
          %s909 = scalar_lea.vmem %s3, %s908
          // Predicated region
          $region144: #{reformer_layer_forward.4} parent=142 // pred_check
            _
          $region145: #{reformer_layer_forward.4} parent=142 // pred_check_branch
            %911 = sbr.rel (0) target = $region147
          $region146: #{reformer_layer_forward.4} parent=142 // pred_region
            // Predicated region
            $region148: #{reformer_layer_forward.4} parent=146 // pred_check
              _
            $region149: #{reformer_layer_forward.4} parent=146 // pred_check_branch
              %913 = sbr.rel target = $region151
            $region150: #{reformer_layer_forward.4} parent=146 // pred_region
              // Predicated region
              $region163: #{reformer_layer_forward.4} parent=150 // pred_check
                _
              $region164: #{reformer_layer_forward.4} parent=150 // pred_check_branch
                %934 = sbr.rel (0) target = $region166
              $region165: #{reformer_layer_forward.4} parent=150 // pred_region
                loop: start=0, step=1, limit=1
                $region167: #{reformer_layer_forward.4} parent=165 // loop_pre_header
                  _
                $region168: #{reformer_layer_forward.4} parent=165 // loop_header
                  %s936 = sphi 0, %s940
                  %p937 = scmp.ge.s32.totalorder %s936, 1
                  %s941 = sphi %s909, %s909
                  %s942 = sphi %s890, %s890
                $region169: #{reformer_layer_forward.4} parent=165 // loop_header_branch
                  %939 = sbr.rel (%p937) target = $region173
                $region170: #{reformer_layer_forward.4} parent=165 // loop_body
                  _
                $region171: #{reformer_layer_forward.4} parent=165 // loop_footer
                  %s940 = sadd.s32 1, %s936
                $region172: #{reformer_layer_forward.4} parent=165 // loop_footer_branch
                  %935 = sbr.rel target = $region168
                $region173: #{reformer_layer_forward.4} parent=165 // loop_exit
                  _
                loop: start=0, step=1, limit=1
                $region174: #{reformer_layer_forward.4} parent=165 // loop_pre_header
                  _
                $region175: #{reformer_layer_forward.4} parent=165 // loop_header
                  %s945 = sphi 0, %s949
                  %p946 = scmp.ge.s32.totalorder %s945, 1
                  %s950 = sphi %s909, %s909
                  %s951 = sphi %s890, %s890
                $region176: #{reformer_layer_forward.4} parent=165 // loop_header_branch
                  %948 = sbr.rel (%p946) target = $region180
                $region177: #{reformer_layer_forward.4} parent=165 // loop_body
                  %v952 = vld [vmem:[%s950] sm:$0x3]
                  %953 = vst [vmem:[%s951] sm:$0x3] %v952
                  %v954 = vld [vmem:[%s950 + $0x20] sm:$0x3]
                  %955 = vst [vmem:[%s951 + $0x2] sm:$0x3] %v954
                  %v956 = vld [vmem:[%s950 + $0x40] sm:$0x3]
                  %957 = vst [vmem:[%s951 + $0x4] sm:$0x3] %v956
                  %v958 = vld [vmem:[%s950 + $0x60] sm:$0x3]
                  %959 = vst [vmem:[%s951 + $0x6] sm:$0x3] %v958
                $region178: #{reformer_layer_forward.4} parent=165 // loop_footer
                  %s949 = sadd.s32 1, %s945
                $region179: #{reformer_layer_forward.4} parent=165 // loop_footer_branch
                  %944 = sbr.rel target = $region175
                $region180: #{reformer_layer_forward.4} parent=165 // loop_exit
                  _
              $region166: #{reformer_layer_forward.4} parent=150 // pred_fallthru
                _
            $region151: #{reformer_layer_forward.4} parent=146 // pred_fallthru
              _
            // Predicated region
            $region152: #{reformer_layer_forward.4} parent=146 // pred_check
              _
            $region153: #{reformer_layer_forward.4} parent=146 // pred_check_branch
              %915 = sbr.rel (0) target = $region155
            $region154: #{reformer_layer_forward.4} parent=146 // pred_region
              loop: start=0, step=1, limit=1
              $region156: #{reformer_layer_forward.4} parent=154 // loop_pre_header
                _
              $region157: #{reformer_layer_forward.4} parent=154 // loop_header
                %s918 = sphi 0, %s922
                %p919 = scmp.ge.s32.totalorder %s918, 1
                %s923 = sphi %s909, %s909
                %s924 = sphi %s890, %s890
              $region158: #{reformer_layer_forward.4} parent=154 // loop_header_branch
                %921 = sbr.rel (%p919) target = $region162
              $region159: #{reformer_layer_forward.4} parent=154 // loop_body
                %v925 = vld [vmem:[%s923] sm:$0x3]
                %926 = vst [vmem:[%s924] sm:$0x3] %v925
                %v927 = vld [vmem:[%s923 + $0x20] sm:$0x3]
                %928 = vst [vmem:[%s924 + $0x2] sm:$0x3] %v927
                %v929 = vld [vmem:[%s923 + $0x40] sm:$0x3]
                %930 = vst [vmem:[%s924 + $0x4] sm:$0x3] %v929
                %v931 = vld [vmem:[%s923 + $0x60] sm:$0x3]
                %932 = vst [vmem:[%s924 + $0x6] sm:$0x3] %v931
              $region160: #{reformer_layer_forward.4} parent=154 // loop_footer
                %s922 = sadd.s32 1, %s918
              $region161: #{reformer_layer_forward.4} parent=154 // loop_footer_branch
                %917 = sbr.rel target = $region157
              $region162: #{reformer_layer_forward.4} parent=154 // loop_exit
                _
            $region155: #{reformer_layer_forward.4} parent=146 // pred_fallthru
              _
          $region147: #{reformer_layer_forward.4} parent=142 // pred_fallthru
            _
          %960 = vnop
        $region143: #{reformer_layer_forward.4} parent=15 // pred_fallthru
          _
        // Predicated region
        $region181: #{reformer_layer_forward.4} parent=15 // pred_check
          %p961 = pneg %p219
        $region182: #{reformer_layer_forward.4} parent=15 // pred_check_branch
          %963 = sbr.rel (%p961) target = $region184
        $region183: #{reformer_layer_forward.4} parent=15 // pred_region
          %s964 = sand.u32 %s209, 1
          %s965 = sand.u32 %s209, 1
          %s966 = smul.addr %s965, 8
          %s967 = scalar_lea.vmem [#allocation6], %s966
          %s968 = smul.u32 %s25, 8
          %s969 = sadd.s32 %s968, 15
          %p970 = scmp.lt.s32.totalorder %s969, 0
          %s971 = ssub.s32 0, %s969
          %s972 = scalar_select %p970, %s971, %s969
          %s973 = sand.u32 %s972, 15
          %s974 = ssub.s32 0, %s973
          %s975 = scalar_select %p970, %s974, %s973
          %p976 = scmp.ne.s32.totalorder %s975, 0
          %p977 = scmp.lt.s32.totalorder %s975, 0
          %p978 = pnand %p977, %p976
          %p979 = pneg %p978
          %s980 = sadd.s32 %s975, 16
          %s981 = scalar_select %p979, %s980, %s975
          %s982 = smul.u32 4, %s24
          %s983 = smul.addr %s982, 16
          %s984 = sadd.s32 %s981, %s983
          %s985 = smul.addr %s984, 2
          %s986 = scalar_lea.vmem %s4, %s985
          // Predicated region
          $region185: #{reformer_layer_forward.4} parent=183 // pred_check
            _
          $region186: #{reformer_layer_forward.4} parent=183 // pred_check_branch
            %988 = sbr.rel (0) target = $region188
          $region187: #{reformer_layer_forward.4} parent=183 // pred_region
            // Predicated region
            $region189: #{reformer_layer_forward.4} parent=187 // pred_check
              _
            $region190: #{reformer_layer_forward.4} parent=187 // pred_check_branch
              %990 = sbr.rel target = $region192
            $region191: #{reformer_layer_forward.4} parent=187 // pred_region
              // Predicated region
              $region204: #{reformer_layer_forward.4} parent=191 // pred_check
                _
              $region205: #{reformer_layer_forward.4} parent=191 // pred_check_branch
                %1011 = sbr.rel (0) target = $region207
              $region206: #{reformer_layer_forward.4} parent=191 // pred_region
                loop: start=0, step=1, limit=1
                $region208: #{reformer_layer_forward.4} parent=206 // loop_pre_header
                  _
                $region209: #{reformer_layer_forward.4} parent=206 // loop_header
                  %s1013 = sphi 0, %s1017
                  %p1014 = scmp.ge.s32.totalorder %s1013, 1
                  %s1018 = sphi %s986, %s986
                  %s1019 = sphi %s967, %s967
                $region210: #{reformer_layer_forward.4} parent=206 // loop_header_branch
                  %1016 = sbr.rel (%p1014) target = $region214
                $region211: #{reformer_layer_forward.4} parent=206 // loop_body
                  _
                $region212: #{reformer_layer_forward.4} parent=206 // loop_footer
                  %s1017 = sadd.s32 1, %s1013
                $region213: #{reformer_layer_forward.4} parent=206 // loop_footer_branch
                  %1012 = sbr.rel target = $region209
                $region214: #{reformer_layer_forward.4} parent=206 // loop_exit
                  _
                loop: start=0, step=1, limit=1
                $region215: #{reformer_layer_forward.4} parent=206 // loop_pre_header
                  _
                $region216: #{reformer_layer_forward.4} parent=206 // loop_header
                  %s1022 = sphi 0, %s1026
                  %p1023 = scmp.ge.s32.totalorder %s1022, 1
                  %s1027 = sphi %s986, %s986
                  %s1028 = sphi %s967, %s967
                $region217: #{reformer_layer_forward.4} parent=206 // loop_header_branch
                  %1025 = sbr.rel (%p1023) target = $region221
                $region218: #{reformer_layer_forward.4} parent=206 // loop_body
                  %v1029 = vld [vmem:[%s1027] sm:$0x3]
                  %1030 = vst [vmem:[%s1028] sm:$0x3] %v1029
                  %v1031 = vld [vmem:[%s1027 + $0x20] sm:$0x3]
                  %1032 = vst [vmem:[%s1028 + $0x2] sm:$0x3] %v1031
                  %v1033 = vld [vmem:[%s1027 + $0x40] sm:$0x3]
                  %1034 = vst [vmem:[%s1028 + $0x4] sm:$0x3] %v1033
                  %v1035 = vld [vmem:[%s1027 + $0x60] sm:$0x3]
                  %1036 = vst [vmem:[%s1028 + $0x6] sm:$0x3] %v1035
                $region219: #{reformer_layer_forward.4} parent=206 // loop_footer
                  %s1026 = sadd.s32 1, %s1022
                $region220: #{reformer_layer_forward.4} parent=206 // loop_footer_branch
                  %1021 = sbr.rel target = $region216
                $region221: #{reformer_layer_forward.4} parent=206 // loop_exit
                  _
              $region207: #{reformer_layer_forward.4} parent=191 // pred_fallthru
                _
            $region192: #{reformer_layer_forward.4} parent=187 // pred_fallthru
              _
            // Predicated region
            $region193: #{reformer_layer_forward.4} parent=187 // pred_check
              _
            $region194: #{reformer_layer_forward.4} parent=187 // pred_check_branch
              %992 = sbr.rel (0) target = $region196
            $region195: #{reformer_layer_forward.4} parent=187 // pred_region
              loop: start=0, step=1, limit=1
              $region197: #{reformer_layer_forward.4} parent=195 // loop_pre_header
                _
              $region198: #{reformer_layer_forward.4} parent=195 // loop_header
                %s995 = sphi 0, %s999
                %p996 = scmp.ge.s32.totalorder %s995, 1
                %s1000 = sphi %s986, %s986
                %s1001 = sphi %s967, %s967
              $region199: #{reformer_layer_forward.4} parent=195 // loop_header_branch
                %998 = sbr.rel (%p996) target = $region203
              $region200: #{reformer_layer_forward.4} parent=195 // loop_body
                %v1002 = vld [vmem:[%s1000] sm:$0x3]
                %1003 = vst [vmem:[%s1001] sm:$0x3] %v1002
                %v1004 = vld [vmem:[%s1000 + $0x20] sm:$0x3]
                %1005 = vst [vmem:[%s1001 + $0x2] sm:$0x3] %v1004
                %v1006 = vld [vmem:[%s1000 + $0x40] sm:$0x3]
                %1007 = vst [vmem:[%s1001 + $0x4] sm:$0x3] %v1006
                %v1008 = vld [vmem:[%s1000 + $0x60] sm:$0x3]
                %1009 = vst [vmem:[%s1001 + $0x6] sm:$0x3] %v1008
              $region201: #{reformer_layer_forward.4} parent=195 // loop_footer
                %s999 = sadd.s32 1, %s995
              $region202: #{reformer_layer_forward.4} parent=195 // loop_footer_branch
                %994 = sbr.rel target = $region198
              $region203: #{reformer_layer_forward.4} parent=195 // loop_exit
                _
            $region196: #{reformer_layer_forward.4} parent=187 // pred_fallthru
              _
          $region188: #{reformer_layer_forward.4} parent=183 // pred_fallthru
            _
          %1037 = vnop
        $region184: #{reformer_layer_forward.4} parent=15 // pred_fallthru
          _
        // Predicated region
        $region222: #{reformer_layer_forward.4} parent=15 // pred_check
          %p1038 = pneg %p275
        $region223: #{reformer_layer_forward.4} parent=15 // pred_check_branch
          %1040 = sbr.rel (%p1038) target = $region225
        $region224: #{reformer_layer_forward.4} parent=15 // pred_region
          %s1041 = sand.u32 %s265, 1
          %s1042 = sand.u32 %s265, 1
          %s1043 = smul.addr %s1042, 16
          %s1044 = scalar_lea.vmem [#allocation7], %s1043
          %s1045 = smul.u32 %s25, 8
          %s1046 = sadd.s32 %s1045, 15
          %p1047 = scmp.lt.s32.totalorder %s1046, 0
          %s1048 = ssub.s32 0, %s1046
          %s1049 = scalar_select %p1047, %s1048, %s1046
          %s1050 = sand.u32 %s1049, 15
          %s1051 = ssub.s32 0, %s1050
          %s1052 = scalar_select %p1047, %s1051, %s1050
          %p1053 = scmp.ne.s32.totalorder %s1052, 0
          %p1054 = scmp.lt.s32.totalorder %s1052, 0
          %p1055 = pnand %p1054, %p1053
          %p1056 = pneg %p1055
          %s1057 = sadd.s32 %s1052, 16
          %s1058 = scalar_select %p1056, %s1057, %s1052
          %s1059 = smul.u32 4, %s24
          %s1060 = smul.addr %s1059, 16
          %s1061 = sadd.s32 %s1058, %s1060
          %s1062 = smul.addr %s1061, 4
          %s1063 = scalar_lea.vmem %s5, %s1062
          // Predicated region
          $region226: #{reformer_layer_forward.4} parent=224 // pred_check
            _
          $region227: #{reformer_layer_forward.4} parent=224 // pred_check_branch
            %1065 = sbr.rel (0) target = $region229
          $region228: #{reformer_layer_forward.4} parent=224 // pred_region
            // Predicated region
            $region230: #{reformer_layer_forward.4} parent=228 // pred_check
              _
            $region231: #{reformer_layer_forward.4} parent=228 // pred_check_branch
              %1067 = sbr.rel target = $region233
            $region232: #{reformer_layer_forward.4} parent=228 // pred_region
              // Predicated region
              $region245: #{reformer_layer_forward.4} parent=232 // pred_check
                _
              $region246: #{reformer_layer_forward.4} parent=232 // pred_check_branch
                %1088 = sbr.rel (0) target = $region248
              $region247: #{reformer_layer_forward.4} parent=232 // pred_region
                loop: start=0, step=1, limit=1
                $region249: #{reformer_layer_forward.4} parent=247 // loop_pre_header
                  _
                $region250: #{reformer_layer_forward.4} parent=247 // loop_header
                  %s1090 = sphi 0, %s1094
                  %p1091 = scmp.ge.s32.totalorder %s1090, 1
                  %s1095 = sphi %s1063, %s1063
                  %s1096 = sphi %s1044, %s1044
                $region251: #{reformer_layer_forward.4} parent=247 // loop_header_branch
                  %1093 = sbr.rel (%p1091) target = $region255
                $region252: #{reformer_layer_forward.4} parent=247 // loop_body
                  _
                $region253: #{reformer_layer_forward.4} parent=247 // loop_footer
                  %s1094 = sadd.s32 1, %s1090
                $region254: #{reformer_layer_forward.4} parent=247 // loop_footer_branch
                  %1089 = sbr.rel target = $region250
                $region255: #{reformer_layer_forward.4} parent=247 // loop_exit
                  _
                loop: start=0, step=1, limit=1
                $region256: #{reformer_layer_forward.4} parent=247 // loop_pre_header
                  _
                $region257: #{reformer_layer_forward.4} parent=247 // loop_header
                  %s1099 = sphi 0, %s1103
                  %p1100 = scmp.ge.s32.totalorder %s1099, 1
                  %s1104 = sphi %s1063, %s1063
                  %s1105 = sphi %s1044, %s1044
                $region258: #{reformer_layer_forward.4} parent=247 // loop_header_branch
                  %1102 = sbr.rel (%p1100) target = $region262
                $region259: #{reformer_layer_forward.4} parent=247 // loop_body
                  %v1106 = vld [vmem:[%s1104] sm:$0xf]
                  %1107 = vst [vmem:[%s1105] sm:$0xf] %v1106
                  %v1108 = vld [vmem:[%s1104 + $0x40] sm:$0xf]
                  %1109 = vst [vmem:[%s1105 + $0x4] sm:$0xf] %v1108
                  %v1110 = vld [vmem:[%s1104 + $0x80] sm:$0xf]
                  %1111 = vst [vmem:[%s1105 + $0x8] sm:$0xf] %v1110
                  %v1112 = vld [vmem:[%s1104 + $0xc0] sm:$0xf]
                  %1113 = vst [vmem:[%s1105 + $0xc] sm:$0xf] %v1112
                $region260: #{reformer_layer_forward.4} parent=247 // loop_footer
                  %s1103 = sadd.s32 1, %s1099
                $region261: #{reformer_layer_forward.4} parent=247 // loop_footer_branch
                  %1098 = sbr.rel target = $region257
                $region262: #{reformer_layer_forward.4} parent=247 // loop_exit
                  _
              $region248: #{reformer_layer_forward.4} parent=232 // pred_fallthru
                _
            $region233: #{reformer_layer_forward.4} parent=228 // pred_fallthru
              _
            // Predicated region
            $region234: #{reformer_layer_forward.4} parent=228 // pred_check
              _
            $region235: #{reformer_layer_forward.4} parent=228 // pred_check_branch
              %1069 = sbr.rel (0) target = $region237
            $region236: #{reformer_layer_forward.4} parent=228 // pred_region
              loop: start=0, step=1, limit=1
              $region238: #{reformer_layer_forward.4} parent=236 // loop_pre_header
                _
              $region239: #{reformer_layer_forward.4} parent=236 // loop_header
                %s1072 = sphi 0, %s1076
                %p1073 = scmp.ge.s32.totalorder %s1072, 1
                %s1077 = sphi %s1063, %s1063
                %s1078 = sphi %s1044, %s1044
              $region240: #{reformer_layer_forward.4} parent=236 // loop_header_branch
                %1075 = sbr.rel (%p1073) target = $region244
              $region241: #{reformer_layer_forward.4} parent=236 // loop_body
                %v1079 = vld [vmem:[%s1077] sm:$0xf]
                %1080 = vst [vmem:[%s1078] sm:$0xf] %v1079
                %v1081 = vld [vmem:[%s1077 + $0x40] sm:$0xf]
                %1082 = vst [vmem:[%s1078 + $0x4] sm:$0xf] %v1081
                %v1083 = vld [vmem:[%s1077 + $0x80] sm:$0xf]
                %1084 = vst [vmem:[%s1078 + $0x8] sm:$0xf] %v1083
                %v1085 = vld [vmem:[%s1077 + $0xc0] sm:$0xf]
                %1086 = vst [vmem:[%s1078 + $0xc] sm:$0xf] %v1085
              $region242: #{reformer_layer_forward.4} parent=236 // loop_footer
                %s1076 = sadd.s32 1, %s1072
              $region243: #{reformer_layer_forward.4} parent=236 // loop_footer_branch
                %1071 = sbr.rel target = $region239
              $region244: #{reformer_layer_forward.4} parent=236 // loop_exit
                _
            $region237: #{reformer_layer_forward.4} parent=228 // pred_fallthru
              _
          $region229: #{reformer_layer_forward.4} parent=224 // pred_fallthru
            _
          %1114 = vnop
        $region225: #{reformer_layer_forward.4} parent=15 // pred_fallthru
          _
      $region16: #{reformer_layer_forward.4} parent=5 // pred_fallthru
        _
      %p1115 = scmp.le.s32.totalorder 1, %s17
      %p1116 = scmp.lt.s32.totalorder %s17, 5
      %p1117 = pnand %p1115, %p1116
      %p1118 = pneg %p1117
      // Predicated region
      $region263: #{reformer_layer_forward.4} parent=5 // pred_check
        _
      $region264: #{reformer_layer_forward.4} parent=5 // pred_check_branch
        %1120 = sbr.rel (%p1117) target = $region266
      $region265: #{reformer_layer_forward.4} parent=5 // pred_region
        %s1121 = ssub.s32 %s17, 1
        %s1122 = sand.u32 %s44, 1
        %s1123 = sand.u32 %s44, 1
        %s1124 = smul.addr %s1123, 64
        %s1125 = scalar_lea.vmem [#allocation2], %s1124
        // Predicated region
        $region267: #{reformer_layer_forward.4} parent=265 // pred_check
          %p1126 = pneg %p57
        $region268: #{reformer_layer_forward.4} parent=265 // pred_check_branch
          %1128 = sbr.rel (%p1126) target = $region270
        $region269: #{reformer_layer_forward.4} parent=265 // pred_region
          _
        $region270: #{reformer_layer_forward.4} parent=265 // pred_fallthru
          _
        %s1129 = sand.u32 %s72, 1
        %s1130 = sand.u32 %s72, 1
        %s1131 = smul.addr %s1130, 64
        %s1132 = scalar_lea.vmem [#allocation3], %s1131
        // Predicated region
        $region271: #{reformer_layer_forward.4} parent=265 // pred_check
          %p1133 = pneg %p85
        $region272: #{reformer_layer_forward.4} parent=265 // pred_check_branch
          %1135 = sbr.rel (%p1133) target = $region274
        $region273: #{reformer_layer_forward.4} parent=265 // pred_region
          _
        $region274: #{reformer_layer_forward.4} parent=265 // pred_fallthru
          _
        %s1136 = sand.u32 %s100, 1
        %s1137 = sand.u32 %s100, 1
        %s1138 = smul.addr %s1137, 128
        %s1139 = scalar_lea.vmem [#allocation4], %s1138
        // Predicated region
        $region275: #{reformer_layer_forward.4} parent=265 // pred_check
          %p1140 = pneg %p113
        $region276: #{reformer_layer_forward.4} parent=265 // pred_check_branch
          %1142 = sbr.rel (%p1140) target = $region278
        $region277: #{reformer_layer_forward.4} parent=265 // pred_region
          _
        $region278: #{reformer_layer_forward.4} parent=265 // pred_fallthru
          _
        %s1143 = sand.u32 %s156, 1
        %s1144 = sand.u32 %s156, 1
        %s1145 = smul.addr %s1144, 8
        %s1146 = scalar_lea.vmem [#allocation5], %s1145
        // Predicated region
        $region279: #{reformer_layer_forward.4} parent=265 // pred_check
          %p1147 = pneg %p169
        $region280: #{reformer_layer_forward.4} parent=265 // pred_check_branch
          %1149 = sbr.rel (%p1147) target = $region282
        $region281: #{reformer_layer_forward.4} parent=265 // pred_region
          _
        $region282: #{reformer_layer_forward.4} parent=265 // pred_fallthru
          _
        %s1150 = sand.u32 %s212, 1
        %s1151 = sand.u32 %s212, 1
        %s1152 = smul.addr %s1151, 8
        %s1153 = scalar_lea.vmem [#allocation6], %s1152
        // Predicated region
        $region283: #{reformer_layer_forward.4} parent=265 // pred_check
          %p1154 = pneg %p225
        $region284: #{reformer_layer_forward.4} parent=265 // pred_check_branch
          %1156 = sbr.rel (%p1154) target = $region286
        $region285: #{reformer_layer_forward.4} parent=265 // pred_region
          _
        $region286: #{reformer_layer_forward.4} parent=265 // pred_fallthru
          _
        %s1157 = sand.u32 %s268, 1
        %s1158 = sand.u32 %s268, 1
        %s1159 = smul.addr %s1158, 16
        %s1160 = scalar_lea.vmem [#allocation7], %s1159
        // Predicated region
        $region287: #{reformer_layer_forward.4} parent=265 // pred_check
          %p1161 = pneg %p281
        $region288: #{reformer_layer_forward.4} parent=265 // pred_check_branch
          %1163 = sbr.rel (%p1161) target = $region290
        $region289: #{reformer_layer_forward.4} parent=265 // pred_region
          _
        $region290: #{reformer_layer_forward.4} parent=265 // pred_fallthru
          _
        %s1164 = sand.u32 %s44, 1
        %s1165 = sand.u32 %s44, 1
        %s1166 = smul.addr %s1165, 64
        %s1167 = scalar_lea.vmem [#allocation2], %s1166
        %p1168 = pneg %p57
        %p1169 = pneg %p54
        %s1170 = sand.u32 %s72, 1
        %s1171 = sand.u32 %s72, 1
        %s1172 = smul.addr %s1171, 64
        %s1173 = scalar_lea.vmem [#allocation3], %s1172
        %p1174 = pneg %p85
        %p1175 = pneg %p82
        %s1176 = sand.u32 %s100, 1
        %s1177 = sand.u32 %s100, 1
        %s1178 = smul.addr %s1177, 128
        %s1179 = scalar_lea.vmem [#allocation4], %s1178
        %p1180 = pneg %p113
        %p1181 = pneg %p110
        %s1182 = sand.u32 %s156, 1
        %s1183 = sand.u32 %s156, 1
        %s1184 = smul.addr %s1183, 8
        %s1185 = scalar_lea.vmem [#allocation5], %s1184
        %p1186 = pneg %p169
        %p1187 = pneg %p166
        %s1188 = sand.u32 %s212, 1
        %s1189 = sand.u32 %s212, 1
        %s1190 = smul.addr %s1189, 8
        %s1191 = scalar_lea.vmem [#allocation6], %s1190
        %p1192 = pneg %p225
        %p1193 = pneg %p222
        %s1194 = sand.u32 %s268, 1
        %s1195 = sand.u32 %s268, 1
        %s1196 = smul.addr %s1195, 16
        %s1197 = scalar_lea.vmem [#allocation7], %s1196
        %p1198 = pneg %p281
        %p1199 = pneg %p278
        %p1200 = pneg %p309
        %p1201 = pneg %p306
        %s1202 = sand.u32 %s296, 1
        %s1203 = scalar_lea.sflag [#allocation9], %s1202
        %s1204 = sand.u32 %s296, 1
        %s1205 = smul.addr %s1204, 64
        %s1206 = scalar_lea.vmem [#allocation8], %s1205
        %p1207 = pneg %p337
        %p1208 = pneg %p334
        %s1209 = sand.u32 %s324, 1
        %s1210 = sand.u32 %s324, 1
        %s1211 = smul.addr %s1210, 32
        %s1212 = scalar_lea.vmem [#allocation10], %s1211
        %s1213 = smul.u32 4, %s26
        %s1214 = smul.u32 8, %s27
        %s1215 = smul.u32 4, %s26
        %s1216 = smul.u32 8, %s27
        %s1217 = smul.u32 4, %s26
        %s1218 = smul.u32 8, %s27
        %s1219 = smul.u32 %s27, 8
        %s1220 = sadd.s32 %s1219, 15
        %p1221 = scmp.lt.s32.totalorder %s1220, 0
        %s1222 = ssub.s32 0, %s1220
        %s1223 = scalar_select %p1221, %s1222, %s1220
        %s1224 = sand.u32 %s1223, 15
        %s1225 = ssub.s32 0, %s1224
        %s1226 = scalar_select %p1221, %s1225, %s1224
        %p1227 = scmp.ne.s32.totalorder %s1226, 0
        %p1228 = scmp.lt.s32.totalorder %s1226, 0
        %p1229 = pnand %p1228, %p1227
        %p1230 = pneg %p1229
        %s1231 = sadd.s32 %s1226, 16
        %s1232 = scalar_select %p1230, %s1231, %s1226
        %s1233 = smul.u32 4, %s26
        %s1234 = smul.u32 %s27, 8
        %s1235 = sadd.s32 %s1234, 15
        %p1236 = scmp.lt.s32.totalorder %s1235, 0
        %s1237 = ssub.s32 0, %s1235
        %s1238 = scalar_select %p1236, %s1237, %s1235
        %s1239 = sand.u32 %s1238, 15
        %s1240 = ssub.s32 0, %s1239
        %s1241 = scalar_select %p1236, %s1240, %s1239
        %p1242 = scmp.ne.s32.totalorder %s1241, 0
        %p1243 = scmp.lt.s32.totalorder %s1241, 0
        %p1244 = pnand %p1243, %p1242
        %p1245 = pneg %p1244
        %s1246 = sadd.s32 %s1241, 16
        %s1247 = scalar_select %p1245, %s1246, %s1241
        %s1248 = smul.u32 4, %s26
        %s1249 = smul.u32 %s27, 8
        %s1250 = sadd.s32 %s1249, 15
        %p1251 = scmp.lt.s32.totalorder %s1250, 0
        %s1252 = ssub.s32 0, %s1250
        %s1253 = scalar_select %p1251, %s1252, %s1250
        %s1254 = sand.u32 %s1253, 15
        %s1255 = ssub.s32 0, %s1254
        %s1256 = scalar_select %p1251, %s1255, %s1254
        %p1257 = scmp.ne.s32.totalorder %s1256, 0
        %p1258 = scmp.lt.s32.totalorder %s1256, 0
        %p1259 = pnand %p1258, %p1257
        %p1260 = pneg %p1259
        %s1261 = sadd.s32 %s1256, 16
        %s1262 = scalar_select %p1260, %s1261, %s1256
        %s1263 = smul.u32 4, %s26
        %s1264 = smul.u32 4, %s26
        %s1265 = smul.u32 8, %s27
        %s1266 = smul.u32 4, %s26
        %v1268 = vld [vmem:[%s1125] sm:$0x3]
        %v1269 = vld [vmem:[%s1125 + $0x2] sm:$0x3]
        %v1270 = vld [vmem:[%s1125 + $0x4] sm:$0x3]
        %v1271 = vld [vmem:[%s1125 + $0x6] sm:$0x3]
        %v1272 = vld [vmem:[%s1125 + $0x8] sm:$0x3]
        %v1273 = vld [vmem:[%s1125 + $0xa] sm:$0x3]
        %v1274 = vld [vmem:[%s1125 + $0xc] sm:$0x3]
        %v1275 = vld [vmem:[%s1125 + $0xe] sm:$0x3]
        %v1276 = vld [vmem:[%s1125 + $0x10] sm:$0x3]
        %v1277 = vld [vmem:[%s1125 + $0x12] sm:$0x3]
        %v1278 = vld [vmem:[%s1125 + $0x14] sm:$0x3]
        %v1279 = vld [vmem:[%s1125 + $0x16] sm:$0x3]
        %v1280 = vld [vmem:[%s1125 + $0x18] sm:$0x3]
        %v1281 = vld [vmem:[%s1125 + $0x1a] sm:$0x3]
        %v1282 = vld [vmem:[%s1125 + $0x1c] sm:$0x3]
        %v1283 = vld [vmem:[%s1125 + $0x1e] sm:$0x3]
        %v1284 = vld [vmem:[%s1125 + $0x20] sm:$0x3]
        %v1285 = vld [vmem:[%s1125 + $0x22] sm:$0x3]
        %v1286 = vld [vmem:[%s1125 + $0x24] sm:$0x3]
        %v1287 = vld [vmem:[%s1125 + $0x26] sm:$0x3]
        %v1288 = vld [vmem:[%s1125 + $0x28] sm:$0x3]
        %v1289 = vld [vmem:[%s1125 + $0x2a] sm:$0x3]
        %v1290 = vld [vmem:[%s1125 + $0x2c] sm:$0x3]
        %v1291 = vld [vmem:[%s1125 + $0x2e] sm:$0x3]
        %v1292 = vld [vmem:[%s1125 + $0x30] sm:$0x3]
        %v1293 = vld [vmem:[%s1125 + $0x32] sm:$0x3]
        %v1294 = vld [vmem:[%s1125 + $0x34] sm:$0x3]
        %v1295 = vld [vmem:[%s1125 + $0x36] sm:$0x3]
        %v1296 = vld [vmem:[%s1125 + $0x38] sm:$0x3]
        %v1297 = vld [vmem:[%s1125 + $0x3a] sm:$0x3]
        %v1298 = vld [vmem:[%s1125 + $0x3c] sm:$0x3]
        %v1299 = vld [vmem:[%s1125 + $0x3e] sm:$0x3]
        %v1300 = vunpack.c.l.bf16 %v1268
        %v1301 = vunpack.c.l.bf16 %v1269
        %v1302 = vunpack.c.l.bf16 %v1270
        %v1303 = vunpack.c.l.bf16 %v1271
        %v1304 = vunpack.c.l.bf16 %v1272
        %v1305 = vunpack.c.l.bf16 %v1273
        %v1306 = vunpack.c.l.bf16 %v1274
        %v1307 = vunpack.c.l.bf16 %v1275
        %v1308 = vunpack.c.l.bf16 %v1276
        %v1309 = vunpack.c.l.bf16 %v1277
        %v1310 = vunpack.c.l.bf16 %v1278
        %v1311 = vunpack.c.l.bf16 %v1279
        %v1312 = vunpack.c.l.bf16 %v1280
        %v1313 = vunpack.c.l.bf16 %v1281
        %v1314 = vunpack.c.l.bf16 %v1282
        %v1315 = vunpack.c.l.bf16 %v1283
        %v1316 = vunpack.c.l.bf16 %v1284
        %v1317 = vunpack.c.l.bf16 %v1285
        %v1318 = vunpack.c.l.bf16 %v1286
        %v1319 = vunpack.c.l.bf16 %v1287
        %v1320 = vunpack.c.l.bf16 %v1288
        %v1321 = vunpack.c.l.bf16 %v1289
        %v1322 = vunpack.c.l.bf16 %v1290
        %v1323 = vunpack.c.l.bf16 %v1291
        %v1324 = vunpack.c.l.bf16 %v1292
        %v1325 = vunpack.c.l.bf16 %v1293
        %v1326 = vunpack.c.l.bf16 %v1294
        %v1327 = vunpack.c.l.bf16 %v1295
        %v1328 = vunpack.c.l.bf16 %v1296
        %v1329 = vunpack.c.l.bf16 %v1297
        %v1330 = vunpack.c.l.bf16 %v1298
        %v1331 = vunpack.c.l.bf16 %v1299
        %v1332 = vld [vmem:[%s1132] sm:$0x3]
        %v1333 = vld [vmem:[%s1132 + $0x2] sm:$0x3]
        %v1334 = vld [vmem:[%s1132 + $0x4] sm:$0x3]
        %v1335 = vld [vmem:[%s1132 + $0x6] sm:$0x3]
        %v1336 = vld [vmem:[%s1132 + $0x8] sm:$0x3]
        %v1337 = vld [vmem:[%s1132 + $0xa] sm:$0x3]
        %v1338 = vld [vmem:[%s1132 + $0xc] sm:$0x3]
        %v1339 = vld [vmem:[%s1132 + $0xe] sm:$0x3]
        %v1340 = vld [vmem:[%s1132 + $0x10] sm:$0x3]
        %v1341 = vld [vmem:[%s1132 + $0x12] sm:$0x3]
        %v1342 = vld [vmem:[%s1132 + $0x14] sm:$0x3]
        %v1343 = vld [vmem:[%s1132 + $0x16] sm:$0x3]
        %v1344 = vld [vmem:[%s1132 + $0x18] sm:$0x3]
        %v1345 = vld [vmem:[%s1132 + $0x1a] sm:$0x3]
        %v1346 = vld [vmem:[%s1132 + $0x1c] sm:$0x3]
        %v1347 = vld [vmem:[%s1132 + $0x1e] sm:$0x3]
        %v1348 = vld [vmem:[%s1132 + $0x20] sm:$0x3]
        %v1349 = vld [vmem:[%s1132 + $0x22] sm:$0x3]
        %v1350 = vld [vmem:[%s1132 + $0x24] sm:$0x3]
        %v1351 = vld [vmem:[%s1132 + $0x26] sm:$0x3]
        %v1352 = vld [vmem:[%s1132 + $0x28] sm:$0x3]
        %v1353 = vld [vmem:[%s1132 + $0x2a] sm:$0x3]
        %v1354 = vld [vmem:[%s1132 + $0x2c] sm:$0x3]
        %v1355 = vld [vmem:[%s1132 + $0x2e] sm:$0x3]
        %v1356 = vld [vmem:[%s1132 + $0x30] sm:$0x3]
        %v1357 = vld [vmem:[%s1132 + $0x32] sm:$0x3]
        %v1358 = vld [vmem:[%s1132 + $0x34] sm:$0x3]
        %v1359 = vld [vmem:[%s1132 + $0x36] sm:$0x3]
        %v1360 = vld [vmem:[%s1132 + $0x38] sm:$0x3]
        %v1361 = vld [vmem:[%s1132 + $0x3a] sm:$0x3]
        %v1362 = vld [vmem:[%s1132 + $0x3c] sm:$0x3]
        %v1363 = vld [vmem:[%s1132 + $0x3e] sm:$0x3]
        %v1364 = vld [vmem:[%s1139] sm:$0xf]
        %v1365 = vld [vmem:[%s1139 + $0x4] sm:$0xf]
        %v1366 = vld [vmem:[%s1139 + $0x8] sm:$0xf]
        %v1367 = vld [vmem:[%s1139 + $0xc] sm:$0xf]
        %v1368 = vld [vmem:[%s1139 + $0x10] sm:$0xf]
        %v1369 = vld [vmem:[%s1139 + $0x14] sm:$0xf]
        %v1370 = vld [vmem:[%s1139 + $0x18] sm:$0xf]
        %v1371 = vld [vmem:[%s1139 + $0x1c] sm:$0xf]
        %v1372 = vld [vmem:[%s1139 + $0x20] sm:$0xf]
        %v1373 = vld [vmem:[%s1139 + $0x24] sm:$0xf]
        %v1374 = vld [vmem:[%s1139 + $0x28] sm:$0xf]
        %v1375 = vld [vmem:[%s1139 + $0x2c] sm:$0xf]
        %v1376 = vld [vmem:[%s1139 + $0x30] sm:$0xf]
        %v1377 = vld [vmem:[%s1139 + $0x34] sm:$0xf]
        %v1378 = vld [vmem:[%s1139 + $0x38] sm:$0xf]
        %v1379 = vld [vmem:[%s1139 + $0x3c] sm:$0xf]
        %v1380 = vld [vmem:[%s1139 + $0x40] sm:$0xf]
        %v1381 = vld [vmem:[%s1139 + $0x44] sm:$0xf]
        %v1382 = vld [vmem:[%s1139 + $0x48] sm:$0xf]
        %v1383 = vld [vmem:[%s1139 + $0x4c] sm:$0xf]
        %v1384 = vld [vmem:[%s1139 + $0x50] sm:$0xf]
        %v1385 = vld [vmem:[%s1139 + $0x54] sm:$0xf]
        %v1386 = vld [vmem:[%s1139 + $0x58] sm:$0xf]
        %v1387 = vld [vmem:[%s1139 + $0x5c] sm:$0xf]
        %v1388 = vld [vmem:[%s1139 + $0x60] sm:$0xf]
        %v1389 = vld [vmem:[%s1139 + $0x64] sm:$0xf]
        %v1390 = vld [vmem:[%s1139 + $0x68] sm:$0xf]
        %v1391 = vld [vmem:[%s1139 + $0x6c] sm:$0xf]
        %v1392 = vld [vmem:[%s1139 + $0x70] sm:$0xf]
        %v1393 = vld [vmem:[%s1139 + $0x74] sm:$0xf]
        %v1394 = vld [vmem:[%s1139 + $0x78] sm:$0xf]
        %v1395 = vld [vmem:[%s1139 + $0x7c] sm:$0xf]
        %v1396 = vld [vmem:[%s1146] sm:$0x3]
        %v1397 = vld [vmem:[%s1146 + $0x2] sm:$0x3]
        %v1398 = vld [vmem:[%s1146 + $0x4] sm:$0x3]
        %v1399 = vld [vmem:[%s1146 + $0x6] sm:$0x3]
        %v1400 = vunpack.c.l.bf16 %v1396
        %v1401 = vunpack.c.l.bf16 %v1397
        %v1402 = vunpack.c.l.bf16 %v1398
        %v1403 = vunpack.c.l.bf16 %v1399
        %v1404 = vld [vmem:[%s1153] sm:$0x3]
        %v1405 = vld [vmem:[%s1153 + $0x2] sm:$0x3]
        %v1406 = vld [vmem:[%s1153 + $0x4] sm:$0x3]
        %v1407 = vld [vmem:[%s1153 + $0x6] sm:$0x3]
        %v1408 = vld [vmem:[%s1160] sm:$0xf]
        %v1409 = vld [vmem:[%s1160 + $0x4] sm:$0xf]
        %v1410 = vld [vmem:[%s1160 + $0x8] sm:$0xf]
        %v1411 = vld [vmem:[%s1160 + $0xc] sm:$0xf]
        %v1412 = vmul.f32 %v1300, %v1300
        %v1413 = vmul.f32 %v1301, %v1301
        %v1414 = vmul.f32 %v1302, %v1302
        %v1415 = vmul.f32 %v1303, %v1303
        %v1416 = vmul.f32 %v1304, %v1304
        %v1417 = vmul.f32 %v1305, %v1305
        %v1418 = vmul.f32 %v1306, %v1306
        %v1419 = vmul.f32 %v1307, %v1307
        %v1420 = vmul.f32 %v1308, %v1308
        %v1421 = vmul.f32 %v1309, %v1309
        %v1422 = vmul.f32 %v1310, %v1310
        %v1423 = vmul.f32 %v1311, %v1311
        %v1424 = vmul.f32 %v1312, %v1312
        %v1425 = vmul.f32 %v1313, %v1313
        %v1426 = vmul.f32 %v1314, %v1314
        %v1427 = vmul.f32 %v1315, %v1315
        %v1428 = vmul.f32 %v1316, %v1316
        %v1429 = vmul.f32 %v1317, %v1317
        %v1430 = vmul.f32 %v1318, %v1318
        %v1431 = vmul.f32 %v1319, %v1319
        %v1432 = vmul.f32 %v1320, %v1320
        %v1433 = vmul.f32 %v1321, %v1321
        %v1434 = vmul.f32 %v1322, %v1322
        %v1435 = vmul.f32 %v1323, %v1323
        %v1436 = vmul.f32 %v1324, %v1324
        %v1437 = vmul.f32 %v1325, %v1325
        %v1438 = vmul.f32 %v1326, %v1326
        %v1439 = vmul.f32 %v1327, %v1327
        %v1440 = vmul.f32 %v1328, %v1328
        %v1441 = vmul.f32 %v1329, %v1329
        %v1442 = vmul.f32 %v1330, %v1330
        %v1443 = vmul.f32 %v1331, %v1331
        %vm1444 = vcmask 60416
        %v1445 = vsel %vm1444, %v1412, 0.0
        %1446 = vadd.xlane.f32.xlu0 %v1445
        %v1447 = vpop.xlane.xlu0 %1446
        %v1448 = vsel %vm1444, %v1413, 0.0
        %1449 = vadd.xlane.f32.xlu0 %v1448
        %v1450 = vpop.xlane.xlu0 %1449
        %v1451 = vsel %vm1444, %v1414, 0.0
        %1452 = vadd.xlane.f32.xlu0 %v1451
        %v1453 = vpop.xlane.xlu0 %1452
        %v1454 = vsel %vm1444, %v1415, 0.0
        %1455 = vadd.xlane.f32.xlu0 %v1454
        %v1456 = vpop.xlane.xlu0 %1455
        %v1457 = vsel %vm1444, %v1416, 0.0
        %1458 = vadd.xlane.f32.xlu0 %v1457
        %v1459 = vpop.xlane.xlu0 %1458
        %v1460 = vsel %vm1444, %v1417, 0.0
        %1461 = vadd.xlane.f32.xlu0 %v1460
        %v1462 = vpop.xlane.xlu0 %1461
        %v1463 = vsel %vm1444, %v1418, 0.0
        %1464 = vadd.xlane.f32.xlu0 %v1463
        %v1465 = vpop.xlane.xlu0 %1464
        %v1466 = vsel %vm1444, %v1419, 0.0
        %1467 = vadd.xlane.f32.xlu0 %v1466
        %v1468 = vpop.xlane.xlu0 %1467
        %v1469 = vsel %vm1444, %v1420, 0.0
        %1470 = vadd.xlane.f32.xlu0 %v1469
        %v1471 = vpop.xlane.xlu0 %1470
        %v1472 = vsel %vm1444, %v1421, 0.0
        %1473 = vadd.xlane.f32.xlu0 %v1472
        %v1474 = vpop.xlane.xlu0 %1473
        %v1475 = vsel %vm1444, %v1422, 0.0
        %1476 = vadd.xlane.f32.xlu0 %v1475
        %v1477 = vpop.xlane.xlu0 %1476
        %v1478 = vsel %vm1444, %v1423, 0.0
        %1479 = vadd.xlane.f32.xlu0 %v1478
        %v1480 = vpop.xlane.xlu0 %1479
        %v1481 = vsel %vm1444, %v1424, 0.0
        %1482 = vadd.xlane.f32.xlu0 %v1481
        %v1483 = vpop.xlane.xlu0 %1482
        %v1484 = vsel %vm1444, %v1425, 0.0
        %1485 = vadd.xlane.f32.xlu0 %v1484
        %v1486 = vpop.xlane.xlu0 %1485
        %v1487 = vsel %vm1444, %v1426, 0.0
        %1488 = vadd.xlane.f32.xlu0 %v1487
        %v1489 = vpop.xlane.xlu0 %1488
        %v1490 = vsel %vm1444, %v1427, 0.0
        %1491 = vadd.xlane.f32.xlu0 %v1490
        %v1492 = vpop.xlane.xlu0 %1491
        %v1493 = vsel %vm1444, %v1428, 0.0
        %1494 = vadd.xlane.f32.xlu0 %v1493
        %v1495 = vpop.xlane.xlu0 %1494
        %v1496 = vsel %vm1444, %v1429, 0.0
        %1497 = vadd.xlane.f32.xlu0 %v1496
        %v1498 = vpop.xlane.xlu0 %1497
        %v1499 = vsel %vm1444, %v1430, 0.0
        %1500 = vadd.xlane.f32.xlu0 %v1499
        %v1501 = vpop.xlane.xlu0 %1500
        %v1502 = vsel %vm1444, %v1431, 0.0
        %1503 = vadd.xlane.f32.xlu0 %v1502
        %v1504 = vpop.xlane.xlu0 %1503
        %v1505 = vsel %vm1444, %v1432, 0.0
        %1506 = vadd.xlane.f32.xlu0 %v1505
        %v1507 = vpop.xlane.xlu0 %1506
        %v1508 = vsel %vm1444, %v1433, 0.0
        %1509 = vadd.xlane.f32.xlu0 %v1508
        %v1510 = vpop.xlane.xlu0 %1509
        %v1511 = vsel %vm1444, %v1434, 0.0
        %1512 = vadd.xlane.f32.xlu0 %v1511
        %v1513 = vpop.xlane.xlu0 %1512
        %v1514 = vsel %vm1444, %v1435, 0.0
        %1515 = vadd.xlane.f32.xlu0 %v1514
        %v1516 = vpop.xlane.xlu0 %1515
        %v1517 = vsel %vm1444, %v1436, 0.0
        %1518 = vadd.xlane.f32.xlu0 %v1517
        %v1519 = vpop.xlane.xlu0 %1518
        %v1520 = vsel %vm1444, %v1437, 0.0
        %1521 = vadd.xlane.f32.xlu0 %v1520
        %v1522 = vpop.xlane.xlu0 %1521
        %v1523 = vsel %vm1444, %v1438, 0.0
        %1524 = vadd.xlane.f32.xlu0 %v1523
        %v1525 = vpop.xlane.xlu0 %1524
        %v1526 = vsel %vm1444, %v1439, 0.0
        %1527 = vadd.xlane.f32.xlu0 %v1526
        %v1528 = vpop.xlane.xlu0 %1527
        %v1529 = vsel %vm1444, %v1440, 0.0
        %1530 = vadd.xlane.f32.xlu0 %v1529
        %v1531 = vpop.xlane.xlu0 %1530
        %v1532 = vsel %vm1444, %v1441, 0.0
        %1533 = vadd.xlane.f32.xlu0 %v1532
        %v1534 = vpop.xlane.xlu0 %1533
        %v1535 = vsel %vm1444, %v1442, 0.0
        %1536 = vadd.xlane.f32.xlu0 %v1535
        %v1537 = vpop.xlane.xlu0 %1536
        %v1538 = vsel %vm1444, %v1443, 0.0
        %1539 = vadd.xlane.f32.xlu0 %v1538
        %v1540 = vpop.xlane.xlu0 %1539
        %v1541 = vmax.f32 %v1447, 1e-24
        %v1542 = vmax.f32 %v1450, 1e-24
        %v1543 = vmax.f32 %v1453, 1e-24
        %v1544 = vmax.f32 %v1456, 1e-24
        %v1545 = vmax.f32 %v1459, 1e-24
        %v1546 = vmax.f32 %v1462, 1e-24
        %v1547 = vmax.f32 %v1465, 1e-24
        %v1548 = vmax.f32 %v1468, 1e-24
        %v1549 = vmax.f32 %v1471, 1e-24
        %v1550 = vmax.f32 %v1474, 1e-24
        %v1551 = vmax.f32 %v1477, 1e-24
        %v1552 = vmax.f32 %v1480, 1e-24
        %v1553 = vmax.f32 %v1483, 1e-24
        %v1554 = vmax.f32 %v1486, 1e-24
        %v1555 = vmax.f32 %v1489, 1e-24
        %v1556 = vmax.f32 %v1492, 1e-24
        %v1557 = vmax.f32 %v1495, 1e-24
        %v1558 = vmax.f32 %v1498, 1e-24
        %v1559 = vmax.f32 %v1501, 1e-24
        %v1560 = vmax.f32 %v1504, 1e-24
        %v1561 = vmax.f32 %v1507, 1e-24
        %v1562 = vmax.f32 %v1510, 1e-24
        %v1563 = vmax.f32 %v1513, 1e-24
        %v1564 = vmax.f32 %v1516, 1e-24
        %v1565 = vmax.f32 %v1519, 1e-24
        %v1566 = vmax.f32 %v1522, 1e-24
        %v1567 = vmax.f32 %v1525, 1e-24
        %v1568 = vmax.f32 %v1528, 1e-24
        %v1569 = vmax.f32 %v1531, 1e-24
        %v1570 = vmax.f32 %v1534, 1e-24
        %v1571 = vmax.f32 %v1537, 1e-24
        %v1572 = vmax.f32 %v1540, 1e-24
        %v1573 = vrsqrt.pop %v1541
        %v1574 = vrsqrt.pop %v1542
        %v1575 = vrsqrt.pop %v1543
        %v1576 = vrsqrt.pop %v1544
        %v1577 = vrsqrt.pop %v1545
        %v1578 = vrsqrt.pop %v1546
        %v1579 = vrsqrt.pop %v1547
        %v1580 = vrsqrt.pop %v1548
        %v1581 = vrsqrt.pop %v1549
        %v1582 = vrsqrt.pop %v1550
        %v1583 = vrsqrt.pop %v1551
        %v1584 = vrsqrt.pop %v1552
        %v1585 = vrsqrt.pop %v1553
        %v1586 = vrsqrt.pop %v1554
        %v1587 = vrsqrt.pop %v1555
        %v1588 = vrsqrt.pop %v1556
        %v1589 = vrsqrt.pop %v1557
        %v1590 = vrsqrt.pop %v1558
        %v1591 = vrsqrt.pop %v1559
        %v1592 = vrsqrt.pop %v1560
        %v1593 = vrsqrt.pop %v1561
        %v1594 = vrsqrt.pop %v1562
        %v1595 = vrsqrt.pop %v1563
        %v1596 = vrsqrt.pop %v1564
        %v1597 = vrsqrt.pop %v1565
        %v1598 = vrsqrt.pop %v1566
        %v1599 = vrsqrt.pop %v1567
        %v1600 = vrsqrt.pop %v1568
        %v1601 = vrsqrt.pop %v1569
        %v1602 = vrsqrt.pop %v1570
        %v1603 = vrsqrt.pop %v1571
        %v1604 = vrsqrt.pop %v1572
        %v1605 = vmul.f32 %v1300, %v1573
        %v1606 = vmul.f32 %v1301, %v1574
        %v1607 = vmul.f32 %v1302, %v1575
        %v1608 = vmul.f32 %v1303, %v1576
        %v1609 = vmul.f32 %v1304, %v1577
        %v1610 = vmul.f32 %v1305, %v1578
        %v1611 = vmul.f32 %v1306, %v1579
        %v1612 = vmul.f32 %v1307, %v1580
        %v1613 = vmul.f32 %v1308, %v1581
        %v1614 = vmul.f32 %v1309, %v1582
        %v1615 = vmul.f32 %v1310, %v1583
        %v1616 = vmul.f32 %v1311, %v1584
        %v1617 = vmul.f32 %v1312, %v1585
        %v1618 = vmul.f32 %v1313, %v1586
        %v1619 = vmul.f32 %v1314, %v1587
        %v1620 = vmul.f32 %v1315, %v1588
        %v1621 = vmul.f32 %v1316, %v1589
        %v1622 = vmul.f32 %v1317, %v1590
        %v1623 = vmul.f32 %v1318, %v1591
        %v1624 = vmul.f32 %v1319, %v1592
        %v1625 = vmul.f32 %v1320, %v1593
        %v1626 = vmul.f32 %v1321, %v1594
        %v1627 = vmul.f32 %v1322, %v1595
        %v1628 = vmul.f32 %v1323, %v1596
        %v1629 = vmul.f32 %v1324, %v1597
        %v1630 = vmul.f32 %v1325, %v1598
        %v1631 = vmul.f32 %v1326, %v1599
        %v1632 = vmul.f32 %v1327, %v1600
        %v1633 = vmul.f32 %v1328, %v1601
        %v1634 = vmul.f32 %v1329, %v1602
        %v1635 = vmul.f32 %v1330, %v1603
        %v1636 = vmul.f32 %v1331, %v1604
        %v1637 = vmul.f32 %v1400, %v1400
        %v1638 = vmul.f32 %v1401, %v1401
        %v1639 = vmul.f32 %v1402, %v1402
        %v1640 = vmul.f32 %v1403, %v1403
        %v1641 = vsel %vm1444, %v1637, 0.0
        %1642 = vadd.xlane.f32.xlu0 %v1641
        %v1643 = vpop.xlane.xlu0 %1642
        %v1644 = vsel %vm1444, %v1638, 0.0
        %1645 = vadd.xlane.f32.xlu0 %v1644
        %v1646 = vpop.xlane.xlu0 %1645
        %v1647 = vsel %vm1444, %v1639, 0.0
        %1648 = vadd.xlane.f32.xlu0 %v1647
        %v1649 = vpop.xlane.xlu0 %1648
        %v1650 = vsel %vm1444, %v1640, 0.0
        %1651 = vadd.xlane.f32.xlu0 %v1650
        %v1652 = vpop.xlane.xlu0 %1651
        %v1653 = vmax.f32 %v1643, 1e-24
        %v1654 = vmax.f32 %v1646, 1e-24
        %v1655 = vmax.f32 %v1649, 1e-24
        %v1656 = vmax.f32 %v1652, 1e-24
        %v1657 = vrsqrt.pop %v1653
        %v1658 = vrsqrt.pop %v1654
        %v1659 = vrsqrt.pop %v1655
        %v1660 = vrsqrt.pop %v1656
        %v1661 = vmul.f32 %v1400, %v1657
        %v1662 = vmul.f32 %v1401, %v1658
        %v1663 = vmul.f32 %v1402, %v1659
        %v1664 = vmul.f32 %v1403, %v1660
        %1665 = vset.pattern.permute.xlu0 0
        %1666 = vperm.xlu0 %1665, %v1408
        %v1667 = vpop.permute.xlu0 %1666
        %1668 = vset.pattern.permute.xlu0 0
        %1669 = vperm.xlu0 %1668, %v1409
        %v1670 = vpop.permute.xlu0 %1669
        %1671 = vset.pattern.permute.xlu0 0
        %1672 = vperm.xlu0 %1671, %v1410
        %v1673 = vpop.permute.xlu0 %1672
        %1674 = vset.pattern.permute.xlu0 0
        %1675 = vperm.xlu0 %1674, %v1411
        %v1676 = vpop.permute.xlu0 %1675
        %v1677 = vlaneseq
        %v1678 = vand.u32 %v1677, 127
        %v1679 = vlaneseq
        %v1680 = vshrl.u32 %v1679, 7
        %v1681 = vsub.s32 %v1678, %v1680
        %v1682 = vrot.slane %v1667, %v1681
        %v1683 = vlaneseq
        %v1684 = vshrl.u32 %v1683, 7
        %v1685 = vsub.s32 %v1678, %v1684
        %v1686 = vrot.slane %v1670, %v1685
        %v1687 = vlaneseq
        %v1688 = vshrl.u32 %v1687, 7
        %v1689 = vsub.s32 %v1678, %v1688
        %v1690 = vrot.slane %v1673, %v1689
        %v1691 = vlaneseq
        %v1692 = vshrl.u32 %v1691, 7
        %v1693 = vsub.s32 %v1678, %v1692
        %v1694 = vrot.slane %v1676, %v1693
        %1695 = vset.pattern.permute.xlu0 0
        %1696 = vperm.xlu0 %1695, %v1364
        %v1697 = vpop.permute.xlu0 %1696
        %1698 = vset.pattern.permute.xlu0 0
        %1699 = vperm.xlu0 %1698, %v1365
        %v1700 = vpop.permute.xlu0 %1699
        %1701 = vset.pattern.permute.xlu0 0
        %1702 = vperm.xlu0 %1701, %v1366
        %v1703 = vpop.permute.xlu0 %1702
        %1704 = vset.pattern.permute.xlu0 0
        %1705 = vperm.xlu0 %1704, %v1367
        %v1706 = vpop.permute.xlu0 %1705
        %1707 = vset.pattern.permute.xlu0 0
        %1708 = vperm.xlu0 %1707, %v1368
        %v1709 = vpop.permute.xlu0 %1708
        %1710 = vset.pattern.permute.xlu0 0
        %1711 = vperm.xlu0 %1710, %v1369
        %v1712 = vpop.permute.xlu0 %1711
        %1713 = vset.pattern.permute.xlu0 0
        %1714 = vperm.xlu0 %1713, %v1370
        %v1715 = vpop.permute.xlu0 %1714
        %1716 = vset.pattern.permute.xlu0 0
        %1717 = vperm.xlu0 %1716, %v1372
        %v1718 = vpop.permute.xlu0 %1717
        %1719 = vset.pattern.permute.xlu0 0
        %1720 = vperm.xlu0 %1719, %v1373
        %v1721 = vpop.permute.xlu0 %1720
        %1722 = vset.pattern.permute.xlu0 0
        %1723 = vperm.xlu0 %1722, %v1374
        %v1724 = vpop.permute.xlu0 %1723
        %1725 = vset.pattern.permute.xlu0 0
        %1726 = vperm.xlu0 %1725, %v1375
        %v1727 = vpop.permute.xlu0 %1726
        %1728 = vset.pattern.permute.xlu0 0
        %1729 = vperm.xlu0 %1728, %v1376
        %v1730 = vpop.permute.xlu0 %1729
        %1731 = vset.pattern.permute.xlu0 0
        %1732 = vperm.xlu0 %1731, %v1377
        %v1733 = vpop.permute.xlu0 %1732
        %1734 = vset.pattern.permute.xlu0 0
        %1735 = vperm.xlu0 %1734, %v1378
        %v1736 = vpop.permute.xlu0 %1735
        %1737 = vset.pattern.permute.xlu0 0
        %1738 = vperm.xlu0 %1737, %v1380
        %v1739 = vpop.permute.xlu0 %1738
        %1740 = vset.pattern.permute.xlu0 0
        %1741 = vperm.xlu0 %1740, %v1381
        %v1742 = vpop.permute.xlu0 %1741
        %1743 = vset.pattern.permute.xlu0 0
        %1744 = vperm.xlu0 %1743, %v1382
        %v1745 = vpop.permute.xlu0 %1744
        %1746 = vset.pattern.permute.xlu0 0
        %1747 = vperm.xlu0 %1746, %v1383
        %v1748 = vpop.permute.xlu0 %1747
        %1749 = vset.pattern.permute.xlu0 0
        %1750 = vperm.xlu0 %1749, %v1384
        %v1751 = vpop.permute.xlu0 %1750
        %1752 = vset.pattern.permute.xlu0 0
        %1753 = vperm.xlu0 %1752, %v1385
        %v1754 = vpop.permute.xlu0 %1753
        %1755 = vset.pattern.permute.xlu0 0
        %1756 = vperm.xlu0 %1755, %v1386
        %v1757 = vpop.permute.xlu0 %1756
        %1758 = vset.pattern.permute.xlu0 0
        %1759 = vperm.xlu0 %1758, %v1388
        %v1760 = vpop.permute.xlu0 %1759
        %1761 = vset.pattern.permute.xlu0 0
        %1762 = vperm.xlu0 %1761, %v1389
        %v1763 = vpop.permute.xlu0 %1762
        %1764 = vset.pattern.permute.xlu0 0
        %1765 = vperm.xlu0 %1764, %v1390
        %v1766 = vpop.permute.xlu0 %1765
        %1767 = vset.pattern.permute.xlu0 0
        %1768 = vperm.xlu0 %1767, %v1391
        %v1769 = vpop.permute.xlu0 %1768
        %1770 = vset.pattern.permute.xlu0 0
        %1771 = vperm.xlu0 %1770, %v1392
        %v1772 = vpop.permute.xlu0 %1771
        %1773 = vset.pattern.permute.xlu0 0
        %1774 = vperm.xlu0 %1773, %v1393
        %v1775 = vpop.permute.xlu0 %1774
        %1776 = vset.pattern.permute.xlu0 0
        %1777 = vperm.xlu0 %1776, %v1394
        %v1778 = vpop.permute.xlu0 %1777
        %v1779 = vlaneseq
        %v1780 = vshrl.u32 %v1779, 7
        %v1781 = vsub.s32 %v1678, %v1780
        %v1782 = vrot.slane %v1697, %v1781
        %v1783 = vlaneseq
        %v1784 = vshrl.u32 %v1783, 7
        %v1785 = vsub.s32 %v1678, %v1784
        %v1786 = vrot.slane %v1700, %v1785
        %v1787 = vlaneseq
        %v1788 = vshrl.u32 %v1787, 7
        %v1789 = vsub.s32 %v1678, %v1788
        %v1790 = vrot.slane %v1703, %v1789
        %v1791 = vlaneseq
        %v1792 = vshrl.u32 %v1791, 7
        %v1793 = vsub.s32 %v1678, %v1792
        %v1794 = vrot.slane %v1706, %v1793
        %v1795 = vlaneseq
        %v1796 = vshrl.u32 %v1795, 7
        %v1797 = vsub.s32 %v1678, %v1796
        %v1798 = vrot.slane %v1709, %v1797
        %v1799 = vlaneseq
        %v1800 = vshrl.u32 %v1799, 7
        %v1801 = vsub.s32 %v1678, %v1800
        %v1802 = vrot.slane %v1712, %v1801
        %v1803 = vlaneseq
        %v1804 = vshrl.u32 %v1803, 7
        %v1805 = vsub.s32 %v1678, %v1804
        %v1806 = vrot.slane %v1715, %v1805
        %v1807 = vlaneseq
        %v1808 = vshrl.u32 %v1807, 7
        %v1809 = vsub.s32 %v1678, %v1808
        %v1810 = vrot.slane %v1718, %v1809
        %v1811 = vlaneseq
        %v1812 = vshrl.u32 %v1811, 7
        %v1813 = vsub.s32 %v1678, %v1812
        %v1814 = vrot.slane %v1721, %v1813
        %v1815 = vlaneseq
        %v1816 = vshrl.u32 %v1815, 7
        %v1817 = vsub.s32 %v1678, %v1816
        %v1818 = vrot.slane %v1724, %v1817
        %v1819 = vlaneseq
        %v1820 = vshrl.u32 %v1819, 7
        %v1821 = vsub.s32 %v1678, %v1820
        %v1822 = vrot.slane %v1727, %v1821
        %v1823 = vlaneseq
        %v1824 = vshrl.u32 %v1823, 7
        %v1825 = vsub.s32 %v1678, %v1824
        %v1826 = vrot.slane %v1730, %v1825
        %v1827 = vlaneseq
        %v1828 = vshrl.u32 %v1827, 7
        %v1829 = vsub.s32 %v1678, %v1828
        %v1830 = vrot.slane %v1733, %v1829
        %v1831 = vlaneseq
        %v1832 = vshrl.u32 %v1831, 7
        %v1833 = vsub.s32 %v1678, %v1832
        %v1834 = vrot.slane %v1736, %v1833
        %v1835 = vlaneseq
        %v1836 = vshrl.u32 %v1835, 7
        %v1837 = vsub.s32 %v1678, %v1836
        %v1838 = vrot.slane %v1739, %v1837
        %v1839 = vlaneseq
        %v1840 = vshrl.u32 %v1839, 7
        %v1841 = vsub.s32 %v1678, %v1840
        %v1842 = vrot.slane %v1742, %v1841
        %v1843 = vlaneseq
        %v1844 = vshrl.u32 %v1843, 7
        %v1845 = vsub.s32 %v1678, %v1844
        %v1846 = vrot.slane %v1745, %v1845
        %v1847 = vlaneseq
        %v1848 = vshrl.u32 %v1847, 7
        %v1849 = vsub.s32 %v1678, %v1848
        %v1850 = vrot.slane %v1748, %v1849
        %v1851 = vlaneseq
        %v1852 = vshrl.u32 %v1851, 7
        %v1853 = vsub.s32 %v1678, %v1852
        %v1854 = vrot.slane %v1751, %v1853
        %v1855 = vlaneseq
        %v1856 = vshrl.u32 %v1855, 7
        %v1857 = vsub.s32 %v1678, %v1856
        %v1858 = vrot.slane %v1754, %v1857
        %v1859 = vlaneseq
        %v1860 = vshrl.u32 %v1859, 7
        %v1861 = vsub.s32 %v1678, %v1860
        %v1862 = vrot.slane %v1757, %v1861
        %v1863 = vlaneseq
        %v1864 = vshrl.u32 %v1863, 7
        %v1865 = vsub.s32 %v1678, %v1864
        %v1866 = vrot.slane %v1760, %v1865
        %v1867 = vlaneseq
        %v1868 = vshrl.u32 %v1867, 7
        %v1869 = vsub.s32 %v1678, %v1868
        %v1870 = vrot.slane %v1763, %v1869
        %v1871 = vlaneseq
        %v1872 = vshrl.u32 %v1871, 7
        %v1873 = vsub.s32 %v1678, %v1872
        %v1874 = vrot.slane %v1766, %v1873
        %v1875 = vlaneseq
        %v1876 = vshrl.u32 %v1875, 7
        %v1877 = vsub.s32 %v1678, %v1876
        %v1878 = vrot.slane %v1769, %v1877
        %v1879 = vlaneseq
        %v1880 = vshrl.u32 %v1879, 7
        %v1881 = vsub.s32 %v1678, %v1880
        %v1882 = vrot.slane %v1772, %v1881
        %v1883 = vlaneseq
        %v1884 = vshrl.u32 %v1883, 7
        %v1885 = vsub.s32 %v1678, %v1884
        %v1886 = vrot.slane %v1775, %v1885
        %v1887 = vlaneseq
        %v1888 = vshrl.u32 %v1887, 7
        %v1889 = vsub.s32 %v1678, %v1888
        %v1890 = vrot.slane %v1778, %v1889
        %vm1891 = vcmask 1042434
        %v1892 = vsel %vm1891, %v1786, %v1782
        %vm1893 = vcmask 1043459
        %v1894 = vsel %vm1893, %v1790, %v1892
        %vm1895 = vcmask 1044484
        %v1896 = vsel %vm1895, %v1794, %v1894
        %vm1897 = vcmask 1045509
        %v1898 = vsel %vm1897, %v1798, %v1896
        %vm1899 = vcmask 1046534
        %v1900 = vsel %vm1899, %v1802, %v1898
        %vm1901 = vcmask 1047559
        %v1902 = vsel %vm1901, %v1806, %v1900
        %v1903 = vsel %vm1891, %v1814, %v1810
        %v1904 = vsel %vm1893, %v1818, %v1903
        %v1905 = vsel %vm1895, %v1822, %v1904
        %v1906 = vsel %vm1897, %v1826, %v1905
        %v1907 = vsel %vm1899, %v1830, %v1906
        %v1908 = vsel %vm1901, %v1834, %v1907
        %v1909 = vsel %vm1891, %v1842, %v1838
        %v1910 = vsel %vm1893, %v1846, %v1909
        %v1911 = vsel %vm1895, %v1850, %v1910
        %v1912 = vsel %vm1897, %v1854, %v1911
        %v1913 = vsel %vm1899, %v1858, %v1912
        %v1914 = vsel %vm1901, %v1862, %v1913
        %v1915 = vsel %vm1891, %v1870, %v1866
        %v1916 = vsel %vm1893, %v1874, %v1915
        %v1917 = vsel %vm1895, %v1878, %v1916
        %v1918 = vsel %vm1897, %v1882, %v1917
        %v1919 = vsel %vm1899, %v1886, %v1918
        %v1920 = vsel %vm1901, %v1890, %v1919
        %vm1921 = vcmask 1040384
        %v1922 = vsel %vm1921, %v1682, %v1902
        %v1923 = vsel %vm1921, %v1686, %v1908
        %v1924 = vsel %vm1921, %v1690, %v1914
        %v1925 = vsel %vm1921, %v1694, %v1920
        %v1958 = vcombine.low %v1661, %v1661
        %v1959 = vcombine.low %v1605, %v1605
        %v1960 = vcombine.low %v1606, %v1606
        %v1961 = vcombine.low %v1607, %v1607
        %v1962 = vcombine.low %v1608, %v1608
        %v1963 = vcombine.low %v1609, %v1609
        %v1964 = vcombine.low %v1610, %v1610
        %v1965 = vcombine.low %v1611, %v1611
        %v1966 = vcombine.low %v1662, %v1662
        %v1967 = vcombine.low %v1613, %v1613
        %v1968 = vcombine.low %v1614, %v1614
        %v1969 = vcombine.low %v1615, %v1615
        %v1970 = vcombine.low %v1616, %v1616
        %v1971 = vcombine.low %v1617, %v1617
        %v1972 = vcombine.low %v1618, %v1618
        %v1973 = vcombine.low %v1619, %v1619
        %v1974 = vcombine.low %v1663, %v1663
        %v1975 = vcombine.low %v1621, %v1621
        %v1976 = vcombine.low %v1622, %v1622
        %v1977 = vcombine.low %v1623, %v1623
        %v1978 = vcombine.low %v1624, %v1624
        %v1979 = vcombine.low %v1625, %v1625
        %v1980 = vcombine.low %v1626, %v1626
        %v1981 = vcombine.low %v1627, %v1627
        %v1982 = vcombine.low %v1664, %v1664
        %v1983 = vcombine.low %v1629, %v1629
        %v1984 = vcombine.low %v1630, %v1630
        %v1985 = vcombine.low %v1631, %v1631
        %v1986 = vcombine.low %v1632, %v1632
        %v1987 = vcombine.low %v1633, %v1633
        %v1988 = vcombine.low %v1634, %v1634
        %v1989 = vcombine.low %v1635, %v1635
        %vm2022 = vcmask 1043456
        %v2023 = vsel %vm2022, %v1605, %v1958
        %v2024 = vsel %vm2022, %v1606, %v1959
        %v2025 = vsel %vm2022, %v1607, %v1960
        %v2026 = vsel %vm2022, %v1608, %v1961
        %v2027 = vsel %vm2022, %v1609, %v1962
        %v2028 = vsel %vm2022, %v1610, %v1963
        %v2029 = vsel %vm2022, %v1611, %v1964
        %v2030 = vsel %vm2022, %v1612, %v1965
        %v2031 = vsel %vm2022, %v1613, %v1966
        %v2032 = vsel %vm2022, %v1614, %v1967
        %v2033 = vsel %vm2022, %v1615, %v1968
        %v2034 = vsel %vm2022, %v1616, %v1969
        %v2035 = vsel %vm2022, %v1617, %v1970
        %v2036 = vsel %vm2022, %v1618, %v1971
        %v2037 = vsel %vm2022, %v1619, %v1972
        %v2038 = vsel %vm2022, %v1620, %v1973
        %v2039 = vsel %vm2022, %v1621, %v1974
        %v2040 = vsel %vm2022, %v1622, %v1975
        %v2041 = vsel %vm2022, %v1623, %v1976
        %v2042 = vsel %vm2022, %v1624, %v1977
        %v2043 = vsel %vm2022, %v1625, %v1978
        %v2044 = vsel %vm2022, %v1626, %v1979
        %v2045 = vsel %vm2022, %v1627, %v1980
        %v2046 = vsel %vm2022, %v1628, %v1981
        %v2047 = vsel %vm2022, %v1629, %v1982
        %v2048 = vsel %vm2022, %v1630, %v1983
        %v2049 = vsel %vm2022, %v1631, %v1984
        %v2050 = vsel %vm2022, %v1632, %v1985
        %v2051 = vsel %vm2022, %v1633, %v1986
        %v2052 = vsel %vm2022, %v1634, %v1987
        %v2053 = vsel %vm2022, %v1635, %v1988
        %v2054 = vsel %vm2022, %v1636, %v1989
        %v2087 = vcombine.low %v1404, %v1404
        %v2089 = vunpack.c.l.s4 1983009808
        %v2090 = vunpack.c.0.s8 %v2089
        %v2091 = vlaneseq
        %v2092 = vshrl.u32 %v2091, 7
        %v2093 = vsub.s32 %v2090, %v2092
        %v2094 = vrot.slane %v2087, %v2093
        %v2095 = vcombine.low %v1332, %v1332
        %v2097 = vunpack.c.l.s4 1983009808
        %v2098 = vunpack.c.0.s8 %v2097
        %v2099 = vlaneseq
        %v2100 = vshrl.u32 %v2099, 7
        %v2101 = vsub.s32 %v2098, %v2100
        %v2102 = vrot.slane %v2095, %v2101
        %v2103 = vcombine.low %v1333, %v1333
        %v2105 = vunpack.c.l.s4 1983009808
        %v2106 = vunpack.c.0.s8 %v2105
        %v2107 = vlaneseq
        %v2108 = vshrl.u32 %v2107, 7
        %v2109 = vsub.s32 %v2106, %v2108
        %v2110 = vrot.slane %v2103, %v2109
        %v2111 = vcombine.low %v1334, %v1334
        %v2113 = vunpack.c.l.s4 1983009808
        %v2114 = vunpack.c.0.s8 %v2113
        %v2115 = vlaneseq
        %v2116 = vshrl.u32 %v2115, 7
        %v2117 = vsub.s32 %v2114, %v2116
        %v2118 = vrot.slane %v2111, %v2117
        %v2119 = vcombine.low %v1335, %v1335
        %v2121 = vunpack.c.l.s4 1983009808
        %v2122 = vunpack.c.0.s8 %v2121
        %v2123 = vlaneseq
        %v2124 = vshrl.u32 %v2123, 7
        %v2125 = vsub.s32 %v2122, %v2124
        %v2126 = vrot.slane %v2119, %v2125
        %v2127 = vcombine.low %v1336, %v1336
        %v2129 = vunpack.c.l.s4 1983009808
        %v2130 = vunpack.c.0.s8 %v2129
        %v2131 = vlaneseq
        %v2132 = vshrl.u32 %v2131, 7
        %v2133 = vsub.s32 %v2130, %v2132
        %v2134 = vrot.slane %v2127, %v2133
        %v2135 = vcombine.low %v1337, %v1337
        %v2137 = vunpack.c.l.s4 1983009808
        %v2138 = vunpack.c.0.s8 %v2137
        %v2139 = vlaneseq
        %v2140 = vshrl.u32 %v2139, 7
        %v2141 = vsub.s32 %v2138, %v2140
        %v2142 = vrot.slane %v2135, %v2141
        %v2143 = vcombine.low %v1338, %v1338
        %v2145 = vunpack.c.l.s4 1983009808
        %v2146 = vunpack.c.0.s8 %v2145
        %v2147 = vlaneseq
        %v2148 = vshrl.u32 %v2147, 7
        %v2149 = vsub.s32 %v2146, %v2148
        %v2150 = vrot.slane %v2143, %v2149
        %v2151 = vcombine.low %v1405, %v1405
        %v2153 = vunpack.c.l.s4 1983009808
        %v2154 = vunpack.c.0.s8 %v2153
        %v2155 = vlaneseq
        %v2156 = vshrl.u32 %v2155, 7
        %v2157 = vsub.s32 %v2154, %v2156
        %v2158 = vrot.slane %v2151, %v2157
        %v2159 = vcombine.low %v1340, %v1340
        %v2161 = vunpack.c.l.s4 1983009808
        %v2162 = vunpack.c.0.s8 %v2161
        %v2163 = vlaneseq
        %v2164 = vshrl.u32 %v2163, 7
        %v2165 = vsub.s32 %v2162, %v2164
        %v2166 = vrot.slane %v2159, %v2165
        %v2167 = vcombine.low %v1341, %v1341
        %v2169 = vunpack.c.l.s4 1983009808
        %v2170 = vunpack.c.0.s8 %v2169
        %v2171 = vlaneseq
        %v2172 = vshrl.u32 %v2171, 7
        %v2173 = vsub.s32 %v2170, %v2172
        %v2174 = vrot.slane %v2167, %v2173
        %v2175 = vcombine.low %v1342, %v1342
        %v2177 = vunpack.c.l.s4 1983009808
        %v2178 = vunpack.c.0.s8 %v2177
        %v2179 = vlaneseq
        %v2180 = vshrl.u32 %v2179, 7
        %v2181 = vsub.s32 %v2178, %v2180
        %v2182 = vrot.slane %v2175, %v2181
        %v2183 = vcombine.low %v1343, %v1343
        %v2185 = vunpack.c.l.s4 1983009808
        %v2186 = vunpack.c.0.s8 %v2185
        %v2187 = vlaneseq
        %v2188 = vshrl.u32 %v2187, 7
        %v2189 = vsub.s32 %v2186, %v2188
        %v2190 = vrot.slane %v2183, %v2189
        %v2191 = vcombine.low %v1344, %v1344
        %v2193 = vunpack.c.l.s4 1983009808
        %v2194 = vunpack.c.0.s8 %v2193
        %v2195 = vlaneseq
        %v2196 = vshrl.u32 %v2195, 7
        %v2197 = vsub.s32 %v2194, %v2196
        %v2198 = vrot.slane %v2191, %v2197
        %v2199 = vcombine.low %v1345, %v1345
        %v2201 = vunpack.c.l.s4 1983009808
        %v2202 = vunpack.c.0.s8 %v2201
        %v2203 = vlaneseq
        %v2204 = vshrl.u32 %v2203, 7
        %v2205 = vsub.s32 %v2202, %v2204
        %v2206 = vrot.slane %v2199, %v2205
        %v2207 = vcombine.low %v1346, %v1346
        %v2209 = vunpack.c.l.s4 1983009808
        %v2210 = vunpack.c.0.s8 %v2209
        %v2211 = vlaneseq
        %v2212 = vshrl.u32 %v2211, 7
        %v2213 = vsub.s32 %v2210, %v2212
        %v2214 = vrot.slane %v2207, %v2213
        %v2215 = vcombine.low %v1406, %v1406
        %v2217 = vunpack.c.l.s4 1983009808
        %v2218 = vunpack.c.0.s8 %v2217
        %v2219 = vlaneseq
        %v2220 = vshrl.u32 %v2219, 7
        %v2221 = vsub.s32 %v2218, %v2220
        %v2222 = vrot.slane %v2215, %v2221
        %v2223 = vcombine.low %v1348, %v1348
        %v2225 = vunpack.c.l.s4 1983009808
        %v2226 = vunpack.c.0.s8 %v2225
        %v2227 = vlaneseq
        %v2228 = vshrl.u32 %v2227, 7
        %v2229 = vsub.s32 %v2226, %v2228
        %v2230 = vrot.slane %v2223, %v2229
        %v2231 = vcombine.low %v1349, %v1349
        %v2233 = vunpack.c.l.s4 1983009808
        %v2234 = vunpack.c.0.s8 %v2233
        %v2235 = vlaneseq
        %v2236 = vshrl.u32 %v2235, 7
        %v2237 = vsub.s32 %v2234, %v2236
        %v2238 = vrot.slane %v2231, %v2237
        %v2239 = vcombine.low %v1350, %v1350
        %v2241 = vunpack.c.l.s4 1983009808
        %v2242 = vunpack.c.0.s8 %v2241
        %v2243 = vlaneseq
        %v2244 = vshrl.u32 %v2243, 7
        %v2245 = vsub.s32 %v2242, %v2244
        %v2246 = vrot.slane %v2239, %v2245
        %v2247 = vcombine.low %v1351, %v1351
        %v2249 = vunpack.c.l.s4 1983009808
        %v2250 = vunpack.c.0.s8 %v2249
        %v2251 = vlaneseq
        %v2252 = vshrl.u32 %v2251, 7
        %v2253 = vsub.s32 %v2250, %v2252
        %v2254 = vrot.slane %v2247, %v2253
        %v2255 = vcombine.low %v1352, %v1352
        %v2257 = vunpack.c.l.s4 1983009808
        %v2258 = vunpack.c.0.s8 %v2257
        %v2259 = vlaneseq
        %v2260 = vshrl.u32 %v2259, 7
        %v2261 = vsub.s32 %v2258, %v2260
        %v2262 = vrot.slane %v2255, %v2261
        %v2263 = vcombine.low %v1353, %v1353
        %v2265 = vunpack.c.l.s4 1983009808
        %v2266 = vunpack.c.0.s8 %v2265
        %v2267 = vlaneseq
        %v2268 = vshrl.u32 %v2267, 7
        %v2269 = vsub.s32 %v2266, %v2268
        %v2270 = vrot.slane %v2263, %v2269
        %v2271 = vcombine.low %v1354, %v1354
        %v2273 = vunpack.c.l.s4 1983009808
        %v2274 = vunpack.c.0.s8 %v2273
        %v2275 = vlaneseq
        %v2276 = vshrl.u32 %v2275, 7
        %v2277 = vsub.s32 %v2274, %v2276
        %v2278 = vrot.slane %v2271, %v2277
        %v2279 = vcombine.low %v1407, %v1407
        %v2281 = vunpack.c.l.s4 1983009808
        %v2282 = vunpack.c.0.s8 %v2281
        %v2283 = vlaneseq
        %v2284 = vshrl.u32 %v2283, 7
        %v2285 = vsub.s32 %v2282, %v2284
        %v2286 = vrot.slane %v2279, %v2285
        %v2287 = vcombine.low %v1356, %v1356
        %v2289 = vunpack.c.l.s4 1983009808
        %v2290 = vunpack.c.0.s8 %v2289
        %v2291 = vlaneseq
        %v2292 = vshrl.u32 %v2291, 7
        %v2293 = vsub.s32 %v2290, %v2292
        %v2294 = vrot.slane %v2287, %v2293
        %v2295 = vcombine.low %v1357, %v1357
        %v2297 = vunpack.c.l.s4 1983009808
        %v2298 = vunpack.c.0.s8 %v2297
        %v2299 = vlaneseq
        %v2300 = vshrl.u32 %v2299, 7
        %v2301 = vsub.s32 %v2298, %v2300
        %v2302 = vrot.slane %v2295, %v2301
        %v2303 = vcombine.low %v1358, %v1358
        %v2305 = vunpack.c.l.s4 1983009808
        %v2306 = vunpack.c.0.s8 %v2305
        %v2307 = vlaneseq
        %v2308 = vshrl.u32 %v2307, 7
        %v2309 = vsub.s32 %v2306, %v2308
        %v2310 = vrot.slane %v2303, %v2309
        %v2311 = vcombine.low %v1359, %v1359
        %v2313 = vunpack.c.l.s4 1983009808
        %v2314 = vunpack.c.0.s8 %v2313
        %v2315 = vlaneseq
        %v2316 = vshrl.u32 %v2315, 7
        %v2317 = vsub.s32 %v2314, %v2316
        %v2318 = vrot.slane %v2311, %v2317
        %v2319 = vcombine.low %v1360, %v1360
        %v2321 = vunpack.c.l.s4 1983009808
        %v2322 = vunpack.c.0.s8 %v2321
        %v2323 = vlaneseq
        %v2324 = vshrl.u32 %v2323, 7
        %v2325 = vsub.s32 %v2322, %v2324
        %v2326 = vrot.slane %v2319, %v2325
        %v2327 = vcombine.low %v1361, %v1361
        %v2329 = vunpack.c.l.s4 1983009808
        %v2330 = vunpack.c.0.s8 %v2329
        %v2331 = vlaneseq
        %v2332 = vshrl.u32 %v2331, 7
        %v2333 = vsub.s32 %v2330, %v2332
        %v2334 = vrot.slane %v2327, %v2333
        %v2335 = vcombine.low %v1362, %v1362
        %v2337 = vunpack.c.l.s4 1983009808
        %v2338 = vunpack.c.0.s8 %v2337
        %v2339 = vlaneseq
        %v2340 = vshrl.u32 %v2339, 7
        %v2341 = vsub.s32 %v2338, %v2340
        %v2342 = vrot.slane %v2335, %v2341
        %vm2343 = vcmask 1041408
        %v2346 = vsel %vm2343, %v1332, %v2094
        %v2349 = vsel %vm2343, %v1333, %v2102
        %v2352 = vsel %vm2343, %v1334, %v2110
        %v2355 = vsel %vm2343, %v1335, %v2118
        %v2358 = vsel %vm2343, %v1336, %v2126
        %v2361 = vsel %vm2343, %v1337, %v2134
        %v2364 = vsel %vm2343, %v1338, %v2142
        %v2367 = vsel %vm2343, %v1339, %v2150
        %v2370 = vsel %vm2343, %v1340, %v2158
        %v2373 = vsel %vm2343, %v1341, %v2166
        %v2376 = vsel %vm2343, %v1342, %v2174
        %v2379 = vsel %vm2343, %v1343, %v2182
        %v2382 = vsel %vm2343, %v1344, %v2190
        %v2385 = vsel %vm2343, %v1345, %v2198
        %v2388 = vsel %vm2343, %v1346, %v2206
        %v2391 = vsel %vm2343, %v1347, %v2214
        %v2394 = vsel %vm2343, %v1348, %v2222
        %v2397 = vsel %vm2343, %v1349, %v2230
        %v2400 = vsel %vm2343, %v1350, %v2238
        %v2403 = vsel %vm2343, %v1351, %v2246
        %v2406 = vsel %vm2343, %v1352, %v2254
        %v2409 = vsel %vm2343, %v1353, %v2262
        %v2412 = vsel %vm2343, %v1354, %v2270
        %v2415 = vsel %vm2343, %v1355, %v2278
        %v2418 = vsel %vm2343, %v1356, %v2286
        %v2421 = vsel %vm2343, %v1357, %v2294
        %v2424 = vsel %vm2343, %v1358, %v2302
        %v2427 = vsel %vm2343, %v1359, %v2310
        %v2430 = vsel %vm2343, %v1360, %v2318
        %v2433 = vsel %vm2343, %v1361, %v2326
        %v2436 = vsel %vm2343, %v1362, %v2334
        %v2439 = vsel %vm2343, %v1363, %v2342
        %2440 = vset.pattern.permute.xlu0 0
        %2441 = vperm.xlu0 %2440, %v1371
        %v2442 = vpop.permute.xlu0 %2441
        %2443 = vset.pattern.permute.xlu0 0
        %2444 = vperm.xlu0 %2443, %v1379
        %v2445 = vpop.permute.xlu0 %2444
        %2446 = vset.pattern.permute.xlu0 0
        %2447 = vperm.xlu0 %2446, %v1387
        %v2448 = vpop.permute.xlu0 %2447
        %2449 = vset.pattern.permute.xlu0 0
        %2450 = vperm.xlu0 %2449, %v1395
        %v2451 = vpop.permute.xlu0 %2450
        %v2452 = vlaneseq
        %v2453 = vshrl.u32 %v2452, 7
        %v2454 = vsub.s32 %v1678, %v2453
        %v2455 = vrot.slane %v2442, %v2454
        %v2456 = vlaneseq
        %v2457 = vshrl.u32 %v2456, 7
        %v2458 = vsub.s32 %v1678, %v2457
        %v2459 = vrot.slane %v2445, %v2458
        %v2460 = vlaneseq
        %v2461 = vshrl.u32 %v2460, 7
        %v2462 = vsub.s32 %v1678, %v2461
        %v2463 = vrot.slane %v2448, %v2462
        %v2464 = vlaneseq
        %v2465 = vshrl.u32 %v2464, 7
        %v2466 = vsub.s32 %v1678, %v2465
        %v2467 = vrot.slane %v2451, %v2466
        %vm2468 = vcmask 1041409
        %v2469 = vsel %vm2468, %v1786, %v1782
        %v2470 = vsel %vm1891, %v1790, %v2469
        %v2471 = vsel %vm1893, %v1794, %v2470
        %v2472 = vsel %vm1895, %v1798, %v2471
        %v2473 = vsel %vm1897, %v1802, %v2472
        %v2474 = vsel %vm1899, %v1806, %v2473
        %v2475 = vsel %vm1901, %v2455, %v2474
        %v2476 = vsel %vm2468, %v1814, %v1810
        %v2477 = vsel %vm1891, %v1818, %v2476
        %v2478 = vsel %vm1893, %v1822, %v2477
        %v2479 = vsel %vm1895, %v1826, %v2478
        %v2480 = vsel %vm1897, %v1830, %v2479
        %v2481 = vsel %vm1899, %v1834, %v2480
        %v2482 = vsel %vm1901, %v2459, %v2481
        %v2483 = vsel %vm2468, %v1842, %v1838
        %v2484 = vsel %vm1891, %v1846, %v2483
        %v2485 = vsel %vm1893, %v1850, %v2484
        %v2486 = vsel %vm1895, %v1854, %v2485
        %v2487 = vsel %vm1897, %v1858, %v2486
        %v2488 = vsel %vm1899, %v1862, %v2487
        %v2489 = vsel %vm1901, %v2463, %v2488
        %v2490 = vsel %vm2468, %v1870, %v1866
        %v2491 = vsel %vm1891, %v1874, %v2490
        %v2492 = vsel %vm1893, %v1878, %v2491
        %v2493 = vsel %vm1895, %v1882, %v2492
        %v2494 = vsel %vm1897, %v1886, %v2493
        %v2495 = vsel %vm1899, %v1890, %v2494
        %v2496 = vsel %vm1901, %v2467, %v2495
        %2497 = vrot.lane.b32.xlu0 %v1922, 4
        %v2498 = vpop.permute.xlu0 %2497
        %2499 = vrot.lane.b32.xlu0 %v1923, 4
        %v2500 = vpop.permute.xlu0 %2499
        %2501 = vrot.lane.b32.xlu0 %v1924, 4
        %v2502 = vpop.permute.xlu0 %2501
        %2503 = vrot.lane.b32.xlu0 %v1925, 4
        %v2504 = vpop.permute.xlu0 %2503
        %vm2505 = vcmask 31744
        %v2506 = vsel %vm2505, %v2475, %v2498
        %v2507 = vsel %vm2505, %v2482, %v2500
        %v2508 = vsel %vm2505, %v2489, %v2502
        %v2509 = vsel %vm2505, %v2496, %v2504
        %v2510 = vmul.f32 %v1300, 0.35355338
        %v2511 = vmul.f32 %v1301, 0.35355338
        %v2512 = vmul.f32 %v1302, 0.35355338
        %v2513 = vmul.f32 %v1303, 0.35355338
        %v2514 = vmul.f32 %v1304, 0.35355338
        %v2515 = vmul.f32 %v1305, 0.35355338
        %v2516 = vmul.f32 %v1306, 0.35355338
        %v2517 = vmul.f32 %v1307, 0.35355338
        %v2518 = vmul.f32 %v1308, 0.35355338
        %v2519 = vmul.f32 %v1309, 0.35355338
        %v2520 = vmul.f32 %v1310, 0.35355338
        %v2521 = vmul.f32 %v1311, 0.35355338
        %v2522 = vmul.f32 %v1312, 0.35355338
        %v2523 = vmul.f32 %v1313, 0.35355338
        %v2524 = vmul.f32 %v1314, 0.35355338
        %v2525 = vmul.f32 %v1315, 0.35355338
        %v2526 = vmul.f32 %v1316, 0.35355338
        %v2527 = vmul.f32 %v1317, 0.35355338
        %v2528 = vmul.f32 %v1318, 0.35355338
        %v2529 = vmul.f32 %v1319, 0.35355338
        %v2530 = vmul.f32 %v1320, 0.35355338
        %v2531 = vmul.f32 %v1321, 0.35355338
        %v2532 = vmul.f32 %v1322, 0.35355338
        %v2533 = vmul.f32 %v1323, 0.35355338
        %v2534 = vmul.f32 %v1324, 0.35355338
        %v2535 = vmul.f32 %v1325, 0.35355338
        %v2536 = vmul.f32 %v1326, 0.35355338
        %v2537 = vmul.f32 %v1327, 0.35355338
        %v2538 = vmul.f32 %v1328, 0.35355338
        %v2539 = vmul.f32 %v1329, 0.35355338
        %v2540 = vmul.f32 %v1330, 0.35355338
        %v2541 = vmul.f32 %v1331, 0.35355338
        %v2542 = vpack.c.bf16 %v2510, %v2510
        %v2543 = vpack.c.bf16 %v2511, %v2511
        %v2544 = vpack.c.bf16 %v2512, %v2512
        %v2545 = vpack.c.bf16 %v2513, %v2513
        %v2546 = vpack.c.bf16 %v2514, %v2514
        %v2547 = vpack.c.bf16 %v2515, %v2515
        %v2548 = vpack.c.bf16 %v2516, %v2516
        %v2549 = vpack.c.bf16 %v2517, %v2517
        %v2550 = vpack.c.bf16 %v2518, %v2518
        %v2551 = vpack.c.bf16 %v2519, %v2519
        %v2552 = vpack.c.bf16 %v2520, %v2520
        %v2553 = vpack.c.bf16 %v2521, %v2521
        %v2554 = vpack.c.bf16 %v2522, %v2522
        %v2555 = vpack.c.bf16 %v2523, %v2523
        %v2556 = vpack.c.bf16 %v2524, %v2524
        %v2557 = vpack.c.bf16 %v2525, %v2525
        %v2558 = vpack.c.bf16 %v2526, %v2526
        %v2559 = vpack.c.bf16 %v2527, %v2527
        %v2560 = vpack.c.bf16 %v2528, %v2528
        %v2561 = vpack.c.bf16 %v2529, %v2529
        %v2562 = vpack.c.bf16 %v2530, %v2530
        %v2563 = vpack.c.bf16 %v2531, %v2531
        %v2564 = vpack.c.bf16 %v2532, %v2532
        %v2565 = vpack.c.bf16 %v2533, %v2533
        %v2566 = vpack.c.bf16 %v2534, %v2534
        %v2567 = vpack.c.bf16 %v2535, %v2535
        %v2568 = vpack.c.bf16 %v2536, %v2536
        %v2569 = vpack.c.bf16 %v2537, %v2537
        %v2570 = vpack.c.bf16 %v2538, %v2538
        %v2571 = vpack.c.bf16 %v2539, %v2539
        %v2572 = vpack.c.bf16 %v2540, %v2540
        %v2573 = vpack.c.bf16 %v2541, %v2541
        %v2574 = vpack.c.bf16 %v2023, %v2023
        %v2575 = vpack.c.bf16 %v2024, %v2024
        %v2576 = vpack.c.bf16 %v2025, %v2025
        %v2577 = vpack.c.bf16 %v2026, %v2026
        %v2578 = vpack.c.bf16 %v2027, %v2027
        %v2579 = vpack.c.bf16 %v2028, %v2028
        %v2580 = vpack.c.bf16 %v2029, %v2029
        %v2581 = vpack.c.bf16 %v2030, %v2030
        %v2582 = vpack.c.bf16 %v2031, %v2031
        %v2583 = vpack.c.bf16 %v2032, %v2032
        %v2584 = vpack.c.bf16 %v2033, %v2033
        %v2585 = vpack.c.bf16 %v2034, %v2034
        %v2586 = vpack.c.bf16 %v2035, %v2035
        %v2587 = vpack.c.bf16 %v2036, %v2036
        %v2588 = vpack.c.bf16 %v2037, %v2037
        %v2589 = vpack.c.bf16 %v2038, %v2038
        %v2590 = vpack.c.bf16 %v2039, %v2039
        %v2591 = vpack.c.bf16 %v2040, %v2040
        %v2592 = vpack.c.bf16 %v2041, %v2041
        %v2593 = vpack.c.bf16 %v2042, %v2042
        %v2594 = vpack.c.bf16 %v2043, %v2043
        %v2595 = vpack.c.bf16 %v2044, %v2044
        %v2596 = vpack.c.bf16 %v2045, %v2045
        %v2597 = vpack.c.bf16 %v2046, %v2046
        %v2598 = vpack.c.bf16 %v2047, %v2047
        %v2599 = vpack.c.bf16 %v2048, %v2048
        %v2600 = vpack.c.bf16 %v2049, %v2049
        %v2601 = vpack.c.bf16 %v2050, %v2050
        %v2602 = vpack.c.bf16 %v2051, %v2051
        %v2603 = vpack.c.bf16 %v2052, %v2052
        %v2604 = vpack.c.bf16 %v2053, %v2053
        %v2605 = vpack.c.bf16 %v2054, %v2054
        %vm2606 = vcmask 64512
        %v2608 = vsel %vm2606, %v2542, 0
        %v2611 = vsel %vm2606, %v2574, 0
        %2613 = vmatprep.subr.bf16.mxu0 0
        %2614 = vmatpush1.bf16.xpose.msra.mxu0 %v2611
        %2615 = vmatprep.subr.bf16.mxu0 0
        %2616 = vmatpush1.bf16.xpose.msra.mxu0 0
        %2617 = vmatprep.subr.bf16.mxu0 0
        %2618 = vmatpush1.bf16.xpose.msra.mxu0 0
        %2619 = vmatprep.subr.bf16.mxu0 0
        %2620 = vmatpush1.bf16.xpose.msra.mxu0 0
        %2621 = vmatprep.subr.bf16.mxu0 0
        %2622 = vmatpush1.bf16.xpose.msra.mxu0 0
        %2623 = vmatprep.subr.bf16.mxu0 0
        %2624 = vmatpush1.bf16.xpose.msra.mxu0 0
        %2625 = vmatprep.subr.bf16.mxu0 0
        %2626 = vmatpush1.bf16.xpose.msra.mxu0 0
        %2627 = vmatprep.subr.bf16.mxu0 0
        %2628 = vmatpush1.bf16.xpose.msra.mxu0 0
        %2629 = vmatprep.subr.bf16.mxu0 0
        %2630 = vmatpush1.bf16.xpose.msra.mxu0 0
        %2631 = vmatprep.subr.bf16.mxu0 0
        %2632 = vmatpush1.bf16.xpose.msra.mxu0 0
        %2633 = vmatprep.subr.bf16.mxu0 0
        %2634 = vmatpush1.bf16.xpose.msra.mxu0 0
        %2635 = vmatprep.subr.bf16.mxu0 0
        %2636 = vmatpush1.bf16.xpose.msra.mxu0 0
        %2637 = vmatprep.subr.bf16.mxu0 0
        %2638 = vmatpush1.bf16.xpose.msra.mxu0 0
        %2639 = vmatprep.subr.bf16.mxu0 0
        %2640 = vmatpush1.bf16.xpose.msra.mxu0 0
        %2641 = vmatprep.subr.bf16.mxu0 0
        %2642 = vmatpush1.bf16.xpose.msra.mxu0 0
        %2643 = vmatprep.subr.bf16.mxu0 0
        %2644 = vmatpush1.bf16.xpose.msra.mxu0 0
        %2645 = vmatprep.mubr.bf16.mxu0 0
        %2646 = vmatmul.mubr.bf16.gmra.mrb[0].mxu0 %v2608
        %v2647 = vpop.f32.mrb[0].mxu0
        %v2648 = vadd.f32 0.0, %v2647
        %v2649 = vpop.f32.mrb[0].mxu0
        %v2650 = vpop.f32.mrb[0].mxu0
        %v2651 = vpop.f32.mrb[0].mxu0
        %2652 = vdwg.mxu0
        %v2654 = vsel %vm2606, %v2543, 0
        %v2657 = vsel %vm2606, %v2575, 0
        %2659 = vmatprep.subr.bf16.mxu0 0
        %2660 = vmatpush1.bf16.xpose.msra.mxu0 %v2657
        %2661 = vmatprep.subr.bf16.mxu0 0
        %2662 = vmatpush1.bf16.xpose.msra.mxu0 0
        %2663 = vmatprep.subr.bf16.mxu0 0
        %2664 = vmatpush1.bf16.xpose.msra.mxu0 0
        %2665 = vmatprep.subr.bf16.mxu0 0
        %2666 = vmatpush1.bf16.xpose.msra.mxu0 0
        %2667 = vmatprep.subr.bf16.mxu0 0
        %2668 = vmatpush1.bf16.xpose.msra.mxu0 0
        %2669 = vmatprep.subr.bf16.mxu0 0
        %2670 = vmatpush1.bf16.xpose.msra.mxu0 0
        %2671 = vmatprep.subr.bf16.mxu0 0
        %2672 = vmatpush1.bf16.xpose.msra.mxu0 0
        %2673 = vmatprep.subr.bf16.mxu0 0
        %2674 = vmatpush1.bf16.xpose.msra.mxu0 0
        %2675 = vmatprep.subr.bf16.mxu0 0
        %2676 = vmatpush1.bf16.xpose.msra.mxu0 0
        %2677 = vmatprep.subr.bf16.mxu0 0
        %2678 = vmatpush1.bf16.xpose.msra.mxu0 0
        %2679 = vmatprep.subr.bf16.mxu0 0
        %2680 = vmatpush1.bf16.xpose.msra.mxu0 0
        %2681 = vmatprep.subr.bf16.mxu0 0
        %2682 = vmatpush1.bf16.xpose.msra.mxu0 0
        %2683 = vmatprep.subr.bf16.mxu0 0
        %2684 = vmatpush1.bf16.xpose.msra.mxu0 0
        %2685 = vmatprep.subr.bf16.mxu0 0
        %2686 = vmatpush1.bf16.xpose.msra.mxu0 0
        %2687 = vmatprep.subr.bf16.mxu0 0
        %2688 = vmatpush1.bf16.xpose.msra.mxu0 0
        %2689 = vmatprep.subr.bf16.mxu0 0
        %2690 = vmatpush1.bf16.xpose.msra.mxu0 0
        %2691 = vmatprep.mubr.bf16.mxu0 0
        %2692 = vmatmul.mubr.bf16.gmra.mrb[0].mxu0 %v2654
        %v2693 = vpop.f32.mrb[0].mxu0
        %v2694 = vadd.f32 0.0, %v2693
        %v2695 = vpop.f32.mrb[0].mxu0
        %v2696 = vpop.f32.mrb[0].mxu0
        %v2697 = vpop.f32.mrb[0].mxu0
        %2698 = vdwg.mxu0
        %v2700 = vsel %vm2606, %v2544, 0
        %v2703 = vsel %vm2606, %v2576, 0
        %2705 = vmatprep.subr.bf16.mxu0 0
        %2706 = vmatpush1.bf16.xpose.msra.mxu0 %v2703
        %2707 = vmatprep.subr.bf16.mxu0 0
        %2708 = vmatpush1.bf16.xpose.msra.mxu0 0
        %2709 = vmatprep.subr.bf16.mxu0 0
        %2710 = vmatpush1.bf16.xpose.msra.mxu0 0
        %2711 = vmatprep.subr.bf16.mxu0 0
        %2712 = vmatpush1.bf16.xpose.msra.mxu0 0
        %2713 = vmatprep.subr.bf16.mxu0 0
        %2714 = vmatpush1.bf16.xpose.msra.mxu0 0
        %2715 = vmatprep.subr.bf16.mxu0 0
        %2716 = vmatpush1.bf16.xpose.msra.mxu0 0
        %2717 = vmatprep.subr.bf16.mxu0 0
        %2718 = vmatpush1.bf16.xpose.msra.mxu0 0
        %2719 = vmatprep.subr.bf16.mxu0 0
        %2720 = vmatpush1.bf16.xpose.msra.mxu0 0
        %2721 = vmatprep.subr.bf16.mxu0 0
        %2722 = vmatpush1.bf16.xpose.msra.mxu0 0
        %2723 = vmatprep.subr.bf16.mxu0 0
        %2724 = vmatpush1.bf16.xpose.msra.mxu0 0
        %2725 = vmatprep.subr.bf16.mxu0 0
        %2726 = vmatpush1.bf16.xpose.msra.mxu0 0
        %2727 = vmatprep.subr.bf16.mxu0 0
        %2728 = vmatpush1.bf16.xpose.msra.mxu0 0
        %2729 = vmatprep.subr.bf16.mxu0 0
        %2730 = vmatpush1.bf16.xpose.msra.mxu0 0
        %2731 = vmatprep.subr.bf16.mxu0 0
        %2732 = vmatpush1.bf16.xpose.msra.mxu0 0
        %2733 = vmatprep.subr.bf16.mxu0 0
        %2734 = vmatpush1.bf16.xpose.msra.mxu0 0
        %2735 = vmatprep.subr.bf16.mxu0 0
        %2736 = vmatpush1.bf16.xpose.msra.mxu0 0
        %2737 = vmatprep.mubr.bf16.mxu0 0
        %2738 = vmatmul.mubr.bf16.gmra.mrb[0].mxu0 %v2700
        %v2739 = vpop.f32.mrb[0].mxu0
        %v2740 = vadd.f32 0.0, %v2739
        %v2741 = vpop.f32.mrb[0].mxu0
        %v2742 = vpop.f32.mrb[0].mxu0
        %v2743 = vpop.f32.mrb[0].mxu0
        %2744 = vdwg.mxu0
        %v2746 = vsel %vm2606, %v2545, 0
        %v2749 = vsel %vm2606, %v2577, 0
        %2751 = vmatprep.subr.bf16.mxu0 0
        %2752 = vmatpush1.bf16.xpose.msra.mxu0 %v2749
        %2753 = vmatprep.subr.bf16.mxu0 0
        %2754 = vmatpush1.bf16.xpose.msra.mxu0 0
        %2755 = vmatprep.subr.bf16.mxu0 0
        %2756 = vmatpush1.bf16.xpose.msra.mxu0 0
        %2757 = vmatprep.subr.bf16.mxu0 0
        %2758 = vmatpush1.bf16.xpose.msra.mxu0 0
        %2759 = vmatprep.subr.bf16.mxu0 0
        %2760 = vmatpush1.bf16.xpose.msra.mxu0 0
        %2761 = vmatprep.subr.bf16.mxu0 0
        %2762 = vmatpush1.bf16.xpose.msra.mxu0 0
        %2763 = vmatprep.subr.bf16.mxu0 0
        %2764 = vmatpush1.bf16.xpose.msra.mxu0 0
        %2765 = vmatprep.subr.bf16.mxu0 0
        %2766 = vmatpush1.bf16.xpose.msra.mxu0 0
        %2767 = vmatprep.subr.bf16.mxu0 0
        %2768 = vmatpush1.bf16.xpose.msra.mxu0 0
        %2769 = vmatprep.subr.bf16.mxu0 0
        %2770 = vmatpush1.bf16.xpose.msra.mxu0 0
        %2771 = vmatprep.subr.bf16.mxu0 0
        %2772 = vmatpush1.bf16.xpose.msra.mxu0 0
        %2773 = vmatprep.subr.bf16.mxu0 0
        %2774 = vmatpush1.bf16.xpose.msra.mxu0 0
        %2775 = vmatprep.subr.bf16.mxu0 0
        %2776 = vmatpush1.bf16.xpose.msra.mxu0 0
        %2777 = vmatprep.subr.bf16.mxu0 0
        %2778 = vmatpush1.bf16.xpose.msra.mxu0 0
        %2779 = vmatprep.subr.bf16.mxu0 0
        %2780 = vmatpush1.bf16.xpose.msra.mxu0 0
        %2781 = vmatprep.subr.bf16.mxu0 0
        %2782 = vmatpush1.bf16.xpose.msra.mxu0 0
        %2783 = vmatprep.mubr.bf16.mxu0 0
        %2784 = vmatmul.mubr.bf16.gmra.mrb[0].mxu0 %v2746
        %v2785 = vpop.f32.mrb[0].mxu0
        %v2786 = vadd.f32 0.0, %v2785
        %v2787 = vpop.f32.mrb[0].mxu0
        %v2788 = vpop.f32.mrb[0].mxu0
        %v2789 = vpop.f32.mrb[0].mxu0
        %2790 = vdwg.mxu0
        %v2792 = vsel %vm2606, %v2546, 0
        %v2795 = vsel %vm2606, %v2578, 0
        %2797 = vmatprep.subr.bf16.mxu0 0
        %2798 = vmatpush1.bf16.xpose.msra.mxu0 %v2795
        %2799 = vmatprep.subr.bf16.mxu0 0
        %2800 = vmatpush1.bf16.xpose.msra.mxu0 0
        %2801 = vmatprep.subr.bf16.mxu0 0
        %2802 = vmatpush1.bf16.xpose.msra.mxu0 0
        %2803 = vmatprep.subr.bf16.mxu0 0
        %2804 = vmatpush1.bf16.xpose.msra.mxu0 0
        %2805 = vmatprep.subr.bf16.mxu0 0
        %2806 = vmatpush1.bf16.xpose.msra.mxu0 0
        %2807 = vmatprep.subr.bf16.mxu0 0
        %2808 = vmatpush1.bf16.xpose.msra.mxu0 0
        %2809 = vmatprep.subr.bf16.mxu0 0
        %2810 = vmatpush1.bf16.xpose.msra.mxu0 0
        %2811 = vmatprep.subr.bf16.mxu0 0
        %2812 = vmatpush1.bf16.xpose.msra.mxu0 0
        %2813 = vmatprep.subr.bf16.mxu0 0
        %2814 = vmatpush1.bf16.xpose.msra.mxu0 0
        %2815 = vmatprep.subr.bf16.mxu0 0
        %2816 = vmatpush1.bf16.xpose.msra.mxu0 0
        %2817 = vmatprep.subr.bf16.mxu0 0
        %2818 = vmatpush1.bf16.xpose.msra.mxu0 0
        %2819 = vmatprep.subr.bf16.mxu0 0
        %2820 = vmatpush1.bf16.xpose.msra.mxu0 0
        %2821 = vmatprep.subr.bf16.mxu0 0
        %2822 = vmatpush1.bf16.xpose.msra.mxu0 0
        %2823 = vmatprep.subr.bf16.mxu0 0
        %2824 = vmatpush1.bf16.xpose.msra.mxu0 0
        %2825 = vmatprep.subr.bf16.mxu0 0
        %2826 = vmatpush1.bf16.xpose.msra.mxu0 0
        %2827 = vmatprep.subr.bf16.mxu0 0
        %2828 = vmatpush1.bf16.xpose.msra.mxu0 0
        %2829 = vmatprep.mubr.bf16.mxu0 0
        %2830 = vmatmul.mubr.bf16.gmra.mrb[0].mxu0 %v2792
        %v2831 = vpop.f32.mrb[0].mxu0
        %v2832 = vadd.f32 0.0, %v2831
        %v2833 = vpop.f32.mrb[0].mxu0
        %v2834 = vpop.f32.mrb[0].mxu0
        %v2835 = vpop.f32.mrb[0].mxu0
        %2836 = vdwg.mxu0
        %v2838 = vsel %vm2606, %v2547, 0
        %v2841 = vsel %vm2606, %v2579, 0
        %2843 = vmatprep.subr.bf16.mxu0 0
        %2844 = vmatpush1.bf16.xpose.msra.mxu0 %v2841
        %2845 = vmatprep.subr.bf16.mxu0 0
        %2846 = vmatpush1.bf16.xpose.msra.mxu0 0
        %2847 = vmatprep.subr.bf16.mxu0 0
        %2848 = vmatpush1.bf16.xpose.msra.mxu0 0
        %2849 = vmatprep.subr.bf16.mxu0 0
        %2850 = vmatpush1.bf16.xpose.msra.mxu0 0
        %2851 = vmatprep.subr.bf16.mxu0 0
        %2852 = vmatpush1.bf16.xpose.msra.mxu0 0
        %2853 = vmatprep.subr.bf16.mxu0 0
        %2854 = vmatpush1.bf16.xpose.msra.mxu0 0
        %2855 = vmatprep.subr.bf16.mxu0 0
        %2856 = vmatpush1.bf16.xpose.msra.mxu0 0
        %2857 = vmatprep.subr.bf16.mxu0 0
        %2858 = vmatpush1.bf16.xpose.msra.mxu0 0
        %2859 = vmatprep.subr.bf16.mxu0 0
        %2860 = vmatpush1.bf16.xpose.msra.mxu0 0
        %2861 = vmatprep.subr.bf16.mxu0 0
        %2862 = vmatpush1.bf16.xpose.msra.mxu0 0
        %2863 = vmatprep.subr.bf16.mxu0 0
        %2864 = vmatpush1.bf16.xpose.msra.mxu0 0
        %2865 = vmatprep.subr.bf16.mxu0 0
        %2866 = vmatpush1.bf16.xpose.msra.mxu0 0
        %2867 = vmatprep.subr.bf16.mxu0 0
        %2868 = vmatpush1.bf16.xpose.msra.mxu0 0
        %2869 = vmatprep.subr.bf16.mxu0 0
        %2870 = vmatpush1.bf16.xpose.msra.mxu0 0
        %2871 = vmatprep.subr.bf16.mxu0 0
        %2872 = vmatpush1.bf16.xpose.msra.mxu0 0
        %2873 = vmatprep.subr.bf16.mxu0 0
        %2874 = vmatpush1.bf16.xpose.msra.mxu0 0
        %2875 = vmatprep.mubr.bf16.mxu0 0
        %2876 = vmatmul.mubr.bf16.gmra.mrb[0].mxu0 %v2838
        %v2877 = vpop.f32.mrb[0].mxu0
        %v2878 = vadd.f32 0.0, %v2877
        %v2879 = vpop.f32.mrb[0].mxu0
        %v2880 = vpop.f32.mrb[0].mxu0
        %v2881 = vpop.f32.mrb[0].mxu0
        %2882 = vdwg.mxu0
        %v2884 = vsel %vm2606, %v2548, 0
        %v2887 = vsel %vm2606, %v2580, 0
        %2889 = vmatprep.subr.bf16.mxu0 0
        %2890 = vmatpush1.bf16.xpose.msra.mxu0 %v2887
        %2891 = vmatprep.subr.bf16.mxu0 0
        %2892 = vmatpush1.bf16.xpose.msra.mxu0 0
        %2893 = vmatprep.subr.bf16.mxu0 0
        %2894 = vmatpush1.bf16.xpose.msra.mxu0 0
        %2895 = vmatprep.subr.bf16.mxu0 0
        %2896 = vmatpush1.bf16.xpose.msra.mxu0 0
        %2897 = vmatprep.subr.bf16.mxu0 0
        %2898 = vmatpush1.bf16.xpose.msra.mxu0 0
        %2899 = vmatprep.subr.bf16.mxu0 0
        %2900 = vmatpush1.bf16.xpose.msra.mxu0 0
        %2901 = vmatprep.subr.bf16.mxu0 0
        %2902 = vmatpush1.bf16.xpose.msra.mxu0 0
        %2903 = vmatprep.subr.bf16.mxu0 0
        %2904 = vmatpush1.bf16.xpose.msra.mxu0 0
        %2905 = vmatprep.subr.bf16.mxu0 0
        %2906 = vmatpush1.bf16.xpose.msra.mxu0 0
        %2907 = vmatprep.subr.bf16.mxu0 0
        %2908 = vmatpush1.bf16.xpose.msra.mxu0 0
        %2909 = vmatprep.subr.bf16.mxu0 0
        %2910 = vmatpush1.bf16.xpose.msra.mxu0 0
        %2911 = vmatprep.subr.bf16.mxu0 0
        %2912 = vmatpush1.bf16.xpose.msra.mxu0 0
        %2913 = vmatprep.subr.bf16.mxu0 0
        %2914 = vmatpush1.bf16.xpose.msra.mxu0 0
        %2915 = vmatprep.subr.bf16.mxu0 0
        %2916 = vmatpush1.bf16.xpose.msra.mxu0 0
        %2917 = vmatprep.subr.bf16.mxu0 0
        %2918 = vmatpush1.bf16.xpose.msra.mxu0 0
        %2919 = vmatprep.subr.bf16.mxu0 0
        %2920 = vmatpush1.bf16.xpose.msra.mxu0 0
        %2921 = vmatprep.mubr.bf16.mxu0 0
        %2922 = vmatmul.mubr.bf16.gmra.mrb[0].mxu0 %v2884
        %v2923 = vpop.f32.mrb[0].mxu0
        %v2924 = vadd.f32 0.0, %v2923
        %v2925 = vpop.f32.mrb[0].mxu0
        %v2926 = vpop.f32.mrb[0].mxu0
        %v2927 = vpop.f32.mrb[0].mxu0
        %2928 = vdwg.mxu0
        %v2930 = vsel %vm2606, %v2549, 0
        %v2933 = vsel %vm2606, %v2581, 0
        %2935 = vmatprep.subr.bf16.mxu0 0
        %2936 = vmatpush1.bf16.xpose.msra.mxu0 %v2933
        %2937 = vmatprep.subr.bf16.mxu0 0
        %2938 = vmatpush1.bf16.xpose.msra.mxu0 0
        %2939 = vmatprep.subr.bf16.mxu0 0
        %2940 = vmatpush1.bf16.xpose.msra.mxu0 0
        %2941 = vmatprep.subr.bf16.mxu0 0
        %2942 = vmatpush1.bf16.xpose.msra.mxu0 0
        %2943 = vmatprep.subr.bf16.mxu0 0
        %2944 = vmatpush1.bf16.xpose.msra.mxu0 0
        %2945 = vmatprep.subr.bf16.mxu0 0
        %2946 = vmatpush1.bf16.xpose.msra.mxu0 0
        %2947 = vmatprep.subr.bf16.mxu0 0
        %2948 = vmatpush1.bf16.xpose.msra.mxu0 0
        %2949 = vmatprep.subr.bf16.mxu0 0
        %2950 = vmatpush1.bf16.xpose.msra.mxu0 0
        %2951 = vmatprep.subr.bf16.mxu0 0
        %2952 = vmatpush1.bf16.xpose.msra.mxu0 0
        %2953 = vmatprep.subr.bf16.mxu0 0
        %2954 = vmatpush1.bf16.xpose.msra.mxu0 0
        %2955 = vmatprep.subr.bf16.mxu0 0
        %2956 = vmatpush1.bf16.xpose.msra.mxu0 0
        %2957 = vmatprep.subr.bf16.mxu0 0
        %2958 = vmatpush1.bf16.xpose.msra.mxu0 0
        %2959 = vmatprep.subr.bf16.mxu0 0
        %2960 = vmatpush1.bf16.xpose.msra.mxu0 0
        %2961 = vmatprep.subr.bf16.mxu0 0
        %2962 = vmatpush1.bf16.xpose.msra.mxu0 0
        %2963 = vmatprep.subr.bf16.mxu0 0
        %2964 = vmatpush1.bf16.xpose.msra.mxu0 0
        %2965 = vmatprep.subr.bf16.mxu0 0
        %2966 = vmatpush1.bf16.xpose.msra.mxu0 0
        %2967 = vmatprep.mubr.bf16.mxu0 0
        %2968 = vmatmul.mubr.bf16.gmra.mrb[0].mxu0 %v2930
        %v2969 = vpop.f32.mrb[0].mxu0
        %v2970 = vadd.f32 0.0, %v2969
        %v2971 = vpop.f32.mrb[0].mxu0
        %v2972 = vpop.f32.mrb[0].mxu0
        %v2973 = vpop.f32.mrb[0].mxu0
        %2974 = vdwg.mxu0
        %v2976 = vsel %vm2606, %v2550, 0
        %v2979 = vsel %vm2606, %v2582, 0
        %2981 = vmatprep.subr.bf16.mxu0 0
        %2982 = vmatpush1.bf16.xpose.msra.mxu0 %v2979
        %2983 = vmatprep.subr.bf16.mxu0 0
        %2984 = vmatpush1.bf16.xpose.msra.mxu0 0
        %2985 = vmatprep.subr.bf16.mxu0 0
        %2986 = vmatpush1.bf16.xpose.msra.mxu0 0
        %2987 = vmatprep.subr.bf16.mxu0 0
        %2988 = vmatpush1.bf16.xpose.msra.mxu0 0
        %2989 = vmatprep.subr.bf16.mxu0 0
        %2990 = vmatpush1.bf16.xpose.msra.mxu0 0
        %2991 = vmatprep.subr.bf16.mxu0 0
        %2992 = vmatpush1.bf16.xpose.msra.mxu0 0
        %2993 = vmatprep.subr.bf16.mxu0 0
        %2994 = vmatpush1.bf16.xpose.msra.mxu0 0
        %2995 = vmatprep.subr.bf16.mxu0 0
        %2996 = vmatpush1.bf16.xpose.msra.mxu0 0
        %2997 = vmatprep.subr.bf16.mxu0 0
        %2998 = vmatpush1.bf16.xpose.msra.mxu0 0
        %2999 = vmatprep.subr.bf16.mxu0 0
        %3000 = vmatpush1.bf16.xpose.msra.mxu0 0
        %3001 = vmatprep.subr.bf16.mxu0 0
        %3002 = vmatpush1.bf16.xpose.msra.mxu0 0
        %3003 = vmatprep.subr.bf16.mxu0 0
        %3004 = vmatpush1.bf16.xpose.msra.mxu0 0
        %3005 = vmatprep.subr.bf16.mxu0 0
        %3006 = vmatpush1.bf16.xpose.msra.mxu0 0
        %3007 = vmatprep.subr.bf16.mxu0 0
        %3008 = vmatpush1.bf16.xpose.msra.mxu0 0
        %3009 = vmatprep.subr.bf16.mxu0 0
        %3010 = vmatpush1.bf16.xpose.msra.mxu0 0
        %3011 = vmatprep.subr.bf16.mxu0 0
        %3012 = vmatpush1.bf16.xpose.msra.mxu0 0
        %3013 = vmatprep.mubr.bf16.mxu0 0
        %3014 = vmatmul.mubr.bf16.gmra.mrb[0].mxu0 %v2976
        %v3015 = vpop.f32.mrb[0].mxu0
        %v3016 = vadd.f32 0.0, %v3015
        %v3017 = vpop.f32.mrb[0].mxu0
        %v3018 = vpop.f32.mrb[0].mxu0
        %v3019 = vpop.f32.mrb[0].mxu0
        %3020 = vdwg.mxu0
        %v3022 = vsel %vm2606, %v2551, 0
        %v3025 = vsel %vm2606, %v2583, 0
        %3027 = vmatprep.subr.bf16.mxu0 0
        %3028 = vmatpush1.bf16.xpose.msra.mxu0 %v3025
        %3029 = vmatprep.subr.bf16.mxu0 0
        %3030 = vmatpush1.bf16.xpose.msra.mxu0 0
        %3031 = vmatprep.subr.bf16.mxu0 0
        %3032 = vmatpush1.bf16.xpose.msra.mxu0 0
        %3033 = vmatprep.subr.bf16.mxu0 0
        %3034 = vmatpush1.bf16.xpose.msra.mxu0 0
        %3035 = vmatprep.subr.bf16.mxu0 0
        %3036 = vmatpush1.bf16.xpose.msra.mxu0 0
        %3037 = vmatprep.subr.bf16.mxu0 0
        %3038 = vmatpush1.bf16.xpose.msra.mxu0 0
        %3039 = vmatprep.subr.bf16.mxu0 0
        %3040 = vmatpush1.bf16.xpose.msra.mxu0 0
        %3041 = vmatprep.subr.bf16.mxu0 0
        %3042 = vmatpush1.bf16.xpose.msra.mxu0 0
        %3043 = vmatprep.subr.bf16.mxu0 0
        %3044 = vmatpush1.bf16.xpose.msra.mxu0 0
        %3045 = vmatprep.subr.bf16.mxu0 0
        %3046 = vmatpush1.bf16.xpose.msra.mxu0 0
        %3047 = vmatprep.subr.bf16.mxu0 0
        %3048 = vmatpush1.bf16.xpose.msra.mxu0 0
        %3049 = vmatprep.subr.bf16.mxu0 0
        %3050 = vmatpush1.bf16.xpose.msra.mxu0 0
        %3051 = vmatprep.subr.bf16.mxu0 0
        %3052 = vmatpush1.bf16.xpose.msra.mxu0 0
        %3053 = vmatprep.subr.bf16.mxu0 0
        %3054 = vmatpush1.bf16.xpose.msra.mxu0 0
        %3055 = vmatprep.subr.bf16.mxu0 0
        %3056 = vmatpush1.bf16.xpose.msra.mxu0 0
        %3057 = vmatprep.subr.bf16.mxu0 0
        %3058 = vmatpush1.bf16.xpose.msra.mxu0 0
        %3059 = vmatprep.mubr.bf16.mxu0 0
        %3060 = vmatmul.mubr.bf16.gmra.mrb[0].mxu0 %v3022
        %v3061 = vpop.f32.mrb[0].mxu0
        %v3062 = vadd.f32 0.0, %v3061
        %v3063 = vpop.f32.mrb[0].mxu0
        %v3064 = vpop.f32.mrb[0].mxu0
        %v3065 = vpop.f32.mrb[0].mxu0
        %3066 = vdwg.mxu0
        %v3068 = vsel %vm2606, %v2552, 0
        %v3071 = vsel %vm2606, %v2584, 0
        %3073 = vmatprep.subr.bf16.mxu0 0
        %3074 = vmatpush1.bf16.xpose.msra.mxu0 %v3071
        %3075 = vmatprep.subr.bf16.mxu0 0
        %3076 = vmatpush1.bf16.xpose.msra.mxu0 0
        %3077 = vmatprep.subr.bf16.mxu0 0
        %3078 = vmatpush1.bf16.xpose.msra.mxu0 0
        %3079 = vmatprep.subr.bf16.mxu0 0
        %3080 = vmatpush1.bf16.xpose.msra.mxu0 0
        %3081 = vmatprep.subr.bf16.mxu0 0
        %3082 = vmatpush1.bf16.xpose.msra.mxu0 0
        %3083 = vmatprep.subr.bf16.mxu0 0
        %3084 = vmatpush1.bf16.xpose.msra.mxu0 0
        %3085 = vmatprep.subr.bf16.mxu0 0
        %3086 = vmatpush1.bf16.xpose.msra.mxu0 0
        %3087 = vmatprep.subr.bf16.mxu0 0
        %3088 = vmatpush1.bf16.xpose.msra.mxu0 0
        %3089 = vmatprep.subr.bf16.mxu0 0
        %3090 = vmatpush1.bf16.xpose.msra.mxu0 0
        %3091 = vmatprep.subr.bf16.mxu0 0
        %3092 = vmatpush1.bf16.xpose.msra.mxu0 0
        %3093 = vmatprep.subr.bf16.mxu0 0
        %3094 = vmatpush1.bf16.xpose.msra.mxu0 0
        %3095 = vmatprep.subr.bf16.mxu0 0
        %3096 = vmatpush1.bf16.xpose.msra.mxu0 0
        %3097 = vmatprep.subr.bf16.mxu0 0
        %3098 = vmatpush1.bf16.xpose.msra.mxu0 0
        %3099 = vmatprep.subr.bf16.mxu0 0
        %3100 = vmatpush1.bf16.xpose.msra.mxu0 0
        %3101 = vmatprep.subr.bf16.mxu0 0
        %3102 = vmatpush1.bf16.xpose.msra.mxu0 0
        %3103 = vmatprep.subr.bf16.mxu0 0
        %3104 = vmatpush1.bf16.xpose.msra.mxu0 0
        %3105 = vmatprep.mubr.bf16.mxu0 0
        %3106 = vmatmul.mubr.bf16.gmra.mrb[0].mxu0 %v3068
        %v3107 = vpop.f32.mrb[0].mxu0
        %v3108 = vadd.f32 0.0, %v3107
        %v3109 = vpop.f32.mrb[0].mxu0
        %v3110 = vpop.f32.mrb[0].mxu0
        %v3111 = vpop.f32.mrb[0].mxu0
        %3112 = vdwg.mxu0
        %v3114 = vsel %vm2606, %v2553, 0
        %v3117 = vsel %vm2606, %v2585, 0
        %3119 = vmatprep.subr.bf16.mxu0 0
        %3120 = vmatpush1.bf16.xpose.msra.mxu0 %v3117
        %3121 = vmatprep.subr.bf16.mxu0 0
        %3122 = vmatpush1.bf16.xpose.msra.mxu0 0
        %3123 = vmatprep.subr.bf16.mxu0 0
        %3124 = vmatpush1.bf16.xpose.msra.mxu0 0
        %3125 = vmatprep.subr.bf16.mxu0 0
        %3126 = vmatpush1.bf16.xpose.msra.mxu0 0
        %3127 = vmatprep.subr.bf16.mxu0 0
        %3128 = vmatpush1.bf16.xpose.msra.mxu0 0
        %3129 = vmatprep.subr.bf16.mxu0 0
        %3130 = vmatpush1.bf16.xpose.msra.mxu0 0
        %3131 = vmatprep.subr.bf16.mxu0 0
        %3132 = vmatpush1.bf16.xpose.msra.mxu0 0
        %3133 = vmatprep.subr.bf16.mxu0 0
        %3134 = vmatpush1.bf16.xpose.msra.mxu0 0
        %3135 = vmatprep.subr.bf16.mxu0 0
        %3136 = vmatpush1.bf16.xpose.msra.mxu0 0
        %3137 = vmatprep.subr.bf16.mxu0 0
        %3138 = vmatpush1.bf16.xpose.msra.mxu0 0
        %3139 = vmatprep.subr.bf16.mxu0 0
        %3140 = vmatpush1.bf16.xpose.msra.mxu0 0
        %3141 = vmatprep.subr.bf16.mxu0 0
        %3142 = vmatpush1.bf16.xpose.msra.mxu0 0
        %3143 = vmatprep.subr.bf16.mxu0 0
        %3144 = vmatpush1.bf16.xpose.msra.mxu0 0
        %3145 = vmatprep.subr.bf16.mxu0 0
        %3146 = vmatpush1.bf16.xpose.msra.mxu0 0
        %3147 = vmatprep.subr.bf16.mxu0 0
        %3148 = vmatpush1.bf16.xpose.msra.mxu0 0
        %3149 = vmatprep.subr.bf16.mxu0 0
        %3150 = vmatpush1.bf16.xpose.msra.mxu0 0
        %3151 = vmatprep.mubr.bf16.mxu0 0
        %3152 = vmatmul.mubr.bf16.gmra.mrb[0].mxu0 %v3114
        %v3153 = vpop.f32.mrb[0].mxu0
        %v3154 = vadd.f32 0.0, %v3153
        %v3155 = vpop.f32.mrb[0].mxu0
        %v3156 = vpop.f32.mrb[0].mxu0
        %v3157 = vpop.f32.mrb[0].mxu0
        %3158 = vdwg.mxu0
        %v3160 = vsel %vm2606, %v2554, 0
        %v3163 = vsel %vm2606, %v2586, 0
        %3165 = vmatprep.subr.bf16.mxu0 0
        %3166 = vmatpush1.bf16.xpose.msra.mxu0 %v3163
        %3167 = vmatprep.subr.bf16.mxu0 0
        %3168 = vmatpush1.bf16.xpose.msra.mxu0 0
        %3169 = vmatprep.subr.bf16.mxu0 0
        %3170 = vmatpush1.bf16.xpose.msra.mxu0 0
        %3171 = vmatprep.subr.bf16.mxu0 0
        %3172 = vmatpush1.bf16.xpose.msra.mxu0 0
        %3173 = vmatprep.subr.bf16.mxu0 0
        %3174 = vmatpush1.bf16.xpose.msra.mxu0 0
        %3175 = vmatprep.subr.bf16.mxu0 0
        %3176 = vmatpush1.bf16.xpose.msra.mxu0 0
        %3177 = vmatprep.subr.bf16.mxu0 0
        %3178 = vmatpush1.bf16.xpose.msra.mxu0 0
        %3179 = vmatprep.subr.bf16.mxu0 0
        %3180 = vmatpush1.bf16.xpose.msra.mxu0 0
        %3181 = vmatprep.subr.bf16.mxu0 0
        %3182 = vmatpush1.bf16.xpose.msra.mxu0 0
        %3183 = vmatprep.subr.bf16.mxu0 0
        %3184 = vmatpush1.bf16.xpose.msra.mxu0 0
        %3185 = vmatprep.subr.bf16.mxu0 0
        %3186 = vmatpush1.bf16.xpose.msra.mxu0 0
        %3187 = vmatprep.subr.bf16.mxu0 0
        %3188 = vmatpush1.bf16.xpose.msra.mxu0 0
        %3189 = vmatprep.subr.bf16.mxu0 0
        %3190 = vmatpush1.bf16.xpose.msra.mxu0 0
        %3191 = vmatprep.subr.bf16.mxu0 0
        %3192 = vmatpush1.bf16.xpose.msra.mxu0 0
        %3193 = vmatprep.subr.bf16.mxu0 0
        %3194 = vmatpush1.bf16.xpose.msra.mxu0 0
        %3195 = vmatprep.subr.bf16.mxu0 0
        %3196 = vmatpush1.bf16.xpose.msra.mxu0 0
        %3197 = vmatprep.mubr.bf16.mxu0 0
        %3198 = vmatmul.mubr.bf16.gmra.mrb[0].mxu0 %v3160
        %v3199 = vpop.f32.mrb[0].mxu0
        %v3200 = vadd.f32 0.0, %v3199
        %v3201 = vpop.f32.mrb[0].mxu0
        %v3202 = vpop.f32.mrb[0].mxu0
        %v3203 = vpop.f32.mrb[0].mxu0
        %3204 = vdwg.mxu0
        %v3206 = vsel %vm2606, %v2555, 0
        %v3209 = vsel %vm2606, %v2587, 0
        %3211 = vmatprep.subr.bf16.mxu0 0
        %3212 = vmatpush1.bf16.xpose.msra.mxu0 %v3209
        %3213 = vmatprep.subr.bf16.mxu0 0
        %3214 = vmatpush1.bf16.xpose.msra.mxu0 0
        %3215 = vmatprep.subr.bf16.mxu0 0
        %3216 = vmatpush1.bf16.xpose.msra.mxu0 0
        %3217 = vmatprep.subr.bf16.mxu0 0
        %3218 = vmatpush1.bf16.xpose.msra.mxu0 0
        %3219 = vmatprep.subr.bf16.mxu0 0
        %3220 = vmatpush1.bf16.xpose.msra.mxu0 0
        %3221 = vmatprep.subr.bf16.mxu0 0
        %3222 = vmatpush1.bf16.xpose.msra.mxu0 0
        %3223 = vmatprep.subr.bf16.mxu0 0
        %3224 = vmatpush1.bf16.xpose.msra.mxu0 0
        %3225 = vmatprep.subr.bf16.mxu0 0
        %3226 = vmatpush1.bf16.xpose.msra.mxu0 0
        %3227 = vmatprep.subr.bf16.mxu0 0
        %3228 = vmatpush1.bf16.xpose.msra.mxu0 0
        %3229 = vmatprep.subr.bf16.mxu0 0
        %3230 = vmatpush1.bf16.xpose.msra.mxu0 0
        %3231 = vmatprep.subr.bf16.mxu0 0
        %3232 = vmatpush1.bf16.xpose.msra.mxu0 0
        %3233 = vmatprep.subr.bf16.mxu0 0
        %3234 = vmatpush1.bf16.xpose.msra.mxu0 0
        %3235 = vmatprep.subr.bf16.mxu0 0
        %3236 = vmatpush1.bf16.xpose.msra.mxu0 0
        %3237 = vmatprep.subr.bf16.mxu0 0
        %3238 = vmatpush1.bf16.xpose.msra.mxu0 0
        %3239 = vmatprep.subr.bf16.mxu0 0
        %3240 = vmatpush1.bf16.xpose.msra.mxu0 0
        %3241 = vmatprep.subr.bf16.mxu0 0
        %3242 = vmatpush1.bf16.xpose.msra.mxu0 0
        %3243 = vmatprep.mubr.bf16.mxu0 0
        %3244 = vmatmul.mubr.bf16.gmra.mrb[0].mxu0 %v3206
        %v3245 = vpop.f32.mrb[0].mxu0
        %v3246 = vadd.f32 0.0, %v3245
        %v3247 = vpop.f32.mrb[0].mxu0
        %v3248 = vpop.f32.mrb[0].mxu0
        %v3249 = vpop.f32.mrb[0].mxu0
        %3250 = vdwg.mxu0
        %v3252 = vsel %vm2606, %v2556, 0
        %v3255 = vsel %vm2606, %v2588, 0
        %3257 = vmatprep.subr.bf16.mxu0 0
        %3258 = vmatpush1.bf16.xpose.msra.mxu0 %v3255
        %3259 = vmatprep.subr.bf16.mxu0 0
        %3260 = vmatpush1.bf16.xpose.msra.mxu0 0
        %3261 = vmatprep.subr.bf16.mxu0 0
        %3262 = vmatpush1.bf16.xpose.msra.mxu0 0
        %3263 = vmatprep.subr.bf16.mxu0 0
        %3264 = vmatpush1.bf16.xpose.msra.mxu0 0
        %3265 = vmatprep.subr.bf16.mxu0 0
        %3266 = vmatpush1.bf16.xpose.msra.mxu0 0
        %3267 = vmatprep.subr.bf16.mxu0 0
        %3268 = vmatpush1.bf16.xpose.msra.mxu0 0
        %3269 = vmatprep.subr.bf16.mxu0 0
        %3270 = vmatpush1.bf16.xpose.msra.mxu0 0
        %3271 = vmatprep.subr.bf16.mxu0 0
        %3272 = vmatpush1.bf16.xpose.msra.mxu0 0
        %3273 = vmatprep.subr.bf16.mxu0 0
        %3274 = vmatpush1.bf16.xpose.msra.mxu0 0
        %3275 = vmatprep.subr.bf16.mxu0 0
        %3276 = vmatpush1.bf16.xpose.msra.mxu0 0
        %3277 = vmatprep.subr.bf16.mxu0 0
        %3278 = vmatpush1.bf16.xpose.msra.mxu0 0
        %3279 = vmatprep.subr.bf16.mxu0 0
        %3280 = vmatpush1.bf16.xpose.msra.mxu0 0
        %3281 = vmatprep.subr.bf16.mxu0 0
        %3282 = vmatpush1.bf16.xpose.msra.mxu0 0
        %3283 = vmatprep.subr.bf16.mxu0 0
        %3284 = vmatpush1.bf16.xpose.msra.mxu0 0
        %3285 = vmatprep.subr.bf16.mxu0 0
        %3286 = vmatpush1.bf16.xpose.msra.mxu0 0
        %3287 = vmatprep.subr.bf16.mxu0 0
        %3288 = vmatpush1.bf16.xpose.msra.mxu0 0
        %3289 = vmatprep.mubr.bf16.mxu0 0
        %3290 = vmatmul.mubr.bf16.gmra.mrb[0].mxu0 %v3252
        %v3291 = vpop.f32.mrb[0].mxu0
        %v3292 = vadd.f32 0.0, %v3291
        %v3293 = vpop.f32.mrb[0].mxu0
        %v3294 = vpop.f32.mrb[0].mxu0
        %v3295 = vpop.f32.mrb[0].mxu0
        %3296 = vdwg.mxu0
        %v3298 = vsel %vm2606, %v2557, 0
        %v3301 = vsel %vm2606, %v2589, 0
        %3303 = vmatprep.subr.bf16.mxu0 0
        %3304 = vmatpush1.bf16.xpose.msra.mxu0 %v3301
        %3305 = vmatprep.subr.bf16.mxu0 0
        %3306 = vmatpush1.bf16.xpose.msra.mxu0 0
        %3307 = vmatprep.subr.bf16.mxu0 0
        %3308 = vmatpush1.bf16.xpose.msra.mxu0 0
        %3309 = vmatprep.subr.bf16.mxu0 0
        %3310 = vmatpush1.bf16.xpose.msra.mxu0 0
        %3311 = vmatprep.subr.bf16.mxu0 0
        %3312 = vmatpush1.bf16.xpose.msra.mxu0 0
        %3313 = vmatprep.subr.bf16.mxu0 0
        %3314 = vmatpush1.bf16.xpose.msra.mxu0 0
        %3315 = vmatprep.subr.bf16.mxu0 0
        %3316 = vmatpush1.bf16.xpose.msra.mxu0 0
        %3317 = vmatprep.subr.bf16.mxu0 0
        %3318 = vmatpush1.bf16.xpose.msra.mxu0 0
        %3319 = vmatprep.subr.bf16.mxu0 0
        %3320 = vmatpush1.bf16.xpose.msra.mxu0 0
        %3321 = vmatprep.subr.bf16.mxu0 0
        %3322 = vmatpush1.bf16.xpose.msra.mxu0 0
        %3323 = vmatprep.subr.bf16.mxu0 0
        %3324 = vmatpush1.bf16.xpose.msra.mxu0 0
        %3325 = vmatprep.subr.bf16.mxu0 0
        %3326 = vmatpush1.bf16.xpose.msra.mxu0 0
        %3327 = vmatprep.subr.bf16.mxu0 0
        %3328 = vmatpush1.bf16.xpose.msra.mxu0 0
        %3329 = vmatprep.subr.bf16.mxu0 0
        %3330 = vmatpush1.bf16.xpose.msra.mxu0 0
        %3331 = vmatprep.subr.bf16.mxu0 0
        %3332 = vmatpush1.bf16.xpose.msra.mxu0 0
        %3333 = vmatprep.subr.bf16.mxu0 0
        %3334 = vmatpush1.bf16.xpose.msra.mxu0 0
        %3335 = vmatprep.mubr.bf16.mxu0 0
        %3336 = vmatmul.mubr.bf16.gmra.mrb[0].mxu0 %v3298
        %v3337 = vpop.f32.mrb[0].mxu0
        %v3338 = vadd.f32 0.0, %v3337
        %v3339 = vpop.f32.mrb[0].mxu0
        %v3340 = vpop.f32.mrb[0].mxu0
        %v3341 = vpop.f32.mrb[0].mxu0
        %3342 = vdwg.mxu0
        %v3344 = vsel %vm2606, %v2558, 0
        %v3347 = vsel %vm2606, %v2590, 0
        %3349 = vmatprep.subr.bf16.mxu0 0
        %3350 = vmatpush1.bf16.xpose.msra.mxu0 %v3347
        %3351 = vmatprep.subr.bf16.mxu0 0
        %3352 = vmatpush1.bf16.xpose.msra.mxu0 0
        %3353 = vmatprep.subr.bf16.mxu0 0
        %3354 = vmatpush1.bf16.xpose.msra.mxu0 0
        %3355 = vmatprep.subr.bf16.mxu0 0
        %3356 = vmatpush1.bf16.xpose.msra.mxu0 0
        %3357 = vmatprep.subr.bf16.mxu0 0
        %3358 = vmatpush1.bf16.xpose.msra.mxu0 0
        %3359 = vmatprep.subr.bf16.mxu0 0
        %3360 = vmatpush1.bf16.xpose.msra.mxu0 0
        %3361 = vmatprep.subr.bf16.mxu0 0
        %3362 = vmatpush1.bf16.xpose.msra.mxu0 0
        %3363 = vmatprep.subr.bf16.mxu0 0
        %3364 = vmatpush1.bf16.xpose.msra.mxu0 0
        %3365 = vmatprep.subr.bf16.mxu0 0
        %3366 = vmatpush1.bf16.xpose.msra.mxu0 0
        %3367 = vmatprep.subr.bf16.mxu0 0
        %3368 = vmatpush1.bf16.xpose.msra.mxu0 0
        %3369 = vmatprep.subr.bf16.mxu0 0
        %3370 = vmatpush1.bf16.xpose.msra.mxu0 0
        %3371 = vmatprep.subr.bf16.mxu0 0
        %3372 = vmatpush1.bf16.xpose.msra.mxu0 0
        %3373 = vmatprep.subr.bf16.mxu0 0
        %3374 = vmatpush1.bf16.xpose.msra.mxu0 0
        %3375 = vmatprep.subr.bf16.mxu0 0
        %3376 = vmatpush1.bf16.xpose.msra.mxu0 0
        %3377 = vmatprep.subr.bf16.mxu0 0
        %3378 = vmatpush1.bf16.xpose.msra.mxu0 0
        %3379 = vmatprep.subr.bf16.mxu0 0
        %3380 = vmatpush1.bf16.xpose.msra.mxu0 0
        %3381 = vmatprep.mubr.bf16.mxu0 0
        %3382 = vmatmul.mubr.bf16.gmra.mrb[0].mxu0 %v3344
        %v3383 = vpop.f32.mrb[0].mxu0
        %v3384 = vadd.f32 0.0, %v3383
        %v3385 = vpop.f32.mrb[0].mxu0
        %v3386 = vpop.f32.mrb[0].mxu0
        %v3387 = vpop.f32.mrb[0].mxu0
        %3388 = vdwg.mxu0
        %v3390 = vsel %vm2606, %v2559, 0
        %v3393 = vsel %vm2606, %v2591, 0
        %3395 = vmatprep.subr.bf16.mxu0 0
        %3396 = vmatpush1.bf16.xpose.msra.mxu0 %v3393
        %3397 = vmatprep.subr.bf16.mxu0 0
        %3398 = vmatpush1.bf16.xpose.msra.mxu0 0
        %3399 = vmatprep.subr.bf16.mxu0 0
        %3400 = vmatpush1.bf16.xpose.msra.mxu0 0
        %3401 = vmatprep.subr.bf16.mxu0 0
        %3402 = vmatpush1.bf16.xpose.msra.mxu0 0
        %3403 = vmatprep.subr.bf16.mxu0 0
        %3404 = vmatpush1.bf16.xpose.msra.mxu0 0
        %3405 = vmatprep.subr.bf16.mxu0 0
        %3406 = vmatpush1.bf16.xpose.msra.mxu0 0
        %3407 = vmatprep.subr.bf16.mxu0 0
        %3408 = vmatpush1.bf16.xpose.msra.mxu0 0
        %3409 = vmatprep.subr.bf16.mxu0 0
        %3410 = vmatpush1.bf16.xpose.msra.mxu0 0
        %3411 = vmatprep.subr.bf16.mxu0 0
        %3412 = vmatpush1.bf16.xpose.msra.mxu0 0
        %3413 = vmatprep.subr.bf16.mxu0 0
        %3414 = vmatpush1.bf16.xpose.msra.mxu0 0
        %3415 = vmatprep.subr.bf16.mxu0 0
        %3416 = vmatpush1.bf16.xpose.msra.mxu0 0
        %3417 = vmatprep.subr.bf16.mxu0 0
        %3418 = vmatpush1.bf16.xpose.msra.mxu0 0
        %3419 = vmatprep.subr.bf16.mxu0 0
        %3420 = vmatpush1.bf16.xpose.msra.mxu0 0
        %3421 = vmatprep.subr.bf16.mxu0 0
        %3422 = vmatpush1.bf16.xpose.msra.mxu0 0
        %3423 = vmatprep.subr.bf16.mxu0 0
        %3424 = vmatpush1.bf16.xpose.msra.mxu0 0
        %3425 = vmatprep.subr.bf16.mxu0 0
        %3426 = vmatpush1.bf16.xpose.msra.mxu0 0
        %3427 = vmatprep.mubr.bf16.mxu0 0
        %3428 = vmatmul.mubr.bf16.gmra.mrb[0].mxu0 %v3390
        %v3429 = vpop.f32.mrb[0].mxu0
        %v3430 = vadd.f32 0.0, %v3429
        %v3431 = vpop.f32.mrb[0].mxu0
        %v3432 = vpop.f32.mrb[0].mxu0
        %v3433 = vpop.f32.mrb[0].mxu0
        %3434 = vdwg.mxu0
        %v3436 = vsel %vm2606, %v2560, 0
        %v3439 = vsel %vm2606, %v2592, 0
        %3441 = vmatprep.subr.bf16.mxu0 0
        %3442 = vmatpush1.bf16.xpose.msra.mxu0 %v3439
        %3443 = vmatprep.subr.bf16.mxu0 0
        %3444 = vmatpush1.bf16.xpose.msra.mxu0 0
        %3445 = vmatprep.subr.bf16.mxu0 0
        %3446 = vmatpush1.bf16.xpose.msra.mxu0 0
        %3447 = vmatprep.subr.bf16.mxu0 0
        %3448 = vmatpush1.bf16.xpose.msra.mxu0 0
        %3449 = vmatprep.subr.bf16.mxu0 0
        %3450 = vmatpush1.bf16.xpose.msra.mxu0 0
        %3451 = vmatprep.subr.bf16.mxu0 0
        %3452 = vmatpush1.bf16.xpose.msra.mxu0 0
        %3453 = vmatprep.subr.bf16.mxu0 0
        %3454 = vmatpush1.bf16.xpose.msra.mxu0 0
        %3455 = vmatprep.subr.bf16.mxu0 0
        %3456 = vmatpush1.bf16.xpose.msra.mxu0 0
        %3457 = vmatprep.subr.bf16.mxu0 0
        %3458 = vmatpush1.bf16.xpose.msra.mxu0 0
        %3459 = vmatprep.subr.bf16.mxu0 0
        %3460 = vmatpush1.bf16.xpose.msra.mxu0 0
        %3461 = vmatprep.subr.bf16.mxu0 0
        %3462 = vmatpush1.bf16.xpose.msra.mxu0 0
        %3463 = vmatprep.subr.bf16.mxu0 0
        %3464 = vmatpush1.bf16.xpose.msra.mxu0 0
        %3465 = vmatprep.subr.bf16.mxu0 0
        %3466 = vmatpush1.bf16.xpose.msra.mxu0 0
        %3467 = vmatprep.subr.bf16.mxu0 0
        %3468 = vmatpush1.bf16.xpose.msra.mxu0 0
        %3469 = vmatprep.subr.bf16.mxu0 0
        %3470 = vmatpush1.bf16.xpose.msra.mxu0 0
        %3471 = vmatprep.subr.bf16.mxu0 0
        %3472 = vmatpush1.bf16.xpose.msra.mxu0 0
        %3473 = vmatprep.mubr.bf16.mxu0 0
        %3474 = vmatmul.mubr.bf16.gmra.mrb[0].mxu0 %v3436
        %v3475 = vpop.f32.mrb[0].mxu0
        %v3476 = vadd.f32 0.0, %v3475
        %v3477 = vpop.f32.mrb[0].mxu0
        %v3478 = vpop.f32.mrb[0].mxu0
        %v3479 = vpop.f32.mrb[0].mxu0
        %3480 = vdwg.mxu0
        %v3482 = vsel %vm2606, %v2561, 0
        %v3485 = vsel %vm2606, %v2593, 0
        %3487 = vmatprep.subr.bf16.mxu0 0
        %3488 = vmatpush1.bf16.xpose.msra.mxu0 %v3485
        %3489 = vmatprep.subr.bf16.mxu0 0
        %3490 = vmatpush1.bf16.xpose.msra.mxu0 0
        %3491 = vmatprep.subr.bf16.mxu0 0
        %3492 = vmatpush1.bf16.xpose.msra.mxu0 0
        %3493 = vmatprep.subr.bf16.mxu0 0
        %3494 = vmatpush1.bf16.xpose.msra.mxu0 0
        %3495 = vmatprep.subr.bf16.mxu0 0
        %3496 = vmatpush1.bf16.xpose.msra.mxu0 0
        %3497 = vmatprep.subr.bf16.mxu0 0
        %3498 = vmatpush1.bf16.xpose.msra.mxu0 0
        %3499 = vmatprep.subr.bf16.mxu0 0
        %3500 = vmatpush1.bf16.xpose.msra.mxu0 0
        %3501 = vmatprep.subr.bf16.mxu0 0
        %3502 = vmatpush1.bf16.xpose.msra.mxu0 0
        %3503 = vmatprep.subr.bf16.mxu0 0
        %3504 = vmatpush1.bf16.xpose.msra.mxu0 0
        %3505 = vmatprep.subr.bf16.mxu0 0
        %3506 = vmatpush1.bf16.xpose.msra.mxu0 0
        %3507 = vmatprep.subr.bf16.mxu0 0
        %3508 = vmatpush1.bf16.xpose.msra.mxu0 0
        %3509 = vmatprep.subr.bf16.mxu0 0
        %3510 = vmatpush1.bf16.xpose.msra.mxu0 0
        %3511 = vmatprep.subr.bf16.mxu0 0
        %3512 = vmatpush1.bf16.xpose.msra.mxu0 0
        %3513 = vmatprep.subr.bf16.mxu0 0
        %3514 = vmatpush1.bf16.xpose.msra.mxu0 0
        %3515 = vmatprep.subr.bf16.mxu0 0
        %3516 = vmatpush1.bf16.xpose.msra.mxu0 0
        %3517 = vmatprep.subr.bf16.mxu0 0
        %3518 = vmatpush1.bf16.xpose.msra.mxu0 0
        %3519 = vmatprep.mubr.bf16.mxu0 0
        %3520 = vmatmul.mubr.bf16.gmra.mrb[0].mxu0 %v3482
        %v3521 = vpop.f32.mrb[0].mxu0
        %v3522 = vadd.f32 0.0, %v3521
        %v3523 = vpop.f32.mrb[0].mxu0
        %v3524 = vpop.f32.mrb[0].mxu0
        %v3525 = vpop.f32.mrb[0].mxu0
        %3526 = vdwg.mxu0
        %v3528 = vsel %vm2606, %v2562, 0
        %v3531 = vsel %vm2606, %v2594, 0
        %3533 = vmatprep.subr.bf16.mxu0 0
        %3534 = vmatpush1.bf16.xpose.msra.mxu0 %v3531
        %3535 = vmatprep.subr.bf16.mxu0 0
        %3536 = vmatpush1.bf16.xpose.msra.mxu0 0
        %3537 = vmatprep.subr.bf16.mxu0 0
        %3538 = vmatpush1.bf16.xpose.msra.mxu0 0
        %3539 = vmatprep.subr.bf16.mxu0 0
        %3540 = vmatpush1.bf16.xpose.msra.mxu0 0
        %3541 = vmatprep.subr.bf16.mxu0 0
        %3542 = vmatpush1.bf16.xpose.msra.mxu0 0
        %3543 = vmatprep.subr.bf16.mxu0 0
        %3544 = vmatpush1.bf16.xpose.msra.mxu0 0
        %3545 = vmatprep.subr.bf16.mxu0 0
        %3546 = vmatpush1.bf16.xpose.msra.mxu0 0
        %3547 = vmatprep.subr.bf16.mxu0 0
        %3548 = vmatpush1.bf16.xpose.msra.mxu0 0
        %3549 = vmatprep.subr.bf16.mxu0 0
        %3550 = vmatpush1.bf16.xpose.msra.mxu0 0
        %3551 = vmatprep.subr.bf16.mxu0 0
        %3552 = vmatpush1.bf16.xpose.msra.mxu0 0
        %3553 = vmatprep.subr.bf16.mxu0 0
        %3554 = vmatpush1.bf16.xpose.msra.mxu0 0
        %3555 = vmatprep.subr.bf16.mxu0 0
        %3556 = vmatpush1.bf16.xpose.msra.mxu0 0
        %3557 = vmatprep.subr.bf16.mxu0 0
        %3558 = vmatpush1.bf16.xpose.msra.mxu0 0
        %3559 = vmatprep.subr.bf16.mxu0 0
        %3560 = vmatpush1.bf16.xpose.msra.mxu0 0
        %3561 = vmatprep.subr.bf16.mxu0 0
        %3562 = vmatpush1.bf16.xpose.msra.mxu0 0
        %3563 = vmatprep.subr.bf16.mxu0 0
        %3564 = vmatpush1.bf16.xpose.msra.mxu0 0
        %3565 = vmatprep.mubr.bf16.mxu0 0
        %3566 = vmatmul.mubr.bf16.gmra.mrb[0].mxu0 %v3528
        %v3567 = vpop.f32.mrb[0].mxu0
        %v3568 = vadd.f32 0.0, %v3567
        %v3569 = vpop.f32.mrb[0].mxu0
        %v3570 = vpop.f32.mrb[0].mxu0
        %v3571 = vpop.f32.mrb[0].mxu0
        %3572 = vdwg.mxu0
        %v3574 = vsel %vm2606, %v2563, 0
        %v3577 = vsel %vm2606, %v2595, 0
        %3579 = vmatprep.subr.bf16.mxu0 0
        %3580 = vmatpush1.bf16.xpose.msra.mxu0 %v3577
        %3581 = vmatprep.subr.bf16.mxu0 0
        %3582 = vmatpush1.bf16.xpose.msra.mxu0 0
        %3583 = vmatprep.subr.bf16.mxu0 0
        %3584 = vmatpush1.bf16.xpose.msra.mxu0 0
        %3585 = vmatprep.subr.bf16.mxu0 0
        %3586 = vmatpush1.bf16.xpose.msra.mxu0 0
        %3587 = vmatprep.subr.bf16.mxu0 0
        %3588 = vmatpush1.bf16.xpose.msra.mxu0 0
        %3589 = vmatprep.subr.bf16.mxu0 0
        %3590 = vmatpush1.bf16.xpose.msra.mxu0 0
        %3591 = vmatprep.subr.bf16.mxu0 0
        %3592 = vmatpush1.bf16.xpose.msra.mxu0 0
        %3593 = vmatprep.subr.bf16.mxu0 0
        %3594 = vmatpush1.bf16.xpose.msra.mxu0 0
        %3595 = vmatprep.subr.bf16.mxu0 0
        %3596 = vmatpush1.bf16.xpose.msra.mxu0 0
        %3597 = vmatprep.subr.bf16.mxu0 0
        %3598 = vmatpush1.bf16.xpose.msra.mxu0 0
        %3599 = vmatprep.subr.bf16.mxu0 0
        %3600 = vmatpush1.bf16.xpose.msra.mxu0 0
        %3601 = vmatprep.subr.bf16.mxu0 0
        %3602 = vmatpush1.bf16.xpose.msra.mxu0 0
        %3603 = vmatprep.subr.bf16.mxu0 0
        %3604 = vmatpush1.bf16.xpose.msra.mxu0 0
        %3605 = vmatprep.subr.bf16.mxu0 0
        %3606 = vmatpush1.bf16.xpose.msra.mxu0 0
        %3607 = vmatprep.subr.bf16.mxu0 0
        %3608 = vmatpush1.bf16.xpose.msra.mxu0 0
        %3609 = vmatprep.subr.bf16.mxu0 0
        %3610 = vmatpush1.bf16.xpose.msra.mxu0 0
        %3611 = vmatprep.mubr.bf16.mxu0 0
        %3612 = vmatmul.mubr.bf16.gmra.mrb[0].mxu0 %v3574
        %v3613 = vpop.f32.mrb[0].mxu0
        %v3614 = vadd.f32 0.0, %v3613
        %v3615 = vpop.f32.mrb[0].mxu0
        %v3616 = vpop.f32.mrb[0].mxu0
        %v3617 = vpop.f32.mrb[0].mxu0
        %3618 = vdwg.mxu0
        %v3620 = vsel %vm2606, %v2564, 0
        %v3623 = vsel %vm2606, %v2596, 0
        %3625 = vmatprep.subr.bf16.mxu0 0
        %3626 = vmatpush1.bf16.xpose.msra.mxu0 %v3623
        %3627 = vmatprep.subr.bf16.mxu0 0
        %3628 = vmatpush1.bf16.xpose.msra.mxu0 0
        %3629 = vmatprep.subr.bf16.mxu0 0
        %3630 = vmatpush1.bf16.xpose.msra.mxu0 0
        %3631 = vmatprep.subr.bf16.mxu0 0
        %3632 = vmatpush1.bf16.xpose.msra.mxu0 0
        %3633 = vmatprep.subr.bf16.mxu0 0
        %3634 = vmatpush1.bf16.xpose.msra.mxu0 0
        %3635 = vmatprep.subr.bf16.mxu0 0
        %3636 = vmatpush1.bf16.xpose.msra.mxu0 0
        %3637 = vmatprep.subr.bf16.mxu0 0
        %3638 = vmatpush1.bf16.xpose.msra.mxu0 0
        %3639 = vmatprep.subr.bf16.mxu0 0
        %3640 = vmatpush1.bf16.xpose.msra.mxu0 0
        %3641 = vmatprep.subr.bf16.mxu0 0
        %3642 = vmatpush1.bf16.xpose.msra.mxu0 0
        %3643 = vmatprep.subr.bf16.mxu0 0
        %3644 = vmatpush1.bf16.xpose.msra.mxu0 0
        %3645 = vmatprep.subr.bf16.mxu0 0
        %3646 = vmatpush1.bf16.xpose.msra.mxu0 0
        %3647 = vmatprep.subr.bf16.mxu0 0
        %3648 = vmatpush1.bf16.xpose.msra.mxu0 0
        %3649 = vmatprep.subr.bf16.mxu0 0
        %3650 = vmatpush1.bf16.xpose.msra.mxu0 0
        %3651 = vmatprep.subr.bf16.mxu0 0
        %3652 = vmatpush1.bf16.xpose.msra.mxu0 0
        %3653 = vmatprep.subr.bf16.mxu0 0
        %3654 = vmatpush1.bf16.xpose.msra.mxu0 0
        %3655 = vmatprep.subr.bf16.mxu0 0
        %3656 = vmatpush1.bf16.xpose.msra.mxu0 0
        %3657 = vmatprep.mubr.bf16.mxu0 0
        %3658 = vmatmul.mubr.bf16.gmra.mrb[0].mxu0 %v3620
        %v3659 = vpop.f32.mrb[0].mxu0
        %v3660 = vadd.f32 0.0, %v3659
        %v3661 = vpop.f32.mrb[0].mxu0
        %v3662 = vpop.f32.mrb[0].mxu0
        %v3663 = vpop.f32.mrb[0].mxu0
        %3664 = vdwg.mxu0
        %v3666 = vsel %vm2606, %v2565, 0
        %v3669 = vsel %vm2606, %v2597, 0
        %3671 = vmatprep.subr.bf16.mxu0 0
        %3672 = vmatpush1.bf16.xpose.msra.mxu0 %v3669
        %3673 = vmatprep.subr.bf16.mxu0 0
        %3674 = vmatpush1.bf16.xpose.msra.mxu0 0
        %3675 = vmatprep.subr.bf16.mxu0 0
        %3676 = vmatpush1.bf16.xpose.msra.mxu0 0
        %3677 = vmatprep.subr.bf16.mxu0 0
        %3678 = vmatpush1.bf16.xpose.msra.mxu0 0
        %3679 = vmatprep.subr.bf16.mxu0 0
        %3680 = vmatpush1.bf16.xpose.msra.mxu0 0
        %3681 = vmatprep.subr.bf16.mxu0 0
        %3682 = vmatpush1.bf16.xpose.msra.mxu0 0
        %3683 = vmatprep.subr.bf16.mxu0 0
        %3684 = vmatpush1.bf16.xpose.msra.mxu0 0
        %3685 = vmatprep.subr.bf16.mxu0 0
        %3686 = vmatpush1.bf16.xpose.msra.mxu0 0
        %3687 = vmatprep.subr.bf16.mxu0 0
        %3688 = vmatpush1.bf16.xpose.msra.mxu0 0
        %3689 = vmatprep.subr.bf16.mxu0 0
        %3690 = vmatpush1.bf16.xpose.msra.mxu0 0
        %3691 = vmatprep.subr.bf16.mxu0 0
        %3692 = vmatpush1.bf16.xpose.msra.mxu0 0
        %3693 = vmatprep.subr.bf16.mxu0 0
        %3694 = vmatpush1.bf16.xpose.msra.mxu0 0
        %3695 = vmatprep.subr.bf16.mxu0 0
        %3696 = vmatpush1.bf16.xpose.msra.mxu0 0
        %3697 = vmatprep.subr.bf16.mxu0 0
        %3698 = vmatpush1.bf16.xpose.msra.mxu0 0
        %3699 = vmatprep.subr.bf16.mxu0 0
        %3700 = vmatpush1.bf16.xpose.msra.mxu0 0
        %3701 = vmatprep.subr.bf16.mxu0 0
        %3702 = vmatpush1.bf16.xpose.msra.mxu0 0
        %3703 = vmatprep.mubr.bf16.mxu0 0
        %3704 = vmatmul.mubr.bf16.gmra.mrb[0].mxu0 %v3666
        %v3705 = vpop.f32.mrb[0].mxu0
        %v3706 = vadd.f32 0.0, %v3705
        %v3707 = vpop.f32.mrb[0].mxu0
        %v3708 = vpop.f32.mrb[0].mxu0
        %v3709 = vpop.f32.mrb[0].mxu0
        %3710 = vdwg.mxu0
        %v3712 = vsel %vm2606, %v2566, 0
        %v3715 = vsel %vm2606, %v2598, 0
        %3717 = vmatprep.subr.bf16.mxu0 0
        %3718 = vmatpush1.bf16.xpose.msra.mxu0 %v3715
        %3719 = vmatprep.subr.bf16.mxu0 0
        %3720 = vmatpush1.bf16.xpose.msra.mxu0 0
        %3721 = vmatprep.subr.bf16.mxu0 0
        %3722 = vmatpush1.bf16.xpose.msra.mxu0 0
        %3723 = vmatprep.subr.bf16.mxu0 0
        %3724 = vmatpush1.bf16.xpose.msra.mxu0 0
        %3725 = vmatprep.subr.bf16.mxu0 0
        %3726 = vmatpush1.bf16.xpose.msra.mxu0 0
        %3727 = vmatprep.subr.bf16.mxu0 0
        %3728 = vmatpush1.bf16.xpose.msra.mxu0 0
        %3729 = vmatprep.subr.bf16.mxu0 0
        %3730 = vmatpush1.bf16.xpose.msra.mxu0 0
        %3731 = vmatprep.subr.bf16.mxu0 0
        %3732 = vmatpush1.bf16.xpose.msra.mxu0 0
        %3733 = vmatprep.subr.bf16.mxu0 0
        %3734 = vmatpush1.bf16.xpose.msra.mxu0 0
        %3735 = vmatprep.subr.bf16.mxu0 0
        %3736 = vmatpush1.bf16.xpose.msra.mxu0 0
        %3737 = vmatprep.subr.bf16.mxu0 0
        %3738 = vmatpush1.bf16.xpose.msra.mxu0 0
        %3739 = vmatprep.subr.bf16.mxu0 0
        %3740 = vmatpush1.bf16.xpose.msra.mxu0 0
        %3741 = vmatprep.subr.bf16.mxu0 0
        %3742 = vmatpush1.bf16.xpose.msra.mxu0 0
        %3743 = vmatprep.subr.bf16.mxu0 0
        %3744 = vmatpush1.bf16.xpose.msra.mxu0 0
        %3745 = vmatprep.subr.bf16.mxu0 0
        %3746 = vmatpush1.bf16.xpose.msra.mxu0 0
        %3747 = vmatprep.subr.bf16.mxu0 0
        %3748 = vmatpush1.bf16.xpose.msra.mxu0 0
        %3749 = vmatprep.mubr.bf16.mxu0 0
        %3750 = vmatmul.mubr.bf16.gmra.mrb[0].mxu0 %v3712
        %v3751 = vpop.f32.mrb[0].mxu0
        %v3752 = vadd.f32 0.0, %v3751
        %v3753 = vpop.f32.mrb[0].mxu0
        %v3754 = vpop.f32.mrb[0].mxu0
        %v3755 = vpop.f32.mrb[0].mxu0
        %3756 = vdwg.mxu0
        %v3758 = vsel %vm2606, %v2567, 0
        %v3761 = vsel %vm2606, %v2599, 0
        %3763 = vmatprep.subr.bf16.mxu0 0
        %3764 = vmatpush1.bf16.xpose.msra.mxu0 %v3761
        %3765 = vmatprep.subr.bf16.mxu0 0
        %3766 = vmatpush1.bf16.xpose.msra.mxu0 0
        %3767 = vmatprep.subr.bf16.mxu0 0
        %3768 = vmatpush1.bf16.xpose.msra.mxu0 0
        %3769 = vmatprep.subr.bf16.mxu0 0
        %3770 = vmatpush1.bf16.xpose.msra.mxu0 0
        %3771 = vmatprep.subr.bf16.mxu0 0
        %3772 = vmatpush1.bf16.xpose.msra.mxu0 0
        %3773 = vmatprep.subr.bf16.mxu0 0
        %3774 = vmatpush1.bf16.xpose.msra.mxu0 0
        %3775 = vmatprep.subr.bf16.mxu0 0
        %3776 = vmatpush1.bf16.xpose.msra.mxu0 0
        %3777 = vmatprep.subr.bf16.mxu0 0
        %3778 = vmatpush1.bf16.xpose.msra.mxu0 0
        %3779 = vmatprep.subr.bf16.mxu0 0
        %3780 = vmatpush1.bf16.xpose.msra.mxu0 0
        %3781 = vmatprep.subr.bf16.mxu0 0
        %3782 = vmatpush1.bf16.xpose.msra.mxu0 0
        %3783 = vmatprep.subr.bf16.mxu0 0
        %3784 = vmatpush1.bf16.xpose.msra.mxu0 0
        %3785 = vmatprep.subr.bf16.mxu0 0
        %3786 = vmatpush1.bf16.xpose.msra.mxu0 0
        %3787 = vmatprep.subr.bf16.mxu0 0
        %3788 = vmatpush1.bf16.xpose.msra.mxu0 0
        %3789 = vmatprep.subr.bf16.mxu0 0
        %3790 = vmatpush1.bf16.xpose.msra.mxu0 0
        %3791 = vmatprep.subr.bf16.mxu0 0
        %3792 = vmatpush1.bf16.xpose.msra.mxu0 0
        %3793 = vmatprep.subr.bf16.mxu0 0
        %3794 = vmatpush1.bf16.xpose.msra.mxu0 0
        %3795 = vmatprep.mubr.bf16.mxu0 0
        %3796 = vmatmul.mubr.bf16.gmra.mrb[0].mxu0 %v3758
        %v3797 = vpop.f32.mrb[0].mxu0
        %v3798 = vadd.f32 0.0, %v3797
        %v3799 = vpop.f32.mrb[0].mxu0
        %v3800 = vpop.f32.mrb[0].mxu0
        %v3801 = vpop.f32.mrb[0].mxu0
        %3802 = vdwg.mxu0
        %v3804 = vsel %vm2606, %v2568, 0
        %v3807 = vsel %vm2606, %v2600, 0
        %3809 = vmatprep.subr.bf16.mxu0 0
        %3810 = vmatpush1.bf16.xpose.msra.mxu0 %v3807
        %3811 = vmatprep.subr.bf16.mxu0 0
        %3812 = vmatpush1.bf16.xpose.msra.mxu0 0
        %3813 = vmatprep.subr.bf16.mxu0 0
        %3814 = vmatpush1.bf16.xpose.msra.mxu0 0
        %3815 = vmatprep.subr.bf16.mxu0 0
        %3816 = vmatpush1.bf16.xpose.msra.mxu0 0
        %3817 = vmatprep.subr.bf16.mxu0 0
        %3818 = vmatpush1.bf16.xpose.msra.mxu0 0
        %3819 = vmatprep.subr.bf16.mxu0 0
        %3820 = vmatpush1.bf16.xpose.msra.mxu0 0
        %3821 = vmatprep.subr.bf16.mxu0 0
        %3822 = vmatpush1.bf16.xpose.msra.mxu0 0
        %3823 = vmatprep.subr.bf16.mxu0 0
        %3824 = vmatpush1.bf16.xpose.msra.mxu0 0
        %3825 = vmatprep.subr.bf16.mxu0 0
        %3826 = vmatpush1.bf16.xpose.msra.mxu0 0
        %3827 = vmatprep.subr.bf16.mxu0 0
        %3828 = vmatpush1.bf16.xpose.msra.mxu0 0
        %3829 = vmatprep.subr.bf16.mxu0 0
        %3830 = vmatpush1.bf16.xpose.msra.mxu0 0
        %3831 = vmatprep.subr.bf16.mxu0 0
        %3832 = vmatpush1.bf16.xpose.msra.mxu0 0
        %3833 = vmatprep.subr.bf16.mxu0 0
        %3834 = vmatpush1.bf16.xpose.msra.mxu0 0
        %3835 = vmatprep.subr.bf16.mxu0 0
        %3836 = vmatpush1.bf16.xpose.msra.mxu0 0
        %3837 = vmatprep.subr.bf16.mxu0 0
        %3838 = vmatpush1.bf16.xpose.msra.mxu0 0
        %3839 = vmatprep.subr.bf16.mxu0 0
        %3840 = vmatpush1.bf16.xpose.msra.mxu0 0
        %3841 = vmatprep.mubr.bf16.mxu0 0
        %3842 = vmatmul.mubr.bf16.gmra.mrb[0].mxu0 %v3804
        %v3843 = vpop.f32.mrb[0].mxu0
        %v3844 = vadd.f32 0.0, %v3843
        %v3845 = vpop.f32.mrb[0].mxu0
        %v3846 = vpop.f32.mrb[0].mxu0
        %v3847 = vpop.f32.mrb[0].mxu0
        %3848 = vdwg.mxu0
        %v3850 = vsel %vm2606, %v2569, 0
        %v3853 = vsel %vm2606, %v2601, 0
        %3855 = vmatprep.subr.bf16.mxu0 0
        %3856 = vmatpush1.bf16.xpose.msra.mxu0 %v3853
        %3857 = vmatprep.subr.bf16.mxu0 0
        %3858 = vmatpush1.bf16.xpose.msra.mxu0 0
        %3859 = vmatprep.subr.bf16.mxu0 0
        %3860 = vmatpush1.bf16.xpose.msra.mxu0 0
        %3861 = vmatprep.subr.bf16.mxu0 0
        %3862 = vmatpush1.bf16.xpose.msra.mxu0 0
        %3863 = vmatprep.subr.bf16.mxu0 0
        %3864 = vmatpush1.bf16.xpose.msra.mxu0 0
        %3865 = vmatprep.subr.bf16.mxu0 0
        %3866 = vmatpush1.bf16.xpose.msra.mxu0 0
        %3867 = vmatprep.subr.bf16.mxu0 0
        %3868 = vmatpush1.bf16.xpose.msra.mxu0 0
        %3869 = vmatprep.subr.bf16.mxu0 0
        %3870 = vmatpush1.bf16.xpose.msra.mxu0 0
        %3871 = vmatprep.subr.bf16.mxu0 0
        %3872 = vmatpush1.bf16.xpose.msra.mxu0 0
        %3873 = vmatprep.subr.bf16.mxu0 0
        %3874 = vmatpush1.bf16.xpose.msra.mxu0 0
        %3875 = vmatprep.subr.bf16.mxu0 0
        %3876 = vmatpush1.bf16.xpose.msra.mxu0 0
        %3877 = vmatprep.subr.bf16.mxu0 0
        %3878 = vmatpush1.bf16.xpose.msra.mxu0 0
        %3879 = vmatprep.subr.bf16.mxu0 0
        %3880 = vmatpush1.bf16.xpose.msra.mxu0 0
        %3881 = vmatprep.subr.bf16.mxu0 0
        %3882 = vmatpush1.bf16.xpose.msra.mxu0 0
        %3883 = vmatprep.subr.bf16.mxu0 0
        %3884 = vmatpush1.bf16.xpose.msra.mxu0 0
        %3885 = vmatprep.subr.bf16.mxu0 0
        %3886 = vmatpush1.bf16.xpose.msra.mxu0 0
        %3887 = vmatprep.mubr.bf16.mxu0 0
        %3888 = vmatmul.mubr.bf16.gmra.mrb[0].mxu0 %v3850
        %v3889 = vpop.f32.mrb[0].mxu0
        %v3890 = vadd.f32 0.0, %v3889
        %v3891 = vpop.f32.mrb[0].mxu0
        %v3892 = vpop.f32.mrb[0].mxu0
        %v3893 = vpop.f32.mrb[0].mxu0
        %3894 = vdwg.mxu0
        %v3896 = vsel %vm2606, %v2570, 0
        %v3899 = vsel %vm2606, %v2602, 0
        %3901 = vmatprep.subr.bf16.mxu0 0
        %3902 = vmatpush1.bf16.xpose.msra.mxu0 %v3899
        %3903 = vmatprep.subr.bf16.mxu0 0
        %3904 = vmatpush1.bf16.xpose.msra.mxu0 0
        %3905 = vmatprep.subr.bf16.mxu0 0
        %3906 = vmatpush1.bf16.xpose.msra.mxu0 0
        %3907 = vmatprep.subr.bf16.mxu0 0
        %3908 = vmatpush1.bf16.xpose.msra.mxu0 0
        %3909 = vmatprep.subr.bf16.mxu0 0
        %3910 = vmatpush1.bf16.xpose.msra.mxu0 0
        %3911 = vmatprep.subr.bf16.mxu0 0
        %3912 = vmatpush1.bf16.xpose.msra.mxu0 0
        %3913 = vmatprep.subr.bf16.mxu0 0
        %3914 = vmatpush1.bf16.xpose.msra.mxu0 0
        %3915 = vmatprep.subr.bf16.mxu0 0
        %3916 = vmatpush1.bf16.xpose.msra.mxu0 0
        %3917 = vmatprep.subr.bf16.mxu0 0
        %3918 = vmatpush1.bf16.xpose.msra.mxu0 0
        %3919 = vmatprep.subr.bf16.mxu0 0
        %3920 = vmatpush1.bf16.xpose.msra.mxu0 0
        %3921 = vmatprep.subr.bf16.mxu0 0
        %3922 = vmatpush1.bf16.xpose.msra.mxu0 0
        %3923 = vmatprep.subr.bf16.mxu0 0
        %3924 = vmatpush1.bf16.xpose.msra.mxu0 0
        %3925 = vmatprep.subr.bf16.mxu0 0
        %3926 = vmatpush1.bf16.xpose.msra.mxu0 0
        %3927 = vmatprep.subr.bf16.mxu0 0
        %3928 = vmatpush1.bf16.xpose.msra.mxu0 0
        %3929 = vmatprep.subr.bf16.mxu0 0
        %3930 = vmatpush1.bf16.xpose.msra.mxu0 0
        %3931 = vmatprep.subr.bf16.mxu0 0
        %3932 = vmatpush1.bf16.xpose.msra.mxu0 0
        %3933 = vmatprep.mubr.bf16.mxu0 0
        %3934 = vmatmul.mubr.bf16.gmra.mrb[0].mxu0 %v3896
        %v3935 = vpop.f32.mrb[0].mxu0
        %v3936 = vadd.f32 0.0, %v3935
        %v3937 = vpop.f32.mrb[0].mxu0
        %v3938 = vpop.f32.mrb[0].mxu0
        %v3939 = vpop.f32.mrb[0].mxu0
        %3940 = vdwg.mxu0
        %v3942 = vsel %vm2606, %v2571, 0
        %v3945 = vsel %vm2606, %v2603, 0
        %3947 = vmatprep.subr.bf16.mxu0 0
        %3948 = vmatpush1.bf16.xpose.msra.mxu0 %v3945
        %3949 = vmatprep.subr.bf16.mxu0 0
        %3950 = vmatpush1.bf16.xpose.msra.mxu0 0
        %3951 = vmatprep.subr.bf16.mxu0 0
        %3952 = vmatpush1.bf16.xpose.msra.mxu0 0
        %3953 = vmatprep.subr.bf16.mxu0 0
        %3954 = vmatpush1.bf16.xpose.msra.mxu0 0
        %3955 = vmatprep.subr.bf16.mxu0 0
        %3956 = vmatpush1.bf16.xpose.msra.mxu0 0
        %3957 = vmatprep.subr.bf16.mxu0 0
        %3958 = vmatpush1.bf16.xpose.msra.mxu0 0
        %3959 = vmatprep.subr.bf16.mxu0 0
        %3960 = vmatpush1.bf16.xpose.msra.mxu0 0
        %3961 = vmatprep.subr.bf16.mxu0 0
        %3962 = vmatpush1.bf16.xpose.msra.mxu0 0
        %3963 = vmatprep.subr.bf16.mxu0 0
        %3964 = vmatpush1.bf16.xpose.msra.mxu0 0
        %3965 = vmatprep.subr.bf16.mxu0 0
        %3966 = vmatpush1.bf16.xpose.msra.mxu0 0
        %3967 = vmatprep.subr.bf16.mxu0 0
        %3968 = vmatpush1.bf16.xpose.msra.mxu0 0
        %3969 = vmatprep.subr.bf16.mxu0 0
        %3970 = vmatpush1.bf16.xpose.msra.mxu0 0
        %3971 = vmatprep.subr.bf16.mxu0 0
        %3972 = vmatpush1.bf16.xpose.msra.mxu0 0
        %3973 = vmatprep.subr.bf16.mxu0 0
        %3974 = vmatpush1.bf16.xpose.msra.mxu0 0
        %3975 = vmatprep.subr.bf16.mxu0 0
        %3976 = vmatpush1.bf16.xpose.msra.mxu0 0
        %3977 = vmatprep.subr.bf16.mxu0 0
        %3978 = vmatpush1.bf16.xpose.msra.mxu0 0
        %3979 = vmatprep.mubr.bf16.mxu0 0
        %3980 = vmatmul.mubr.bf16.gmra.mrb[0].mxu0 %v3942
        %v3981 = vpop.f32.mrb[0].mxu0
        %v3982 = vadd.f32 0.0, %v3981
        %v3983 = vpop.f32.mrb[0].mxu0
        %v3984 = vpop.f32.mrb[0].mxu0
        %v3985 = vpop.f32.mrb[0].mxu0
        %3986 = vdwg.mxu0
        %v3988 = vsel %vm2606, %v2572, 0
        %v3991 = vsel %vm2606, %v2604, 0
        %3993 = vmatprep.subr.bf16.mxu0 0
        %3994 = vmatpush1.bf16.xpose.msra.mxu0 %v3991
        %3995 = vmatprep.subr.bf16.mxu0 0
        %3996 = vmatpush1.bf16.xpose.msra.mxu0 0
        %3997 = vmatprep.subr.bf16.mxu0 0
        %3998 = vmatpush1.bf16.xpose.msra.mxu0 0
        %3999 = vmatprep.subr.bf16.mxu0 0
        %4000 = vmatpush1.bf16.xpose.msra.mxu0 0
        %4001 = vmatprep.subr.bf16.mxu0 0
        %4002 = vmatpush1.bf16.xpose.msra.mxu0 0
        %4003 = vmatprep.subr.bf16.mxu0 0
        %4004 = vmatpush1.bf16.xpose.msra.mxu0 0
        %4005 = vmatprep.subr.bf16.mxu0 0
        %4006 = vmatpush1.bf16.xpose.msra.mxu0 0
        %4007 = vmatprep.subr.bf16.mxu0 0
        %4008 = vmatpush1.bf16.xpose.msra.mxu0 0
        %4009 = vmatprep.subr.bf16.mxu0 0
        %4010 = vmatpush1.bf16.xpose.msra.mxu0 0
        %4011 = vmatprep.subr.bf16.mxu0 0
        %4012 = vmatpush1.bf16.xpose.msra.mxu0 0
        %4013 = vmatprep.subr.bf16.mxu0 0
        %4014 = vmatpush1.bf16.xpose.msra.mxu0 0
        %4015 = vmatprep.subr.bf16.mxu0 0
        %4016 = vmatpush1.bf16.xpose.msra.mxu0 0
        %4017 = vmatprep.subr.bf16.mxu0 0
        %4018 = vmatpush1.bf16.xpose.msra.mxu0 0
        %4019 = vmatprep.subr.bf16.mxu0 0
        %4020 = vmatpush1.bf16.xpose.msra.mxu0 0
        %4021 = vmatprep.subr.bf16.mxu0 0
        %4022 = vmatpush1.bf16.xpose.msra.mxu0 0
        %4023 = vmatprep.subr.bf16.mxu0 0
        %4024 = vmatpush1.bf16.xpose.msra.mxu0 0
        %4025 = vmatprep.mubr.bf16.mxu0 0
        %4026 = vmatmul.mubr.bf16.gmra.mrb[0].mxu0 %v3988
        %v4027 = vpop.f32.mrb[0].mxu0
        %v4028 = vadd.f32 0.0, %v4027
        %v4029 = vpop.f32.mrb[0].mxu0
        %v4030 = vpop.f32.mrb[0].mxu0
        %v4031 = vpop.f32.mrb[0].mxu0
        %4032 = vdwg.mxu0
        %v4034 = vsel %vm2606, %v2573, 0
        %v4037 = vsel %vm2606, %v2605, 0
        %4039 = vmatprep.subr.bf16.mxu0 0
        %4040 = vmatpush1.bf16.xpose.msra.mxu0 %v4037
        %4041 = vmatprep.subr.bf16.mxu0 0
        %4042 = vmatpush1.bf16.xpose.msra.mxu0 0
        %4043 = vmatprep.subr.bf16.mxu0 0
        %4044 = vmatpush1.bf16.xpose.msra.mxu0 0
        %4045 = vmatprep.subr.bf16.mxu0 0
        %4046 = vmatpush1.bf16.xpose.msra.mxu0 0
        %4047 = vmatprep.subr.bf16.mxu0 0
        %4048 = vmatpush1.bf16.xpose.msra.mxu0 0
        %4049 = vmatprep.subr.bf16.mxu0 0
        %4050 = vmatpush1.bf16.xpose.msra.mxu0 0
        %4051 = vmatprep.subr.bf16.mxu0 0
        %4052 = vmatpush1.bf16.xpose.msra.mxu0 0
        %4053 = vmatprep.subr.bf16.mxu0 0
        %4054 = vmatpush1.bf16.xpose.msra.mxu0 0
        %4055 = vmatprep.subr.bf16.mxu0 0
        %4056 = vmatpush1.bf16.xpose.msra.mxu0 0
        %4057 = vmatprep.subr.bf16.mxu0 0
        %4058 = vmatpush1.bf16.xpose.msra.mxu0 0
        %4059 = vmatprep.subr.bf16.mxu0 0
        %4060 = vmatpush1.bf16.xpose.msra.mxu0 0
        %4061 = vmatprep.subr.bf16.mxu0 0
        %4062 = vmatpush1.bf16.xpose.msra.mxu0 0
        %4063 = vmatprep.subr.bf16.mxu0 0
        %4064 = vmatpush1.bf16.xpose.msra.mxu0 0
        %4065 = vmatprep.subr.bf16.mxu0 0
        %4066 = vmatpush1.bf16.xpose.msra.mxu0 0
        %4067 = vmatprep.subr.bf16.mxu0 0
        %4068 = vmatpush1.bf16.xpose.msra.mxu0 0
        %4069 = vmatprep.subr.bf16.mxu0 0
        %4070 = vmatpush1.bf16.xpose.msra.mxu0 0
        %4071 = vmatprep.mubr.bf16.mxu0 0
        %4072 = vmatmul.mubr.bf16.gmra.mrb[0].mxu0 %v4034
        %v4073 = vpop.f32.mrb[0].mxu0
        %v4074 = vadd.f32 0.0, %v4073
        %v4075 = vpop.f32.mrb[0].mxu0
        %v4076 = vpop.f32.mrb[0].mxu0
        %v4077 = vpop.f32.mrb[0].mxu0
        %4078 = vdwg.mxu0
        %v4079 = vcombine.high %v2506, %v2506
        %v4081 = vunpack.c.l.s4 1966171168
        %v4082 = vunpack.c.0.s8 %v4081
        %v4083 = vlaneseq
        %v4084 = vshrl.u32 %v4083, 7
        %v4085 = vsub.s32 %v4082, %v4084
        %v4086 = vrot.slane %v2506, %v4085
        %v4088 = vunpack.c.l.s4 1966171168
        %v4089 = vunpack.c.0.s8 %v4088
        %v4090 = vlaneseq
        %v4091 = vshrl.u32 %v4090, 7
        %v4092 = vsub.s32 %v4089, %v4091
        %v4093 = vrot.slane %v4079, %v4092
        %v4094 = vcombine.high %v4086, %v4086
        %v4095 = vcombine.high %v4093, %v4093
        %v4097 = vunpack.c.l.s4 1966171168
        %v4098 = vunpack.c.0.s8 %v4097
        %v4099 = vlaneseq
        %v4100 = vshrl.u32 %v4099, 7
        %v4101 = vsub.s32 %v4098, %v4100
        %v4102 = vrot.slane %v4086, %v4101
        %v4104 = vunpack.c.l.s4 1966171168
        %v4105 = vunpack.c.0.s8 %v4104
        %v4106 = vlaneseq
        %v4107 = vshrl.u32 %v4106, 7
        %v4108 = vsub.s32 %v4105, %v4107
        %v4109 = vrot.slane %v4093, %v4108
        %v4111 = vunpack.c.l.s4 1966171168
        %v4112 = vunpack.c.0.s8 %v4111
        %v4113 = vlaneseq
        %v4114 = vshrl.u32 %v4113, 7
        %v4115 = vsub.s32 %v4112, %v4114
        %v4116 = vrot.slane %v4094, %v4115
        %v4118 = vunpack.c.l.s4 1966171168
        %v4119 = vunpack.c.0.s8 %v4118
        %v4120 = vlaneseq
        %v4121 = vshrl.u32 %v4120, 7
        %v4122 = vsub.s32 %v4119, %v4121
        %v4123 = vrot.slane %v4095, %v4122
        %v4124 = vcombine.high %v4102, %v4102
        %v4125 = vcombine.high %v4109, %v4109
        %v4126 = vcombine.high %v4116, %v4116
        %v4127 = vcombine.high %v4123, %v4123
        %v4128 = vcombine.high %v2507, %v2507
        %v4130 = vunpack.c.l.s4 1966171168
        %v4131 = vunpack.c.0.s8 %v4130
        %v4132 = vlaneseq
        %v4133 = vshrl.u32 %v4132, 7
        %v4134 = vsub.s32 %v4131, %v4133
        %v4135 = vrot.slane %v2507, %v4134
        %v4137 = vunpack.c.l.s4 1966171168
        %v4138 = vunpack.c.0.s8 %v4137
        %v4139 = vlaneseq
        %v4140 = vshrl.u32 %v4139, 7
        %v4141 = vsub.s32 %v4138, %v4140
        %v4142 = vrot.slane %v4128, %v4141
        %v4143 = vcombine.high %v4135, %v4135
        %v4144 = vcombine.high %v4142, %v4142
        %v4146 = vunpack.c.l.s4 1966171168
        %v4147 = vunpack.c.0.s8 %v4146
        %v4148 = vlaneseq
        %v4149 = vshrl.u32 %v4148, 7
        %v4150 = vsub.s32 %v4147, %v4149
        %v4151 = vrot.slane %v4135, %v4150
        %v4153 = vunpack.c.l.s4 1966171168
        %v4154 = vunpack.c.0.s8 %v4153
        %v4155 = vlaneseq
        %v4156 = vshrl.u32 %v4155, 7
        %v4157 = vsub.s32 %v4154, %v4156
        %v4158 = vrot.slane %v4142, %v4157
        %v4160 = vunpack.c.l.s4 1966171168
        %v4161 = vunpack.c.0.s8 %v4160
        %v4162 = vlaneseq
        %v4163 = vshrl.u32 %v4162, 7
        %v4164 = vsub.s32 %v4161, %v4163
        %v4165 = vrot.slane %v4143, %v4164
        %v4167 = vunpack.c.l.s4 1966171168
        %v4168 = vunpack.c.0.s8 %v4167
        %v4169 = vlaneseq
        %v4170 = vshrl.u32 %v4169, 7
        %v4171 = vsub.s32 %v4168, %v4170
        %v4172 = vrot.slane %v4144, %v4171
        %v4173 = vcombine.high %v4151, %v4151
        %v4174 = vcombine.high %v4158, %v4158
        %v4175 = vcombine.high %v4165, %v4165
        %v4176 = vcombine.high %v4172, %v4172
        %v4177 = vcombine.high %v2508, %v2508
        %v4179 = vunpack.c.l.s4 1966171168
        %v4180 = vunpack.c.0.s8 %v4179
        %v4181 = vlaneseq
        %v4182 = vshrl.u32 %v4181, 7
        %v4183 = vsub.s32 %v4180, %v4182
        %v4184 = vrot.slane %v2508, %v4183
        %v4186 = vunpack.c.l.s4 1966171168
        %v4187 = vunpack.c.0.s8 %v4186
        %v4188 = vlaneseq
        %v4189 = vshrl.u32 %v4188, 7
        %v4190 = vsub.s32 %v4187, %v4189
        %v4191 = vrot.slane %v4177, %v4190
        %v4192 = vcombine.high %v4184, %v4184
        %v4193 = vcombine.high %v4191, %v4191
        %v4195 = vunpack.c.l.s4 1966171168
        %v4196 = vunpack.c.0.s8 %v4195
        %v4197 = vlaneseq
        %v4198 = vshrl.u32 %v4197, 7
        %v4199 = vsub.s32 %v4196, %v4198
        %v4200 = vrot.slane %v4184, %v4199
        %v4202 = vunpack.c.l.s4 1966171168
        %v4203 = vunpack.c.0.s8 %v4202
        %v4204 = vlaneseq
        %v4205 = vshrl.u32 %v4204, 7
        %v4206 = vsub.s32 %v4203, %v4205
        %v4207 = vrot.slane %v4191, %v4206
        %v4209 = vunpack.c.l.s4 1966171168
        %v4210 = vunpack.c.0.s8 %v4209
        %v4211 = vlaneseq
        %v4212 = vshrl.u32 %v4211, 7
        %v4213 = vsub.s32 %v4210, %v4212
        %v4214 = vrot.slane %v4192, %v4213
        %v4216 = vunpack.c.l.s4 1966171168
        %v4217 = vunpack.c.0.s8 %v4216
        %v4218 = vlaneseq
        %v4219 = vshrl.u32 %v4218, 7
        %v4220 = vsub.s32 %v4217, %v4219
        %v4221 = vrot.slane %v4193, %v4220
        %v4222 = vcombine.high %v4200, %v4200
        %v4223 = vcombine.high %v4207, %v4207
        %v4224 = vcombine.high %v4214, %v4214
        %v4225 = vcombine.high %v4221, %v4221
        %v4226 = vcombine.high %v2509, %v2509
        %v4228 = vunpack.c.l.s4 1966171168
        %v4229 = vunpack.c.0.s8 %v4228
        %v4230 = vlaneseq
        %v4231 = vshrl.u32 %v4230, 7
        %v4232 = vsub.s32 %v4229, %v4231
        %v4233 = vrot.slane %v2509, %v4232
        %v4235 = vunpack.c.l.s4 1966171168
        %v4236 = vunpack.c.0.s8 %v4235
        %v4237 = vlaneseq
        %v4238 = vshrl.u32 %v4237, 7
        %v4239 = vsub.s32 %v4236, %v4238
        %v4240 = vrot.slane %v4226, %v4239
        %v4241 = vcombine.high %v4233, %v4233
        %v4242 = vcombine.high %v4240, %v4240
        %v4244 = vunpack.c.l.s4 1966171168
        %v4245 = vunpack.c.0.s8 %v4244
        %v4246 = vlaneseq
        %v4247 = vshrl.u32 %v4246, 7
        %v4248 = vsub.s32 %v4245, %v4247
        %v4249 = vrot.slane %v4233, %v4248
        %v4251 = vunpack.c.l.s4 1966171168
        %v4252 = vunpack.c.0.s8 %v4251
        %v4253 = vlaneseq
        %v4254 = vshrl.u32 %v4253, 7
        %v4255 = vsub.s32 %v4252, %v4254
        %v4256 = vrot.slane %v4240, %v4255
        %v4258 = vunpack.c.l.s4 1966171168
        %v4259 = vunpack.c.0.s8 %v4258
        %v4260 = vlaneseq
        %v4261 = vshrl.u32 %v4260, 7
        %v4262 = vsub.s32 %v4259, %v4261
        %v4263 = vrot.slane %v4241, %v4262
        %v4265 = vunpack.c.l.s4 1966171168
        %v4266 = vunpack.c.0.s8 %v4265
        %v4267 = vlaneseq
        %v4268 = vshrl.u32 %v4267, 7
        %v4269 = vsub.s32 %v4266, %v4268
        %v4270 = vrot.slane %v4242, %v4269
        %v4271 = vcombine.high %v4249, %v4249
        %v4272 = vcombine.high %v4256, %v4256
        %v4273 = vcombine.high %v4263, %v4263
        %v4274 = vcombine.high %v4270, %v4270
        %v4275 = vlaneseq
        %v4276 = vshrl.u32 %v4275, 7
        %v4277 = vsub.s32 0, %v4276
        %v4278 = vrot.slane %v4102, %v4277
        %v4279 = vlaneseq
        %v4280 = vshrl.u32 %v4279, 7
        %v4281 = vsub.s32 0, %v4280
        %v4282 = vrot.slane %v4116, %v4281
        %v4283 = vlaneseq
        %v4284 = vshrl.u32 %v4283, 7
        %v4285 = vsub.s32 0, %v4284
        %v4286 = vrot.slane %v4124, %v4285
        %v4287 = vlaneseq
        %v4288 = vshrl.u32 %v4287, 7
        %v4289 = vsub.s32 0, %v4288
        %v4290 = vrot.slane %v4126, %v4289
        %v4291 = vlaneseq
        %v4292 = vshrl.u32 %v4291, 7
        %v4293 = vsub.s32 0, %v4292
        %v4294 = vrot.slane %v4109, %v4293
        %v4295 = vlaneseq
        %v4296 = vshrl.u32 %v4295, 7
        %v4297 = vsub.s32 0, %v4296
        %v4298 = vrot.slane %v4123, %v4297
        %v4299 = vlaneseq
        %v4300 = vshrl.u32 %v4299, 7
        %v4301 = vsub.s32 0, %v4300
        %v4302 = vrot.slane %v4125, %v4301
        %v4303 = vlaneseq
        %v4304 = vshrl.u32 %v4303, 7
        %v4305 = vsub.s32 0, %v4304
        %v4306 = vrot.slane %v4127, %v4305
        %v4307 = vlaneseq
        %v4308 = vshrl.u32 %v4307, 7
        %v4309 = vsub.s32 0, %v4308
        %v4310 = vrot.slane %v4151, %v4309
        %v4311 = vlaneseq
        %v4312 = vshrl.u32 %v4311, 7
        %v4313 = vsub.s32 0, %v4312
        %v4314 = vrot.slane %v4165, %v4313
        %v4315 = vlaneseq
        %v4316 = vshrl.u32 %v4315, 7
        %v4317 = vsub.s32 0, %v4316
        %v4318 = vrot.slane %v4173, %v4317
        %v4319 = vlaneseq
        %v4320 = vshrl.u32 %v4319, 7
        %v4321 = vsub.s32 0, %v4320
        %v4322 = vrot.slane %v4175, %v4321
        %v4323 = vlaneseq
        %v4324 = vshrl.u32 %v4323, 7
        %v4325 = vsub.s32 0, %v4324
        %v4326 = vrot.slane %v4158, %v4325
        %v4327 = vlaneseq
        %v4328 = vshrl.u32 %v4327, 7
        %v4329 = vsub.s32 0, %v4328
        %v4330 = vrot.slane %v4172, %v4329
        %v4331 = vlaneseq
        %v4332 = vshrl.u32 %v4331, 7
        %v4333 = vsub.s32 0, %v4332
        %v4334 = vrot.slane %v4174, %v4333
        %v4335 = vlaneseq
        %v4336 = vshrl.u32 %v4335, 7
        %v4337 = vsub.s32 0, %v4336
        %v4338 = vrot.slane %v4176, %v4337
        %v4339 = vlaneseq
        %v4340 = vshrl.u32 %v4339, 7
        %v4341 = vsub.s32 0, %v4340
        %v4342 = vrot.slane %v4200, %v4341
        %v4343 = vlaneseq
        %v4344 = vshrl.u32 %v4343, 7
        %v4345 = vsub.s32 0, %v4344
        %v4346 = vrot.slane %v4214, %v4345
        %v4347 = vlaneseq
        %v4348 = vshrl.u32 %v4347, 7
        %v4349 = vsub.s32 0, %v4348
        %v4350 = vrot.slane %v4222, %v4349
        %v4351 = vlaneseq
        %v4352 = vshrl.u32 %v4351, 7
        %v4353 = vsub.s32 0, %v4352
        %v4354 = vrot.slane %v4224, %v4353
        %v4355 = vlaneseq
        %v4356 = vshrl.u32 %v4355, 7
        %v4357 = vsub.s32 0, %v4356
        %v4358 = vrot.slane %v4207, %v4357
        %v4359 = vlaneseq
        %v4360 = vshrl.u32 %v4359, 7
        %v4361 = vsub.s32 0, %v4360
        %v4362 = vrot.slane %v4221, %v4361
        %v4363 = vlaneseq
        %v4364 = vshrl.u32 %v4363, 7
        %v4365 = vsub.s32 0, %v4364
        %v4366 = vrot.slane %v4223, %v4365
        %v4367 = vlaneseq
        %v4368 = vshrl.u32 %v4367, 7
        %v4369 = vsub.s32 0, %v4368
        %v4370 = vrot.slane %v4225, %v4369
        %v4371 = vlaneseq
        %v4372 = vshrl.u32 %v4371, 7
        %v4373 = vsub.s32 0, %v4372
        %v4374 = vrot.slane %v4249, %v4373
        %v4375 = vlaneseq
        %v4376 = vshrl.u32 %v4375, 7
        %v4377 = vsub.s32 0, %v4376
        %v4378 = vrot.slane %v4263, %v4377
        %v4379 = vlaneseq
        %v4380 = vshrl.u32 %v4379, 7
        %v4381 = vsub.s32 0, %v4380
        %v4382 = vrot.slane %v4271, %v4381
        %v4383 = vlaneseq
        %v4384 = vshrl.u32 %v4383, 7
        %v4385 = vsub.s32 0, %v4384
        %v4386 = vrot.slane %v4273, %v4385
        %v4387 = vlaneseq
        %v4388 = vshrl.u32 %v4387, 7
        %v4389 = vsub.s32 0, %v4388
        %v4390 = vrot.slane %v4256, %v4389
        %v4391 = vlaneseq
        %v4392 = vshrl.u32 %v4391, 7
        %v4393 = vsub.s32 0, %v4392
        %v4394 = vrot.slane %v4270, %v4393
        %v4395 = vlaneseq
        %v4396 = vshrl.u32 %v4395, 7
        %v4397 = vsub.s32 0, %v4396
        %v4398 = vrot.slane %v4272, %v4397
        %v4399 = vlaneseq
        %v4400 = vshrl.u32 %v4399, 7
        %v4401 = vsub.s32 0, %v4400
        %v4402 = vrot.slane %v4274, %v4401
        %vm4403 = vcmp.eq.s32.totalorder %v1697, %v4278
        %vm4404 = vcmp.eq.s32.totalorder %v1700, %v4282
        %vm4405 = vcmp.eq.s32.totalorder %v1703, %v4286
        %vm4406 = vcmp.eq.s32.totalorder %v1706, %v4290
        %vm4407 = vcmp.eq.s32.totalorder %v1709, %v4294
        %vm4408 = vcmp.eq.s32.totalorder %v1712, %v4298
        %vm4409 = vcmp.eq.s32.totalorder %v1715, %v4302
        %vm4410 = vcmp.eq.s32.totalorder %v2442, %v4306
        %vm4411 = vcmp.eq.s32.totalorder %v1718, %v4310
        %vm4412 = vcmp.eq.s32.totalorder %v1721, %v4314
        %vm4413 = vcmp.eq.s32.totalorder %v1724, %v4318
        %vm4414 = vcmp.eq.s32.totalorder %v1727, %v4322
        %vm4415 = vcmp.eq.s32.totalorder %v1730, %v4326
        %vm4416 = vcmp.eq.s32.totalorder %v1733, %v4330
        %vm4417 = vcmp.eq.s32.totalorder %v1736, %v4334
        %vm4418 = vcmp.eq.s32.totalorder %v2445, %v4338
        %vm4419 = vcmp.eq.s32.totalorder %v1739, %v4342
        %vm4420 = vcmp.eq.s32.totalorder %v1742, %v4346
        %vm4421 = vcmp.eq.s32.totalorder %v1745, %v4350
        %vm4422 = vcmp.eq.s32.totalorder %v1748, %v4354
        %vm4423 = vcmp.eq.s32.totalorder %v1751, %v4358
        %vm4424 = vcmp.eq.s32.totalorder %v1754, %v4362
        %vm4425 = vcmp.eq.s32.totalorder %v1757, %v4366
        %vm4426 = vcmp.eq.s32.totalorder %v2448, %v4370
        %vm4427 = vcmp.eq.s32.totalorder %v1760, %v4374
        %vm4428 = vcmp.eq.s32.totalorder %v1763, %v4378
        %vm4429 = vcmp.eq.s32.totalorder %v1766, %v4382
        %vm4430 = vcmp.eq.s32.totalorder %v1769, %v4386
        %vm4431 = vcmp.eq.s32.totalorder %v1772, %v4390
        %vm4432 = vcmp.eq.s32.totalorder %v1775, %v4394
        %vm4433 = vcmp.eq.s32.totalorder %v1778, %v4398
        %vm4434 = vcmp.eq.s32.totalorder %v2451, %v4402
        %v4435 = vsel %vm4403, -50000.0, %v2648
        %v4436 = vsel %vm4404, -50000.0, %v2694
        %v4437 = vsel %vm4405, -50000.0, %v2740
        %v4438 = vsel %vm4406, -50000.0, %v2786
        %v4439 = vsel %vm4407, -50000.0, %v2832
        %v4440 = vsel %vm4408, -50000.0, %v2878
        %v4441 = vsel %vm4409, -50000.0, %v2924
        %v4442 = vsel %vm4410, -50000.0, %v2970
        %v4443 = vsel %vm4411, -50000.0, %v3016
        %v4444 = vsel %vm4412, -50000.0, %v3062
        %v4445 = vsel %vm4413, -50000.0, %v3108
        %v4446 = vsel %vm4414, -50000.0, %v3154
        %v4447 = vsel %vm4415, -50000.0, %v3200
        %v4448 = vsel %vm4416, -50000.0, %v3246
        %v4449 = vsel %vm4417, -50000.0, %v3292
        %v4450 = vsel %vm4418, -50000.0, %v3338
        %v4451 = vsel %vm4419, -50000.0, %v3384
        %v4452 = vsel %vm4420, -50000.0, %v3430
        %v4453 = vsel %vm4421, -50000.0, %v3476
        %v4454 = vsel %vm4422, -50000.0, %v3522
        %v4455 = vsel %vm4423, -50000.0, %v3568
        %v4456 = vsel %vm4424, -50000.0, %v3614
        %v4457 = vsel %vm4425, -50000.0, %v3660
        %v4458 = vsel %vm4426, -50000.0, %v3706
        %v4459 = vsel %vm4427, -50000.0, %v3752
        %v4460 = vsel %vm4428, -50000.0, %v3798
        %v4461 = vsel %vm4429, -50000.0, %v3844
        %v4462 = vsel %vm4430, -50000.0, %v3890
        %v4463 = vsel %vm4431, -50000.0, %v3936
        %v4464 = vsel %vm4432, -50000.0, %v3982
        %v4465 = vsel %vm4433, -50000.0, %v4028
        %v4466 = vsel %vm4434, -50000.0, %v4074
        %v4467 = vsel %vm1444, %v4435, -inf
        %4468 = vmax.xlane.f32.xlu0 %v4467
        %v4469 = vpop.xlane.xlu0 %4468
        %v4470 = vsel %vm1444, %v4436, -inf
        %4471 = vmax.xlane.f32.xlu0 %v4470
        %v4472 = vpop.xlane.xlu0 %4471
        %v4473 = vsel %vm1444, %v4437, -inf
        %4474 = vmax.xlane.f32.xlu0 %v4473
        %v4475 = vpop.xlane.xlu0 %4474
        %v4476 = vsel %vm1444, %v4438, -inf
        %4477 = vmax.xlane.f32.xlu0 %v4476
        %v4478 = vpop.xlane.xlu0 %4477
        %v4479 = vsel %vm1444, %v4439, -inf
        %4480 = vmax.xlane.f32.xlu0 %v4479
        %v4481 = vpop.xlane.xlu0 %4480
        %v4482 = vsel %vm1444, %v4440, -inf
        %4483 = vmax.xlane.f32.xlu0 %v4482
        %v4484 = vpop.xlane.xlu0 %4483
        %v4485 = vsel %vm1444, %v4441, -inf
        %4486 = vmax.xlane.f32.xlu0 %v4485
        %v4487 = vpop.xlane.xlu0 %4486
        %v4488 = vsel %vm1444, %v4442, -inf
        %4489 = vmax.xlane.f32.xlu0 %v4488
        %v4490 = vpop.xlane.xlu0 %4489
        %v4491 = vsel %vm1444, %v4443, -inf
        %4492 = vmax.xlane.f32.xlu0 %v4491
        %v4493 = vpop.xlane.xlu0 %4492
        %v4494 = vsel %vm1444, %v4444, -inf
        %4495 = vmax.xlane.f32.xlu0 %v4494
        %v4496 = vpop.xlane.xlu0 %4495
        %v4497 = vsel %vm1444, %v4445, -inf
        %4498 = vmax.xlane.f32.xlu0 %v4497
        %v4499 = vpop.xlane.xlu0 %4498
        %v4500 = vsel %vm1444, %v4446, -inf
        %4501 = vmax.xlane.f32.xlu0 %v4500
        %v4502 = vpop.xlane.xlu0 %4501
        %v4503 = vsel %vm1444, %v4447, -inf
        %4504 = vmax.xlane.f32.xlu0 %v4503
        %v4505 = vpop.xlane.xlu0 %4504
        %v4506 = vsel %vm1444, %v4448, -inf
        %4507 = vmax.xlane.f32.xlu0 %v4506
        %v4508 = vpop.xlane.xlu0 %4507
        %v4509 = vsel %vm1444, %v4449, -inf
        %4510 = vmax.xlane.f32.xlu0 %v4509
        %v4511 = vpop.xlane.xlu0 %4510
        %v4512 = vsel %vm1444, %v4450, -inf
        %4513 = vmax.xlane.f32.xlu0 %v4512
        %v4514 = vpop.xlane.xlu0 %4513
        %v4515 = vsel %vm1444, %v4451, -inf
        %4516 = vmax.xlane.f32.xlu0 %v4515
        %v4517 = vpop.xlane.xlu0 %4516
        %v4518 = vsel %vm1444, %v4452, -inf
        %4519 = vmax.xlane.f32.xlu0 %v4518
        %v4520 = vpop.xlane.xlu0 %4519
        %v4521 = vsel %vm1444, %v4453, -inf
        %4522 = vmax.xlane.f32.xlu0 %v4521
        %v4523 = vpop.xlane.xlu0 %4522
        %v4524 = vsel %vm1444, %v4454, -inf
        %4525 = vmax.xlane.f32.xlu0 %v4524
        %v4526 = vpop.xlane.xlu0 %4525
        %v4527 = vsel %vm1444, %v4455, -inf
        %4528 = vmax.xlane.f32.xlu0 %v4527
        %v4529 = vpop.xlane.xlu0 %4528
        %v4530 = vsel %vm1444, %v4456, -inf
        %4531 = vmax.xlane.f32.xlu0 %v4530
        %v4532 = vpop.xlane.xlu0 %4531
        %v4533 = vsel %vm1444, %v4457, -inf
        %4534 = vmax.xlane.f32.xlu0 %v4533
        %v4535 = vpop.xlane.xlu0 %4534
        %v4536 = vsel %vm1444, %v4458, -inf
        %4537 = vmax.xlane.f32.xlu0 %v4536
        %v4538 = vpop.xlane.xlu0 %4537
        %v4539 = vsel %vm1444, %v4459, -inf
        %4540 = vmax.xlane.f32.xlu0 %v4539
        %v4541 = vpop.xlane.xlu0 %4540
        %v4542 = vsel %vm1444, %v4460, -inf
        %4543 = vmax.xlane.f32.xlu0 %v4542
        %v4544 = vpop.xlane.xlu0 %4543
        %v4545 = vsel %vm1444, %v4461, -inf
        %4546 = vmax.xlane.f32.xlu0 %v4545
        %v4547 = vpop.xlane.xlu0 %4546
        %v4548 = vsel %vm1444, %v4462, -inf
        %4549 = vmax.xlane.f32.xlu0 %v4548
        %v4550 = vpop.xlane.xlu0 %4549
        %v4551 = vsel %vm1444, %v4463, -inf
        %4552 = vmax.xlane.f32.xlu0 %v4551
        %v4553 = vpop.xlane.xlu0 %4552
        %v4554 = vsel %vm1444, %v4464, -inf
        %4555 = vmax.xlane.f32.xlu0 %v4554
        %v4556 = vpop.xlane.xlu0 %4555
        %v4557 = vsel %vm1444, %v4465, -inf
        %4558 = vmax.xlane.f32.xlu0 %v4557
        %v4559 = vpop.xlane.xlu0 %4558
        %v4560 = vsel %vm1444, %v4466, -inf
        %4561 = vmax.xlane.f32.xlu0 %v4560
        %v4562 = vpop.xlane.xlu0 %4561
        %v4563 = vsub.f32 %v4435, %v4469
        %v4564 = vsub.f32 %v4436, %v4472
        %v4565 = vsub.f32 %v4437, %v4475
        %v4566 = vsub.f32 %v4438, %v4478
        %v4567 = vsub.f32 %v4439, %v4481
        %v4568 = vsub.f32 %v4440, %v4484
        %v4569 = vsub.f32 %v4441, %v4487
        %v4570 = vsub.f32 %v4442, %v4490
        %v4571 = vsub.f32 %v4443, %v4493
        %v4572 = vsub.f32 %v4444, %v4496
        %v4573 = vsub.f32 %v4445, %v4499
        %v4574 = vsub.f32 %v4446, %v4502
        %v4575 = vsub.f32 %v4447, %v4505
        %v4576 = vsub.f32 %v4448, %v4508
        %v4577 = vsub.f32 %v4449, %v4511
        %v4578 = vsub.f32 %v4450, %v4514
        %v4579 = vsub.f32 %v4451, %v4517
        %v4580 = vsub.f32 %v4452, %v4520
        %v4581 = vsub.f32 %v4453, %v4523
        %v4582 = vsub.f32 %v4454, %v4526
        %v4583 = vsub.f32 %v4455, %v4529
        %v4584 = vsub.f32 %v4456, %v4532
        %v4585 = vsub.f32 %v4457, %v4535
        %v4586 = vsub.f32 %v4458, %v4538
        %v4587 = vsub.f32 %v4459, %v4541
        %v4588 = vsub.f32 %v4460, %v4544
        %v4589 = vsub.f32 %v4461, %v4547
        %v4590 = vsub.f32 %v4462, %v4550
        %v4591 = vsub.f32 %v4463, %v4553
        %v4592 = vsub.f32 %v4464, %v4556
        %v4593 = vsub.f32 %v4465, %v4559
        %v4594 = vsub.f32 %v4466, %v4562
        %v4595 = vmul.f32 %v4563, 1.442695
        %v4596 = vpow.pop %v4595
        %v4597 = vmul.f32 %v4564, 1.442695
        %v4598 = vpow.pop %v4597
        %v4599 = vmul.f32 %v4565, 1.442695
        %v4600 = vpow.pop %v4599
        %v4601 = vmul.f32 %v4566, 1.442695
        %v4602 = vpow.pop %v4601
        %v4603 = vmul.f32 %v4567, 1.442695
        %v4604 = vpow.pop %v4603
        %v4605 = vmul.f32 %v4568, 1.442695
        %v4606 = vpow.pop %v4605
        %v4607 = vmul.f32 %v4569, 1.442695
        %v4608 = vpow.pop %v4607
        %v4609 = vmul.f32 %v4570, 1.442695
        %v4610 = vpow.pop %v4609
        %v4611 = vmul.f32 %v4571, 1.442695
        %v4612 = vpow.pop %v4611
        %v4613 = vmul.f32 %v4572, 1.442695
        %v4614 = vpow.pop %v4613
        %v4615 = vmul.f32 %v4573, 1.442695
        %v4616 = vpow.pop %v4615
        %v4617 = vmul.f32 %v4574, 1.442695
        %v4618 = vpow.pop %v4617
        %v4619 = vmul.f32 %v4575, 1.442695
        %v4620 = vpow.pop %v4619
        %v4621 = vmul.f32 %v4576, 1.442695
        %v4622 = vpow.pop %v4621
        %v4623 = vmul.f32 %v4577, 1.442695
        %v4624 = vpow.pop %v4623
        %v4625 = vmul.f32 %v4578, 1.442695
        %v4626 = vpow.pop %v4625
        %v4627 = vmul.f32 %v4579, 1.442695
        %v4628 = vpow.pop %v4627
        %v4629 = vmul.f32 %v4580, 1.442695
        %v4630 = vpow.pop %v4629
        %v4631 = vmul.f32 %v4581, 1.442695
        %v4632 = vpow.pop %v4631
        %v4633 = vmul.f32 %v4582, 1.442695
        %v4634 = vpow.pop %v4633
        %v4635 = vmul.f32 %v4583, 1.442695
        %v4636 = vpow.pop %v4635
        %v4637 = vmul.f32 %v4584, 1.442695
        %v4638 = vpow.pop %v4637
        %v4639 = vmul.f32 %v4585, 1.442695
        %v4640 = vpow.pop %v4639
        %v4641 = vmul.f32 %v4586, 1.442695
        %v4642 = vpow.pop %v4641
        %v4643 = vmul.f32 %v4587, 1.442695
        %v4644 = vpow.pop %v4643
        %v4645 = vmul.f32 %v4588, 1.442695
        %v4646 = vpow.pop %v4645
        %v4647 = vmul.f32 %v4589, 1.442695
        %v4648 = vpow.pop %v4647
        %v4649 = vmul.f32 %v4590, 1.442695
        %v4650 = vpow.pop %v4649
        %v4651 = vmul.f32 %v4591, 1.442695
        %v4652 = vpow.pop %v4651
        %v4653 = vmul.f32 %v4592, 1.442695
        %v4654 = vpow.pop %v4653
        %v4655 = vmul.f32 %v4593, 1.442695
        %v4656 = vpow.pop %v4655
        %v4657 = vmul.f32 %v4594, 1.442695
        %v4658 = vpow.pop %v4657
        %v4659 = vsel %vm1444, %v4596, 0.0
        %4660 = vadd.xlane.f32.xlu0 %v4659
        %v4661 = vpop.xlane.xlu0 %4660
        %v4662 = vsel %vm1444, %v4598, 0.0
        %4663 = vadd.xlane.f32.xlu0 %v4662
        %v4664 = vpop.xlane.xlu0 %4663
        %v4665 = vsel %vm1444, %v4600, 0.0
        %4666 = vadd.xlane.f32.xlu0 %v4665
        %v4667 = vpop.xlane.xlu0 %4666
        %v4668 = vsel %vm1444, %v4602, 0.0
        %4669 = vadd.xlane.f32.xlu0 %v4668
        %v4670 = vpop.xlane.xlu0 %4669
        %v4671 = vsel %vm1444, %v4604, 0.0
        %4672 = vadd.xlane.f32.xlu0 %v4671
        %v4673 = vpop.xlane.xlu0 %4672
        %v4674 = vsel %vm1444, %v4606, 0.0
        %4675 = vadd.xlane.f32.xlu0 %v4674
        %v4676 = vpop.xlane.xlu0 %4675
        %v4677 = vsel %vm1444, %v4608, 0.0
        %4678 = vadd.xlane.f32.xlu0 %v4677
        %v4679 = vpop.xlane.xlu0 %4678
        %v4680 = vsel %vm1444, %v4610, 0.0
        %4681 = vadd.xlane.f32.xlu0 %v4680
        %v4682 = vpop.xlane.xlu0 %4681
        %v4683 = vsel %vm1444, %v4612, 0.0
        %4684 = vadd.xlane.f32.xlu0 %v4683
        %v4685 = vpop.xlane.xlu0 %4684
        %v4686 = vsel %vm1444, %v4614, 0.0
        %4687 = vadd.xlane.f32.xlu0 %v4686
        %v4688 = vpop.xlane.xlu0 %4687
        %v4689 = vsel %vm1444, %v4616, 0.0
        %4690 = vadd.xlane.f32.xlu0 %v4689
        %v4691 = vpop.xlane.xlu0 %4690
        %v4692 = vsel %vm1444, %v4618, 0.0
        %4693 = vadd.xlane.f32.xlu0 %v4692
        %v4694 = vpop.xlane.xlu0 %4693
        %v4695 = vsel %vm1444, %v4620, 0.0
        %4696 = vadd.xlane.f32.xlu0 %v4695
        %v4697 = vpop.xlane.xlu0 %4696
        %v4698 = vsel %vm1444, %v4622, 0.0
        %4699 = vadd.xlane.f32.xlu0 %v4698
        %v4700 = vpop.xlane.xlu0 %4699
        %v4701 = vsel %vm1444, %v4624, 0.0
        %4702 = vadd.xlane.f32.xlu0 %v4701
        %v4703 = vpop.xlane.xlu0 %4702
        %v4704 = vsel %vm1444, %v4626, 0.0
        %4705 = vadd.xlane.f32.xlu0 %v4704
        %v4706 = vpop.xlane.xlu0 %4705
        %v4707 = vsel %vm1444, %v4628, 0.0
        %4708 = vadd.xlane.f32.xlu0 %v4707
        %v4709 = vpop.xlane.xlu0 %4708
        %v4710 = vsel %vm1444, %v4630, 0.0
        %4711 = vadd.xlane.f32.xlu0 %v4710
        %v4712 = vpop.xlane.xlu0 %4711
        %v4713 = vsel %vm1444, %v4632, 0.0
        %4714 = vadd.xlane.f32.xlu0 %v4713
        %v4715 = vpop.xlane.xlu0 %4714
        %v4716 = vsel %vm1444, %v4634, 0.0
        %4717 = vadd.xlane.f32.xlu0 %v4716
        %v4718 = vpop.xlane.xlu0 %4717
        %v4719 = vsel %vm1444, %v4636, 0.0
        %4720 = vadd.xlane.f32.xlu0 %v4719
        %v4721 = vpop.xlane.xlu0 %4720
        %v4722 = vsel %vm1444, %v4638, 0.0
        %4723 = vadd.xlane.f32.xlu0 %v4722
        %v4724 = vpop.xlane.xlu0 %4723
        %v4725 = vsel %vm1444, %v4640, 0.0
        %4726 = vadd.xlane.f32.xlu0 %v4725
        %v4727 = vpop.xlane.xlu0 %4726
        %v4728 = vsel %vm1444, %v4642, 0.0
        %4729 = vadd.xlane.f32.xlu0 %v4728
        %v4730 = vpop.xlane.xlu0 %4729
        %v4731 = vsel %vm1444, %v4644, 0.0
        %4732 = vadd.xlane.f32.xlu0 %v4731
        %v4733 = vpop.xlane.xlu0 %4732
        %v4734 = vsel %vm1444, %v4646, 0.0
        %4735 = vadd.xlane.f32.xlu0 %v4734
        %v4736 = vpop.xlane.xlu0 %4735
        %v4737 = vsel %vm1444, %v4648, 0.0
        %4738 = vadd.xlane.f32.xlu0 %v4737
        %v4739 = vpop.xlane.xlu0 %4738
        %v4740 = vsel %vm1444, %v4650, 0.0
        %4741 = vadd.xlane.f32.xlu0 %v4740
        %v4742 = vpop.xlane.xlu0 %4741
        %v4743 = vsel %vm1444, %v4652, 0.0
        %4744 = vadd.xlane.f32.xlu0 %v4743
        %v4745 = vpop.xlane.xlu0 %4744
        %v4746 = vsel %vm1444, %v4654, 0.0
        %4747 = vadd.xlane.f32.xlu0 %v4746
        %v4748 = vpop.xlane.xlu0 %4747
        %v4749 = vsel %vm1444, %v4656, 0.0
        %4750 = vadd.xlane.f32.xlu0 %v4749
        %v4751 = vpop.xlane.xlu0 %4750
        %v4752 = vsel %vm1444, %v4658, 0.0
        %4753 = vadd.xlane.f32.xlu0 %v4752
        %v4754 = vpop.xlane.xlu0 %4753
        %v4755 = vlog2.pop %v4661
        %v4756 = vmul.f32 %v4755, 0.6931472
        %v4757 = vlog2.pop %v4664
        %v4758 = vmul.f32 %v4757, 0.6931472
        %v4759 = vlog2.pop %v4667
        %v4760 = vmul.f32 %v4759, 0.6931472
        %v4761 = vlog2.pop %v4670
        %v4762 = vmul.f32 %v4761, 0.6931472
        %v4763 = vlog2.pop %v4673
        %v4764 = vmul.f32 %v4763, 0.6931472
        %v4765 = vlog2.pop %v4676
        %v4766 = vmul.f32 %v4765, 0.6931472
        %v4767 = vlog2.pop %v4679
        %v4768 = vmul.f32 %v4767, 0.6931472
        %v4769 = vlog2.pop %v4682
        %v4770 = vmul.f32 %v4769, 0.6931472
        %v4771 = vlog2.pop %v4685
        %v4772 = vmul.f32 %v4771, 0.6931472
        %v4773 = vlog2.pop %v4688
        %v4774 = vmul.f32 %v4773, 0.6931472
        %v4775 = vlog2.pop %v4691
        %v4776 = vmul.f32 %v4775, 0.6931472
        %v4777 = vlog2.pop %v4694
        %v4778 = vmul.f32 %v4777, 0.6931472
        %v4779 = vlog2.pop %v4697
        %v4780 = vmul.f32 %v4779, 0.6931472
        %v4781 = vlog2.pop %v4700
        %v4782 = vmul.f32 %v4781, 0.6931472
        %v4783 = vlog2.pop %v4703
        %v4784 = vmul.f32 %v4783, 0.6931472
        %v4785 = vlog2.pop %v4706
        %v4786 = vmul.f32 %v4785, 0.6931472
        %v4787 = vlog2.pop %v4709
        %v4788 = vmul.f32 %v4787, 0.6931472
        %v4789 = vlog2.pop %v4712
        %v4790 = vmul.f32 %v4789, 0.6931472
        %v4791 = vlog2.pop %v4715
        %v4792 = vmul.f32 %v4791, 0.6931472
        %v4793 = vlog2.pop %v4718
        %v4794 = vmul.f32 %v4793, 0.6931472
        %v4795 = vlog2.pop %v4721
        %v4796 = vmul.f32 %v4795, 0.6931472
        %v4797 = vlog2.pop %v4724
        %v4798 = vmul.f32 %v4797, 0.6931472
        %v4799 = vlog2.pop %v4727
        %v4800 = vmul.f32 %v4799, 0.6931472
        %v4801 = vlog2.pop %v4730
        %v4802 = vmul.f32 %v4801, 0.6931472
        %v4803 = vlog2.pop %v4733
        %v4804 = vmul.f32 %v4803, 0.6931472
        %v4805 = vlog2.pop %v4736
        %v4806 = vmul.f32 %v4805, 0.6931472
        %v4807 = vlog2.pop %v4739
        %v4808 = vmul.f32 %v4807, 0.6931472
        %v4809 = vlog2.pop %v4742
        %v4810 = vmul.f32 %v4809, 0.6931472
        %v4811 = vlog2.pop %v4745
        %v4812 = vmul.f32 %v4811, 0.6931472
        %v4813 = vlog2.pop %v4748
        %v4814 = vmul.f32 %v4813, 0.6931472
        %v4815 = vlog2.pop %v4751
        %v4816 = vmul.f32 %v4815, 0.6931472
        %v4817 = vlog2.pop %v4754
        %v4818 = vmul.f32 %v4817, 0.6931472
        %v4819 = vadd.f32 %v4469, %v4756
        %v4820 = vadd.f32 %v4472, %v4758
        %v4821 = vadd.f32 %v4475, %v4760
        %v4822 = vadd.f32 %v4478, %v4762
        %v4823 = vadd.f32 %v4481, %v4764
        %v4824 = vadd.f32 %v4484, %v4766
        %v4825 = vadd.f32 %v4487, %v4768
        %v4826 = vadd.f32 %v4490, %v4770
        %v4827 = vadd.f32 %v4493, %v4772
        %v4828 = vadd.f32 %v4496, %v4774
        %v4829 = vadd.f32 %v4499, %v4776
        %v4830 = vadd.f32 %v4502, %v4778
        %v4831 = vadd.f32 %v4505, %v4780
        %v4832 = vadd.f32 %v4508, %v4782
        %v4833 = vadd.f32 %v4511, %v4784
        %v4834 = vadd.f32 %v4514, %v4786
        %v4835 = vadd.f32 %v4517, %v4788
        %v4836 = vadd.f32 %v4520, %v4790
        %v4837 = vadd.f32 %v4523, %v4792
        %v4838 = vadd.f32 %v4526, %v4794
        %v4839 = vadd.f32 %v4529, %v4796
        %v4840 = vadd.f32 %v4532, %v4798
        %v4841 = vadd.f32 %v4535, %v4800
        %v4842 = vadd.f32 %v4538, %v4802
        %v4843 = vadd.f32 %v4541, %v4804
        %v4844 = vadd.f32 %v4544, %v4806
        %v4845 = vadd.f32 %v4547, %v4808
        %v4846 = vadd.f32 %v4550, %v4810
        %v4847 = vadd.f32 %v4553, %v4812
        %v4848 = vadd.f32 %v4556, %v4814
        %v4849 = vadd.f32 %v4559, %v4816
        %v4850 = vadd.f32 %v4562, %v4818
        %v4851 = vpack.c.bf16 %v4596, %v4596
        %v4852 = vpack.c.bf16 %v4598, %v4598
        %v4853 = vpack.c.bf16 %v4600, %v4600
        %v4854 = vpack.c.bf16 %v4602, %v4602
        %v4855 = vpack.c.bf16 %v4604, %v4604
        %v4856 = vpack.c.bf16 %v4606, %v4606
        %v4857 = vpack.c.bf16 %v4608, %v4608
        %v4858 = vpack.c.bf16 %v4610, %v4610
        %v4859 = vpack.c.bf16 %v4612, %v4612
        %v4860 = vpack.c.bf16 %v4614, %v4614
        %v4861 = vpack.c.bf16 %v4616, %v4616
        %v4862 = vpack.c.bf16 %v4618, %v4618
        %v4863 = vpack.c.bf16 %v4620, %v4620
        %v4864 = vpack.c.bf16 %v4622, %v4622
        %v4865 = vpack.c.bf16 %v4624, %v4624
        %v4866 = vpack.c.bf16 %v4626, %v4626
        %v4867 = vpack.c.bf16 %v4628, %v4628
        %v4868 = vpack.c.bf16 %v4630, %v4630
        %v4869 = vpack.c.bf16 %v4632, %v4632
        %v4870 = vpack.c.bf16 %v4634, %v4634
        %v4871 = vpack.c.bf16 %v4636, %v4636
        %v4872 = vpack.c.bf16 %v4638, %v4638
        %v4873 = vpack.c.bf16 %v4640, %v4640
        %v4874 = vpack.c.bf16 %v4642, %v4642
        %v4875 = vpack.c.bf16 %v4644, %v4644
        %v4876 = vpack.c.bf16 %v4646, %v4646
        %v4877 = vpack.c.bf16 %v4648, %v4648
        %v4878 = vpack.c.bf16 %v4650, %v4650
        %v4879 = vpack.c.bf16 %v4652, %v4652
        %v4880 = vpack.c.bf16 %v4654, %v4654
        %v4881 = vpack.c.bf16 %v4656, %v4656
        %v4882 = vpack.c.bf16 %v4658, %v4658
        %v4884 = vsel %vm2606, %v4851, 0
        %v4886 = vsel %vm2022, %v2346, 0
        %4888 = vmatprep.subr.bf16.mxu0 0
        %4889 = vmatpush1.bf16.msra.mxu0 %v4886
        %4890 = vmatprep.subr.bf16.mxu0 0
        %4891 = vmatpush1.bf16.msra.mxu0 0
        %4892 = vmatprep.subr.bf16.mxu0 0
        %4893 = vmatpush1.bf16.msra.mxu0 0
        %4894 = vmatprep.subr.bf16.mxu0 0
        %4895 = vmatpush1.bf16.msra.mxu0 0
        %4896 = vmatprep.subr.bf16.mxu0 0
        %4897 = vmatpush1.bf16.msra.mxu0 0
        %4898 = vmatprep.subr.bf16.mxu0 0
        %4899 = vmatpush1.bf16.msra.mxu0 0
        %4900 = vmatprep.subr.bf16.mxu0 0
        %4901 = vmatpush1.bf16.msra.mxu0 0
        %4902 = vmatprep.subr.bf16.mxu0 0
        %4903 = vmatpush1.bf16.msra.mxu0 0
        %4904 = vmatprep.subr.bf16.mxu0 0
        %4905 = vmatpush1.bf16.msra.mxu0 0
        %4906 = vmatprep.subr.bf16.mxu0 0
        %4907 = vmatpush1.bf16.msra.mxu0 0
        %4908 = vmatprep.subr.bf16.mxu0 0
        %4909 = vmatpush1.bf16.msra.mxu0 0
        %4910 = vmatprep.subr.bf16.mxu0 0
        %4911 = vmatpush1.bf16.msra.mxu0 0
        %4912 = vmatprep.subr.bf16.mxu0 0
        %4913 = vmatpush1.bf16.msra.mxu0 0
        %4914 = vmatprep.subr.bf16.mxu0 0
        %4915 = vmatpush1.bf16.msra.mxu0 0
        %4916 = vmatprep.subr.bf16.mxu0 0
        %4917 = vmatpush1.bf16.msra.mxu0 0
        %4918 = vmatprep.subr.bf16.mxu0 0
        %4919 = vmatpush1.bf16.msra.mxu0 0
        %4920 = vmatprep.mubr.bf16.mxu0 0
        %4921 = vmatmul.mubr.bf16.gmra.mrb[0].mxu0 %v4884
        %v4922 = vpop.f32.mrb[0].mxu0
        %v4923 = vadd.f32 0.0, %v4922
        %v4924 = vpop.f32.mrb[0].mxu0
        %v4925 = vpop.f32.mrb[0].mxu0
        %v4926 = vpop.f32.mrb[0].mxu0
        %4927 = vdwg.mxu0
        %v4929 = vsel %vm2606, %v4852, 0
        %v4931 = vsel %vm2022, %v2349, 0
        %4933 = vmatprep.subr.bf16.mxu0 0
        %4934 = vmatpush1.bf16.msra.mxu0 %v4931
        %4935 = vmatprep.subr.bf16.mxu0 0
        %4936 = vmatpush1.bf16.msra.mxu0 0
        %4937 = vmatprep.subr.bf16.mxu0 0
        %4938 = vmatpush1.bf16.msra.mxu0 0
        %4939 = vmatprep.subr.bf16.mxu0 0
        %4940 = vmatpush1.bf16.msra.mxu0 0
        %4941 = vmatprep.subr.bf16.mxu0 0
        %4942 = vmatpush1.bf16.msra.mxu0 0
        %4943 = vmatprep.subr.bf16.mxu0 0
        %4944 = vmatpush1.bf16.msra.mxu0 0
        %4945 = vmatprep.subr.bf16.mxu0 0
        %4946 = vmatpush1.bf16.msra.mxu0 0
        %4947 = vmatprep.subr.bf16.mxu0 0
        %4948 = vmatpush1.bf16.msra.mxu0 0
        %4949 = vmatprep.subr.bf16.mxu0 0
        %4950 = vmatpush1.bf16.msra.mxu0 0
        %4951 = vmatprep.subr.bf16.mxu0 0
        %4952 = vmatpush1.bf16.msra.mxu0 0
        %4953 = vmatprep.subr.bf16.mxu0 0
        %4954 = vmatpush1.bf16.msra.mxu0 0
        %4955 = vmatprep.subr.bf16.mxu0 0
        %4956 = vmatpush1.bf16.msra.mxu0 0
        %4957 = vmatprep.subr.bf16.mxu0 0
        %4958 = vmatpush1.bf16.msra.mxu0 0
        %4959 = vmatprep.subr.bf16.mxu0 0
        %4960 = vmatpush1.bf16.msra.mxu0 0
        %4961 = vmatprep.subr.bf16.mxu0 0
        %4962 = vmatpush1.bf16.msra.mxu0 0
        %4963 = vmatprep.subr.bf16.mxu0 0
        %4964 = vmatpush1.bf16.msra.mxu0 0
        %4965 = vmatprep.mubr.bf16.mxu0 0
        %4966 = vmatmul.mubr.bf16.gmra.mrb[0].mxu0 %v4929
        %v4967 = vpop.f32.mrb[0].mxu0
        %v4968 = vadd.f32 0.0, %v4967
        %v4969 = vpop.f32.mrb[0].mxu0
        %v4970 = vpop.f32.mrb[0].mxu0
        %v4971 = vpop.f32.mrb[0].mxu0
        %4972 = vdwg.mxu0
        %v4974 = vsel %vm2606, %v4853, 0
        %v4976 = vsel %vm2022, %v2352, 0
        %4978 = vmatprep.subr.bf16.mxu0 0
        %4979 = vmatpush1.bf16.msra.mxu0 %v4976
        %4980 = vmatprep.subr.bf16.mxu0 0
        %4981 = vmatpush1.bf16.msra.mxu0 0
        %4982 = vmatprep.subr.bf16.mxu0 0
        %4983 = vmatpush1.bf16.msra.mxu0 0
        %4984 = vmatprep.subr.bf16.mxu0 0
        %4985 = vmatpush1.bf16.msra.mxu0 0
        %4986 = vmatprep.subr.bf16.mxu0 0
        %4987 = vmatpush1.bf16.msra.mxu0 0
        %4988 = vmatprep.subr.bf16.mxu0 0
        %4989 = vmatpush1.bf16.msra.mxu0 0
        %4990 = vmatprep.subr.bf16.mxu0 0
        %4991 = vmatpush1.bf16.msra.mxu0 0
        %4992 = vmatprep.subr.bf16.mxu0 0
        %4993 = vmatpush1.bf16.msra.mxu0 0
        %4994 = vmatprep.subr.bf16.mxu0 0
        %4995 = vmatpush1.bf16.msra.mxu0 0
        %4996 = vmatprep.subr.bf16.mxu0 0
        %4997 = vmatpush1.bf16.msra.mxu0 0
        %4998 = vmatprep.subr.bf16.mxu0 0
        %4999 = vmatpush1.bf16.msra.mxu0 0
        %5000 = vmatprep.subr.bf16.mxu0 0
        %5001 = vmatpush1.bf16.msra.mxu0 0
        %5002 = vmatprep.subr.bf16.mxu0 0
        %5003 = vmatpush1.bf16.msra.mxu0 0
        %5004 = vmatprep.subr.bf16.mxu0 0
        %5005 = vmatpush1.bf16.msra.mxu0 0
        %5006 = vmatprep.subr.bf16.mxu0 0
        %5007 = vmatpush1.bf16.msra.mxu0 0
        %5008 = vmatprep.subr.bf16.mxu0 0
        %5009 = vmatpush1.bf16.msra.mxu0 0
        %5010 = vmatprep.mubr.bf16.mxu0 0
        %5011 = vmatmul.mubr.bf16.gmra.mrb[0].mxu0 %v4974
        %v5012 = vpop.f32.mrb[0].mxu0
        %v5013 = vadd.f32 0.0, %v5012
        %v5014 = vpop.f32.mrb[0].mxu0
        %v5015 = vpop.f32.mrb[0].mxu0
        %v5016 = vpop.f32.mrb[0].mxu0
        %5017 = vdwg.mxu0
        %v5019 = vsel %vm2606, %v4854, 0
        %v5021 = vsel %vm2022, %v2355, 0
        %5023 = vmatprep.subr.bf16.mxu0 0
        %5024 = vmatpush1.bf16.msra.mxu0 %v5021
        %5025 = vmatprep.subr.bf16.mxu0 0
        %5026 = vmatpush1.bf16.msra.mxu0 0
        %5027 = vmatprep.subr.bf16.mxu0 0
        %5028 = vmatpush1.bf16.msra.mxu0 0
        %5029 = vmatprep.subr.bf16.mxu0 0
        %5030 = vmatpush1.bf16.msra.mxu0 0
        %5031 = vmatprep.subr.bf16.mxu0 0
        %5032 = vmatpush1.bf16.msra.mxu0 0
        %5033 = vmatprep.subr.bf16.mxu0 0
        %5034 = vmatpush1.bf16.msra.mxu0 0
        %5035 = vmatprep.subr.bf16.mxu0 0
        %5036 = vmatpush1.bf16.msra.mxu0 0
        %5037 = vmatprep.subr.bf16.mxu0 0
        %5038 = vmatpush1.bf16.msra.mxu0 0
        %5039 = vmatprep.subr.bf16.mxu0 0
        %5040 = vmatpush1.bf16.msra.mxu0 0
        %5041 = vmatprep.subr.bf16.mxu0 0
        %5042 = vmatpush1.bf16.msra.mxu0 0
        %5043 = vmatprep.subr.bf16.mxu0 0
        %5044 = vmatpush1.bf16.msra.mxu0 0
        %5045 = vmatprep.subr.bf16.mxu0 0
        %5046 = vmatpush1.bf16.msra.mxu0 0
        %5047 = vmatprep.subr.bf16.mxu0 0
        %5048 = vmatpush1.bf16.msra.mxu0 0
        %5049 = vmatprep.subr.bf16.mxu0 0
        %5050 = vmatpush1.bf16.msra.mxu0 0
        %5051 = vmatprep.subr.bf16.mxu0 0
        %5052 = vmatpush1.bf16.msra.mxu0 0
        %5053 = vmatprep.subr.bf16.mxu0 0
        %5054 = vmatpush1.bf16.msra.mxu0 0
        %5055 = vmatprep.mubr.bf16.mxu0 0
        %5056 = vmatmul.mubr.bf16.gmra.mrb[0].mxu0 %v5019
        %v5057 = vpop.f32.mrb[0].mxu0
        %v5058 = vadd.f32 0.0, %v5057
        %v5059 = vpop.f32.mrb[0].mxu0
        %v5060 = vpop.f32.mrb[0].mxu0
        %v5061 = vpop.f32.mrb[0].mxu0
        %5062 = vdwg.mxu0
        %v5064 = vsel %vm2606, %v4855, 0
        %v5066 = vsel %vm2022, %v2358, 0
        %5068 = vmatprep.subr.bf16.mxu0 0
        %5069 = vmatpush1.bf16.msra.mxu0 %v5066
        %5070 = vmatprep.subr.bf16.mxu0 0
        %5071 = vmatpush1.bf16.msra.mxu0 0
        %5072 = vmatprep.subr.bf16.mxu0 0
        %5073 = vmatpush1.bf16.msra.mxu0 0
        %5074 = vmatprep.subr.bf16.mxu0 0
        %5075 = vmatpush1.bf16.msra.mxu0 0
        %5076 = vmatprep.subr.bf16.mxu0 0
        %5077 = vmatpush1.bf16.msra.mxu0 0
        %5078 = vmatprep.subr.bf16.mxu0 0
        %5079 = vmatpush1.bf16.msra.mxu0 0
        %5080 = vmatprep.subr.bf16.mxu0 0
        %5081 = vmatpush1.bf16.msra.mxu0 0
        %5082 = vmatprep.subr.bf16.mxu0 0
        %5083 = vmatpush1.bf16.msra.mxu0 0
        %5084 = vmatprep.subr.bf16.mxu0 0
        %5085 = vmatpush1.bf16.msra.mxu0 0
        %5086 = vmatprep.subr.bf16.mxu0 0
        %5087 = vmatpush1.bf16.msra.mxu0 0
        %5088 = vmatprep.subr.bf16.mxu0 0
        %5089 = vmatpush1.bf16.msra.mxu0 0
        %5090 = vmatprep.subr.bf16.mxu0 0
        %5091 = vmatpush1.bf16.msra.mxu0 0
        %5092 = vmatprep.subr.bf16.mxu0 0
        %5093 = vmatpush1.bf16.msra.mxu0 0
        %5094 = vmatprep.subr.bf16.mxu0 0
        %5095 = vmatpush1.bf16.msra.mxu0 0
        %5096 = vmatprep.subr.bf16.mxu0 0
        %5097 = vmatpush1.bf16.msra.mxu0 0
        %5098 = vmatprep.subr.bf16.mxu0 0
        %5099 = vmatpush1.bf16.msra.mxu0 0
        %5100 = vmatprep.mubr.bf16.mxu0 0
        %5101 = vmatmul.mubr.bf16.gmra.mrb[0].mxu0 %v5064
        %v5102 = vpop.f32.mrb[0].mxu0
        %v5103 = vadd.f32 0.0, %v5102
        %v5104 = vpop.f32.mrb[0].mxu0
        %v5105 = vpop.f32.mrb[0].mxu0
        %v5106 = vpop.f32.mrb[0].mxu0
        %5107 = vdwg.mxu0
        %v5109 = vsel %vm2606, %v4856, 0
        %v5111 = vsel %vm2022, %v2361, 0
        %5113 = vmatprep.subr.bf16.mxu0 0
        %5114 = vmatpush1.bf16.msra.mxu0 %v5111
        %5115 = vmatprep.subr.bf16.mxu0 0
        %5116 = vmatpush1.bf16.msra.mxu0 0
        %5117 = vmatprep.subr.bf16.mxu0 0
        %5118 = vmatpush1.bf16.msra.mxu0 0
        %5119 = vmatprep.subr.bf16.mxu0 0
        %5120 = vmatpush1.bf16.msra.mxu0 0
        %5121 = vmatprep.subr.bf16.mxu0 0
        %5122 = vmatpush1.bf16.msra.mxu0 0
        %5123 = vmatprep.subr.bf16.mxu0 0
        %5124 = vmatpush1.bf16.msra.mxu0 0
        %5125 = vmatprep.subr.bf16.mxu0 0
        %5126 = vmatpush1.bf16.msra.mxu0 0
        %5127 = vmatprep.subr.bf16.mxu0 0
        %5128 = vmatpush1.bf16.msra.mxu0 0
        %5129 = vmatprep.subr.bf16.mxu0 0
        %5130 = vmatpush1.bf16.msra.mxu0 0
        %5131 = vmatprep.subr.bf16.mxu0 0
        %5132 = vmatpush1.bf16.msra.mxu0 0
        %5133 = vmatprep.subr.bf16.mxu0 0
        %5134 = vmatpush1.bf16.msra.mxu0 0
        %5135 = vmatprep.subr.bf16.mxu0 0
        %5136 = vmatpush1.bf16.msra.mxu0 0
        %5137 = vmatprep.subr.bf16.mxu0 0
        %5138 = vmatpush1.bf16.msra.mxu0 0
        %5139 = vmatprep.subr.bf16.mxu0 0
        %5140 = vmatpush1.bf16.msra.mxu0 0
        %5141 = vmatprep.subr.bf16.mxu0 0
        %5142 = vmatpush1.bf16.msra.mxu0 0
        %5143 = vmatprep.subr.bf16.mxu0 0
        %5144 = vmatpush1.bf16.msra.mxu0 0
        %5145 = vmatprep.mubr.bf16.mxu0 0
        %5146 = vmatmul.mubr.bf16.gmra.mrb[0].mxu0 %v5109
        %v5147 = vpop.f32.mrb[0].mxu0
        %v5148 = vadd.f32 0.0, %v5147
        %v5149 = vpop.f32.mrb[0].mxu0
        %v5150 = vpop.f32.mrb[0].mxu0
        %v5151 = vpop.f32.mrb[0].mxu0
        %5152 = vdwg.mxu0
        %v5154 = vsel %vm2606, %v4857, 0
        %v5156 = vsel %vm2022, %v2364, 0
        %5158 = vmatprep.subr.bf16.mxu0 0
        %5159 = vmatpush1.bf16.msra.mxu0 %v5156
        %5160 = vmatprep.subr.bf16.mxu0 0
        %5161 = vmatpush1.bf16.msra.mxu0 0
        %5162 = vmatprep.subr.bf16.mxu0 0
        %5163 = vmatpush1.bf16.msra.mxu0 0
        %5164 = vmatprep.subr.bf16.mxu0 0
        %5165 = vmatpush1.bf16.msra.mxu0 0
        %5166 = vmatprep.subr.bf16.mxu0 0
        %5167 = vmatpush1.bf16.msra.mxu0 0
        %5168 = vmatprep.subr.bf16.mxu0 0
        %5169 = vmatpush1.bf16.msra.mxu0 0
        %5170 = vmatprep.subr.bf16.mxu0 0
        %5171 = vmatpush1.bf16.msra.mxu0 0
        %5172 = vmatprep.subr.bf16.mxu0 0
        %5173 = vmatpush1.bf16.msra.mxu0 0
        %5174 = vmatprep.subr.bf16.mxu0 0
        %5175 = vmatpush1.bf16.msra.mxu0 0
        %5176 = vmatprep.subr.bf16.mxu0 0
        %5177 = vmatpush1.bf16.msra.mxu0 0
        %5178 = vmatprep.subr.bf16.mxu0 0
        %5179 = vmatpush1.bf16.msra.mxu0 0
        %5180 = vmatprep.subr.bf16.mxu0 0
        %5181 = vmatpush1.bf16.msra.mxu0 0
        %5182 = vmatprep.subr.bf16.mxu0 0
        %5183 = vmatpush1.bf16.msra.mxu0 0
        %5184 = vmatprep.subr.bf16.mxu0 0
        %5185 = vmatpush1.bf16.msra.mxu0 0
        %5186 = vmatprep.subr.bf16.mxu0 0
        %5187 = vmatpush1.bf16.msra.mxu0 0
        %5188 = vmatprep.subr.bf16.mxu0 0
        %5189 = vmatpush1.bf16.msra.mxu0 0
        %5190 = vmatprep.mubr.bf16.mxu0 0
        %5191 = vmatmul.mubr.bf16.gmra.mrb[0].mxu0 %v5154
        %v5192 = vpop.f32.mrb[0].mxu0
        %v5193 = vadd.f32 0.0, %v5192
        %v5194 = vpop.f32.mrb[0].mxu0
        %v5195 = vpop.f32.mrb[0].mxu0
        %v5196 = vpop.f32.mrb[0].mxu0
        %5197 = vdwg.mxu0
        %v5199 = vsel %vm2606, %v4858, 0
        %v5201 = vsel %vm2022, %v2367, 0
        %5203 = vmatprep.subr.bf16.mxu0 0
        %5204 = vmatpush1.bf16.msra.mxu0 %v5201
        %5205 = vmatprep.subr.bf16.mxu0 0
        %5206 = vmatpush1.bf16.msra.mxu0 0
        %5207 = vmatprep.subr.bf16.mxu0 0
        %5208 = vmatpush1.bf16.msra.mxu0 0
        %5209 = vmatprep.subr.bf16.mxu0 0
        %5210 = vmatpush1.bf16.msra.mxu0 0
        %5211 = vmatprep.subr.bf16.mxu0 0
        %5212 = vmatpush1.bf16.msra.mxu0 0
        %5213 = vmatprep.subr.bf16.mxu0 0
        %5214 = vmatpush1.bf16.msra.mxu0 0
        %5215 = vmatprep.subr.bf16.mxu0 0
        %5216 = vmatpush1.bf16.msra.mxu0 0
        %5217 = vmatprep.subr.bf16.mxu0 0
        %5218 = vmatpush1.bf16.msra.mxu0 0
        %5219 = vmatprep.subr.bf16.mxu0 0
        %5220 = vmatpush1.bf16.msra.mxu0 0
        %5221 = vmatprep.subr.bf16.mxu0 0
        %5222 = vmatpush1.bf16.msra.mxu0 0
        %5223 = vmatprep.subr.bf16.mxu0 0
        %5224 = vmatpush1.bf16.msra.mxu0 0
        %5225 = vmatprep.subr.bf16.mxu0 0
        %5226 = vmatpush1.bf16.msra.mxu0 0
        %5227 = vmatprep.subr.bf16.mxu0 0
        %5228 = vmatpush1.bf16.msra.mxu0 0
        %5229 = vmatprep.subr.bf16.mxu0 0
        %5230 = vmatpush1.bf16.msra.mxu0 0
        %5231 = vmatprep.subr.bf16.mxu0 0
        %5232 = vmatpush1.bf16.msra.mxu0 0
        %5233 = vmatprep.subr.bf16.mxu0 0
        %5234 = vmatpush1.bf16.msra.mxu0 0
        %5235 = vmatprep.mubr.bf16.mxu0 0
        %5236 = vmatmul.mubr.bf16.gmra.mrb[0].mxu0 %v5199
        %v5237 = vpop.f32.mrb[0].mxu0
        %v5238 = vadd.f32 0.0, %v5237
        %v5239 = vpop.f32.mrb[0].mxu0
        %v5240 = vpop.f32.mrb[0].mxu0
        %v5241 = vpop.f32.mrb[0].mxu0
        %5242 = vdwg.mxu0
        %v5244 = vsel %vm2606, %v4859, 0
        %v5246 = vsel %vm2022, %v2370, 0
        %5248 = vmatprep.subr.bf16.mxu0 0
        %5249 = vmatpush1.bf16.msra.mxu0 %v5246
        %5250 = vmatprep.subr.bf16.mxu0 0
        %5251 = vmatpush1.bf16.msra.mxu0 0
        %5252 = vmatprep.subr.bf16.mxu0 0
        %5253 = vmatpush1.bf16.msra.mxu0 0
        %5254 = vmatprep.subr.bf16.mxu0 0
        %5255 = vmatpush1.bf16.msra.mxu0 0
        %5256 = vmatprep.subr.bf16.mxu0 0
        %5257 = vmatpush1.bf16.msra.mxu0 0
        %5258 = vmatprep.subr.bf16.mxu0 0
        %5259 = vmatpush1.bf16.msra.mxu0 0
        %5260 = vmatprep.subr.bf16.mxu0 0
        %5261 = vmatpush1.bf16.msra.mxu0 0
        %5262 = vmatprep.subr.bf16.mxu0 0
        %5263 = vmatpush1.bf16.msra.mxu0 0
        %5264 = vmatprep.subr.bf16.mxu0 0
        %5265 = vmatpush1.bf16.msra.mxu0 0
        %5266 = vmatprep.subr.bf16.mxu0 0
        %5267 = vmatpush1.bf16.msra.mxu0 0
        %5268 = vmatprep.subr.bf16.mxu0 0
        %5269 = vmatpush1.bf16.msra.mxu0 0
        %5270 = vmatprep.subr.bf16.mxu0 0
        %5271 = vmatpush1.bf16.msra.mxu0 0
        %5272 = vmatprep.subr.bf16.mxu0 0
        %5273 = vmatpush1.bf16.msra.mxu0 0
        %5274 = vmatprep.subr.bf16.mxu0 0
        %5275 = vmatpush1.bf16.msra.mxu0 0
        %5276 = vmatprep.subr.bf16.mxu0 0
        %5277 = vmatpush1.bf16.msra.mxu0 0
        %5278 = vmatprep.subr.bf16.mxu0 0
        %5279 = vmatpush1.bf16.msra.mxu0 0
        %5280 = vmatprep.mubr.bf16.mxu0 0
        %5281 = vmatmul.mubr.bf16.gmra.mrb[0].mxu0 %v5244
        %v5282 = vpop.f32.mrb[0].mxu0
        %v5283 = vadd.f32 0.0, %v5282
        %v5284 = vpop.f32.mrb[0].mxu0
        %v5285 = vpop.f32.mrb[0].mxu0
        %v5286 = vpop.f32.mrb[0].mxu0
        %5287 = vdwg.mxu0
        %v5289 = vsel %vm2606, %v4860, 0
        %v5291 = vsel %vm2022, %v2373, 0
        %5293 = vmatprep.subr.bf16.mxu0 0
        %5294 = vmatpush1.bf16.msra.mxu0 %v5291
        %5295 = vmatprep.subr.bf16.mxu0 0
        %5296 = vmatpush1.bf16.msra.mxu0 0
        %5297 = vmatprep.subr.bf16.mxu0 0
        %5298 = vmatpush1.bf16.msra.mxu0 0
        %5299 = vmatprep.subr.bf16.mxu0 0
        %5300 = vmatpush1.bf16.msra.mxu0 0
        %5301 = vmatprep.subr.bf16.mxu0 0
        %5302 = vmatpush1.bf16.msra.mxu0 0
        %5303 = vmatprep.subr.bf16.mxu0 0
        %5304 = vmatpush1.bf16.msra.mxu0 0
        %5305 = vmatprep.subr.bf16.mxu0 0
        %5306 = vmatpush1.bf16.msra.mxu0 0
        %5307 = vmatprep.subr.bf16.mxu0 0
        %5308 = vmatpush1.bf16.msra.mxu0 0
        %5309 = vmatprep.subr.bf16.mxu0 0
        %5310 = vmatpush1.bf16.msra.mxu0 0
        %5311 = vmatprep.subr.bf16.mxu0 0
        %5312 = vmatpush1.bf16.msra.mxu0 0
        %5313 = vmatprep.subr.bf16.mxu0 0
        %5314 = vmatpush1.bf16.msra.mxu0 0
        %5315 = vmatprep.subr.bf16.mxu0 0
        %5316 = vmatpush1.bf16.msra.mxu0 0
        %5317 = vmatprep.subr.bf16.mxu0 0
        %5318 = vmatpush1.bf16.msra.mxu0 0
        %5319 = vmatprep.subr.bf16.mxu0 0
        %5320 = vmatpush1.bf16.msra.mxu0 0
        %5321 = vmatprep.subr.bf16.mxu0 0
        %5322 = vmatpush1.bf16.msra.mxu0 0
        %5323 = vmatprep.subr.bf16.mxu0 0
        %5324 = vmatpush1.bf16.msra.mxu0 0
        %5325 = vmatprep.mubr.bf16.mxu0 0
        %5326 = vmatmul.mubr.bf16.gmra.mrb[0].mxu0 %v5289
        %v5327 = vpop.f32.mrb[0].mxu0
        %v5328 = vadd.f32 0.0, %v5327
        %v5329 = vpop.f32.mrb[0].mxu0
        %v5330 = vpop.f32.mrb[0].mxu0
        %v5331 = vpop.f32.mrb[0].mxu0
        %5332 = vdwg.mxu0
        %v5334 = vsel %vm2606, %v4861, 0
        %v5336 = vsel %vm2022, %v2376, 0
        %5338 = vmatprep.subr.bf16.mxu0 0
        %5339 = vmatpush1.bf16.msra.mxu0 %v5336
        %5340 = vmatprep.subr.bf16.mxu0 0
        %5341 = vmatpush1.bf16.msra.mxu0 0
        %5342 = vmatprep.subr.bf16.mxu0 0
        %5343 = vmatpush1.bf16.msra.mxu0 0
        %5344 = vmatprep.subr.bf16.mxu0 0
        %5345 = vmatpush1.bf16.msra.mxu0 0
        %5346 = vmatprep.subr.bf16.mxu0 0
        %5347 = vmatpush1.bf16.msra.mxu0 0
        %5348 = vmatprep.subr.bf16.mxu0 0
        %5349 = vmatpush1.bf16.msra.mxu0 0
        %5350 = vmatprep.subr.bf16.mxu0 0
        %5351 = vmatpush1.bf16.msra.mxu0 0
        %5352 = vmatprep.subr.bf16.mxu0 0
        %5353 = vmatpush1.bf16.msra.mxu0 0
        %5354 = vmatprep.subr.bf16.mxu0 0
        %5355 = vmatpush1.bf16.msra.mxu0 0
        %5356 = vmatprep.subr.bf16.mxu0 0
        %5357 = vmatpush1.bf16.msra.mxu0 0
        %5358 = vmatprep.subr.bf16.mxu0 0
        %5359 = vmatpush1.bf16.msra.mxu0 0
        %5360 = vmatprep.subr.bf16.mxu0 0
        %5361 = vmatpush1.bf16.msra.mxu0 0
        %5362 = vmatprep.subr.bf16.mxu0 0
        %5363 = vmatpush1.bf16.msra.mxu0 0
        %5364 = vmatprep.subr.bf16.mxu0 0
        %5365 = vmatpush1.bf16.msra.mxu0 0
        %5366 = vmatprep.subr.bf16.mxu0 0
        %5367 = vmatpush1.bf16.msra.mxu0 0
        %5368 = vmatprep.subr.bf16.mxu0 0
        %5369 = vmatpush1.bf16.msra.mxu0 0
        %5370 = vmatprep.mubr.bf16.mxu0 0
        %5371 = vmatmul.mubr.bf16.gmra.mrb[0].mxu0 %v5334
        %v5372 = vpop.f32.mrb[0].mxu0
        %v5373 = vadd.f32 0.0, %v5372
        %v5374 = vpop.f32.mrb[0].mxu0
        %v5375 = vpop.f32.mrb[0].mxu0
        %v5376 = vpop.f32.mrb[0].mxu0
        %5377 = vdwg.mxu0
        %v5379 = vsel %vm2606, %v4862, 0
        %v5381 = vsel %vm2022, %v2379, 0
        %5383 = vmatprep.subr.bf16.mxu0 0
        %5384 = vmatpush1.bf16.msra.mxu0 %v5381
        %5385 = vmatprep.subr.bf16.mxu0 0
        %5386 = vmatpush1.bf16.msra.mxu0 0
        %5387 = vmatprep.subr.bf16.mxu0 0
        %5388 = vmatpush1.bf16.msra.mxu0 0
        %5389 = vmatprep.subr.bf16.mxu0 0
        %5390 = vmatpush1.bf16.msra.mxu0 0
        %5391 = vmatprep.subr.bf16.mxu0 0
        %5392 = vmatpush1.bf16.msra.mxu0 0
        %5393 = vmatprep.subr.bf16.mxu0 0
        %5394 = vmatpush1.bf16.msra.mxu0 0
        %5395 = vmatprep.subr.bf16.mxu0 0
        %5396 = vmatpush1.bf16.msra.mxu0 0
        %5397 = vmatprep.subr.bf16.mxu0 0
        %5398 = vmatpush1.bf16.msra.mxu0 0
        %5399 = vmatprep.subr.bf16.mxu0 0
        %5400 = vmatpush1.bf16.msra.mxu0 0
        %5401 = vmatprep.subr.bf16.mxu0 0
        %5402 = vmatpush1.bf16.msra.mxu0 0
        %5403 = vmatprep.subr.bf16.mxu0 0
        %5404 = vmatpush1.bf16.msra.mxu0 0
        %5405 = vmatprep.subr.bf16.mxu0 0
        %5406 = vmatpush1.bf16.msra.mxu0 0
        %5407 = vmatprep.subr.bf16.mxu0 0
        %5408 = vmatpush1.bf16.msra.mxu0 0
        %5409 = vmatprep.subr.bf16.mxu0 0
        %5410 = vmatpush1.bf16.msra.mxu0 0
        %5411 = vmatprep.subr.bf16.mxu0 0
        %5412 = vmatpush1.bf16.msra.mxu0 0
        %5413 = vmatprep.subr.bf16.mxu0 0
        %5414 = vmatpush1.bf16.msra.mxu0 0
        %5415 = vmatprep.mubr.bf16.mxu0 0
        %5416 = vmatmul.mubr.bf16.gmra.mrb[0].mxu0 %v5379
        %v5417 = vpop.f32.mrb[0].mxu0
        %v5418 = vadd.f32 0.0, %v5417
        %v5419 = vpop.f32.mrb[0].mxu0
        %v5420 = vpop.f32.mrb[0].mxu0
        %v5421 = vpop.f32.mrb[0].mxu0
        %5422 = vdwg.mxu0
        %v5424 = vsel %vm2606, %v4863, 0
        %v5426 = vsel %vm2022, %v2382, 0
        %5428 = vmatprep.subr.bf16.mxu0 0
        %5429 = vmatpush1.bf16.msra.mxu0 %v5426
        %5430 = vmatprep.subr.bf16.mxu0 0
        %5431 = vmatpush1.bf16.msra.mxu0 0
        %5432 = vmatprep.subr.bf16.mxu0 0
        %5433 = vmatpush1.bf16.msra.mxu0 0
        %5434 = vmatprep.subr.bf16.mxu0 0
        %5435 = vmatpush1.bf16.msra.mxu0 0
        %5436 = vmatprep.subr.bf16.mxu0 0
        %5437 = vmatpush1.bf16.msra.mxu0 0
        %5438 = vmatprep.subr.bf16.mxu0 0
        %5439 = vmatpush1.bf16.msra.mxu0 0
        %5440 = vmatprep.subr.bf16.mxu0 0
        %5441 = vmatpush1.bf16.msra.mxu0 0
        %5442 = vmatprep.subr.bf16.mxu0 0
        %5443 = vmatpush1.bf16.msra.mxu0 0
        %5444 = vmatprep.subr.bf16.mxu0 0
        %5445 = vmatpush1.bf16.msra.mxu0 0
        %5446 = vmatprep.subr.bf16.mxu0 0
        %5447 = vmatpush1.bf16.msra.mxu0 0
        %5448 = vmatprep.subr.bf16.mxu0 0
        %5449 = vmatpush1.bf16.msra.mxu0 0
        %5450 = vmatprep.subr.bf16.mxu0 0
        %5451 = vmatpush1.bf16.msra.mxu0 0
        %5452 = vmatprep.subr.bf16.mxu0 0
        %5453 = vmatpush1.bf16.msra.mxu0 0
        %5454 = vmatprep.subr.bf16.mxu0 0
        %5455 = vmatpush1.bf16.msra.mxu0 0
        %5456 = vmatprep.subr.bf16.mxu0 0
        %5457 = vmatpush1.bf16.msra.mxu0 0
        %5458 = vmatprep.subr.bf16.mxu0 0
        %5459 = vmatpush1.bf16.msra.mxu0 0
        %5460 = vmatprep.mubr.bf16.mxu0 0
        %5461 = vmatmul.mubr.bf16.gmra.mrb[0].mxu0 %v5424
        %v5462 = vpop.f32.mrb[0].mxu0
        %v5463 = vadd.f32 0.0, %v5462
        %v5464 = vpop.f32.mrb[0].mxu0
        %v5465 = vpop.f32.mrb[0].mxu0
        %v5466 = vpop.f32.mrb[0].mxu0
        %5467 = vdwg.mxu0
        %v5469 = vsel %vm2606, %v4864, 0
        %v5471 = vsel %vm2022, %v2385, 0
        %5473 = vmatprep.subr.bf16.mxu0 0
        %5474 = vmatpush1.bf16.msra.mxu0 %v5471
        %5475 = vmatprep.subr.bf16.mxu0 0
        %5476 = vmatpush1.bf16.msra.mxu0 0
        %5477 = vmatprep.subr.bf16.mxu0 0
        %5478 = vmatpush1.bf16.msra.mxu0 0
        %5479 = vmatprep.subr.bf16.mxu0 0
        %5480 = vmatpush1.bf16.msra.mxu0 0
        %5481 = vmatprep.subr.bf16.mxu0 0
        %5482 = vmatpush1.bf16.msra.mxu0 0
        %5483 = vmatprep.subr.bf16.mxu0 0
        %5484 = vmatpush1.bf16.msra.mxu0 0
        %5485 = vmatprep.subr.bf16.mxu0 0
        %5486 = vmatpush1.bf16.msra.mxu0 0
        %5487 = vmatprep.subr.bf16.mxu0 0
        %5488 = vmatpush1.bf16.msra.mxu0 0
        %5489 = vmatprep.subr.bf16.mxu0 0
        %5490 = vmatpush1.bf16.msra.mxu0 0
        %5491 = vmatprep.subr.bf16.mxu0 0
        %5492 = vmatpush1.bf16.msra.mxu0 0
        %5493 = vmatprep.subr.bf16.mxu0 0
        %5494 = vmatpush1.bf16.msra.mxu0 0
        %5495 = vmatprep.subr.bf16.mxu0 0
        %5496 = vmatpush1.bf16.msra.mxu0 0
        %5497 = vmatprep.subr.bf16.mxu0 0
        %5498 = vmatpush1.bf16.msra.mxu0 0
        %5499 = vmatprep.subr.bf16.mxu0 0
        %5500 = vmatpush1.bf16.msra.mxu0 0
        %5501 = vmatprep.subr.bf16.mxu0 0
        %5502 = vmatpush1.bf16.msra.mxu0 0
        %5503 = vmatprep.subr.bf16.mxu0 0
        %5504 = vmatpush1.bf16.msra.mxu0 0
        %5505 = vmatprep.mubr.bf16.mxu0 0
        %5506 = vmatmul.mubr.bf16.gmra.mrb[0].mxu0 %v5469
        %v5507 = vpop.f32.mrb[0].mxu0
        %v5508 = vadd.f32 0.0, %v5507
        %v5509 = vpop.f32.mrb[0].mxu0
        %v5510 = vpop.f32.mrb[0].mxu0
        %v5511 = vpop.f32.mrb[0].mxu0
        %5512 = vdwg.mxu0
        %v5514 = vsel %vm2606, %v4865, 0
        %v5516 = vsel %vm2022, %v2388, 0
        %5518 = vmatprep.subr.bf16.mxu0 0
        %5519 = vmatpush1.bf16.msra.mxu0 %v5516
        %5520 = vmatprep.subr.bf16.mxu0 0
        %5521 = vmatpush1.bf16.msra.mxu0 0
        %5522 = vmatprep.subr.bf16.mxu0 0
        %5523 = vmatpush1.bf16.msra.mxu0 0
        %5524 = vmatprep.subr.bf16.mxu0 0
        %5525 = vmatpush1.bf16.msra.mxu0 0
        %5526 = vmatprep.subr.bf16.mxu0 0
        %5527 = vmatpush1.bf16.msra.mxu0 0
        %5528 = vmatprep.subr.bf16.mxu0 0
        %5529 = vmatpush1.bf16.msra.mxu0 0
        %5530 = vmatprep.subr.bf16.mxu0 0
        %5531 = vmatpush1.bf16.msra.mxu0 0
        %5532 = vmatprep.subr.bf16.mxu0 0
        %5533 = vmatpush1.bf16.msra.mxu0 0
        %5534 = vmatprep.subr.bf16.mxu0 0
        %5535 = vmatpush1.bf16.msra.mxu0 0
        %5536 = vmatprep.subr.bf16.mxu0 0
        %5537 = vmatpush1.bf16.msra.mxu0 0
        %5538 = vmatprep.subr.bf16.mxu0 0
        %5539 = vmatpush1.bf16.msra.mxu0 0
        %5540 = vmatprep.subr.bf16.mxu0 0
        %5541 = vmatpush1.bf16.msra.mxu0 0
        %5542 = vmatprep.subr.bf16.mxu0 0
        %5543 = vmatpush1.bf16.msra.mxu0 0
        %5544 = vmatprep.subr.bf16.mxu0 0
        %5545 = vmatpush1.bf16.msra.mxu0 0
        %5546 = vmatprep.subr.bf16.mxu0 0
        %5547 = vmatpush1.bf16.msra.mxu0 0
        %5548 = vmatprep.subr.bf16.mxu0 0
        %5549 = vmatpush1.bf16.msra.mxu0 0
        %5550 = vmatprep.mubr.bf16.mxu0 0
        %5551 = vmatmul.mubr.bf16.gmra.mrb[0].mxu0 %v5514
        %v5552 = vpop.f32.mrb[0].mxu0
        %v5553 = vadd.f32 0.0, %v5552
        %v5554 = vpop.f32.mrb[0].mxu0
        %v5555 = vpop.f32.mrb[0].mxu0
        %v5556 = vpop.f32.mrb[0].mxu0
        %5557 = vdwg.mxu0
        %v5559 = vsel %vm2606, %v4866, 0
        %v5561 = vsel %vm2022, %v2391, 0
        %5563 = vmatprep.subr.bf16.mxu0 0
        %5564 = vmatpush1.bf16.msra.mxu0 %v5561
        %5565 = vmatprep.subr.bf16.mxu0 0
        %5566 = vmatpush1.bf16.msra.mxu0 0
        %5567 = vmatprep.subr.bf16.mxu0 0
        %5568 = vmatpush1.bf16.msra.mxu0 0
        %5569 = vmatprep.subr.bf16.mxu0 0
        %5570 = vmatpush1.bf16.msra.mxu0 0
        %5571 = vmatprep.subr.bf16.mxu0 0
        %5572 = vmatpush1.bf16.msra.mxu0 0
        %5573 = vmatprep.subr.bf16.mxu0 0
        %5574 = vmatpush1.bf16.msra.mxu0 0
        %5575 = vmatprep.subr.bf16.mxu0 0
        %5576 = vmatpush1.bf16.msra.mxu0 0
        %5577 = vmatprep.subr.bf16.mxu0 0
        %5578 = vmatpush1.bf16.msra.mxu0 0
        %5579 = vmatprep.subr.bf16.mxu0 0
        %5580 = vmatpush1.bf16.msra.mxu0 0
        %5581 = vmatprep.subr.bf16.mxu0 0
        %5582 = vmatpush1.bf16.msra.mxu0 0
        %5583 = vmatprep.subr.bf16.mxu0 0
        %5584 = vmatpush1.bf16.msra.mxu0 0
        %5585 = vmatprep.subr.bf16.mxu0 0
        %5586 = vmatpush1.bf16.msra.mxu0 0
        %5587 = vmatprep.subr.bf16.mxu0 0
        %5588 = vmatpush1.bf16.msra.mxu0 0
        %5589 = vmatprep.subr.bf16.mxu0 0
        %5590 = vmatpush1.bf16.msra.mxu0 0
        %5591 = vmatprep.subr.bf16.mxu0 0
        %5592 = vmatpush1.bf16.msra.mxu0 0
        %5593 = vmatprep.subr.bf16.mxu0 0
        %5594 = vmatpush1.bf16.msra.mxu0 0
        %5595 = vmatprep.mubr.bf16.mxu0 0
        %5596 = vmatmul.mubr.bf16.gmra.mrb[0].mxu0 %v5559
        %v5597 = vpop.f32.mrb[0].mxu0
        %v5598 = vadd.f32 0.0, %v5597
        %v5599 = vpop.f32.mrb[0].mxu0
        %v5600 = vpop.f32.mrb[0].mxu0
        %v5601 = vpop.f32.mrb[0].mxu0
        %5602 = vdwg.mxu0
        %v5604 = vsel %vm2606, %v4867, 0
        %v5606 = vsel %vm2022, %v2394, 0
        %5608 = vmatprep.subr.bf16.mxu0 0
        %5609 = vmatpush1.bf16.msra.mxu0 %v5606
        %5610 = vmatprep.subr.bf16.mxu0 0
        %5611 = vmatpush1.bf16.msra.mxu0 0
        %5612 = vmatprep.subr.bf16.mxu0 0
        %5613 = vmatpush1.bf16.msra.mxu0 0
        %5614 = vmatprep.subr.bf16.mxu0 0
        %5615 = vmatpush1.bf16.msra.mxu0 0
        %5616 = vmatprep.subr.bf16.mxu0 0
        %5617 = vmatpush1.bf16.msra.mxu0 0
        %5618 = vmatprep.subr.bf16.mxu0 0
        %5619 = vmatpush1.bf16.msra.mxu0 0
        %5620 = vmatprep.subr.bf16.mxu0 0
        %5621 = vmatpush1.bf16.msra.mxu0 0
        %5622 = vmatprep.subr.bf16.mxu0 0
        %5623 = vmatpush1.bf16.msra.mxu0 0
        %5624 = vmatprep.subr.bf16.mxu0 0
        %5625 = vmatpush1.bf16.msra.mxu0 0
        %5626 = vmatprep.subr.bf16.mxu0 0
        %5627 = vmatpush1.bf16.msra.mxu0 0
        %5628 = vmatprep.subr.bf16.mxu0 0
        %5629 = vmatpush1.bf16.msra.mxu0 0
        %5630 = vmatprep.subr.bf16.mxu0 0
        %5631 = vmatpush1.bf16.msra.mxu0 0
        %5632 = vmatprep.subr.bf16.mxu0 0
        %5633 = vmatpush1.bf16.msra.mxu0 0
        %5634 = vmatprep.subr.bf16.mxu0 0
        %5635 = vmatpush1.bf16.msra.mxu0 0
        %5636 = vmatprep.subr.bf16.mxu0 0
        %5637 = vmatpush1.bf16.msra.mxu0 0
        %5638 = vmatprep.subr.bf16.mxu0 0
        %5639 = vmatpush1.bf16.msra.mxu0 0
        %5640 = vmatprep.mubr.bf16.mxu0 0
        %5641 = vmatmul.mubr.bf16.gmra.mrb[0].mxu0 %v5604
        %v5642 = vpop.f32.mrb[0].mxu0
        %v5643 = vadd.f32 0.0, %v5642
        %v5644 = vpop.f32.mrb[0].mxu0
        %v5645 = vpop.f32.mrb[0].mxu0
        %v5646 = vpop.f32.mrb[0].mxu0
        %5647 = vdwg.mxu0
        %v5649 = vsel %vm2606, %v4868, 0
        %v5651 = vsel %vm2022, %v2397, 0
        %5653 = vmatprep.subr.bf16.mxu0 0
        %5654 = vmatpush1.bf16.msra.mxu0 %v5651
        %5655 = vmatprep.subr.bf16.mxu0 0
        %5656 = vmatpush1.bf16.msra.mxu0 0
        %5657 = vmatprep.subr.bf16.mxu0 0
        %5658 = vmatpush1.bf16.msra.mxu0 0
        %5659 = vmatprep.subr.bf16.mxu0 0
        %5660 = vmatpush1.bf16.msra.mxu0 0
        %5661 = vmatprep.subr.bf16.mxu0 0
        %5662 = vmatpush1.bf16.msra.mxu0 0
        %5663 = vmatprep.subr.bf16.mxu0 0
        %5664 = vmatpush1.bf16.msra.mxu0 0
        %5665 = vmatprep.subr.bf16.mxu0 0
        %5666 = vmatpush1.bf16.msra.mxu0 0
        %5667 = vmatprep.subr.bf16.mxu0 0
        %5668 = vmatpush1.bf16.msra.mxu0 0
        %5669 = vmatprep.subr.bf16.mxu0 0
        %5670 = vmatpush1.bf16.msra.mxu0 0
        %5671 = vmatprep.subr.bf16.mxu0 0
        %5672 = vmatpush1.bf16.msra.mxu0 0
        %5673 = vmatprep.subr.bf16.mxu0 0
        %5674 = vmatpush1.bf16.msra.mxu0 0
        %5675 = vmatprep.subr.bf16.mxu0 0
        %5676 = vmatpush1.bf16.msra.mxu0 0
        %5677 = vmatprep.subr.bf16.mxu0 0
        %5678 = vmatpush1.bf16.msra.mxu0 0
        %5679 = vmatprep.subr.bf16.mxu0 0
        %5680 = vmatpush1.bf16.msra.mxu0 0
        %5681 = vmatprep.subr.bf16.mxu0 0
        %5682 = vmatpush1.bf16.msra.mxu0 0
        %5683 = vmatprep.subr.bf16.mxu0 0
        %5684 = vmatpush1.bf16.msra.mxu0 0
        %5685 = vmatprep.mubr.bf16.mxu0 0
        %5686 = vmatmul.mubr.bf16.gmra.mrb[0].mxu0 %v5649
        %v5687 = vpop.f32.mrb[0].mxu0
        %v5688 = vadd.f32 0.0, %v5687
        %v5689 = vpop.f32.mrb[0].mxu0
        %v5690 = vpop.f32.mrb[0].mxu0
        %v5691 = vpop.f32.mrb[0].mxu0
        %5692 = vdwg.mxu0
        %v5694 = vsel %vm2606, %v4869, 0
        %v5696 = vsel %vm2022, %v2400, 0
        %5698 = vmatprep.subr.bf16.mxu0 0
        %5699 = vmatpush1.bf16.msra.mxu0 %v5696
        %5700 = vmatprep.subr.bf16.mxu0 0
        %5701 = vmatpush1.bf16.msra.mxu0 0
        %5702 = vmatprep.subr.bf16.mxu0 0
        %5703 = vmatpush1.bf16.msra.mxu0 0
        %5704 = vmatprep.subr.bf16.mxu0 0
        %5705 = vmatpush1.bf16.msra.mxu0 0
        %5706 = vmatprep.subr.bf16.mxu0 0
        %5707 = vmatpush1.bf16.msra.mxu0 0
        %5708 = vmatprep.subr.bf16.mxu0 0
        %5709 = vmatpush1.bf16.msra.mxu0 0
        %5710 = vmatprep.subr.bf16.mxu0 0
        %5711 = vmatpush1.bf16.msra.mxu0 0
        %5712 = vmatprep.subr.bf16.mxu0 0
        %5713 = vmatpush1.bf16.msra.mxu0 0
        %5714 = vmatprep.subr.bf16.mxu0 0
        %5715 = vmatpush1.bf16.msra.mxu0 0
        %5716 = vmatprep.subr.bf16.mxu0 0
        %5717 = vmatpush1.bf16.msra.mxu0 0
        %5718 = vmatprep.subr.bf16.mxu0 0
        %5719 = vmatpush1.bf16.msra.mxu0 0
        %5720 = vmatprep.subr.bf16.mxu0 0
        %5721 = vmatpush1.bf16.msra.mxu0 0
        %5722 = vmatprep.subr.bf16.mxu0 0
        %5723 = vmatpush1.bf16.msra.mxu0 0
        %5724 = vmatprep.subr.bf16.mxu0 0
        %5725 = vmatpush1.bf16.msra.mxu0 0
        %5726 = vmatprep.subr.bf16.mxu0 0
        %5727 = vmatpush1.bf16.msra.mxu0 0
        %5728 = vmatprep.subr.bf16.mxu0 0
        %5729 = vmatpush1.bf16.msra.mxu0 0
        %5730 = vmatprep.mubr.bf16.mxu0 0
        %5731 = vmatmul.mubr.bf16.gmra.mrb[0].mxu0 %v5694
        %v5732 = vpop.f32.mrb[0].mxu0
        %v5733 = vadd.f32 0.0, %v5732
        %v5734 = vpop.f32.mrb[0].mxu0
        %v5735 = vpop.f32.mrb[0].mxu0
        %v5736 = vpop.f32.mrb[0].mxu0
        %5737 = vdwg.mxu0
        %v5739 = vsel %vm2606, %v4870, 0
        %v5741 = vsel %vm2022, %v2403, 0
        %5743 = vmatprep.subr.bf16.mxu0 0
        %5744 = vmatpush1.bf16.msra.mxu0 %v5741
        %5745 = vmatprep.subr.bf16.mxu0 0
        %5746 = vmatpush1.bf16.msra.mxu0 0
        %5747 = vmatprep.subr.bf16.mxu0 0
        %5748 = vmatpush1.bf16.msra.mxu0 0
        %5749 = vmatprep.subr.bf16.mxu0 0
        %5750 = vmatpush1.bf16.msra.mxu0 0
        %5751 = vmatprep.subr.bf16.mxu0 0
        %5752 = vmatpush1.bf16.msra.mxu0 0
        %5753 = vmatprep.subr.bf16.mxu0 0
        %5754 = vmatpush1.bf16.msra.mxu0 0
        %5755 = vmatprep.subr.bf16.mxu0 0
        %5756 = vmatpush1.bf16.msra.mxu0 0
        %5757 = vmatprep.subr.bf16.mxu0 0
        %5758 = vmatpush1.bf16.msra.mxu0 0
        %5759 = vmatprep.subr.bf16.mxu0 0
        %5760 = vmatpush1.bf16.msra.mxu0 0
        %5761 = vmatprep.subr.bf16.mxu0 0
        %5762 = vmatpush1.bf16.msra.mxu0 0
        %5763 = vmatprep.subr.bf16.mxu0 0
        %5764 = vmatpush1.bf16.msra.mxu0 0
        %5765 = vmatprep.subr.bf16.mxu0 0
        %5766 = vmatpush1.bf16.msra.mxu0 0
        %5767 = vmatprep.subr.bf16.mxu0 0
        %5768 = vmatpush1.bf16.msra.mxu0 0
        %5769 = vmatprep.subr.bf16.mxu0 0
        %5770 = vmatpush1.bf16.msra.mxu0 0
        %5771 = vmatprep.subr.bf16.mxu0 0
        %5772 = vmatpush1.bf16.msra.mxu0 0
        %5773 = vmatprep.subr.bf16.mxu0 0
        %5774 = vmatpush1.bf16.msra.mxu0 0
        %5775 = vmatprep.mubr.bf16.mxu0 0
        %5776 = vmatmul.mubr.bf16.gmra.mrb[0].mxu0 %v5739
        %v5777 = vpop.f32.mrb[0].mxu0
        %v5778 = vadd.f32 0.0, %v5777
        %v5779 = vpop.f32.mrb[0].mxu0
        %v5780 = vpop.f32.mrb[0].mxu0
        %v5781 = vpop.f32.mrb[0].mxu0
        %5782 = vdwg.mxu0
        %v5784 = vsel %vm2606, %v4871, 0
        %v5786 = vsel %vm2022, %v2406, 0
        %5788 = vmatprep.subr.bf16.mxu0 0
        %5789 = vmatpush1.bf16.msra.mxu0 %v5786
        %5790 = vmatprep.subr.bf16.mxu0 0
        %5791 = vmatpush1.bf16.msra.mxu0 0
        %5792 = vmatprep.subr.bf16.mxu0 0
        %5793 = vmatpush1.bf16.msra.mxu0 0
        %5794 = vmatprep.subr.bf16.mxu0 0
        %5795 = vmatpush1.bf16.msra.mxu0 0
        %5796 = vmatprep.subr.bf16.mxu0 0
        %5797 = vmatpush1.bf16.msra.mxu0 0
        %5798 = vmatprep.subr.bf16.mxu0 0
        %5799 = vmatpush1.bf16.msra.mxu0 0
        %5800 = vmatprep.subr.bf16.mxu0 0
        %5801 = vmatpush1.bf16.msra.mxu0 0
        %5802 = vmatprep.subr.bf16.mxu0 0
        %5803 = vmatpush1.bf16.msra.mxu0 0
        %5804 = vmatprep.subr.bf16.mxu0 0
        %5805 = vmatpush1.bf16.msra.mxu0 0
        %5806 = vmatprep.subr.bf16.mxu0 0
        %5807 = vmatpush1.bf16.msra.mxu0 0
        %5808 = vmatprep.subr.bf16.mxu0 0
        %5809 = vmatpush1.bf16.msra.mxu0 0
        %5810 = vmatprep.subr.bf16.mxu0 0
        %5811 = vmatpush1.bf16.msra.mxu0 0
        %5812 = vmatprep.subr.bf16.mxu0 0
        %5813 = vmatpush1.bf16.msra.mxu0 0
        %5814 = vmatprep.subr.bf16.mxu0 0
        %5815 = vmatpush1.bf16.msra.mxu0 0
        %5816 = vmatprep.subr.bf16.mxu0 0
        %5817 = vmatpush1.bf16.msra.mxu0 0
        %5818 = vmatprep.subr.bf16.mxu0 0
        %5819 = vmatpush1.bf16.msra.mxu0 0
        %5820 = vmatprep.mubr.bf16.mxu0 0
        %5821 = vmatmul.mubr.bf16.gmra.mrb[0].mxu0 %v5784
        %v5822 = vpop.f32.mrb[0].mxu0
        %v5823 = vadd.f32 0.0, %v5822
        %v5824 = vpop.f32.mrb[0].mxu0
        %v5825 = vpop.f32.mrb[0].mxu0
        %v5826 = vpop.f32.mrb[0].mxu0
        %5827 = vdwg.mxu0
        %v5829 = vsel %vm2606, %v4872, 0
        %v5831 = vsel %vm2022, %v2409, 0
        %5833 = vmatprep.subr.bf16.mxu0 0
        %5834 = vmatpush1.bf16.msra.mxu0 %v5831
        %5835 = vmatprep.subr.bf16.mxu0 0
        %5836 = vmatpush1.bf16.msra.mxu0 0
        %5837 = vmatprep.subr.bf16.mxu0 0
        %5838 = vmatpush1.bf16.msra.mxu0 0
        %5839 = vmatprep.subr.bf16.mxu0 0
        %5840 = vmatpush1.bf16.msra.mxu0 0
        %5841 = vmatprep.subr.bf16.mxu0 0
        %5842 = vmatpush1.bf16.msra.mxu0 0
        %5843 = vmatprep.subr.bf16.mxu0 0
        %5844 = vmatpush1.bf16.msra.mxu0 0
        %5845 = vmatprep.subr.bf16.mxu0 0
        %5846 = vmatpush1.bf16.msra.mxu0 0
        %5847 = vmatprep.subr.bf16.mxu0 0
        %5848 = vmatpush1.bf16.msra.mxu0 0
        %5849 = vmatprep.subr.bf16.mxu0 0
        %5850 = vmatpush1.bf16.msra.mxu0 0
        %5851 = vmatprep.subr.bf16.mxu0 0
        %5852 = vmatpush1.bf16.msra.mxu0 0
        %5853 = vmatprep.subr.bf16.mxu0 0
        %5854 = vmatpush1.bf16.msra.mxu0 0
        %5855 = vmatprep.subr.bf16.mxu0 0
        %5856 = vmatpush1.bf16.msra.mxu0 0
        %5857 = vmatprep.subr.bf16.mxu0 0
        %5858 = vmatpush1.bf16.msra.mxu0 0
        %5859 = vmatprep.subr.bf16.mxu0 0
        %5860 = vmatpush1.bf16.msra.mxu0 0
        %5861 = vmatprep.subr.bf16.mxu0 0
        %5862 = vmatpush1.bf16.msra.mxu0 0
        %5863 = vmatprep.subr.bf16.mxu0 0
        %5864 = vmatpush1.bf16.msra.mxu0 0
        %5865 = vmatprep.mubr.bf16.mxu0 0
        %5866 = vmatmul.mubr.bf16.gmra.mrb[0].mxu0 %v5829
        %v5867 = vpop.f32.mrb[0].mxu0
        %v5868 = vadd.f32 0.0, %v5867
        %v5869 = vpop.f32.mrb[0].mxu0
        %v5870 = vpop.f32.mrb[0].mxu0
        %v5871 = vpop.f32.mrb[0].mxu0
        %5872 = vdwg.mxu0
        %v5874 = vsel %vm2606, %v4873, 0
        %v5876 = vsel %vm2022, %v2412, 0
        %5878 = vmatprep.subr.bf16.mxu0 0
        %5879 = vmatpush1.bf16.msra.mxu0 %v5876
        %5880 = vmatprep.subr.bf16.mxu0 0
        %5881 = vmatpush1.bf16.msra.mxu0 0
        %5882 = vmatprep.subr.bf16.mxu0 0
        %5883 = vmatpush1.bf16.msra.mxu0 0
        %5884 = vmatprep.subr.bf16.mxu0 0
        %5885 = vmatpush1.bf16.msra.mxu0 0
        %5886 = vmatprep.subr.bf16.mxu0 0
        %5887 = vmatpush1.bf16.msra.mxu0 0
        %5888 = vmatprep.subr.bf16.mxu0 0
        %5889 = vmatpush1.bf16.msra.mxu0 0
        %5890 = vmatprep.subr.bf16.mxu0 0
        %5891 = vmatpush1.bf16.msra.mxu0 0
        %5892 = vmatprep.subr.bf16.mxu0 0
        %5893 = vmatpush1.bf16.msra.mxu0 0
        %5894 = vmatprep.subr.bf16.mxu0 0
        %5895 = vmatpush1.bf16.msra.mxu0 0
        %5896 = vmatprep.subr.bf16.mxu0 0
        %5897 = vmatpush1.bf16.msra.mxu0 0
        %5898 = vmatprep.subr.bf16.mxu0 0
        %5899 = vmatpush1.bf16.msra.mxu0 0
        %5900 = vmatprep.subr.bf16.mxu0 0
        %5901 = vmatpush1.bf16.msra.mxu0 0
        %5902 = vmatprep.subr.bf16.mxu0 0
        %5903 = vmatpush1.bf16.msra.mxu0 0
        %5904 = vmatprep.subr.bf16.mxu0 0
        %5905 = vmatpush1.bf16.msra.mxu0 0
        %5906 = vmatprep.subr.bf16.mxu0 0
        %5907 = vmatpush1.bf16.msra.mxu0 0
        %5908 = vmatprep.subr.bf16.mxu0 0
        %5909 = vmatpush1.bf16.msra.mxu0 0
        %5910 = vmatprep.mubr.bf16.mxu0 0
        %5911 = vmatmul.mubr.bf16.gmra.mrb[0].mxu0 %v5874
        %v5912 = vpop.f32.mrb[0].mxu0
        %v5913 = vadd.f32 0.0, %v5912
        %v5914 = vpop.f32.mrb[0].mxu0
        %v5915 = vpop.f32.mrb[0].mxu0
        %v5916 = vpop.f32.mrb[0].mxu0
        %5917 = vdwg.mxu0
        %v5919 = vsel %vm2606, %v4874, 0
        %v5921 = vsel %vm2022, %v2415, 0
        %5923 = vmatprep.subr.bf16.mxu0 0
        %5924 = vmatpush1.bf16.msra.mxu0 %v5921
        %5925 = vmatprep.subr.bf16.mxu0 0
        %5926 = vmatpush1.bf16.msra.mxu0 0
        %5927 = vmatprep.subr.bf16.mxu0 0
        %5928 = vmatpush1.bf16.msra.mxu0 0
        %5929 = vmatprep.subr.bf16.mxu0 0
        %5930 = vmatpush1.bf16.msra.mxu0 0
        %5931 = vmatprep.subr.bf16.mxu0 0
        %5932 = vmatpush1.bf16.msra.mxu0 0
        %5933 = vmatprep.subr.bf16.mxu0 0
        %5934 = vmatpush1.bf16.msra.mxu0 0
        %5935 = vmatprep.subr.bf16.mxu0 0
        %5936 = vmatpush1.bf16.msra.mxu0 0
        %5937 = vmatprep.subr.bf16.mxu0 0
        %5938 = vmatpush1.bf16.msra.mxu0 0
        %5939 = vmatprep.subr.bf16.mxu0 0
        %5940 = vmatpush1.bf16.msra.mxu0 0
        %5941 = vmatprep.subr.bf16.mxu0 0
        %5942 = vmatpush1.bf16.msra.mxu0 0
        %5943 = vmatprep.subr.bf16.mxu0 0
        %5944 = vmatpush1.bf16.msra.mxu0 0
        %5945 = vmatprep.subr.bf16.mxu0 0
        %5946 = vmatpush1.bf16.msra.mxu0 0
        %5947 = vmatprep.subr.bf16.mxu0 0
        %5948 = vmatpush1.bf16.msra.mxu0 0
        %5949 = vmatprep.subr.bf16.mxu0 0
        %5950 = vmatpush1.bf16.msra.mxu0 0
        %5951 = vmatprep.subr.bf16.mxu0 0
        %5952 = vmatpush1.bf16.msra.mxu0 0
        %5953 = vmatprep.subr.bf16.mxu0 0
        %5954 = vmatpush1.bf16.msra.mxu0 0
        %5955 = vmatprep.mubr.bf16.mxu0 0
        %5956 = vmatmul.mubr.bf16.gmra.mrb[0].mxu0 %v5919
        %v5957 = vpop.f32.mrb[0].mxu0
        %v5958 = vadd.f32 0.0, %v5957
        %v5959 = vpop.f32.mrb[0].mxu0
        %v5960 = vpop.f32.mrb[0].mxu0
        %v5961 = vpop.f32.mrb[0].mxu0
        %5962 = vdwg.mxu0
        %v5964 = vsel %vm2606, %v4875, 0
        %v5966 = vsel %vm2022, %v2418, 0
        %5968 = vmatprep.subr.bf16.mxu0 0
        %5969 = vmatpush1.bf16.msra.mxu0 %v5966
        %5970 = vmatprep.subr.bf16.mxu0 0
        %5971 = vmatpush1.bf16.msra.mxu0 0
        %5972 = vmatprep.subr.bf16.mxu0 0
        %5973 = vmatpush1.bf16.msra.mxu0 0
        %5974 = vmatprep.subr.bf16.mxu0 0
        %5975 = vmatpush1.bf16.msra.mxu0 0
        %5976 = vmatprep.subr.bf16.mxu0 0
        %5977 = vmatpush1.bf16.msra.mxu0 0
        %5978 = vmatprep.subr.bf16.mxu0 0
        %5979 = vmatpush1.bf16.msra.mxu0 0
        %5980 = vmatprep.subr.bf16.mxu0 0
        %5981 = vmatpush1.bf16.msra.mxu0 0
        %5982 = vmatprep.subr.bf16.mxu0 0
        %5983 = vmatpush1.bf16.msra.mxu0 0
        %5984 = vmatprep.subr.bf16.mxu0 0
        %5985 = vmatpush1.bf16.msra.mxu0 0
        %5986 = vmatprep.subr.bf16.mxu0 0
        %5987 = vmatpush1.bf16.msra.mxu0 0
        %5988 = vmatprep.subr.bf16.mxu0 0
        %5989 = vmatpush1.bf16.msra.mxu0 0
        %5990 = vmatprep.subr.bf16.mxu0 0
        %5991 = vmatpush1.bf16.msra.mxu0 0
        %5992 = vmatprep.subr.bf16.mxu0 0
        %5993 = vmatpush1.bf16.msra.mxu0 0
        %5994 = vmatprep.subr.bf16.mxu0 0
        %5995 = vmatpush1.bf16.msra.mxu0 0
        %5996 = vmatprep.subr.bf16.mxu0 0
        %5997 = vmatpush1.bf16.msra.mxu0 0
        %5998 = vmatprep.subr.bf16.mxu0 0
        %5999 = vmatpush1.bf16.msra.mxu0 0
        %6000 = vmatprep.mubr.bf16.mxu0 0
        %6001 = vmatmul.mubr.bf16.gmra.mrb[0].mxu0 %v5964
        %v6002 = vpop.f32.mrb[0].mxu0
        %v6003 = vadd.f32 0.0, %v6002
        %v6004 = vpop.f32.mrb[0].mxu0
        %v6005 = vpop.f32.mrb[0].mxu0
        %v6006 = vpop.f32.mrb[0].mxu0
        %6007 = vdwg.mxu0
        %v6009 = vsel %vm2606, %v4876, 0
        %v6011 = vsel %vm2022, %v2421, 0
        %6013 = vmatprep.subr.bf16.mxu0 0
        %6014 = vmatpush1.bf16.msra.mxu0 %v6011
        %6015 = vmatprep.subr.bf16.mxu0 0
        %6016 = vmatpush1.bf16.msra.mxu0 0
        %6017 = vmatprep.subr.bf16.mxu0 0
        %6018 = vmatpush1.bf16.msra.mxu0 0
        %6019 = vmatprep.subr.bf16.mxu0 0
        %6020 = vmatpush1.bf16.msra.mxu0 0
        %6021 = vmatprep.subr.bf16.mxu0 0
        %6022 = vmatpush1.bf16.msra.mxu0 0
        %6023 = vmatprep.subr.bf16.mxu0 0
        %6024 = vmatpush1.bf16.msra.mxu0 0
        %6025 = vmatprep.subr.bf16.mxu0 0
        %6026 = vmatpush1.bf16.msra.mxu0 0
        %6027 = vmatprep.subr.bf16.mxu0 0
        %6028 = vmatpush1.bf16.msra.mxu0 0
        %6029 = vmatprep.subr.bf16.mxu0 0
        %6030 = vmatpush1.bf16.msra.mxu0 0
        %6031 = vmatprep.subr.bf16.mxu0 0
        %6032 = vmatpush1.bf16.msra.mxu0 0
        %6033 = vmatprep.subr.bf16.mxu0 0
        %6034 = vmatpush1.bf16.msra.mxu0 0
        %6035 = vmatprep.subr.bf16.mxu0 0
        %6036 = vmatpush1.bf16.msra.mxu0 0
        %6037 = vmatprep.subr.bf16.mxu0 0
        %6038 = vmatpush1.bf16.msra.mxu0 0
        %6039 = vmatprep.subr.bf16.mxu0 0
        %6040 = vmatpush1.bf16.msra.mxu0 0
        %6041 = vmatprep.subr.bf16.mxu0 0
        %6042 = vmatpush1.bf16.msra.mxu0 0
        %6043 = vmatprep.subr.bf16.mxu0 0
        %6044 = vmatpush1.bf16.msra.mxu0 0
        %6045 = vmatprep.mubr.bf16.mxu0 0
        %6046 = vmatmul.mubr.bf16.gmra.mrb[0].mxu0 %v6009
        %v6047 = vpop.f32.mrb[0].mxu0
        %v6048 = vadd.f32 0.0, %v6047
        %v6049 = vpop.f32.mrb[0].mxu0
        %v6050 = vpop.f32.mrb[0].mxu0
        %v6051 = vpop.f32.mrb[0].mxu0
        %6052 = vdwg.mxu0
        %v6054 = vsel %vm2606, %v4877, 0
        %v6056 = vsel %vm2022, %v2424, 0
        %6058 = vmatprep.subr.bf16.mxu0 0
        %6059 = vmatpush1.bf16.msra.mxu0 %v6056
        %6060 = vmatprep.subr.bf16.mxu0 0
        %6061 = vmatpush1.bf16.msra.mxu0 0
        %6062 = vmatprep.subr.bf16.mxu0 0
        %6063 = vmatpush1.bf16.msra.mxu0 0
        %6064 = vmatprep.subr.bf16.mxu0 0
        %6065 = vmatpush1.bf16.msra.mxu0 0
        %6066 = vmatprep.subr.bf16.mxu0 0
        %6067 = vmatpush1.bf16.msra.mxu0 0
        %6068 = vmatprep.subr.bf16.mxu0 0
        %6069 = vmatpush1.bf16.msra.mxu0 0
        %6070 = vmatprep.subr.bf16.mxu0 0
        %6071 = vmatpush1.bf16.msra.mxu0 0
        %6072 = vmatprep.subr.bf16.mxu0 0
        %6073 = vmatpush1.bf16.msra.mxu0 0
        %6074 = vmatprep.subr.bf16.mxu0 0
        %6075 = vmatpush1.bf16.msra.mxu0 0
        %6076 = vmatprep.subr.bf16.mxu0 0
        %6077 = vmatpush1.bf16.msra.mxu0 0
        %6078 = vmatprep.subr.bf16.mxu0 0
        %6079 = vmatpush1.bf16.msra.mxu0 0
        %6080 = vmatprep.subr.bf16.mxu0 0
        %6081 = vmatpush1.bf16.msra.mxu0 0
        %6082 = vmatprep.subr.bf16.mxu0 0
        %6083 = vmatpush1.bf16.msra.mxu0 0
        %6084 = vmatprep.subr.bf16.mxu0 0
        %6085 = vmatpush1.bf16.msra.mxu0 0
        %6086 = vmatprep.subr.bf16.mxu0 0
        %6087 = vmatpush1.bf16.msra.mxu0 0
        %6088 = vmatprep.subr.bf16.mxu0 0
        %6089 = vmatpush1.bf16.msra.mxu0 0
        %6090 = vmatprep.mubr.bf16.mxu0 0
        %6091 = vmatmul.mubr.bf16.gmra.mrb[0].mxu0 %v6054
        %v6092 = vpop.f32.mrb[0].mxu0
        %v6093 = vadd.f32 0.0, %v6092
        %v6094 = vpop.f32.mrb[0].mxu0
        %v6095 = vpop.f32.mrb[0].mxu0
        %v6096 = vpop.f32.mrb[0].mxu0
        %6097 = vdwg.mxu0
        %v6099 = vsel %vm2606, %v4878, 0
        %v6101 = vsel %vm2022, %v2427, 0
        %6103 = vmatprep.subr.bf16.mxu0 0
        %6104 = vmatpush1.bf16.msra.mxu0 %v6101
        %6105 = vmatprep.subr.bf16.mxu0 0
        %6106 = vmatpush1.bf16.msra.mxu0 0
        %6107 = vmatprep.subr.bf16.mxu0 0
        %6108 = vmatpush1.bf16.msra.mxu0 0
        %6109 = vmatprep.subr.bf16.mxu0 0
        %6110 = vmatpush1.bf16.msra.mxu0 0
        %6111 = vmatprep.subr.bf16.mxu0 0
        %6112 = vmatpush1.bf16.msra.mxu0 0
        %6113 = vmatprep.subr.bf16.mxu0 0
        %6114 = vmatpush1.bf16.msra.mxu0 0
        %6115 = vmatprep.subr.bf16.mxu0 0
        %6116 = vmatpush1.bf16.msra.mxu0 0
        %6117 = vmatprep.subr.bf16.mxu0 0
        %6118 = vmatpush1.bf16.msra.mxu0 0
        %6119 = vmatprep.subr.bf16.mxu0 0
        %6120 = vmatpush1.bf16.msra.mxu0 0
        %6121 = vmatprep.subr.bf16.mxu0 0
        %6122 = vmatpush1.bf16.msra.mxu0 0
        %6123 = vmatprep.subr.bf16.mxu0 0
        %6124 = vmatpush1.bf16.msra.mxu0 0
        %6125 = vmatprep.subr.bf16.mxu0 0
        %6126 = vmatpush1.bf16.msra.mxu0 0
        %6127 = vmatprep.subr.bf16.mxu0 0
        %6128 = vmatpush1.bf16.msra.mxu0 0
        %6129 = vmatprep.subr.bf16.mxu0 0
        %6130 = vmatpush1.bf16.msra.mxu0 0
        %6131 = vmatprep.subr.bf16.mxu0 0
        %6132 = vmatpush1.bf16.msra.mxu0 0
        %6133 = vmatprep.subr.bf16.mxu0 0
        %6134 = vmatpush1.bf16.msra.mxu0 0
        %6135 = vmatprep.mubr.bf16.mxu0 0
        %6136 = vmatmul.mubr.bf16.gmra.mrb[0].mxu0 %v6099
        %v6137 = vpop.f32.mrb[0].mxu0
        %v6138 = vadd.f32 0.0, %v6137
        %v6139 = vpop.f32.mrb[0].mxu0
        %v6140 = vpop.f32.mrb[0].mxu0
        %v6141 = vpop.f32.mrb[0].mxu0
        %6142 = vdwg.mxu0
        %v6144 = vsel %vm2606, %v4879, 0
        %v6146 = vsel %vm2022, %v2430, 0
        %6148 = vmatprep.subr.bf16.mxu0 0
        %6149 = vmatpush1.bf16.msra.mxu0 %v6146
        %6150 = vmatprep.subr.bf16.mxu0 0
        %6151 = vmatpush1.bf16.msra.mxu0 0
        %6152 = vmatprep.subr.bf16.mxu0 0
        %6153 = vmatpush1.bf16.msra.mxu0 0
        %6154 = vmatprep.subr.bf16.mxu0 0
        %6155 = vmatpush1.bf16.msra.mxu0 0
        %6156 = vmatprep.subr.bf16.mxu0 0
        %6157 = vmatpush1.bf16.msra.mxu0 0
        %6158 = vmatprep.subr.bf16.mxu0 0
        %6159 = vmatpush1.bf16.msra.mxu0 0
        %6160 = vmatprep.subr.bf16.mxu0 0
        %6161 = vmatpush1.bf16.msra.mxu0 0
        %6162 = vmatprep.subr.bf16.mxu0 0
        %6163 = vmatpush1.bf16.msra.mxu0 0
        %6164 = vmatprep.subr.bf16.mxu0 0
        %6165 = vmatpush1.bf16.msra.mxu0 0
        %6166 = vmatprep.subr.bf16.mxu0 0
        %6167 = vmatpush1.bf16.msra.mxu0 0
        %6168 = vmatprep.subr.bf16.mxu0 0
        %6169 = vmatpush1.bf16.msra.mxu0 0
        %6170 = vmatprep.subr.bf16.mxu0 0
        %6171 = vmatpush1.bf16.msra.mxu0 0
        %6172 = vmatprep.subr.bf16.mxu0 0
        %6173 = vmatpush1.bf16.msra.mxu0 0
        %6174 = vmatprep.subr.bf16.mxu0 0
        %6175 = vmatpush1.bf16.msra.mxu0 0
        %6176 = vmatprep.subr.bf16.mxu0 0
        %6177 = vmatpush1.bf16.msra.mxu0 0
        %6178 = vmatprep.subr.bf16.mxu0 0
        %6179 = vmatpush1.bf16.msra.mxu0 0
        %6180 = vmatprep.mubr.bf16.mxu0 0
        %6181 = vmatmul.mubr.bf16.gmra.mrb[0].mxu0 %v6144
        %v6182 = vpop.f32.mrb[0].mxu0
        %v6183 = vadd.f32 0.0, %v6182
        %v6184 = vpop.f32.mrb[0].mxu0
        %v6185 = vpop.f32.mrb[0].mxu0
        %v6186 = vpop.f32.mrb[0].mxu0
        %6187 = vdwg.mxu0
        %v6189 = vsel %vm2606, %v4880, 0
        %v6191 = vsel %vm2022, %v2433, 0
        %6193 = vmatprep.subr.bf16.mxu0 0
        %6194 = vmatpush1.bf16.msra.mxu0 %v6191
        %6195 = vmatprep.subr.bf16.mxu0 0
        %6196 = vmatpush1.bf16.msra.mxu0 0
        %6197 = vmatprep.subr.bf16.mxu0 0
        %6198 = vmatpush1.bf16.msra.mxu0 0
        %6199 = vmatprep.subr.bf16.mxu0 0
        %6200 = vmatpush1.bf16.msra.mxu0 0
        %6201 = vmatprep.subr.bf16.mxu0 0
        %6202 = vmatpush1.bf16.msra.mxu0 0
        %6203 = vmatprep.subr.bf16.mxu0 0
        %6204 = vmatpush1.bf16.msra.mxu0 0
        %6205 = vmatprep.subr.bf16.mxu0 0
        %6206 = vmatpush1.bf16.msra.mxu0 0
        %6207 = vmatprep.subr.bf16.mxu0 0
        %6208 = vmatpush1.bf16.msra.mxu0 0
        %6209 = vmatprep.subr.bf16.mxu0 0
        %6210 = vmatpush1.bf16.msra.mxu0 0
        %6211 = vmatprep.subr.bf16.mxu0 0
        %6212 = vmatpush1.bf16.msra.mxu0 0
        %6213 = vmatprep.subr.bf16.mxu0 0
        %6214 = vmatpush1.bf16.msra.mxu0 0
        %6215 = vmatprep.subr.bf16.mxu0 0
        %6216 = vmatpush1.bf16.msra.mxu0 0
        %6217 = vmatprep.subr.bf16.mxu0 0
        %6218 = vmatpush1.bf16.msra.mxu0 0
        %6219 = vmatprep.subr.bf16.mxu0 0
        %6220 = vmatpush1.bf16.msra.mxu0 0
        %6221 = vmatprep.subr.bf16.mxu0 0
        %6222 = vmatpush1.bf16.msra.mxu0 0
        %6223 = vmatprep.subr.bf16.mxu0 0
        %6224 = vmatpush1.bf16.msra.mxu0 0
        %6225 = vmatprep.mubr.bf16.mxu0 0
        %6226 = vmatmul.mubr.bf16.gmra.mrb[0].mxu0 %v6189
        %v6227 = vpop.f32.mrb[0].mxu0
        %v6228 = vadd.f32 0.0, %v6227
        %v6229 = vpop.f32.mrb[0].mxu0
        %v6230 = vpop.f32.mrb[0].mxu0
        %v6231 = vpop.f32.mrb[0].mxu0
        %6232 = vdwg.mxu0
        %v6234 = vsel %vm2606, %v4881, 0
        %v6236 = vsel %vm2022, %v2436, 0
        %6238 = vmatprep.subr.bf16.mxu0 0
        %6239 = vmatpush1.bf16.msra.mxu0 %v6236
        %6240 = vmatprep.subr.bf16.mxu0 0
        %6241 = vmatpush1.bf16.msra.mxu0 0
        %6242 = vmatprep.subr.bf16.mxu0 0
        %6243 = vmatpush1.bf16.msra.mxu0 0
        %6244 = vmatprep.subr.bf16.mxu0 0
        %6245 = vmatpush1.bf16.msra.mxu0 0
        %6246 = vmatprep.subr.bf16.mxu0 0
        %6247 = vmatpush1.bf16.msra.mxu0 0
        %6248 = vmatprep.subr.bf16.mxu0 0
        %6249 = vmatpush1.bf16.msra.mxu0 0
        %6250 = vmatprep.subr.bf16.mxu0 0
        %6251 = vmatpush1.bf16.msra.mxu0 0
        %6252 = vmatprep.subr.bf16.mxu0 0
        %6253 = vmatpush1.bf16.msra.mxu0 0
        %6254 = vmatprep.subr.bf16.mxu0 0
        %6255 = vmatpush1.bf16.msra.mxu0 0
        %6256 = vmatprep.subr.bf16.mxu0 0
        %6257 = vmatpush1.bf16.msra.mxu0 0
        %6258 = vmatprep.subr.bf16.mxu0 0
        %6259 = vmatpush1.bf16.msra.mxu0 0
        %6260 = vmatprep.subr.bf16.mxu0 0
        %6261 = vmatpush1.bf16.msra.mxu0 0
        %6262 = vmatprep.subr.bf16.mxu0 0
        %6263 = vmatpush1.bf16.msra.mxu0 0
        %6264 = vmatprep.subr.bf16.mxu0 0
        %6265 = vmatpush1.bf16.msra.mxu0 0
        %6266 = vmatprep.subr.bf16.mxu0 0
        %6267 = vmatpush1.bf16.msra.mxu0 0
        %6268 = vmatprep.subr.bf16.mxu0 0
        %6269 = vmatpush1.bf16.msra.mxu0 0
        %6270 = vmatprep.mubr.bf16.mxu0 0
        %6271 = vmatmul.mubr.bf16.gmra.mrb[0].mxu0 %v6234
        %v6272 = vpop.f32.mrb[0].mxu0
        %v6273 = vadd.f32 0.0, %v6272
        %v6274 = vpop.f32.mrb[0].mxu0
        %v6275 = vpop.f32.mrb[0].mxu0
        %v6276 = vpop.f32.mrb[0].mxu0
        %6277 = vdwg.mxu0
        %v6279 = vsel %vm2606, %v4882, 0
        %v6281 = vsel %vm2022, %v2439, 0
        %6283 = vmatprep.subr.bf16.mxu0 0
        %6284 = vmatpush1.bf16.msra.mxu0 %v6281
        %6285 = vmatprep.subr.bf16.mxu0 0
        %6286 = vmatpush1.bf16.msra.mxu0 0
        %6287 = vmatprep.subr.bf16.mxu0 0
        %6288 = vmatpush1.bf16.msra.mxu0 0
        %6289 = vmatprep.subr.bf16.mxu0 0
        %6290 = vmatpush1.bf16.msra.mxu0 0
        %6291 = vmatprep.subr.bf16.mxu0 0
        %6292 = vmatpush1.bf16.msra.mxu0 0
        %6293 = vmatprep.subr.bf16.mxu0 0
        %6294 = vmatpush1.bf16.msra.mxu0 0
        %6295 = vmatprep.subr.bf16.mxu0 0
        %6296 = vmatpush1.bf16.msra.mxu0 0
        %6297 = vmatprep.subr.bf16.mxu0 0
        %6298 = vmatpush1.bf16.msra.mxu0 0
        %6299 = vmatprep.subr.bf16.mxu0 0
        %6300 = vmatpush1.bf16.msra.mxu0 0
        %6301 = vmatprep.subr.bf16.mxu0 0
        %6302 = vmatpush1.bf16.msra.mxu0 0
        %6303 = vmatprep.subr.bf16.mxu0 0
        %6304 = vmatpush1.bf16.msra.mxu0 0
        %6305 = vmatprep.subr.bf16.mxu0 0
        %6306 = vmatpush1.bf16.msra.mxu0 0
        %6307 = vmatprep.subr.bf16.mxu0 0
        %6308 = vmatpush1.bf16.msra.mxu0 0
        %6309 = vmatprep.subr.bf16.mxu0 0
        %6310 = vmatpush1.bf16.msra.mxu0 0
        %6311 = vmatprep.subr.bf16.mxu0 0
        %6312 = vmatpush1.bf16.msra.mxu0 0
        %6313 = vmatprep.subr.bf16.mxu0 0
        %6314 = vmatpush1.bf16.msra.mxu0 0
        %6315 = vmatprep.mubr.bf16.mxu0 0
        %6316 = vmatmul.mubr.bf16.gmra.mrb[0].mxu0 %v6279
        %v6317 = vpop.f32.mrb[0].mxu0
        %v6318 = vadd.f32 0.0, %v6317
        %v6319 = vpop.f32.mrb[0].mxu0
        %v6320 = vpop.f32.mrb[0].mxu0
        %v6321 = vpop.f32.mrb[0].mxu0
        %6322 = vdwg.mxu0
        %v6323 = vrcp.pop %v4661
        %v6324 = vmul.f32 1.0, %v6323
        %v6325 = vrcp.pop %v4664
        %v6326 = vmul.f32 1.0, %v6325
        %v6327 = vrcp.pop %v4667
        %v6328 = vmul.f32 1.0, %v6327
        %v6329 = vrcp.pop %v4670
        %v6330 = vmul.f32 1.0, %v6329
        %v6331 = vrcp.pop %v4673
        %v6332 = vmul.f32 1.0, %v6331
        %v6333 = vrcp.pop %v4676
        %v6334 = vmul.f32 1.0, %v6333
        %v6335 = vrcp.pop %v4679
        %v6336 = vmul.f32 1.0, %v6335
        %v6337 = vrcp.pop %v4682
        %v6338 = vmul.f32 1.0, %v6337
        %v6339 = vrcp.pop %v4685
        %v6340 = vmul.f32 1.0, %v6339
        %v6341 = vrcp.pop %v4688
        %v6342 = vmul.f32 1.0, %v6341
        %v6343 = vrcp.pop %v4691
        %v6344 = vmul.f32 1.0, %v6343
        %v6345 = vrcp.pop %v4694
        %v6346 = vmul.f32 1.0, %v6345
        %v6347 = vrcp.pop %v4697
        %v6348 = vmul.f32 1.0, %v6347
        %v6349 = vrcp.pop %v4700
        %v6350 = vmul.f32 1.0, %v6349
        %v6351 = vrcp.pop %v4703
        %v6352 = vmul.f32 1.0, %v6351
        %v6353 = vrcp.pop %v4706
        %v6354 = vmul.f32 1.0, %v6353
        %v6355 = vrcp.pop %v4709
        %v6356 = vmul.f32 1.0, %v6355
        %v6357 = vrcp.pop %v4712
        %v6358 = vmul.f32 1.0, %v6357
        %v6359 = vrcp.pop %v4715
        %v6360 = vmul.f32 1.0, %v6359
        %v6361 = vrcp.pop %v4718
        %v6362 = vmul.f32 1.0, %v6361
        %v6363 = vrcp.pop %v4721
        %v6364 = vmul.f32 1.0, %v6363
        %v6365 = vrcp.pop %v4724
        %v6366 = vmul.f32 1.0, %v6365
        %v6367 = vrcp.pop %v4727
        %v6368 = vmul.f32 1.0, %v6367
        %v6369 = vrcp.pop %v4730
        %v6370 = vmul.f32 1.0, %v6369
        %v6371 = vrcp.pop %v4733
        %v6372 = vmul.f32 1.0, %v6371
        %v6373 = vrcp.pop %v4736
        %v6374 = vmul.f32 1.0, %v6373
        %v6375 = vrcp.pop %v4739
        %v6376 = vmul.f32 1.0, %v6375
        %v6377 = vrcp.pop %v4742
        %v6378 = vmul.f32 1.0, %v6377
        %v6379 = vrcp.pop %v4745
        %v6380 = vmul.f32 1.0, %v6379
        %v6381 = vrcp.pop %v4748
        %v6382 = vmul.f32 1.0, %v6381
        %v6383 = vrcp.pop %v4751
        %v6384 = vmul.f32 1.0, %v6383
        %v6385 = vrcp.pop %v4754
        %v6386 = vmul.f32 1.0, %v6385
        %v6387 = vmul.f32 %v4923, %v6324
        %v6388 = vmul.f32 %v4968, %v6326
        %v6389 = vmul.f32 %v5013, %v6328
        %v6390 = vmul.f32 %v5058, %v6330
        %v6391 = vmul.f32 %v5103, %v6332
        %v6392 = vmul.f32 %v5148, %v6334
        %v6393 = vmul.f32 %v5193, %v6336
        %v6394 = vmul.f32 %v5238, %v6338
        %v6395 = vmul.f32 %v5283, %v6340
        %v6396 = vmul.f32 %v5328, %v6342
        %v6397 = vmul.f32 %v5373, %v6344
        %v6398 = vmul.f32 %v5418, %v6346
        %v6399 = vmul.f32 %v5463, %v6348
        %v6400 = vmul.f32 %v5508, %v6350
        %v6401 = vmul.f32 %v5553, %v6352
        %v6402 = vmul.f32 %v5598, %v6354
        %v6403 = vmul.f32 %v5643, %v6356
        %v6404 = vmul.f32 %v5688, %v6358
        %v6405 = vmul.f32 %v5733, %v6360
        %v6406 = vmul.f32 %v5778, %v6362
        %v6407 = vmul.f32 %v5823, %v6364
        %v6408 = vmul.f32 %v5868, %v6366
        %v6409 = vmul.f32 %v5913, %v6368
        %v6410 = vmul.f32 %v5958, %v6370
        %v6411 = vmul.f32 %v6003, %v6372
        %v6412 = vmul.f32 %v6048, %v6374
        %v6413 = vmul.f32 %v6093, %v6376
        %v6414 = vmul.f32 %v6138, %v6378
        %v6415 = vmul.f32 %v6183, %v6380
        %v6416 = vmul.f32 %v6228, %v6382
        %v6417 = vmul.f32 %v6273, %v6384
        %v6418 = vmul.f32 %v6318, %v6386
        %v6419 = vpack.c.bf16 %v6387, %v6387
        %v6420 = vpack.c.bf16 %v6388, %v6388
        %v6421 = vpack.c.bf16 %v6389, %v6389
        %v6422 = vpack.c.bf16 %v6390, %v6390
        %v6423 = vpack.c.bf16 %v6391, %v6391
        %v6424 = vpack.c.bf16 %v6392, %v6392
        %v6425 = vpack.c.bf16 %v6393, %v6393
        %v6426 = vpack.c.bf16 %v6394, %v6394
        %v6427 = vpack.c.bf16 %v6395, %v6395
        %v6428 = vpack.c.bf16 %v6396, %v6396
        %v6429 = vpack.c.bf16 %v6397, %v6397
        %v6430 = vpack.c.bf16 %v6398, %v6398
        %v6431 = vpack.c.bf16 %v6399, %v6399
        %v6432 = vpack.c.bf16 %v6400, %v6400
        %v6433 = vpack.c.bf16 %v6401, %v6401
        %v6434 = vpack.c.bf16 %v6402, %v6402
        %v6435 = vpack.c.bf16 %v6403, %v6403
        %v6436 = vpack.c.bf16 %v6404, %v6404
        %v6437 = vpack.c.bf16 %v6405, %v6405
        %v6438 = vpack.c.bf16 %v6406, %v6406
        %v6439 = vpack.c.bf16 %v6407, %v6407
        %v6440 = vpack.c.bf16 %v6408, %v6408
        %v6441 = vpack.c.bf16 %v6409, %v6409
        %v6442 = vpack.c.bf16 %v6410, %v6410
        %v6443 = vpack.c.bf16 %v6411, %v6411
        %v6444 = vpack.c.bf16 %v6412, %v6412
        %v6445 = vpack.c.bf16 %v6413, %v6413
        %v6446 = vpack.c.bf16 %v6414, %v6414
        %v6447 = vpack.c.bf16 %v6415, %v6415
        %v6448 = vpack.c.bf16 %v6416, %v6416
        %v6449 = vpack.c.bf16 %v6417, %v6417
        %v6450 = vpack.c.bf16 %v6418, %v6418
        %vm6451 = vcmask 58368
        %6452 = vst.msk [vmem:[%s1206] sm:$0x3] %vm6451, %v6419
        %6453 = vst.msk [vmem:[%s1206 + $0x2] sm:$0x3] %vm6451, %v6420
        %6454 = vst.msk [vmem:[%s1206 + $0x4] sm:$0x3] %vm6451, %v6421
        %6455 = vst.msk [vmem:[%s1206 + $0x6] sm:$0x3] %vm6451, %v6422
        %6456 = vst.msk [vmem:[%s1206 + $0x8] sm:$0x3] %vm6451, %v6423
        %6457 = vst.msk [vmem:[%s1206 + $0xa] sm:$0x3] %vm6451, %v6424
        %6458 = vst.msk [vmem:[%s1206 + $0xc] sm:$0x3] %vm6451, %v6425
        %6459 = vst.msk [vmem:[%s1206 + $0xe] sm:$0x3] %vm6451, %v6426
        %6460 = vst.msk [vmem:[%s1206 + $0x10] sm:$0x3] %vm6451, %v6427
        %6461 = vst.msk [vmem:[%s1206 + $0x12] sm:$0x3] %vm6451, %v6428
        %6462 = vst.msk [vmem:[%s1206 + $0x14] sm:$0x3] %vm6451, %v6429
        %6463 = vst.msk [vmem:[%s1206 + $0x16] sm:$0x3] %vm6451, %v6430
        %6464 = vst.msk [vmem:[%s1206 + $0x18] sm:$0x3] %vm6451, %v6431
        %6465 = vst.msk [vmem:[%s1206 + $0x1a] sm:$0x3] %vm6451, %v6432
        %6466 = vst.msk [vmem:[%s1206 + $0x1c] sm:$0x3] %vm6451, %v6433
        %6467 = vst.msk [vmem:[%s1206 + $0x1e] sm:$0x3] %vm6451, %v6434
        %6468 = vst.msk [vmem:[%s1206 + $0x20] sm:$0x3] %vm6451, %v6435
        %6469 = vst.msk [vmem:[%s1206 + $0x22] sm:$0x3] %vm6451, %v6436
        %6470 = vst.msk [vmem:[%s1206 + $0x24] sm:$0x3] %vm6451, %v6437
        %6471 = vst.msk [vmem:[%s1206 + $0x26] sm:$0x3] %vm6451, %v6438
        %6472 = vst.msk [vmem:[%s1206 + $0x28] sm:$0x3] %vm6451, %v6439
        %6473 = vst.msk [vmem:[%s1206 + $0x2a] sm:$0x3] %vm6451, %v6440
        %6474 = vst.msk [vmem:[%s1206 + $0x2c] sm:$0x3] %vm6451, %v6441
        %6475 = vst.msk [vmem:[%s1206 + $0x2e] sm:$0x3] %vm6451, %v6442
        %6476 = vst.msk [vmem:[%s1206 + $0x30] sm:$0x3] %vm6451, %v6443
        %6477 = vst.msk [vmem:[%s1206 + $0x32] sm:$0x3] %vm6451, %v6444
        %6478 = vst.msk [vmem:[%s1206 + $0x34] sm:$0x3] %vm6451, %v6445
        %6479 = vst.msk [vmem:[%s1206 + $0x36] sm:$0x3] %vm6451, %v6446
        %6480 = vst.msk [vmem:[%s1206 + $0x38] sm:$0x3] %vm6451, %v6447
        %6481 = vst.msk [vmem:[%s1206 + $0x3a] sm:$0x3] %vm6451, %v6448
        %6482 = vst.msk [vmem:[%s1206 + $0x3c] sm:$0x3] %vm6451, %v6449
        %6483 = vst.msk [vmem:[%s1206 + $0x3e] sm:$0x3] %vm6451, %v6450
        %v6516 = vlaneseq
        %v6517 = vshrl.u32 %v6516, 7
        %v6518 = vsub.s32 %v1678, %v6517
        %v6519 = vrot.slane %v4819, %v6518
        %v6520 = vlaneseq
        %v6521 = vshrl.u32 %v6520, 7
        %v6522 = vsub.s32 %v1678, %v6521
        %v6523 = vrot.slane %v4820, %v6522
        %v6524 = vlaneseq
        %v6525 = vshrl.u32 %v6524, 7
        %v6526 = vsub.s32 %v1678, %v6525
        %v6527 = vrot.slane %v4821, %v6526
        %v6528 = vlaneseq
        %v6529 = vshrl.u32 %v6528, 7
        %v6530 = vsub.s32 %v1678, %v6529
        %v6531 = vrot.slane %v4822, %v6530
        %v6532 = vlaneseq
        %v6533 = vshrl.u32 %v6532, 7
        %v6534 = vsub.s32 %v1678, %v6533
        %v6535 = vrot.slane %v4823, %v6534
        %v6536 = vlaneseq
        %v6537 = vshrl.u32 %v6536, 7
        %v6538 = vsub.s32 %v1678, %v6537
        %v6539 = vrot.slane %v4824, %v6538
        %v6540 = vlaneseq
        %v6541 = vshrl.u32 %v6540, 7
        %v6542 = vsub.s32 %v1678, %v6541
        %v6543 = vrot.slane %v4825, %v6542
        %v6544 = vlaneseq
        %v6545 = vshrl.u32 %v6544, 7
        %v6546 = vsub.s32 %v1678, %v6545
        %v6547 = vrot.slane %v4826, %v6546
        %v6548 = vlaneseq
        %v6549 = vshrl.u32 %v6548, 7
        %v6550 = vsub.s32 %v1678, %v6549
        %v6551 = vrot.slane %v4827, %v6550
        %v6552 = vlaneseq
        %v6553 = vshrl.u32 %v6552, 7
        %v6554 = vsub.s32 %v1678, %v6553
        %v6555 = vrot.slane %v4828, %v6554
        %v6556 = vlaneseq
        %v6557 = vshrl.u32 %v6556, 7
        %v6558 = vsub.s32 %v1678, %v6557
        %v6559 = vrot.slane %v4829, %v6558
        %v6560 = vlaneseq
        %v6561 = vshrl.u32 %v6560, 7
        %v6562 = vsub.s32 %v1678, %v6561
        %v6563 = vrot.slane %v4830, %v6562
        %v6564 = vlaneseq
        %v6565 = vshrl.u32 %v6564, 7
        %v6566 = vsub.s32 %v1678, %v6565
        %v6567 = vrot.slane %v4831, %v6566
        %v6568 = vlaneseq
        %v6569 = vshrl.u32 %v6568, 7
        %v6570 = vsub.s32 %v1678, %v6569
        %v6571 = vrot.slane %v4832, %v6570
        %v6572 = vlaneseq
        %v6573 = vshrl.u32 %v6572, 7
        %v6574 = vsub.s32 %v1678, %v6573
        %v6575 = vrot.slane %v4833, %v6574
        %v6576 = vlaneseq
        %v6577 = vshrl.u32 %v6576, 7
        %v6578 = vsub.s32 %v1678, %v6577
        %v6579 = vrot.slane %v4834, %v6578
        %v6580 = vlaneseq
        %v6581 = vshrl.u32 %v6580, 7
        %v6582 = vsub.s32 %v1678, %v6581
        %v6583 = vrot.slane %v4835, %v6582
        %v6584 = vlaneseq
        %v6585 = vshrl.u32 %v6584, 7
        %v6586 = vsub.s32 %v1678, %v6585
        %v6587 = vrot.slane %v4836, %v6586
        %v6588 = vlaneseq
        %v6589 = vshrl.u32 %v6588, 7
        %v6590 = vsub.s32 %v1678, %v6589
        %v6591 = vrot.slane %v4837, %v6590
        %v6592 = vlaneseq
        %v6593 = vshrl.u32 %v6592, 7
        %v6594 = vsub.s32 %v1678, %v6593
        %v6595 = vrot.slane %v4838, %v6594
        %v6596 = vlaneseq
        %v6597 = vshrl.u32 %v6596, 7
        %v6598 = vsub.s32 %v1678, %v6597
        %v6599 = vrot.slane %v4839, %v6598
        %v6600 = vlaneseq
        %v6601 = vshrl.u32 %v6600, 7
        %v6602 = vsub.s32 %v1678, %v6601
        %v6603 = vrot.slane %v4840, %v6602
        %v6604 = vlaneseq
        %v6605 = vshrl.u32 %v6604, 7
        %v6606 = vsub.s32 %v1678, %v6605
        %v6607 = vrot.slane %v4841, %v6606
        %v6608 = vlaneseq
        %v6609 = vshrl.u32 %v6608, 7
        %v6610 = vsub.s32 %v1678, %v6609
        %v6611 = vrot.slane %v4842, %v6610
        %v6612 = vlaneseq
        %v6613 = vshrl.u32 %v6612, 7
        %v6614 = vsub.s32 %v1678, %v6613
        %v6615 = vrot.slane %v4843, %v6614
        %v6616 = vlaneseq
        %v6617 = vshrl.u32 %v6616, 7
        %v6618 = vsub.s32 %v1678, %v6617
        %v6619 = vrot.slane %v4844, %v6618
        %v6620 = vlaneseq
        %v6621 = vshrl.u32 %v6620, 7
        %v6622 = vsub.s32 %v1678, %v6621
        %v6623 = vrot.slane %v4845, %v6622
        %v6624 = vlaneseq
        %v6625 = vshrl.u32 %v6624, 7
        %v6626 = vsub.s32 %v1678, %v6625
        %v6627 = vrot.slane %v4846, %v6626
        %v6628 = vlaneseq
        %v6629 = vshrl.u32 %v6628, 7
        %v6630 = vsub.s32 %v1678, %v6629
        %v6631 = vrot.slane %v4847, %v6630
        %v6632 = vlaneseq
        %v6633 = vshrl.u32 %v6632, 7
        %v6634 = vsub.s32 %v1678, %v6633
        %v6635 = vrot.slane %v4848, %v6634
        %v6636 = vlaneseq
        %v6637 = vshrl.u32 %v6636, 7
        %v6638 = vsub.s32 %v1678, %v6637
        %v6639 = vrot.slane %v4849, %v6638
        %v6640 = vlaneseq
        %v6641 = vshrl.u32 %v6640, 7
        %v6642 = vsub.s32 %v1678, %v6641
        %v6643 = vrot.slane %v4850, %v6642
        %v6644 = vsel %vm2468, %v6523, %v6519
        %v6645 = vsel %vm1891, %v6527, %v6644
        %v6646 = vsel %vm1893, %v6531, %v6645
        %v6647 = vsel %vm1895, %v6535, %v6646
        %v6648 = vsel %vm1897, %v6539, %v6647
        %v6649 = vsel %vm1899, %v6543, %v6648
        %v6650 = vsel %vm1901, %v6547, %v6649
        %v6651 = vsel %vm2468, %v6555, %v6551
        %v6652 = vsel %vm1891, %v6559, %v6651
        %v6653 = vsel %vm1893, %v6563, %v6652
        %v6654 = vsel %vm1895, %v6567, %v6653
        %v6655 = vsel %vm1897, %v6571, %v6654
        %v6656 = vsel %vm1899, %v6575, %v6655
        %v6657 = vsel %vm1901, %v6579, %v6656
        %v6658 = vsel %vm2468, %v6587, %v6583
        %v6659 = vsel %vm1891, %v6591, %v6658
        %v6660 = vsel %vm1893, %v6595, %v6659
        %v6661 = vsel %vm1895, %v6599, %v6660
        %v6662 = vsel %vm1897, %v6603, %v6661
        %v6663 = vsel %vm1899, %v6607, %v6662
        %v6664 = vsel %vm1901, %v6611, %v6663
        %v6665 = vsel %vm2468, %v6619, %v6615
        %v6666 = vsel %vm1891, %v6623, %v6665
        %v6667 = vsel %vm1893, %v6627, %v6666
        %v6668 = vsel %vm1895, %v6631, %v6667
        %v6669 = vsel %vm1897, %v6635, %v6668
        %v6670 = vsel %vm1899, %v6639, %v6669
        %v6671 = vsel %vm1901, %v6643, %v6670
        %6676 = vst.msk [vmem:[%s1212] sm:$0xff] %vm2505, %v6650
        %6677 = vst.msk [vmem:[%s1212 + $0x8] sm:$0xff] %vm2505, %v6657
        %6678 = vst.msk [vmem:[%s1212 + $0x10] sm:$0xff] %vm2505, %v6664
        %6679 = vst.msk [vmem:[%s1212 + $0x18] sm:$0xff] %vm2505, %v6671
        %s6680 = sand.u32 %s296, 1
        %s6681 = scalar_lea.sflag [#allocation9], %s6680
        %s6682 = sand.u32 %s296, 1
        %s6683 = smul.addr %s6682, 64
        %s6684 = scalar_lea.vmem [#allocation8], %s6683
        %s6685 = sand.u32 %s324, 1
        %s6686 = sand.u32 %s324, 1
        %s6687 = smul.addr %s6686, 32
        %s6688 = scalar_lea.vmem [#allocation10], %s6687
        // Predicated region
        $region291: #{reformer_layer_forward.4} parent=265 // pred_check
          %p6689 = pneg %p306
        $region292: #{reformer_layer_forward.4} parent=265 // pred_check_branch
          %6691 = sbr.rel (%p6689) target = $region294
        $region293: #{reformer_layer_forward.4} parent=265 // pred_region
          #allocation12 [shape = 'u32[6]{0}', space=smem, size = 0x18, scoped, tag = 'DMA stride descriptor']
          %s6692 = smul.u32 4, %s26
          %s6693 = smul.u32 8, %s27
          %s6695 = ssub.s32 1024, 1024
          %6696 = vsyncadd %s6681, %s6695
          %s6697 = smul.addr %s6692, 16
          %s6698 = sadd.s32 %s6693, %s6697
          %s6699 = smul.addr %s6698, 32
          %s6700 = scalar_lea.hbm %s6, %s6699
          %s6702 = sshll.u32 1, 14
          %s6703 = sxor.u32 4294967295, %s6702
          %s6706 = sshll.u32 7, 18
          %s6707 = sxor.u32 4294967295, %s6706
          %s6708 = sand.u32 0, %s6707
          %s6710 = sor.u32 %s6708, 0
          %s6712 = sshll.u32 3, 24
          %s6713 = sxor.u32 4294967295, %s6712
          %s6714 = sand.u32 %s6710, %s6713
          %s6716 = sor.u32 %s6714, 0
          %s6717 = sshll.u32 %s6684, 4
          %s6718 = int_to_ptr.vmem [resolvable:$true] %s6717
          %6724 = sst [smem:[#allocation12]] 256
          %s6725 = scalar_lea.smem [#allocation12], 1
          %6726 = sst [smem:[%s6725]] 512
          %s6727 = scalar_lea.smem [#allocation12], 2
          %6728 = sst [smem:[%s6727]] 8
          %s6729 = scalar_lea.smem [#allocation12], 3
          %6730 = sst [smem:[%s6729]] 32
          %s6731 = scalar_lea.smem [#allocation12], 4
          %6732 = sst [smem:[%s6731]] 32
          %s6733 = scalar_lea.smem [#allocation12], 5
          %6734 = sst [smem:[%s6733]] 2
          %6736 = dma.general %s6718, 1024, %s6700, %s6681, [#allocation11], [#allocation12], %s6716, 0
        $region294: #{reformer_layer_forward.4} parent=265 // pred_fallthru
          _
        // Predicated region
        $region295: #{reformer_layer_forward.4} parent=265 // pred_check
          %p6737 = pneg %p334
        $region296: #{reformer_layer_forward.4} parent=265 // pred_check_branch
          %6739 = sbr.rel (%p6737) target = $region298
        $region297: #{reformer_layer_forward.4} parent=265 // pred_region
          %s6740 = smul.u32 4, %s26
          %s6741 = smul.addr %s6740, 2
          %s6742 = sadd.s32 %s27, %s6741
          %s6743 = smul.addr %s6742, 8
          %s6744 = scalar_lea.vmem %s7, %s6743
          // Predicated region
          $region299: #{reformer_layer_forward.4} parent=297 // pred_check
            _
          $region300: #{reformer_layer_forward.4} parent=297 // pred_check_branch
            %6746 = sbr.rel (0) target = $region302
          $region301: #{reformer_layer_forward.4} parent=297 // pred_region
            // Predicated region
            $region303: #{reformer_layer_forward.4} parent=301 // pred_check
              _
            $region304: #{reformer_layer_forward.4} parent=301 // pred_check_branch
              %6748 = sbr.rel (0) target = $region306
            $region305: #{reformer_layer_forward.4} parent=301 // pred_region
              // Predicated region
              $region318: #{reformer_layer_forward.4} parent=305 // pred_check
                _
              $region319: #{reformer_layer_forward.4} parent=305 // pred_check_branch
                %6769 = sbr.rel (0) target = $region321
              $region320: #{reformer_layer_forward.4} parent=305 // pred_region
                loop: start=0, step=1, limit=1
                $region322: #{reformer_layer_forward.4} parent=320 // loop_pre_header
                  _
                $region323: #{reformer_layer_forward.4} parent=320 // loop_header
                  %s6771 = sphi 0, %s6775
                  %p6772 = scmp.ge.s32.totalorder %s6771, 1
                  %s6776 = sphi %s6688, %s6688
                  %s6777 = sphi %s6744, %s6744
                $region324: #{reformer_layer_forward.4} parent=320 // loop_header_branch
                  %6774 = sbr.rel (%p6772) target = $region328
                $region325: #{reformer_layer_forward.4} parent=320 // loop_body
                  %v6778 = vld [vmem:[%s6776] sm:$0xff]
                  %6779 = vst [vmem:[%s6777] sm:$0xff] %v6778
                  %v6780 = vld [vmem:[%s6776 + $0x8] sm:$0xff]
                  %6781 = vst [vmem:[%s6777 + $0x10] sm:$0xff] %v6780
                  %v6782 = vld [vmem:[%s6776 + $0x10] sm:$0xff]
                  %6783 = vst [vmem:[%s6777 + $0x20] sm:$0xff] %v6782
                  %v6784 = vld [vmem:[%s6776 + $0x18] sm:$0xff]
                  %6785 = vst [vmem:[%s6777 + $0x30] sm:$0xff] %v6784
                $region326: #{reformer_layer_forward.4} parent=320 // loop_footer
                  %s6775 = sadd.s32 1, %s6771
                $region327: #{reformer_layer_forward.4} parent=320 // loop_footer_branch
                  %6770 = sbr.rel target = $region323
                $region328: #{reformer_layer_forward.4} parent=320 // loop_exit
                  _
              $region321: #{reformer_layer_forward.4} parent=305 // pred_fallthru
                _
              // Predicated region
              $region329: #{reformer_layer_forward.4} parent=305 // pred_check
                _
              $region330: #{reformer_layer_forward.4} parent=305 // pred_check_branch
                %6787 = sbr.rel target = $region332
              $region331: #{reformer_layer_forward.4} parent=305 // pred_region
                _
              $region332: #{reformer_layer_forward.4} parent=305 // pred_fallthru
                _
            $region306: #{reformer_layer_forward.4} parent=301 // pred_fallthru
              _
            // Predicated region
            $region307: #{reformer_layer_forward.4} parent=301 // pred_check
              _
            $region308: #{reformer_layer_forward.4} parent=301 // pred_check_branch
              %6750 = sbr.rel target = $region310
            $region309: #{reformer_layer_forward.4} parent=301 // pred_region
              loop: start=0, step=1, limit=1
              $region311: #{reformer_layer_forward.4} parent=309 // loop_pre_header
                _
              $region312: #{reformer_layer_forward.4} parent=309 // loop_header
                %s6753 = sphi 0, %s6757
                %p6754 = scmp.ge.s32.totalorder %s6753, 1
                %s6758 = sphi %s6688, %s6688
                %s6759 = sphi %s6744, %s6744
              $region313: #{reformer_layer_forward.4} parent=309 // loop_header_branch
                %6756 = sbr.rel (%p6754) target = $region317
              $region314: #{reformer_layer_forward.4} parent=309 // loop_body
                %v6760 = vld [vmem:[%s6758] sm:$0xff]
                %6761 = vst [vmem:[%s6759] sm:$0xff] %v6760
                %v6762 = vld [vmem:[%s6758 + $0x8] sm:$0xff]
                %6763 = vst [vmem:[%s6759 + $0x10] sm:$0xff] %v6762
                %v6764 = vld [vmem:[%s6758 + $0x10] sm:$0xff]
                %6765 = vst [vmem:[%s6759 + $0x20] sm:$0xff] %v6764
                %v6766 = vld [vmem:[%s6758 + $0x18] sm:$0xff]
                %6767 = vst [vmem:[%s6759 + $0x30] sm:$0xff] %v6766
              $region315: #{reformer_layer_forward.4} parent=309 // loop_footer
                %s6757 = sadd.s32 1, %s6753
              $region316: #{reformer_layer_forward.4} parent=309 // loop_footer_branch
                %6752 = sbr.rel target = $region312
              $region317: #{reformer_layer_forward.4} parent=309 // loop_exit
                _
            $region310: #{reformer_layer_forward.4} parent=301 // pred_fallthru
              _
          $region302: #{reformer_layer_forward.4} parent=297 // pred_fallthru
            _
          %6788 = vnop
        $region298: #{reformer_layer_forward.4} parent=265 // pred_fallthru
          _
      $region266: #{reformer_layer_forward.4} parent=5 // pred_fallthru
        _
      %p6789 = scmp.le.s32.totalorder 2, %s17
      // Predicated region
      $region333: #{reformer_layer_forward.4} parent=5 // pred_check
        %p6790 = pneg %p6789
      $region334: #{reformer_layer_forward.4} parent=5 // pred_check_branch
        %6792 = sbr.rel (%p6790) target = $region336
      $region335: #{reformer_layer_forward.4} parent=5 // pred_region
        %s6793 = ssub.s32 %s17, 2
        // Predicated region
        $region337: #{reformer_layer_forward.4} parent=335 // pred_check
          %p6794 = pneg %p312
        $region338: #{reformer_layer_forward.4} parent=335 // pred_check_branch
          %6796 = sbr.rel (%p6794) target = $region340
        $region339: #{reformer_layer_forward.4} parent=335 // pred_region
          %s6797 = sand.u32 %s297, 1
          %s6798 = scalar_lea.sflag [#allocation9], %s6797
          %s6799 = sand.u32 %s297, 1
          %s6800 = smul.addr %s6799, 64
          %s6801 = scalar_lea.vmem [#allocation8], %s6800
          %6802 = dma.done %s6798, 1024
        $region340: #{reformer_layer_forward.4} parent=335 // pred_fallthru
          _
        // Predicated region
        $region341: #{reformer_layer_forward.4} parent=335 // pred_check
          %p6803 = pneg %p340
        $region342: #{reformer_layer_forward.4} parent=335 // pred_check_branch
          %6805 = sbr.rel (%p6803) target = $region344
        $region343: #{reformer_layer_forward.4} parent=335 // pred_region
          %s6806 = sand.u32 %s325, 1
          %s6807 = sand.u32 %s325, 1
          %s6808 = smul.addr %s6807, 32
          %s6809 = scalar_lea.vmem [#allocation10], %s6808
        $region344: #{reformer_layer_forward.4} parent=335 // pred_fallthru
          _
      $region336: #{reformer_layer_forward.4} parent=5 // pred_fallthru
        _
    $region6: #{reformer_layer_forward.4} parent=1 // loop_footer
      %s21 = sadd.s32 1, %s17
    $region7: #{reformer_layer_forward.4} parent=1 // loop_footer_branch
      %16 = sbr.rel target = $region3
    $region8: #{reformer_layer_forward.4} parent=1 // loop_exit
      _
    %6810 = vsyncpa [#allocation9], 1
    %s6811 = scalar_lea.sflag [#allocation9], 1
    %6812 = vsyncpa %s6811, 1

</llo_original>
